<compile_context>
chip_gen: v5e
topology: v5e:2x2
jax: 0.10.0
libtpu: 0.0.40
codegen_flags: <defaults>
</compile_context>

<pallas_src>
import functools
import numpy as np
import jax
import jax.numpy as jnp
from jax.experimental import pallas as pl
from jax.experimental.pallas import tpu as pltpu

# --- small sizes consistent with the module structure -----------------------
B = 4      # batch
P = 16     # feature pixels (10x10 in the original -> 16 here)
E = 128    # encoder_dim (2048 in the original)
H = 128    # LSTM / attention hidden size (512 hard-coded in the original)
A = 128    # attention projection dim (512 in the original Attention module)
V = 256    # vocabulary size
L = 8      # max caption length  -> max_timespan T = L - 1


def decoder_kernel(
    img_ref,                          # (Bp, P, E)  f32
    init_w_ref, init_b_ref,           # (E, 2H) bf16, (1, 2H) f32   [init_h | init_c]
    att_w_w_ref, att_w_b_ref,         # (E, A) bf16, (1, A) f32
    h_fused_w_ref, h_fused_b_ref,     # (H, A+E+4H) bf16, (1, A+E+4H) f32  [att_u|f_beta|w_hh]
    att_v_w_ref,                      # (1, A) f32
    att_v_b_ref,                      # (1, 1) f32 in SMEM
    emb_ref,                          # (V, H) bf16
    in_fused_w_ref, b_ih_ref,         # (H+E, 4H) bf16, (1, 4H) f32  [w_ih_emb ; w_ih_ctx]
    deep_w_ref, deep_b_ref,           # (H, V) bf16, (1, V) f32
    preds_ref,                        # (T, Bp, V) f32
    alphas_ref,                       # (T, Bp, P) f32
):
    f32 = jnp.float32
    bf16 = jnp.bfloat16

    T = preds_ref.shape[0]
    b, p, e = img_ref.shape
    v, hdim = emb_ref.shape
    adim = att_v_w_ref.shape[1]

    # ---- small time-invariant values hoisted (a handful of vregs) -----------
    h_fused_b = h_fused_b_ref[...]                       # (1, A+E+4H)
    b_ih = b_ih_ref[...]                                 # (1, 4H)
    deep_b = deep_b_ref[...]                             # (1, V)
    v_row = att_v_w_ref[...][None, :, :]                 # (1, 1, A)
    v_bias = att_v_b_ref[0, 0]                           # SMEM scalar
    iota_v = jax.lax.broadcasted_iota(jnp.int32, (b, v), 1)   # hoisted iota

    # ---- init LSTM state: one fused (E, 2H) bf16 matmul ----------------------
    avg = jnp.mean(img_ref[...], axis=1)                 # (B, E) f32
    hc = jnp.tanh(
        jnp.dot(avg.astype(bf16), init_w_ref[...],
                preferred_element_type=f32) + init_b_ref[...])   # (B, 2H) f32
    h = hc[:, :hdim]
    c = hc[:, hdim:]

    # ---- precompute W @ img_features (time-invariant attention term) --------
    ws = (jnp.dot(img_ref[...].astype(bf16).reshape(b * p, e), att_w_w_ref[...],
                  preferred_element_type=f32).reshape(b, p, adim)
          + att_w_b_ref[...][None, :, :])                 # (B, P, A) f32

    # embedding of <start> word (index 0), broadcast over batch (kept bf16)
    emb = jnp.broadcast_to(emb_ref[0:1, :], (b, hdim))    # (B, H) bf16

    # ---- unrolled time loop (T is small; single kernel invocation) ----------
    for t in range(T):
        # one fused h matmul: [ att_u(h) | f_beta(h) | h @ w_hh + b_hh ]
        hp = jnp.dot(h.astype(bf16), h_fused_w_ref[...],
                     preferred_element_type=f32) + h_fused_b     # (B, A+E+4H)
        u_h = hp[:, :adim]                                # (B, A)
        gate = jax.nn.sigmoid(hp[:, adim:adim + e])       # (B, E)
        hh_gates = hp[:, adim + e:]                       # (B, 4H)

        # ---- attention: P stays on sublanes (trailing singleton lane dim) ----
        att = jnp.tanh(ws + u_h[:, None, :])                           # (B, P, A)
        e_scores = jnp.sum(att * v_row, axis=-1, keepdims=True) + v_bias  # (B, P, 1)
        e_max = jnp.max(e_scores, axis=1, keepdims=True)                # (B, 1, 1)
        expd = jnp.exp(e_scores - e_max)                                # (B, P, 1)
        alpha = expd / jnp.sum(expd, axis=1, keepdims=True)             # (B, P, 1)
        context = jnp.sum(img_ref[...] * alpha, axis=1)                 # (B, E) f32
        gated_ctx = gate * context                                      # (B, E) f32

        # ---- LSTM cell: one fused bf16 input matmul over [emb, gated_ctx] ----
        lstm_in = jnp.concatenate([emb, gated_ctx.astype(bf16)], axis=1)  # (B, H+E)
        gates = (jnp.dot(lstm_in, in_fused_w_ref[...],
                         preferred_element_type=f32)
                 + b_ih + hh_gates)                                     # (B, 4H) f32
        i_g = jax.nn.sigmoid(gates[:, 0 * hdim:1 * hdim])
        f_g = jax.nn.sigmoid(gates[:, 1 * hdim:2 * hdim])
        g_g = jnp.tanh(gates[:, 2 * hdim:3 * hdim])
        o_g = jax.nn.sigmoid(gates[:, 3 * hdim:4 * hdim])
        c = f_g * c + i_g * g_g
        h = o_g * jnp.tanh(c)

        # ---- output projection (dropout = identity in eval) ----
        out = jnp.dot(h.astype(bf16), deep_w_ref[...],
                      preferred_element_type=f32) + deep_b              # (B, V) f32

        preds_ref[t] = out                       # full-tile (8, 256) store
        alphas_ref[t] = alpha[..., 0]            # tiny (8, 16) store

        # ---- greedy next word -> embedding lookup (skipped on last step) ----
        if t + 1 < T:
            max_val = jnp.max(out, axis=-1, keepdims=True)
            masked = jnp.where(out == max_val, iota_v, v)   # first argmax
            idx = jnp.min(masked, axis=-1)                  # (B,) int32
            onehot = (iota_v == idx[:, None]).astype(bf16)  # (B, V)
            emb = jnp.dot(onehot, emb_ref[...],
                          preferred_element_type=f32).astype(bf16)      # (B, H)


def make_params(key):
    def w(key, shape, scale=0.05):
        return scale * jax.random.normal(key, shape, dtype=jnp.float32)
    ks = jax.random.split(key, 16)
    return dict(
        init_h_w=w(ks[0], (E, H)),  init_h_b=w(ks[1], (1, H), 0.01),
        init_c_w=w(ks[2], (E, H)),  init_c_b=w(ks[3], (1, H), 0.01),
        att_w_w=w(ks[4], (E, A)),   att_w_b=w(ks[5], (1, A), 0.01),
        att_u_w=w(ks[6], (H, A)),   att_u_b=w(ks[7], (1, A), 0.01),
        att_v_w=w(ks[8], (1, A)),   att_v_b=w(ks[8], (1, 1), 0.01),
        f_beta_w=w(ks[9], (H, E)),  f_beta_b=w(ks[9], (1, E), 0.01),
        emb=w(ks[10], (V, H)),
        w_ih_emb=w(ks[11], (H, 4 * H)), w_ih_ctx=w(ks[12], (E, 4 * H)),
        b_ih=w(ks[13], (1, 4 * H), 0.01),
        w_hh=w(ks[14], (H, 4 * H)), b_hh=w(ks[14], (1, 4 * H), 0.01),
        deep_w=w(ks[15], (H, V)),   deep_b=w(ks[15], (1, V), 0.01),
    )


@functools.partial(jax.jit, static_argnames=("max_timespan",))
def decoder_forward(img_features, params, *, max_timespan):
    """Returns (preds (B,T,V), alphas (B,T,P)) matching the PyTorch forward."""
    b, p, _ = img_features.shape
    T = max_timespan
    vocab = params["deep_w"].shape[1]
    bf16 = jnp.bfloat16

    # pad batch to a full sublane tile (8): free compute, unmasked stores
    b_pad = max(8, ((b + 7) // 8) * 8)
    img_padded = jnp.pad(img_features, ((0, b_pad - b), (0, 0), (0, 0)))

    # one-time weight fusion + bf16 cast (done in XLA, outside the kernel);
    # biases stay f32 (added after f32 accumulation)
    init_w = jnp.concatenate([params["init_h_w"], params["init_c_w"]],
                             axis=1).astype(bf16)
    init_b = jnp.concatenate([params["init_h_b"], params["init_c_b"]], axis=1)
    h_fused_w = jnp.concatenate(
        [params["att_u_w"], params["f_beta_w"], params["w_hh"]],
        axis=1).astype(bf16)
    h_fused_b = jnp.concatenate(
        [params["att_u_b"], params["f_beta_b"], params["b_hh"]], axis=1)
    in_fused_w = jnp.concatenate([params["w_ih_emb"], params["w_ih_ctx"]],
                                 axis=0).astype(bf16)

    inputs = [
        img_padded,
        init_w, init_b,
        params["att_w_w"].astype(bf16), params["att_w_b"],
        h_fused_w, h_fused_b,
        params["att_v_w"], params["att_v_b"],
        params["emb"].astype(bf16),
        in_fused_w, params["b_ih"],
        params["deep_w"].astype(bf16), params["deep_b"],
    ]

    vmem = pl.BlockSpec(memory_space=pltpu.MemorySpace.VMEM)
    smem = pl.BlockSpec(memory_space=pltpu.MemorySpace.SMEM)
    in_specs = [
        vmem,          # img (padded batch)
        vmem, vmem,    # fused init w, b
        vmem, vmem,    # att_w w, b
        vmem, vmem,    # fused h-matmul w, b
        vmem,          # att_v w
        smem,          # att_v b  (1,1) scalar -> SMEM
        vmem,          # embedding table
        vmem, vmem,    # fused lstm-input w, b_ih
        vmem, vmem,    # deep_output w, b
    ]

    out_shape = (jax.ShapeDtypeStruct((T, b_pad, vocab), jnp.float32),
                 jax.ShapeDtypeStruct((T, b_pad, p), jnp.float32))
    out_specs = (vmem, vmem)

    # single gridless invocation: everything VMEM-resident, outputs DMA'd once
    preds_t, alphas_t = pl.pallas_call(
        decoder_kernel,
        out_shape=out_shape,
        in_specs=in_specs,
        out_specs=out_specs,
    )(*inputs)

    # kernel is time-major; transpose to PyTorch's (B, T, ...) and drop padding
    preds = jnp.transpose(preds_t, (1, 0, 2))[:b]
    alphas = jnp.transpose(alphas_t, (1, 0, 2))[:b]
    return preds, alphas


def _bdot(x, w):
    """bf16-operand / f32-accumulation dot, matching the kernel's MXU precision."""
    return jnp.dot(x.astype(jnp.bfloat16), w.astype(jnp.bfloat16),
                   preferred_element_type=jnp.float32)


def decoder_reference(img, params, T):
    """Pure-JAX reference mirroring the PyTorch eval forward (bf16 matmul ops)."""
    b = img.shape[0]
    emb_tab = params["emb"].astype(jnp.bfloat16).astype(jnp.float32)
    avg = img.mean(axis=1)
    h = jnp.tanh(_bdot(avg, params["init_h_w"]) + params["init_h_b"])
    c = jnp.tanh(_bdot(avg, params["init_c_w"]) + params["init_c_b"])
    ws = (_bdot(img.reshape(b * P, E), params["att_w_w"]).reshape(b, P, A)
          + params["att_w_b"])
    emb = jnp.broadcast_to(emb_tab[0:1], (b, H))
    preds, alphas = [], []
    for _ in range(T):
        u_h = _bdot(h, params["att_u_w"]) + params["att_u_b"]
        att = jnp.tanh(ws + u_h[:, None, :])
        e = jnp.sum(att * params["att_v_w"][0][None, None, :], axis=-1) \
            + params["att_v_b"][0, 0]
        alpha = jax.nn.softmax(e, axis=-1)
        ctx = jnp.sum(img * alpha[:, :, None], axis=1)
        gate = jax.nn.sigmoid(_bdot(h, params["f_beta_w"]) + params["f_beta_b"])
        gctx = gate * ctx
        gates = (_bdot(emb, params["w_ih_emb"]) + _bdot(gctx, params["w_ih_ctx"])
                 + params["b_ih"] + _bdot(h, params["w_hh"]) + params["b_hh"])
        i = jax.nn.sigmoid(gates[:, :H])
        f = jax.nn.sigmoid(gates[:, H:2 * H])
        g = jnp.tanh(gates[:, 2 * H:3 * H])
        o = jax.nn.sigmoid(gates[:, 3 * H:])
        c = f * c + i * g
        h = o * jnp.tanh(c)
        out = _bdot(h, params["deep_w"]) + params["deep_b"]
        preds.append(out)
        alphas.append(alpha)
        emb = emb_tab[jnp.argmax(out, axis=-1)]
    return jnp.stack(preds, axis=1), jnp.stack(alphas, axis=1)


if __name__ == "__main__":
    key = jax.random.PRNGKey(0)
    k_img, k_cap, k_par = jax.random.split(key, 3)

    img_features = jax.random.normal(k_img, (B, P, E), dtype=jnp.float32)
    captions = jax.random.randint(k_cap, (B, L), 0, V, dtype=jnp.int32)
    params = make_params(k_par)

    max_timespan = captions.shape[1] - 1   # == max(len(caption)) - 1

    preds, alphas = decoder_forward(img_features, params,
                                    max_timespan=max_timespan)
    preds, alphas = jax.block_until_ready((preds, alphas))

    assert preds.shape == (B, max_timespan, V)
    assert alphas.shape == (B, max_timespan, P)

    ref_preds, ref_alphas = decoder_reference(img_features, params, max_timespan)
    np.testing.assert_allclose(np.asarray(preds), np.asarray(ref_preds),
                               rtol=1e-3, atol=1e-3)
    np.testing.assert_allclose(np.asarray(alphas), np.asarray(ref_alphas),
                               rtol=1e-3, atol=1e-3)

    print("KERNEL_OK")
</pallas_src>

<mosaic_0001>
module attributes {stable_mosaic.version = 11 : i64} {
  func.func @decoder_kernel(%arg0: memref<8x16x128xf32, #tpu.memory_space<vmem>>, %arg1: memref<128x256xbf16, #tpu.memory_space<vmem>>, %arg2: memref<1x256xf32, #tpu.memory_space<vmem>>, %arg3: memref<128x128xbf16, #tpu.memory_space<vmem>>, %arg4: memref<1x128xf32, #tpu.memory_space<vmem>>, %arg5: memref<128x768xbf16, #tpu.memory_space<vmem>>, %arg6: memref<1x768xf32, #tpu.memory_space<vmem>>, %arg7: memref<1x128xf32, #tpu.memory_space<vmem>>, %arg8: memref<1x1xf32, #tpu.memory_space<smem>>, %arg9: memref<256x128xbf16, #tpu.memory_space<vmem>>, %arg10: memref<256x512xbf16, #tpu.memory_space<vmem>>, %arg11: memref<1x512xf32, #tpu.memory_space<vmem>>, %arg12: memref<128x256xbf16, #tpu.memory_space<vmem>>, %arg13: memref<1x256xf32, #tpu.memory_space<vmem>>, %arg14: memref<7x8x256xf32, #tpu.memory_space<vmem>>, %arg15: memref<7x8x16xf32, #tpu.memory_space<vmem>>) attributes {dimension_semantics = [], scalar_prefetch = 0 : i64, scratch_operands = 0 : i64, tpu.core_type = #tpu.core_type<tc>} {
    %c0 = arith.constant 0 : index
    %c0_0 = arith.constant 0 : index
    %0 = vector.load %arg6[%c0, %c0_0] : memref<1x768xf32, #tpu.memory_space<vmem>>, vector<1x768xf32>
    %c0_1 = arith.constant 0 : index
    %c0_2 = arith.constant 0 : index
    %1 = vector.load %arg11[%c0_1, %c0_2] : memref<1x512xf32, #tpu.memory_space<vmem>>, vector<1x512xf32>
    %c0_3 = arith.constant 0 : index
    %c0_4 = arith.constant 0 : index
    %2 = vector.load %arg13[%c0_3, %c0_4] : memref<1x256xf32, #tpu.memory_space<vmem>>, vector<1x256xf32>
    %c0_5 = arith.constant 0 : index
    %c0_6 = arith.constant 0 : index
    %3 = vector.load %arg7[%c0_5, %c0_6] : memref<1x128xf32, #tpu.memory_space<vmem>>, vector<1x128xf32>
    %4 = vector.shape_cast %3 : vector<1x128xf32> to vector<1x1x128xf32>
    %c0_7 = arith.constant 0 : index
    %c0_8 = arith.constant 0 : index
    %5 = memref.load %arg8[%c0_7, %c0_8] : memref<1x1xf32, #tpu.memory_space<smem>>
    %6 = tpu.iota {dimensions = array<i32: 1>} : vector<8x256xi32>
    %c0_9 = arith.constant 0 : index
    %c0_10 = arith.constant 0 : index
    %c0_11 = arith.constant 0 : index
    %7 = vector.load %arg0[%c0_9, %c0_10, %c0_11] : memref<8x16x128xf32, #tpu.memory_space<vmem>>, vector<8x16x128xf32>
    %cst = arith.constant dense<0.000000e+00> : vector<8x128xf32>
    %8 = vector.multi_reduction <add>, %7, %cst [1] : vector<8x16x128xf32> to vector<8x128xf32>
    %cst_12 = arith.constant 1.600000e+01 : f32
    %9 = vector.broadcast %cst_12 : f32 to vector<8x128xf32>
    %10 = arith.divf %8, %9 : vector<8x128xf32>
    %11 = arith.truncf %10 : vector<8x128xf32> to vector<8x128xbf16>
    %c0_13 = arith.constant 0 : index
    %c0_14 = arith.constant 0 : index
    %12 = vector.load %arg1[%c0_13, %c0_14] : memref<128x256xbf16, #tpu.memory_space<vmem>>, vector<128x256xbf16>
    %cst_15 = arith.constant dense<0.000000e+00> : vector<8x256xf32>
    %13 = tpu.matmul %11, %12, %cst_15 {dimension_numbers = #tpu.dot_dimension_numbers<[1], [0], [0], [1], [0, 0, 1, 1], [], []>} : vector<8x128xbf16>, vector<128x256xbf16>, vector<8x256xf32> -> vector<8x256xf32>
    %c0_16 = arith.constant 0 : index
    %c0_17 = arith.constant 0 : index
    %14 = vector.load %arg2[%c0_16, %c0_17] : memref<1x256xf32, #tpu.memory_space<vmem>>, vector<1x256xf32>
    %15 = vector.broadcast %14 : vector<1x256xf32> to vector<8x256xf32>
    %16 = arith.addf %13, %15 : vector<8x256xf32>
    %17 = math.tanh %16 : vector<8x256xf32>
    %18 = vector.extract_strided_slice %17 {offsets = [0, 0], sizes = [8, 128], strides = [1, 1]} : vector<8x256xf32> to vector<8x128xf32>
    %19 = vector.extract_strided_slice %17 {offsets = [0, 128], sizes = [8, 128], strides = [1, 1]} : vector<8x256xf32> to vector<8x128xf32>
    %c0_18 = arith.constant 0 : index
    %c0_19 = arith.constant 0 : index
    %c0_20 = arith.constant 0 : index
    %20 = vector.load %arg0[%c0_18, %c0_19, %c0_20] : memref<8x16x128xf32, #tpu.memory_space<vmem>>, vector<8x16x128xf32>
    %21 = arith.truncf %20 : vector<8x16x128xf32> to vector<8x16x128xbf16>
    %22 = vector.shape_cast %21 : vector<8x16x128xbf16> to vector<128x128xbf16>
    %c0_21 = arith.constant 0 : index
    %c0_22 = arith.constant 0 : index
    %23 = vector.load %arg3[%c0_21, %c0_22] : memref<128x128xbf16, #tpu.memory_space<vmem>>, vector<128x128xbf16>
    %cst_23 = arith.constant dense<0.000000e+00> : vector<128x128xf32>
    %24 = tpu.matmul %22, %23, %cst_23 {dimension_numbers = #tpu.dot_dimension_numbers<[1], [0], [0], [1], [0, 0, 1, 1], [], []>} : vector<128x128xbf16>, vector<128x128xbf16>, vector<128x128xf32> -> vector<128x128xf32>
    %25 = vector.shape_cast %24 : vector<128x128xf32> to vector<8x16x128xf32>
    %c0_24 = arith.constant 0 : index
    %c0_25 = arith.constant 0 : index
    %26 = vector.load %arg4[%c0_24, %c0_25] : memref<1x128xf32, #tpu.memory_space<vmem>>, vector<1x128xf32>
    %27 = vector.shape_cast %26 : vector<1x128xf32> to vector<1x1x128xf32>
    %28 = vector.broadcast %27 : vector<1x1x128xf32> to vector<8x16x128xf32>
    %29 = arith.addf %25, %28 : vector<8x16x128xf32>
    %c0_26 = arith.constant 0 : index
    %c0_27 = arith.constant 0 : index
    %30 = vector.load %arg9[%c0_26, %c0_27] : memref<256x128xbf16, #tpu.memory_space<vmem>>, vector<1x128xbf16>
    %31 = vector.shape_cast %30 : vector<1x128xbf16> to vector<1x128xbf16>
    %32 = vector.broadcast %31 : vector<1x128xbf16> to vector<8x128xbf16>
    %33 = arith.truncf %18 : vector<8x128xf32> to vector<8x128xbf16>
    %c0_28 = arith.constant 0 : index
    %c0_29 = arith.constant 0 : index
    %34 = vector.load %arg5[%c0_28, %c0_29] : memref<128x768xbf16, #tpu.memory_space<vmem>>, vector<128x768xbf16>
    %cst_30 = arith.constant dense<0.000000e+00> : vector<8x768xf32>
    %35 = tpu.matmul %33, %34, %cst_30 {dimension_numbers = #tpu.dot_dimension_numbers<[1], [0], [0], [1], [0, 0, 1, 1], [], []>} : vector<8x128xbf16>, vector<128x768xbf16>, vector<8x768xf32> -> vector<8x768xf32>
    %36 = vector.broadcast %0 : vector<1x768xf32> to vector<8x768xf32>
    %37 = arith.addf %35, %36 : vector<8x768xf32>
    %38 = vector.extract_strided_slice %37 {offsets = [0, 0], sizes = [8, 128], strides = [1, 1]} : vector<8x768xf32> to vector<8x128xf32>
    %39 = vector.extract_strided_slice %37 {offsets = [0, 128], sizes = [8, 128], strides = [1, 1]} : vector<8x768xf32> to vector<8x128xf32>
    %40 = arith.negf %39 : vector<8x128xf32>
    %41 = math.exp %40 : vector<8x128xf32>
    %cst_31 = arith.constant 1.000000e+00 : f32
    %42 = vector.broadcast %cst_31 : f32 to vector<8x128xf32>
    %43 = arith.addf %42, %41 : vector<8x128xf32>
    %44 = arith.divf %42, %43 : vector<8x128xf32>
    %45 = vector.extract_strided_slice %37 {offsets = [0, 256], sizes = [8, 512], strides = [1, 1]} : vector<8x768xf32> to vector<8x512xf32>
    %46 = vector.shape_cast %38 : vector<8x128xf32> to vector<8x1x128xf32>
    %47 = vector.broadcast %46 : vector<8x1x128xf32> to vector<8x16x128xf32>
    %48 = arith.addf %29, %47 : vector<8x16x128xf32>
    %49 = math.tanh %48 : vector<8x16x128xf32>
    %50 = vector.broadcast %4 : vector<1x1x128xf32> to vector<8x16x128xf32>
    %51 = arith.mulf %49, %50 : vector<8x16x128xf32>
    %cst_32 = arith.constant dense<0.000000e+00> : vector<8x16xf32>
    %52 = vector.multi_reduction <add>, %51, %cst_32 [2] : vector<8x16x128xf32> to vector<8x16xf32>
    %53 = vector.shape_cast %52 : vector<8x16xf32> to vector<8x16x1xf32>
    %54 = vector.broadcast %5 : f32 to vector<8x16x1xf32>
    %55 = arith.addf %53, %54 : vector<8x16x1xf32>
    %cst_33 = arith.constant dense<0xFF800000> : vector<8x1xf32>
    %56 = vector.multi_reduction <maximumf>, %55, %cst_33 [1] : vector<8x16x1xf32> to vector<8x1xf32>
    %57 = vector.shape_cast %56 : vector<8x1xf32> to vector<8x1x1xf32>
    %58 = vector.broadcast %57 : vector<8x1x1xf32> to vector<8x16x1xf32>
    %59 = arith.subf %55, %58 : vector<8x16x1xf32>
    %60 = math.exp %59 : vector<8x16x1xf32>
    %cst_34 = arith.constant dense<0.000000e+00> : vector<8x1xf32>
    %61 = vector.multi_reduction <add>, %60, %cst_34 [1] : vector<8x16x1xf32> to vector<8x1xf32>
    %62 = vector.shape_cast %61 : vector<8x1xf32> to vector<8x1x1xf32>
    %63 = vector.broadcast %62 : vector<8x1x1xf32> to vector<8x16x1xf32>
    %64 = arith.divf %60, %63 : vector<8x16x1xf32>
    %c0_35 = arith.constant 0 : index
    %c0_36 = arith.constant 0 : index
    %c0_37 = arith.constant 0 : index
    %65 = vector.load %arg0[%c0_35, %c0_36, %c0_37] : memref<8x16x128xf32, #tpu.memory_space<vmem>>, vector<8x16x128xf32>
    %66 = vector.broadcast %64 : vector<8x16x1xf32> to vector<8x16x128xf32>
    %67 = arith.mulf %65, %66 : vector<8x16x128xf32>
    %cst_38 = arith.constant dense<0.000000e+00> : vector<8x128xf32>
    %68 = vector.multi_reduction <add>, %67, %cst_38 [1] : vector<8x16x128xf32> to vector<8x128xf32>
    %69 = arith.mulf %44, %68 : vector<8x128xf32>
    %70 = arith.truncf %69 : vector<8x128xf32> to vector<8x128xbf16>
    %71 = tpu.concatenate %32, %70 in 1 : vector<8x128xbf16>, vector<8x128xbf16> -> vector<8x256xbf16>
    %c0_39 = arith.constant 0 : index
    %c0_40 = arith.constant 0 : index
    %72 = vector.load %arg10[%c0_39, %c0_40] : memref<256x512xbf16, #tpu.memory_space<vmem>>, vector<256x512xbf16>
    %cst_41 = arith.constant dense<0.000000e+00> : vector<8x512xf32>
    %73 = tpu.matmul %71, %72, %cst_41 {dimension_numbers = #tpu.dot_dimension_numbers<[1], [0], [0], [1], [0, 0, 1, 1], [], []>} : vector<8x256xbf16>, vector<256x512xbf16>, vector<8x512xf32> -> vector<8x512xf32>
    %74 = vector.broadcast %1 : vector<1x512xf32> to vector<8x512xf32>
    %75 = arith.addf %73, %74 : vector<8x512xf32>
    %76 = arith.addf %75, %45 : vector<8x512xf32>
    %77 = vector.extract_strided_slice %76 {offsets = [0, 0], sizes = [8, 128], strides = [1, 1]} : vector<8x512xf32> to vector<8x128xf32>
    %78 = arith.negf %77 : vector<8x128xf32>
    %79 = math.exp %78 : vector<8x128xf32>
    %cst_42 = arith.constant 1.000000e+00 : f32
    %80 = vector.broadcast %cst_42 : f32 to vector<8x128xf32>
    %81 = arith.addf %80, %79 : vector<8x128xf32>
    %82 = arith.divf %80, %81 : vector<8x128xf32>
    %83 = vector.extract_strided_slice %76 {offsets = [0, 128], sizes = [8, 128], strides = [1, 1]} : vector<8x512xf32> to vector<8x128xf32>
    %84 = arith.negf %83 : vector<8x128xf32>
    %85 = math.exp %84 : vector<8x128xf32>
    %cst_43 = arith.constant 1.000000e+00 : f32
    %86 = vector.broadcast %cst_43 : f32 to vector<8x128xf32>
    %87 = arith.addf %86, %85 : vector<8x128xf32>
    %88 = arith.divf %86, %87 : vector<8x128xf32>
    %89 = vector.extract_strided_slice %76 {offsets = [0, 256], sizes = [8, 128], strides = [1, 1]} : vector<8x512xf32> to vector<8x128xf32>
    %90 = math.tanh %89 : vector<8x128xf32>
    %91 = vector.extract_strided_slice %76 {offsets = [0, 384], sizes = [8, 128], strides = [1, 1]} : vector<8x512xf32> to vector<8x128xf32>
    %92 = arith.negf %91 : vector<8x128xf32>
    %93 = math.exp %92 : vector<8x128xf32>
    %cst_44 = arith.constant 1.000000e+00 : f32
    %94 = vector.broadcast %cst_44 : f32 to vector<8x128xf32>
    %95 = arith.addf %94, %93 : vector<8x128xf32>
    %96 = arith.divf %94, %95 : vector<8x128xf32>
    %97 = arith.mulf %88, %19 : vector<8x128xf32>
    %98 = arith.mulf %82, %90 : vector<8x128xf32>
    %99 = arith.addf %97, %98 : vector<8x128xf32>
    %100 = math.tanh %99 : vector<8x128xf32>
    %101 = arith.mulf %96, %100 : vector<8x128xf32>
    %102 = arith.truncf %101 : vector<8x128xf32> to vector<8x128xbf16>
    %c0_45 = arith.constant 0 : index
    %c0_46 = arith.constant 0 : index
    %103 = vector.load %arg12[%c0_45, %c0_46] : memref<128x256xbf16, #tpu.memory_space<vmem>>, vector<128x256xbf16>
    %cst_47 = arith.constant dense<0.000000e+00> : vector<8x256xf32>
    %104 = tpu.matmul %102, %103, %cst_47 {dimension_numbers = #tpu.dot_dimension_numbers<[1], [0], [0], [1], [0, 0, 1, 1], [], []>} : vector<8x128xbf16>, vector<128x256xbf16>, vector<8x256xf32> -> vector<8x256xf32>
    %105 = vector.broadcast %2 : vector<1x256xf32> to vector<8x256xf32>
    %106 = arith.addf %104, %105 : vector<8x256xf32>
    %c0_48 = arith.constant 0 : index
    %c0_49 = arith.constant 0 : index
    %c0_50 = arith.constant 0 : index
    %107 = vector.load %arg14[%c0_48, %c0_49, %c0_50] : memref<7x8x256xf32, #tpu.memory_space<vmem>>, vector<1x8x256xf32>
    %108 = vector.shape_cast %107 : vector<1x8x256xf32> to vector<8x256xf32>
    %109 = vector.shape_cast %106 : vector<8x256xf32> to vector<1x8x256xf32>
    tpu.vector_store %arg14[%c0_48, %c0_49, %c0_50], %109 {strides = array<i32>} : memref<7x8x256xf32, #tpu.memory_space<vmem>>, vector<1x8x256xf32>,
    %110 = vector.shape_cast %64 : vector<8x16x1xf32> to vector<8x16xf32>
    %c0_51 = arith.constant 0 : index
    %c0_52 = arith.constant 0 : index
    %c0_53 = arith.constant 0 : index
    %111 = vector.load %arg15[%c0_51, %c0_52, %c0_53] : memref<7x8x16xf32, #tpu.memory_space<vmem>>, vector<1x8x16xf32>
    %112 = vector.shape_cast %111 : vector<1x8x16xf32> to vector<8x16xf32>
    %113 = vector.shape_cast %110 : vector<8x16xf32> to vector<1x8x16xf32>
    tpu.vector_store %arg15[%c0_51, %c0_52, %c0_53], %113 {strides = array<i32>} : memref<7x8x16xf32, #tpu.memory_space<vmem>>, vector<1x8x16xf32>,
    %cst_54 = arith.constant dense<0xFF800000> : vector<8xf32>
    %114 = vector.multi_reduction <maximumf>, %106, %cst_54 [1] : vector<8x256xf32> to vector<8xf32>
    %115 = vector.shape_cast %114 : vector<8xf32> to vector<8x1xf32>
    %116 = vector.broadcast %115 : vector<8x1xf32> to vector<8x256xf32>
    %117 = arith.cmpf oeq, %106, %116 : vector<8x256xf32>
    %c256_i32 = arith.constant 256 : i32
    %118 = vector.broadcast %c256_i32 : i32 to vector<8x256xi32>
    %119 = arith.select %117, %6, %118 : vector<8x256xi1>, vector<8x256xi32>
    %cst_55 = arith.constant dense<2147483647> : vector<8xi32>
    %120 = vector.multi_reduction <minsi>, %119, %cst_55 [1] : vector<8x256xi32> to vector<8xi32>
    %121 = vector.shape_cast %120 : vector<8xi32> to vector<8x1xi32>
    %122 = vector.broadcast %121 : vector<8x1xi32> to vector<8x256xi32>
    %123 = arith.cmpi eq, %6, %122 : vector<8x256xi32>
    %124 = arith.extui %123 : vector<8x256xi1> to vector<8x256xi32>
    %125 = arith.sitofp %124 : vector<8x256xi32> to vector<8x256xf32>
    %126 = arith.truncf %125 : vector<8x256xf32> to vector<8x256xbf16>
    %c0_56 = arith.constant 0 : index
    %c0_57 = arith.constant 0 : index
    %127 = vector.load %arg9[%c0_56, %c0_57] : memref<256x128xbf16, #tpu.memory_space<vmem>>, vector<256x128xbf16>
    %cst_58 = arith.constant dense<0.000000e+00> : vector<8x128xf32>
    %128 = tpu.matmul %126, %127, %cst_58 {dimension_numbers = #tpu.dot_dimension_numbers<[1], [0], [0], [1], [0, 0, 1, 1], [], []>} : vector<8x256xbf16>, vector<256x128xbf16>, vector<8x128xf32> -> vector<8x128xf32>
    %129 = arith.truncf %128 : vector<8x128xf32> to vector<8x128xbf16>
    %130 = arith.truncf %101 : vector<8x128xf32> to vector<8x128xbf16>
    %c0_59 = arith.constant 0 : index
    %c0_60 = arith.constant 0 : index
    %131 = vector.load %arg5[%c0_59, %c0_60] : memref<128x768xbf16, #tpu.memory_space<vmem>>, vector<128x768xbf16>
    %cst_61 = arith.constant dense<0.000000e+00> : vector<8x768xf32>
    %132 = tpu.matmul %130, %131, %cst_61 {dimension_numbers = #tpu.dot_dimension_numbers<[1], [0], [0], [1], [0, 0, 1, 1], [], []>} : vector<8x128xbf16>, vector<128x768xbf16>, vector<8x768xf32> -> vector<8x768xf32>
    %133 = vector.broadcast %0 : vector<1x768xf32> to vector<8x768xf32>
    %134 = arith.addf %132, %133 : vector<8x768xf32>
    %135 = vector.extract_strided_slice %134 {offsets = [0, 0], sizes = [8, 128], strides = [1, 1]} : vector<8x768xf32> to vector<8x128xf32>
    %136 = vector.extract_strided_slice %134 {offsets = [0, 128], sizes = [8, 128], strides = [1, 1]} : vector<8x768xf32> to vector<8x128xf32>
    %137 = arith.negf %136 : vector<8x128xf32>
    %138 = math.exp %137 : vector<8x128xf32>
    %cst_62 = arith.constant 1.000000e+00 : f32
    %139 = vector.broadcast %cst_62 : f32 to vector<8x128xf32>
    %140 = arith.addf %139, %138 : vector<8x128xf32>
    %141 = arith.divf %139, %140 : vector<8x128xf32>
    %142 = vector.extract_strided_slice %134 {offsets = [0, 256], sizes = [8, 512], strides = [1, 1]} : vector<8x768xf32> to vector<8x512xf32>
    %143 = vector.shape_cast %135 : vector<8x128xf32> to vector<8x1x128xf32>
    %144 = vector.broadcast %143 : vector<8x1x128xf32> to vector<8x16x128xf32>
    %145 = arith.addf %29, %144 : vector<8x16x128xf32>
    %146 = math.tanh %145 : vector<8x16x128xf32>
    %147 = vector.broadcast %4 : vector<1x1x128xf32> to vector<8x16x128xf32>
    %148 = arith.mulf %146, %147 : vector<8x16x128xf32>
    %cst_63 = arith.constant dense<0.000000e+00> : vector<8x16xf32>
    %149 = vector.multi_reduction <add>, %148, %cst_63 [2] : vector<8x16x128xf32> to vector<8x16xf32>
    %150 = vector.shape_cast %149 : vector<8x16xf32> to vector<8x16x1xf32>
    %151 = vector.broadcast %5 : f32 to vector<8x16x1xf32>
    %152 = arith.addf %150, %151 : vector<8x16x1xf32>
    %cst_64 = arith.constant dense<0xFF800000> : vector<8x1xf32>
    %153 = vector.multi_reduction <maximumf>, %152, %cst_64 [1] : vector<8x16x1xf32> to vector<8x1xf32>
    %154 = vector.shape_cast %153 : vector<8x1xf32> to vector<8x1x1xf32>
    %155 = vector.broadcast %154 : vector<8x1x1xf32> to vector<8x16x1xf32>
    %156 = arith.subf %152, %155 : vector<8x16x1xf32>
    %157 = math.exp %156 : vector<8x16x1xf32>
    %cst_65 = arith.constant dense<0.000000e+00> : vector<8x1xf32>
    %158 = vector.multi_reduction <add>, %157, %cst_65 [1] : vector<8x16x1xf32> to vector<8x1xf32>
    %159 = vector.shape_cast %158 : vector<8x1xf32> to vector<8x1x1xf32>
    %160 = vector.broadcast %159 : vector<8x1x1xf32> to vector<8x16x1xf32>
    %161 = arith.divf %157, %160 : vector<8x16x1xf32>
    %c0_66 = arith.constant 0 : index
    %c0_67 = arith.constant 0 : index
    %c0_68 = arith.constant 0 : index
    %162 = vector.load %arg0[%c0_66, %c0_67, %c0_68] : memref<8x16x128xf32, #tpu.memory_space<vmem>>, vector<8x16x128xf32>
    %163 = vector.broadcast %161 : vector<8x16x1xf32> to vector<8x16x128xf32>
    %164 = arith.mulf %162, %163 : vector<8x16x128xf32>
    %cst_69 = arith.constant dense<0.000000e+00> : vector<8x128xf32>
    %165 = vector.multi_reduction <add>, %164, %cst_69 [1] : vector<8x16x128xf32> to vector<8x128xf32>
    %166 = arith.mulf %141, %165 : vector<8x128xf32>
    %167 = arith.truncf %166 : vector<8x128xf32> to vector<8x128xbf16>
    %168 = tpu.concatenate %129, %167 in 1 : vector<8x128xbf16>, vector<8x128xbf16> -> vector<8x256xbf16>
    %c0_70 = arith.constant 0 : index
    %c0_71 = arith.constant 0 : index
    %169 = vector.load %arg10[%c0_70, %c0_71] : memref<256x512xbf16, #tpu.memory_space<vmem>>, vector<256x512xbf16>
    %cst_72 = arith.constant dense<0.000000e+00> : vector<8x512xf32>
    %170 = tpu.matmul %168, %169, %cst_72 {dimension_numbers = #tpu.dot_dimension_numbers<[1], [0], [0], [1], [0, 0, 1, 1], [], []>} : vector<8x256xbf16>, vector<256x512xbf16>, vector<8x512xf32> -> vector<8x512xf32>
    %171 = vector.broadcast %1 : vector<1x512xf32> to vector<8x512xf32>
    %172 = arith.addf %170, %171 : vector<8x512xf32>
    %173 = arith.addf %172, %142 : vector<8x512xf32>
    %174 = vector.extract_strided_slice %173 {offsets = [0, 0], sizes = [8, 128], strides = [1, 1]} : vector<8x512xf32> to vector<8x128xf32>
    %175 = arith.negf %174 : vector<8x128xf32>
    %176 = math.exp %175 : vector<8x128xf32>
    %cst_73 = arith.constant 1.000000e+00 : f32
    %177 = vector.broadcast %cst_73 : f32 to vector<8x128xf32>
    %178 = arith.addf %177, %176 : vector<8x128xf32>
    %179 = arith.divf %177, %178 : vector<8x128xf32>
    %180 = vector.extract_strided_slice %173 {offsets = [0, 128], sizes = [8, 128], strides = [1, 1]} : vector<8x512xf32> to vector<8x128xf32>
    %181 = arith.negf %180 : vector<8x128xf32>
    %182 = math.exp %181 : vector<8x128xf32>
    %cst_74 = arith.constant 1.000000e+00 : f32
    %183 = vector.broadcast %cst_74 : f32 to vector<8x128xf32>
    %184 = arith.addf %183, %182 : vector<8x128xf32>
    %185 = arith.divf %183, %184 : vector<8x128xf32>
    %186 = vector.extract_strided_slice %173 {offsets = [0, 256], sizes = [8, 128], strides = [1, 1]} : vector<8x512xf32> to vector<8x128xf32>
    %187 = math.tanh %186 : vector<8x128xf32>
    %188 = vector.extract_strided_slice %173 {offsets = [0, 384], sizes = [8, 128], strides = [1, 1]} : vector<8x512xf32> to vector<8x128xf32>
    %189 = arith.negf %188 : vector<8x128xf32>
    %190 = math.exp %189 : vector<8x128xf32>
    %cst_75 = arith.constant 1.000000e+00 : f32
    %191 = vector.broadcast %cst_75 : f32 to vector<8x128xf32>
    %192 = arith.addf %191, %190 : vector<8x128xf32>
    %193 = arith.divf %191, %192 : vector<8x128xf32>
    %194 = arith.mulf %185, %99 : vector<8x128xf32>
    %195 = arith.mulf %179, %187 : vector<8x128xf32>
    %196 = arith.addf %194, %195 : vector<8x128xf32>
    %197 = math.tanh %196 : vector<8x128xf32>
    %198 = arith.mulf %193, %197 : vector<8x128xf32>
    %199 = arith.truncf %198 : vector<8x128xf32> to vector<8x128xbf16>
    %c0_76 = arith.constant 0 : index
    %c0_77 = arith.constant 0 : index
    %200 = vector.load %arg12[%c0_76, %c0_77] : memref<128x256xbf16, #tpu.memory_space<vmem>>, vector<128x256xbf16>
    %cst_78 = arith.constant dense<0.000000e+00> : vector<8x256xf32>
    %201 = tpu.matmul %199, %200, %cst_78 {dimension_numbers = #tpu.dot_dimension_numbers<[1], [0], [0], [1], [0, 0, 1, 1], [], []>} : vector<8x128xbf16>, vector<128x256xbf16>, vector<8x256xf32> -> vector<8x256xf32>
    %202 = vector.broadcast %2 : vector<1x256xf32> to vector<8x256xf32>
    %203 = arith.addf %201, %202 : vector<8x256xf32>
    %c1 = arith.constant 1 : index
    %c0_79 = arith.constant 0 : index
    %c0_80 = arith.constant 0 : index
    %204 = vector.load %arg14[%c1, %c0_79, %c0_80] : memref<7x8x256xf32, #tpu.memory_space<vmem>>, vector<1x8x256xf32>
    %205 = vector.shape_cast %204 : vector<1x8x256xf32> to vector<8x256xf32>
    %206 = vector.shape_cast %203 : vector<8x256xf32> to vector<1x8x256xf32>
    tpu.vector_store %arg14[%c1, %c0_79, %c0_80], %206 {strides = array<i32>} : memref<7x8x256xf32, #tpu.memory_space<vmem>>, vector<1x8x256xf32>,
    %207 = vector.shape_cast %161 : vector<8x16x1xf32> to vector<8x16xf32>
    %c1_81 = arith.constant 1 : index
    %c0_82 = arith.constant 0 : index
    %c0_83 = arith.constant 0 : index
    %208 = vector.load %arg15[%c1_81, %c0_82, %c0_83] : memref<7x8x16xf32, #tpu.memory_space<vmem>>, vector<1x8x16xf32>
    %209 = vector.shape_cast %208 : vector<1x8x16xf32> to vector<8x16xf32>
    %210 = vector.shape_cast %207 : vector<8x16xf32> to vector<1x8x16xf32>
    tpu.vector_store %arg15[%c1_81, %c0_82, %c0_83], %210 {strides = array<i32>} : memref<7x8x16xf32, #tpu.memory_space<vmem>>, vector<1x8x16xf32>,
    %cst_84 = arith.constant dense<0xFF800000> : vector<8xf32>
    %211 = vector.multi_reduction <maximumf>, %203, %cst_84 [1] : vector<8x256xf32> to vector<8xf32>
    %212 = vector.shape_cast %211 : vector<8xf32> to vector<8x1xf32>
    %213 = vector.broadcast %212 : vector<8x1xf32> to vector<8x256xf32>
    %214 = arith.cmpf oeq, %203, %213 : vector<8x256xf32>
    %c256_i32_85 = arith.constant 256 : i32
    %215 = vector.broadcast %c256_i32_85 : i32 to vector<8x256xi32>
    %216 = arith.select %214, %6, %215 : vector<8x256xi1>, vector<8x256xi32>
    %cst_86 = arith.constant dense<2147483647> : vector<8xi32>
    %217 = vector.multi_reduction <minsi>, %216, %cst_86 [1] : vector<8x256xi32> to vector<8xi32>
    %218 = vector.shape_cast %217 : vector<8xi32> to vector<8x1xi32>
    %219 = vector.broadcast %218 : vector<8x1xi32> to vector<8x256xi32>
    %220 = arith.cmpi eq, %6, %219 : vector<8x256xi32>
    %221 = arith.extui %220 : vector<8x256xi1> to vector<8x256xi32>
    %222 = arith.sitofp %221 : vector<8x256xi32> to vector<8x256xf32>
    %223 = arith.truncf %222 : vector<8x256xf32> to vector<8x256xbf16>
    %c0_87 = arith.constant 0 : index
    %c0_88 = arith.constant 0 : index
    %224 = vector.load %arg9[%c0_87, %c0_88] : memref<256x128xbf16, #tpu.memory_space<vmem>>, vector<256x128xbf16>
    %cst_89 = arith.constant dense<0.000000e+00> : vector<8x128xf32>
    %225 = tpu.matmul %223, %224, %cst_89 {dimension_numbers = #tpu.dot_dimension_numbers<[1], [0], [0], [1], [0, 0, 1, 1], [], []>} : vector<8x256xbf16>, vector<256x128xbf16>, vector<8x128xf32> -> vector<8x128xf32>
    %226 = arith.truncf %225 : vector<8x128xf32> to vector<8x128xbf16>
    %227 = arith.truncf %198 : vector<8x128xf32> to vector<8x128xbf16>
    %c0_90 = arith.constant 0 : index
    %c0_91 = arith.constant 0 : index
    %228 = vector.load %arg5[%c0_90, %c0_91] : memref<128x768xbf16, #tpu.memory_space<vmem>>, vector<128x768xbf16>
    %cst_92 = arith.constant dense<0.000000e+00> : vector<8x768xf32>
    %229 = tpu.matmul %227, %228, %cst_92 {dimension_numbers = #tpu.dot_dimension_numbers<[1], [0], [0], [1], [0, 0, 1, 1], [], []>} : vector<8x128xbf16>, vector<128x768xbf16>, vector<8x768xf32> -> vector<8x768xf32>
    %230 = vector.broadcast %0 : vector<1x768xf32> to vector<8x768xf32>
    %231 = arith.addf %229, %230 : vector<8x768xf32>
    %232 = vector.extract_strided_slice %231 {offsets = [0, 0], sizes = [8, 128], strides = [1, 1]} : vector<8x768xf32> to vector<8x128xf32>
    %233 = vector.extract_strided_slice %231 {offsets = [0, 128], sizes = [8, 128], strides = [1, 1]} : vector<8x768xf32> to vector<8x128xf32>
    %234 = arith.negf %233 : vector<8x128xf32>
    %235 = math.exp %234 : vector<8x128xf32>
    %cst_93 = arith.constant 1.000000e+00 : f32
    %236 = vector.broadcast %cst_93 : f32 to vector<8x128xf32>
    %237 = arith.addf %236, %235 : vector<8x128xf32>
    %238 = arith.divf %236, %237 : vector<8x128xf32>
    %239 = vector.extract_strided_slice %231 {offsets = [0, 256], sizes = [8, 512], strides = [1, 1]} : vector<8x768xf32> to vector<8x512xf32>
    %240 = vector.shape_cast %232 : vector<8x128xf32> to vector<8x1x128xf32>
    %241 = vector.broadcast %240 : vector<8x1x128xf32> to vector<8x16x128xf32>
    %242 = arith.addf %29, %241 : vector<8x16x128xf32>
    %243 = math.tanh %242 : vector<8x16x128xf32>
    %244 = vector.broadcast %4 : vector<1x1x128xf32> to vector<8x16x128xf32>
    %245 = arith.mulf %243, %244 : vector<8x16x128xf32>
    %cst_94 = arith.constant dense<0.000000e+00> : vector<8x16xf32>
    %246 = vector.multi_reduction <add>, %245, %cst_94 [2] : vector<8x16x128xf32> to vector<8x16xf32>
    %247 = vector.shape_cast %246 : vector<8x16xf32> to vector<8x16x1xf32>
    %248 = vector.broadcast %5 : f32 to vector<8x16x1xf32>
    %249 = arith.addf %247, %248 : vector<8x16x1xf32>
    %cst_95 = arith.constant dense<0xFF800000> : vector<8x1xf32>
    %250 = vector.multi_reduction <maximumf>, %249, %cst_95 [1] : vector<8x16x1xf32> to vector<8x1xf32>
    %251 = vector.shape_cast %250 : vector<8x1xf32> to vector<8x1x1xf32>
    %252 = vector.broadcast %251 : vector<8x1x1xf32> to vector<8x16x1xf32>
    %253 = arith.subf %249, %252 : vector<8x16x1xf32>
    %254 = math.exp %253 : vector<8x16x1xf32>
    %cst_96 = arith.constant dense<0.000000e+00> : vector<8x1xf32>
    %255 = vector.multi_reduction <add>, %254, %cst_96 [1] : vector<8x16x1xf32> to vector<8x1xf32>
    %256 = vector.shape_cast %255 : vector<8x1xf32> to vector<8x1x1xf32>
    %257 = vector.broadcast %256 : vector<8x1x1xf32> to vector<8x16x1xf32>
    %258 = arith.divf %254, %257 : vector<8x16x1xf32>
    %c0_97 = arith.constant 0 : index
    %c0_98 = arith.constant 0 : index
    %c0_99 = arith.constant 0 : index
    %259 = vector.load %arg0[%c0_97, %c0_98, %c0_99] : memref<8x16x128xf32, #tpu.memory_space<vmem>>, vector<8x16x128xf32>
    %260 = vector.broadcast %258 : vector<8x16x1xf32> to vector<8x16x128xf32>
    %261 = arith.mulf %259, %260 : vector<8x16x128xf32>
    %cst_100 = arith.constant dense<0.000000e+00> : vector<8x128xf32>
    %262 = vector.multi_reduction <add>, %261, %cst_100 [1] : vector<8x16x128xf32> to vector<8x128xf32>
    %263 = arith.mulf %238, %262 : vector<8x128xf32>
    %264 = arith.truncf %263 : vector<8x128xf32> to vector<8x128xbf16>
    %265 = tpu.concatenate %226, %264 in 1 : vector<8x128xbf16>, vector<8x128xbf16> -> vector<8x256xbf16>
    %c0_101 = arith.constant 0 : index
    %c0_102 = arith.constant 0 : index
    %266 = vector.load %arg10[%c0_101, %c0_102] : memref<256x512xbf16, #tpu.memory_space<vmem>>, vector<256x512xbf16>
    %cst_103 = arith.constant dense<0.000000e+00> : vector<8x512xf32>
    %267 = tpu.matmul %265, %266, %cst_103 {dimension_numbers = #tpu.dot_dimension_numbers<[1], [0], [0], [1], [0, 0, 1, 1], [], []>} : vector<8x256xbf16>, vector<256x512xbf16>, vector<8x512xf32> -> vector<8x512xf32>
    %268 = vector.broadcast %1 : vector<1x512xf32> to vector<8x512xf32>
    %269 = arith.addf %267, %268 : vector<8x512xf32>
    %270 = arith.addf %269, %239 : vector<8x512xf32>
    %271 = vector.extract_strided_slice %270 {offsets = [0, 0], sizes = [8, 128], strides = [1, 1]} : vector<8x512xf32> to vector<8x128xf32>
    %272 = arith.negf %271 : vector<8x128xf32>
    %273 = math.exp %272 : vector<8x128xf32>
    %cst_104 = arith.constant 1.000000e+00 : f32
    %274 = vector.broadcast %cst_104 : f32 to vector<8x128xf32>
    %275 = arith.addf %274, %273 : vector<8x128xf32>
    %276 = arith.divf %274, %275 : vector<8x128xf32>
    %277 = vector.extract_strided_slice %270 {offsets = [0, 128], sizes = [8, 128], strides = [1, 1]} : vector<8x512xf32> to vector<8x128xf32>
    %278 = arith.negf %277 : vector<8x128xf32>
    %279 = math.exp %278 : vector<8x128xf32>
    %cst_105 = arith.constant 1.000000e+00 : f32
    %280 = vector.broadcast %cst_105 : f32 to vector<8x128xf32>
    %281 = arith.addf %280, %279 : vector<8x128xf32>
    %282 = arith.divf %280, %281 : vector<8x128xf32>
    %283 = vector.extract_strided_slice %270 {offsets = [0, 256], sizes = [8, 128], strides = [1, 1]} : vector<8x512xf32> to vector<8x128xf32>
    %284 = math.tanh %283 : vector<8x128xf32>
    %285 = vector.extract_strided_slice %270 {offsets = [0, 384], sizes = [8, 128], strides = [1, 1]} : vector<8x512xf32> to vector<8x128xf32>
    %286 = arith.negf %285 : vector<8x128xf32>
    %287 = math.exp %286 : vector<8x128xf32>
    %cst_106 = arith.constant 1.000000e+00 : f32
    %288 = vector.broadcast %cst_106 : f32 to vector<8x128xf32>
    %289 = arith.addf %288, %287 : vector<8x128xf32>
    %290 = arith.divf %288, %289 : vector<8x128xf32>
    %291 = arith.mulf %282, %196 : vector<8x128xf32>
    %292 = arith.mulf %276, %284 : vector<8x128xf32>
    %293 = arith.addf %291, %292 : vector<8x128xf32>
    %294 = math.tanh %293 : vector<8x128xf32>
    %295 = arith.mulf %290, %294 : vector<8x128xf32>
    %296 = arith.truncf %295 : vector<8x128xf32> to vector<8x128xbf16>
    %c0_107 = arith.constant 0 : index
    %c0_108 = arith.constant 0 : index
    %297 = vector.load %arg12[%c0_107, %c0_108] : memref<128x256xbf16, #tpu.memory_space<vmem>>, vector<128x256xbf16>
    %cst_109 = arith.constant dense<0.000000e+00> : vector<8x256xf32>
    %298 = tpu.matmul %296, %297, %cst_109 {dimension_numbers = #tpu.dot_dimension_numbers<[1], [0], [0], [1], [0, 0, 1, 1], [], []>} : vector<8x128xbf16>, vector<128x256xbf16>, vector<8x256xf32> -> vector<8x256xf32>
    %299 = vector.broadcast %2 : vector<1x256xf32> to vector<8x256xf32>
    %300 = arith.addf %298, %299 : vector<8x256xf32>
    %c2 = arith.constant 2 : index
    %c0_110 = arith.constant 0 : index
    %c0_111 = arith.constant 0 : index
    %301 = vector.load %arg14[%c2, %c0_110, %c0_111] : memref<7x8x256xf32, #tpu.memory_space<vmem>>, vector<1x8x256xf32>
    %302 = vector.shape_cast %301 : vector<1x8x256xf32> to vector<8x256xf32>
    %303 = vector.shape_cast %300 : vector<8x256xf32> to vector<1x8x256xf32>
    tpu.vector_store %arg14[%c2, %c0_110, %c0_111], %303 {strides = array<i32>} : memref<7x8x256xf32, #tpu.memory_space<vmem>>, vector<1x8x256xf32>,
    %304 = vector.shape_cast %258 : vector<8x16x1xf32> to vector<8x16xf32>
    %c2_112 = arith.constant 2 : index
    %c0_113 = arith.constant 0 : index
    %c0_114 = arith.constant 0 : index
    %305 = vector.load %arg15[%c2_112, %c0_113, %c0_114] : memref<7x8x16xf32, #tpu.memory_space<vmem>>, vector<1x8x16xf32>
    %306 = vector.shape_cast %305 : vector<1x8x16xf32> to vector<8x16xf32>
    %307 = vector.shape_cast %304 : vector<8x16xf32> to vector<1x8x16xf32>
    tpu.vector_store %arg15[%c2_112, %c0_113, %c0_114], %307 {strides = array<i32>} : memref<7x8x16xf32, #tpu.memory_space<vmem>>, vector<1x8x16xf32>,
    %cst_115 = arith.constant dense<0xFF800000> : vector<8xf32>
    %308 = vector.multi_reduction <maximumf>, %300, %cst_115 [1] : vector<8x256xf32> to vector<8xf32>
    %309 = vector.shape_cast %308 : vector<8xf32> to vector<8x1xf32>
    %310 = vector.broadcast %309 : vector<8x1xf32> to vector<8x256xf32>
    %311 = arith.cmpf oeq, %300, %310 : vector<8x256xf32>
    %c256_i32_116 = arith.constant 256 : i32
    %312 = vector.broadcast %c256_i32_116 : i32 to vector<8x256xi32>
    %313 = arith.select %311, %6, %312 : vector<8x256xi1>, vector<8x256xi32>
    %cst_117 = arith.constant dense<2147483647> : vector<8xi32>
    %314 = vector.multi_reduction <minsi>, %313, %cst_117 [1] : vector<8x256xi32> to vector<8xi32>
    %315 = vector.shape_cast %314 : vector<8xi32> to vector<8x1xi32>
    %316 = vector.broadcast %315 : vector<8x1xi32> to vector<8x256xi32>
    %317 = arith.cmpi eq, %6, %316 : vector<8x256xi32>
    %318 = arith.extui %317 : vector<8x256xi1> to vector<8x256xi32>
    %319 = arith.sitofp %318 : vector<8x256xi32> to vector<8x256xf32>
    %320 = arith.truncf %319 : vector<8x256xf32> to vector<8x256xbf16>
    %c0_118 = arith.constant 0 : index
    %c0_119 = arith.constant 0 : index
    %321 = vector.load %arg9[%c0_118, %c0_119] : memref<256x128xbf16, #tpu.memory_space<vmem>>, vector<256x128xbf16>
    %cst_120 = arith.constant dense<0.000000e+00> : vector<8x128xf32>
    %322 = tpu.matmul %320, %321, %cst_120 {dimension_numbers = #tpu.dot_dimension_numbers<[1], [0], [0], [1], [0, 0, 1, 1], [], []>} : vector<8x256xbf16>, vector<256x128xbf16>, vector<8x128xf32> -> vector<8x128xf32>
    %323 = arith.truncf %322 : vector<8x128xf32> to vector<8x128xbf16>
    %324 = arith.truncf %295 : vector<8x128xf32> to vector<8x128xbf16>
    %c0_121 = arith.constant 0 : index
    %c0_122 = arith.constant 0 : index
    %325 = vector.load %arg5[%c0_121, %c0_122] : memref<128x768xbf16, #tpu.memory_space<vmem>>, vector<128x768xbf16>
    %cst_123 = arith.constant dense<0.000000e+00> : vector<8x768xf32>
    %326 = tpu.matmul %324, %325, %cst_123 {dimension_numbers = #tpu.dot_dimension_numbers<[1], [0], [0], [1], [0, 0, 1, 1], [], []>} : vector<8x128xbf16>, vector<128x768xbf16>, vector<8x768xf32> -> vector<8x768xf32>
    %327 = vector.broadcast %0 : vector<1x768xf32> to vector<8x768xf32>
    %328 = arith.addf %326, %327 : vector<8x768xf32>
    %329 = vector.extract_strided_slice %328 {offsets = [0, 0], sizes = [8, 128], strides = [1, 1]} : vector<8x768xf32> to vector<8x128xf32>
    %330 = vector.extract_strided_slice %328 {offsets = [0, 128], sizes = [8, 128], strides = [1, 1]} : vector<8x768xf32> to vector<8x128xf32>
    %331 = arith.negf %330 : vector<8x128xf32>
    %332 = math.exp %331 : vector<8x128xf32>
    %cst_124 = arith.constant 1.000000e+00 : f32
    %333 = vector.broadcast %cst_124 : f32 to vector<8x128xf32>
    %334 = arith.addf %333, %332 : vector<8x128xf32>
    %335 = arith.divf %333, %334 : vector<8x128xf32>
    %336 = vector.extract_strided_slice %328 {offsets = [0, 256], sizes = [8, 512], strides = [1, 1]} : vector<8x768xf32> to vector<8x512xf32>
    %337 = vector.shape_cast %329 : vector<8x128xf32> to vector<8x1x128xf32>
    %338 = vector.broadcast %337 : vector<8x1x128xf32> to vector<8x16x128xf32>
    %339 = arith.addf %29, %338 : vector<8x16x128xf32>
    %340 = math.tanh %339 : vector<8x16x128xf32>
    %341 = vector.broadcast %4 : vector<1x1x128xf32> to vector<8x16x128xf32>
    %342 = arith.mulf %340, %341 : vector<8x16x128xf32>
    %cst_125 = arith.constant dense<0.000000e+00> : vector<8x16xf32>
    %343 = vector.multi_reduction <add>, %342, %cst_125 [2] : vector<8x16x128xf32> to vector<8x16xf32>
    %344 = vector.shape_cast %343 : vector<8x16xf32> to vector<8x16x1xf32>
    %345 = vector.broadcast %5 : f32 to vector<8x16x1xf32>
    %346 = arith.addf %344, %345 : vector<8x16x1xf32>
    %cst_126 = arith.constant dense<0xFF800000> : vector<8x1xf32>
    %347 = vector.multi_reduction <maximumf>, %346, %cst_126 [1] : vector<8x16x1xf32> to vector<8x1xf32>
    %348 = vector.shape_cast %347 : vector<8x1xf32> to vector<8x1x1xf32>
    %349 = vector.broadcast %348 : vector<8x1x1xf32> to vector<8x16x1xf32>
    %350 = arith.subf %346, %349 : vector<8x16x1xf32>
    %351 = math.exp %350 : vector<8x16x1xf32>
    %cst_127 = arith.constant dense<0.000000e+00> : vector<8x1xf32>
    %352 = vector.multi_reduction <add>, %351, %cst_127 [1] : vector<8x16x1xf32> to vector<8x1xf32>
    %353 = vector.shape_cast %352 : vector<8x1xf32> to vector<8x1x1xf32>
    %354 = vector.broadcast %353 : vector<8x1x1xf32> to vector<8x16x1xf32>
    %355 = arith.divf %351, %354 : vector<8x16x1xf32>
    %c0_128 = arith.constant 0 : index
    %c0_129 = arith.constant 0 : index
    %c0_130 = arith.constant 0 : index
    %356 = vector.load %arg0[%c0_128, %c0_129, %c0_130] : memref<8x16x128xf32, #tpu.memory_space<vmem>>, vector<8x16x128xf32>
    %357 = vector.broadcast %355 : vector<8x16x1xf32> to vector<8x16x128xf32>
    %358 = arith.mulf %356, %357 : vector<8x16x128xf32>
    %cst_131 = arith.constant dense<0.000000e+00> : vector<8x128xf32>
    %359 = vector.multi_reduction <add>, %358, %cst_131 [1] : vector<8x16x128xf32> to vector<8x128xf32>
    %360 = arith.mulf %335, %359 : vector<8x128xf32>
    %361 = arith.truncf %360 : vector<8x128xf32> to vector<8x128xbf16>
    %362 = tpu.concatenate %323, %361 in 1 : vector<8x128xbf16>, vector<8x128xbf16> -> vector<8x256xbf16>
    %c0_132 = arith.constant 0 : index
    %c0_133 = arith.constant 0 : index
    %363 = vector.load %arg10[%c0_132, %c0_133] : memref<256x512xbf16, #tpu.memory_space<vmem>>, vector<256x512xbf16>
    %cst_134 = arith.constant dense<0.000000e+00> : vector<8x512xf32>
    %364 = tpu.matmul %362, %363, %cst_134 {dimension_numbers = #tpu.dot_dimension_numbers<[1], [0], [0], [1], [0, 0, 1, 1], [], []>} : vector<8x256xbf16>, vector<256x512xbf16>, vector<8x512xf32> -> vector<8x512xf32>
    %365 = vector.broadcast %1 : vector<1x512xf32> to vector<8x512xf32>
    %366 = arith.addf %364, %365 : vector<8x512xf32>
    %367 = arith.addf %366, %336 : vector<8x512xf32>
    %368 = vector.extract_strided_slice %367 {offsets = [0, 0], sizes = [8, 128], strides = [1, 1]} : vector<8x512xf32> to vector<8x128xf32>
    %369 = arith.negf %368 : vector<8x128xf32>
    %370 = math.exp %369 : vector<8x128xf32>
    %cst_135 = arith.constant 1.000000e+00 : f32
    %371 = vector.broadcast %cst_135 : f32 to vector<8x128xf32>
    %372 = arith.addf %371, %370 : vector<8x128xf32>
    %373 = arith.divf %371, %372 : vector<8x128xf32>
    %374 = vector.extract_strided_slice %367 {offsets = [0, 128], sizes = [8, 128], strides = [1, 1]} : vector<8x512xf32> to vector<8x128xf32>
    %375 = arith.negf %374 : vector<8x128xf32>
    %376 = math.exp %375 : vector<8x128xf32>
    %cst_136 = arith.constant 1.000000e+00 : f32
    %377 = vector.broadcast %cst_136 : f32 to vector<8x128xf32>
    %378 = arith.addf %377, %376 : vector<8x128xf32>
    %379 = arith.divf %377, %378 : vector<8x128xf32>
    %380 = vector.extract_strided_slice %367 {offsets = [0, 256], sizes = [8, 128], strides = [1, 1]} : vector<8x512xf32> to vector<8x128xf32>
    %381 = math.tanh %380 : vector<8x128xf32>
    %382 = vector.extract_strided_slice %367 {offsets = [0, 384], sizes = [8, 128], strides = [1, 1]} : vector<8x512xf32> to vector<8x128xf32>
    %383 = arith.negf %382 : vector<8x128xf32>
    %384 = math.exp %383 : vector<8x128xf32>
    %cst_137 = arith.constant 1.000000e+00 : f32
    %385 = vector.broadcast %cst_137 : f32 to vector<8x128xf32>
    %386 = arith.addf %385, %384 : vector<8x128xf32>
    %387 = arith.divf %385, %386 : vector<8x128xf32>
    %388 = arith.mulf %379, %293 : vector<8x128xf32>
    %389 = arith.mulf %373, %381 : vector<8x128xf32>
    %390 = arith.addf %388, %389 : vector<8x128xf32>
    %391 = math.tanh %390 : vector<8x128xf32>
    %392 = arith.mulf %387, %391 : vector<8x128xf32>
    %393 = arith.truncf %392 : vector<8x128xf32> to vector<8x128xbf16>
    %c0_138 = arith.constant 0 : index
    %c0_139 = arith.constant 0 : index
    %394 = vector.load %arg12[%c0_138, %c0_139] : memref<128x256xbf16, #tpu.memory_space<vmem>>, vector<128x256xbf16>
    %cst_140 = arith.constant dense<0.000000e+00> : vector<8x256xf32>
    %395 = tpu.matmul %393, %394, %cst_140 {dimension_numbers = #tpu.dot_dimension_numbers<[1], [0], [0], [1], [0, 0, 1, 1], [], []>} : vector<8x128xbf16>, vector<128x256xbf16>, vector<8x256xf32> -> vector<8x256xf32>
    %396 = vector.broadcast %2 : vector<1x256xf32> to vector<8x256xf32>
    %397 = arith.addf %395, %396 : vector<8x256xf32>
    %c3 = arith.constant 3 : index
    %c0_141 = arith.constant 0 : index
    %c0_142 = arith.constant 0 : index
    %398 = vector.load %arg14[%c3, %c0_141, %c0_142] : memref<7x8x256xf32, #tpu.memory_space<vmem>>, vector<1x8x256xf32>
    %399 = vector.shape_cast %398 : vector<1x8x256xf32> to vector<8x256xf32>
    %400 = vector.shape_cast %397 : vector<8x256xf32> to vector<1x8x256xf32>
    tpu.vector_store %arg14[%c3, %c0_141, %c0_142], %400 {strides = array<i32>} : memref<7x8x256xf32, #tpu.memory_space<vmem>>, vector<1x8x256xf32>,
    %401 = vector.shape_cast %355 : vector<8x16x1xf32> to vector<8x16xf32>
    %c3_143 = arith.constant 3 : index
    %c0_144 = arith.constant 0 : index
    %c0_145 = arith.constant 0 : index
    %402 = vector.load %arg15[%c3_143, %c0_144, %c0_145] : memref<7x8x16xf32, #tpu.memory_space<vmem>>, vector<1x8x16xf32>
    %403 = vector.shape_cast %402 : vector<1x8x16xf32> to vector<8x16xf32>
    %404 = vector.shape_cast %401 : vector<8x16xf32> to vector<1x8x16xf32>
    tpu.vector_store %arg15[%c3_143, %c0_144, %c0_145], %404 {strides = array<i32>} : memref<7x8x16xf32, #tpu.memory_space<vmem>>, vector<1x8x16xf32>,
    %cst_146 = arith.constant dense<0xFF800000> : vector<8xf32>
    %405 = vector.multi_reduction <maximumf>, %397, %cst_146 [1] : vector<8x256xf32> to vector<8xf32>
    %406 = vector.shape_cast %405 : vector<8xf32> to vector<8x1xf32>
    %407 = vector.broadcast %406 : vector<8x1xf32> to vector<8x256xf32>
    %408 = arith.cmpf oeq, %397, %407 : vector<8x256xf32>
    %c256_i32_147 = arith.constant 256 : i32
    %409 = vector.broadcast %c256_i32_147 : i32 to vector<8x256xi32>
    %410 = arith.select %408, %6, %409 : vector<8x256xi1>, vector<8x256xi32>
    %cst_148 = arith.constant dense<2147483647> : vector<8xi32>
    %411 = vector.multi_reduction <minsi>, %410, %cst_148 [1] : vector<8x256xi32> to vector<8xi32>
    %412 = vector.shape_cast %411 : vector<8xi32> to vector<8x1xi32>
    %413 = vector.broadcast %412 : vector<8x1xi32> to vector<8x256xi32>
    %414 = arith.cmpi eq, %6, %413 : vector<8x256xi32>
    %415 = arith.extui %414 : vector<8x256xi1> to vector<8x256xi32>
    %416 = arith.sitofp %415 : vector<8x256xi32> to vector<8x256xf32>
    %417 = arith.truncf %416 : vector<8x256xf32> to vector<8x256xbf16>
    %c0_149 = arith.constant 0 : index
    %c0_150 = arith.constant 0 : index
    %418 = vector.load %arg9[%c0_149, %c0_150] : memref<256x128xbf16, #tpu.memory_space<vmem>>, vector<256x128xbf16>
    %cst_151 = arith.constant dense<0.000000e+00> : vector<8x128xf32>
    %419 = tpu.matmul %417, %418, %cst_151 {dimension_numbers = #tpu.dot_dimension_numbers<[1], [0], [0], [1], [0, 0, 1, 1], [], []>} : vector<8x256xbf16>, vector<256x128xbf16>, vector<8x128xf32> -> vector<8x128xf32>
    %420 = arith.truncf %419 : vector<8x128xf32> to vector<8x128xbf16>
    %421 = arith.truncf %392 : vector<8x128xf32> to vector<8x128xbf16>
    %c0_152 = arith.constant 0 : index
    %c0_153 = arith.constant 0 : index
    %422 = vector.load %arg5[%c0_152, %c0_153] : memref<128x768xbf16, #tpu.memory_space<vmem>>, vector<128x768xbf16>
    %cst_154 = arith.constant dense<0.000000e+00> : vector<8x768xf32>
    %423 = tpu.matmul %421, %422, %cst_154 {dimension_numbers = #tpu.dot_dimension_numbers<[1], [0], [0], [1], [0, 0, 1, 1], [], []>} : vector<8x128xbf16>, vector<128x768xbf16>, vector<8x768xf32> -> vector<8x768xf32>
    %424 = vector.broadcast %0 : vector<1x768xf32> to vector<8x768xf32>
    %425 = arith.addf %423, %424 : vector<8x768xf32>
    %426 = vector.extract_strided_slice %425 {offsets = [0, 0], sizes = [8, 128], strides = [1, 1]} : vector<8x768xf32> to vector<8x128xf32>
    %427 = vector.extract_strided_slice %425 {offsets = [0, 128], sizes = [8, 128], strides = [1, 1]} : vector<8x768xf32> to vector<8x128xf32>
    %428 = arith.negf %427 : vector<8x128xf32>
    %429 = math.exp %428 : vector<8x128xf32>
    %cst_155 = arith.constant 1.000000e+00 : f32
    %430 = vector.broadcast %cst_155 : f32 to vector<8x128xf32>
    %431 = arith.addf %430, %429 : vector<8x128xf32>
    %432 = arith.divf %430, %431 : vector<8x128xf32>
    %433 = vector.extract_strided_slice %425 {offsets = [0, 256], sizes = [8, 512], strides = [1, 1]} : vector<8x768xf32> to vector<8x512xf32>
    %434 = vector.shape_cast %426 : vector<8x128xf32> to vector<8x1x128xf32>
    %435 = vector.broadcast %434 : vector<8x1x128xf32> to vector<8x16x128xf32>
    %436 = arith.addf %29, %435 : vector<8x16x128xf32>
    %437 = math.tanh %436 : vector<8x16x128xf32>
    %438 = vector.broadcast %4 : vector<1x1x128xf32> to vector<8x16x128xf32>
    %439 = arith.mulf %437, %438 : vector<8x16x128xf32>
    %cst_156 = arith.constant dense<0.000000e+00> : vector<8x16xf32>
    %440 = vector.multi_reduction <add>, %439, %cst_156 [2] : vector<8x16x128xf32> to vector<8x16xf32>
    %441 = vector.shape_cast %440 : vector<8x16xf32> to vector<8x16x1xf32>
    %442 = vector.broadcast %5 : f32 to vector<8x16x1xf32>
    %443 = arith.addf %441, %442 : vector<8x16x1xf32>
    %cst_157 = arith.constant dense<0xFF800000> : vector<8x1xf32>
    %444 = vector.multi_reduction <maximumf>, %443, %cst_157 [1] : vector<8x16x1xf32> to vector<8x1xf32>
    %445 = vector.shape_cast %444 : vector<8x1xf32> to vector<8x1x1xf32>
    %446 = vector.broadcast %445 : vector<8x1x1xf32> to vector<8x16x1xf32>
    %447 = arith.subf %443, %446 : vector<8x16x1xf32>
    %448 = math.exp %447 : vector<8x16x1xf32>
    %cst_158 = arith.constant dense<0.000000e+00> : vector<8x1xf32>
    %449 = vector.multi_reduction <add>, %448, %cst_158 [1] : vector<8x16x1xf32> to vector<8x1xf32>
    %450 = vector.shape_cast %449 : vector<8x1xf32> to vector<8x1x1xf32>
    %451 = vector.broadcast %450 : vector<8x1x1xf32> to vector<8x16x1xf32>
    %452 = arith.divf %448, %451 : vector<8x16x1xf32>
    %c0_159 = arith.constant 0 : index
    %c0_160 = arith.constant 0 : index
    %c0_161 = arith.constant 0 : index
    %453 = vector.load %arg0[%c0_159, %c0_160, %c0_161] : memref<8x16x128xf32, #tpu.memory_space<vmem>>, vector<8x16x128xf32>
    %454 = vector.broadcast %452 : vector<8x16x1xf32> to vector<8x16x128xf32>
    %455 = arith.mulf %453, %454 : vector<8x16x128xf32>
    %cst_162 = arith.constant dense<0.000000e+00> : vector<8x128xf32>
    %456 = vector.multi_reduction <add>, %455, %cst_162 [1] : vector<8x16x128xf32> to vector<8x128xf32>
    %457 = arith.mulf %432, %456 : vector<8x128xf32>
    %458 = arith.truncf %457 : vector<8x128xf32> to vector<8x128xbf16>
    %459 = tpu.concatenate %420, %458 in 1 : vector<8x128xbf16>, vector<8x128xbf16> -> vector<8x256xbf16>
    %c0_163 = arith.constant 0 : index
    %c0_164 = arith.constant 0 : index
    %460 = vector.load %arg10[%c0_163, %c0_164] : memref<256x512xbf16, #tpu.memory_space<vmem>>, vector<256x512xbf16>
    %cst_165 = arith.constant dense<0.000000e+00> : vector<8x512xf32>
    %461 = tpu.matmul %459, %460, %cst_165 {dimension_numbers = #tpu.dot_dimension_numbers<[1], [0], [0], [1], [0, 0, 1, 1], [], []>} : vector<8x256xbf16>, vector<256x512xbf16>, vector<8x512xf32> -> vector<8x512xf32>
    %462 = vector.broadcast %1 : vector<1x512xf32> to vector<8x512xf32>
    %463 = arith.addf %461, %462 : vector<8x512xf32>
    %464 = arith.addf %463, %433 : vector<8x512xf32>
    %465 = vector.extract_strided_slice %464 {offsets = [0, 0], sizes = [8, 128], strides = [1, 1]} : vector<8x512xf32> to vector<8x128xf32>
    %466 = arith.negf %465 : vector<8x128xf32>
    %467 = math.exp %466 : vector<8x128xf32>
    %cst_166 = arith.constant 1.000000e+00 : f32
    %468 = vector.broadcast %cst_166 : f32 to vector<8x128xf32>
    %469 = arith.addf %468, %467 : vector<8x128xf32>
    %470 = arith.divf %468, %469 : vector<8x128xf32>
    %471 = vector.extract_strided_slice %464 {offsets = [0, 128], sizes = [8, 128], strides = [1, 1]} : vector<8x512xf32> to vector<8x128xf32>
    %472 = arith.negf %471 : vector<8x128xf32>
    %473 = math.exp %472 : vector<8x128xf32>
    %cst_167 = arith.constant 1.000000e+00 : f32
    %474 = vector.broadcast %cst_167 : f32 to vector<8x128xf32>
    %475 = arith.addf %474, %473 : vector<8x128xf32>
    %476 = arith.divf %474, %475 : vector<8x128xf32>
    %477 = vector.extract_strided_slice %464 {offsets = [0, 256], sizes = [8, 128], strides = [1, 1]} : vector<8x512xf32> to vector<8x128xf32>
    %478 = math.tanh %477 : vector<8x128xf32>
    %479 = vector.extract_strided_slice %464 {offsets = [0, 384], sizes = [8, 128], strides = [1, 1]} : vector<8x512xf32> to vector<8x128xf32>
    %480 = arith.negf %479 : vector<8x128xf32>
    %481 = math.exp %480 : vector<8x128xf32>
    %cst_168 = arith.constant 1.000000e+00 : f32
    %482 = vector.broadcast %cst_168 : f32 to vector<8x128xf32>
    %483 = arith.addf %482, %481 : vector<8x128xf32>
    %484 = arith.divf %482, %483 : vector<8x128xf32>
    %485 = arith.mulf %476, %390 : vector<8x128xf32>
    %486 = arith.mulf %470, %478 : vector<8x128xf32>
    %487 = arith.addf %485, %486 : vector<8x128xf32>
    %488 = math.tanh %487 : vector<8x128xf32>
    %489 = arith.mulf %484, %488 : vector<8x128xf32>
    %490 = arith.truncf %489 : vector<8x128xf32> to vector<8x128xbf16>
    %c0_169 = arith.constant 0 : index
    %c0_170 = arith.constant 0 : index
    %491 = vector.load %arg12[%c0_169, %c0_170] : memref<128x256xbf16, #tpu.memory_space<vmem>>, vector<128x256xbf16>
    %cst_171 = arith.constant dense<0.000000e+00> : vector<8x256xf32>
    %492 = tpu.matmul %490, %491, %cst_171 {dimension_numbers = #tpu.dot_dimension_numbers<[1], [0], [0], [1], [0, 0, 1, 1], [], []>} : vector<8x128xbf16>, vector<128x256xbf16>, vector<8x256xf32> -> vector<8x256xf32>
    %493 = vector.broadcast %2 : vector<1x256xf32> to vector<8x256xf32>
    %494 = arith.addf %492, %493 : vector<8x256xf32>
    %c4 = arith.constant 4 : index
    %c0_172 = arith.constant 0 : index
    %c0_173 = arith.constant 0 : index
    %495 = vector.load %arg14[%c4, %c0_172, %c0_173] : memref<7x8x256xf32, #tpu.memory_space<vmem>>, vector<1x8x256xf32>
    %496 = vector.shape_cast %495 : vector<1x8x256xf32> to vector<8x256xf32>
    %497 = vector.shape_cast %494 : vector<8x256xf32> to vector<1x8x256xf32>
    tpu.vector_store %arg14[%c4, %c0_172, %c0_173], %497 {strides = array<i32>} : memref<7x8x256xf32, #tpu.memory_space<vmem>>, vector<1x8x256xf32>,
    %498 = vector.shape_cast %452 : vector<8x16x1xf32> to vector<8x16xf32>
    %c4_174 = arith.constant 4 : index
    %c0_175 = arith.constant 0 : index
    %c0_176 = arith.constant 0 : index
    %499 = vector.load %arg15[%c4_174, %c0_175, %c0_176] : memref<7x8x16xf32, #tpu.memory_space<vmem>>, vector<1x8x16xf32>
    %500 = vector.shape_cast %499 : vector<1x8x16xf32> to vector<8x16xf32>
    %501 = vector.shape_cast %498 : vector<8x16xf32> to vector<1x8x16xf32>
    tpu.vector_store %arg15[%c4_174, %c0_175, %c0_176], %501 {strides = array<i32>} : memref<7x8x16xf32, #tpu.memory_space<vmem>>, vector<1x8x16xf32>,
    %cst_177 = arith.constant dense<0xFF800000> : vector<8xf32>
    %502 = vector.multi_reduction <maximumf>, %494, %cst_177 [1] : vector<8x256xf32> to vector<8xf32>
    %503 = vector.shape_cast %502 : vector<8xf32> to vector<8x1xf32>
    %504 = vector.broadcast %503 : vector<8x1xf32> to vector<8x256xf32>
    %505 = arith.cmpf oeq, %494, %504 : vector<8x256xf32>
    %c256_i32_178 = arith.constant 256 : i32
    %506 = vector.broadcast %c256_i32_178 : i32 to vector<8x256xi32>
    %507 = arith.select %505, %6, %506 : vector<8x256xi1>, vector<8x256xi32>
    %cst_179 = arith.constant dense<2147483647> : vector<8xi32>
    %508 = vector.multi_reduction <minsi>, %507, %cst_179 [1] : vector<8x256xi32> to vector<8xi32>
    %509 = vector.shape_cast %508 : vector<8xi32> to vector<8x1xi32>
    %510 = vector.broadcast %509 : vector<8x1xi32> to vector<8x256xi32>
    %511 = arith.cmpi eq, %6, %510 : vector<8x256xi32>
    %512 = arith.extui %511 : vector<8x256xi1> to vector<8x256xi32>
    %513 = arith.sitofp %512 : vector<8x256xi32> to vector<8x256xf32>
    %514 = arith.truncf %513 : vector<8x256xf32> to vector<8x256xbf16>
    %c0_180 = arith.constant 0 : index
    %c0_181 = arith.constant 0 : index
    %515 = vector.load %arg9[%c0_180, %c0_181] : memref<256x128xbf16, #tpu.memory_space<vmem>>, vector<256x128xbf16>
    %cst_182 = arith.constant dense<0.000000e+00> : vector<8x128xf32>
    %516 = tpu.matmul %514, %515, %cst_182 {dimension_numbers = #tpu.dot_dimension_numbers<[1], [0], [0], [1], [0, 0, 1, 1], [], []>} : vector<8x256xbf16>, vector<256x128xbf16>, vector<8x128xf32> -> vector<8x128xf32>
    %517 = arith.truncf %516 : vector<8x128xf32> to vector<8x128xbf16>
    %518 = arith.truncf %489 : vector<8x128xf32> to vector<8x128xbf16>
    %c0_183 = arith.constant 0 : index
    %c0_184 = arith.constant 0 : index
    %519 = vector.load %arg5[%c0_183, %c0_184] : memref<128x768xbf16, #tpu.memory_space<vmem>>, vector<128x768xbf16>
    %cst_185 = arith.constant dense<0.000000e+00> : vector<8x768xf32>
    %520 = tpu.matmul %518, %519, %cst_185 {dimension_numbers = #tpu.dot_dimension_numbers<[1], [0], [0], [1], [0, 0, 1, 1], [], []>} : vector<8x128xbf16>, vector<128x768xbf16>, vector<8x768xf32> -> vector<8x768xf32>
    %521 = vector.broadcast %0 : vector<1x768xf32> to vector<8x768xf32>
    %522 = arith.addf %520, %521 : vector<8x768xf32>
    %523 = vector.extract_strided_slice %522 {offsets = [0, 0], sizes = [8, 128], strides = [1, 1]} : vector<8x768xf32> to vector<8x128xf32>
    %524 = vector.extract_strided_slice %522 {offsets = [0, 128], sizes = [8, 128], strides = [1, 1]} : vector<8x768xf32> to vector<8x128xf32>
    %525 = arith.negf %524 : vector<8x128xf32>
    %526 = math.exp %525 : vector<8x128xf32>
    %cst_186 = arith.constant 1.000000e+00 : f32
    %527 = vector.broadcast %cst_186 : f32 to vector<8x128xf32>
    %528 = arith.addf %527, %526 : vector<8x128xf32>
    %529 = arith.divf %527, %528 : vector<8x128xf32>
    %530 = vector.extract_strided_slice %522 {offsets = [0, 256], sizes = [8, 512], strides = [1, 1]} : vector<8x768xf32> to vector<8x512xf32>
    %531 = vector.shape_cast %523 : vector<8x128xf32> to vector<8x1x128xf32>
    %532 = vector.broadcast %531 : vector<8x1x128xf32> to vector<8x16x128xf32>
    %533 = arith.addf %29, %532 : vector<8x16x128xf32>
    %534 = math.tanh %533 : vector<8x16x128xf32>
    %535 = vector.broadcast %4 : vector<1x1x128xf32> to vector<8x16x128xf32>
    %536 = arith.mulf %534, %535 : vector<8x16x128xf32>
    %cst_187 = arith.constant dense<0.000000e+00> : vector<8x16xf32>
    %537 = vector.multi_reduction <add>, %536, %cst_187 [2] : vector<8x16x128xf32> to vector<8x16xf32>
    %538 = vector.shape_cast %537 : vector<8x16xf32> to vector<8x16x1xf32>
    %539 = vector.broadcast %5 : f32 to vector<8x16x1xf32>
    %540 = arith.addf %538, %539 : vector<8x16x1xf32>
    %cst_188 = arith.constant dense<0xFF800000> : vector<8x1xf32>
    %541 = vector.multi_reduction <maximumf>, %540, %cst_188 [1] : vector<8x16x1xf32> to vector<8x1xf32>
    %542 = vector.shape_cast %541 : vector<8x1xf32> to vector<8x1x1xf32>
    %543 = vector.broadcast %542 : vector<8x1x1xf32> to vector<8x16x1xf32>
    %544 = arith.subf %540, %543 : vector<8x16x1xf32>
    %545 = math.exp %544 : vector<8x16x1xf32>
    %cst_189 = arith.constant dense<0.000000e+00> : vector<8x1xf32>
    %546 = vector.multi_reduction <add>, %545, %cst_189 [1] : vector<8x16x1xf32> to vector<8x1xf32>
    %547 = vector.shape_cast %546 : vector<8x1xf32> to vector<8x1x1xf32>
    %548 = vector.broadcast %547 : vector<8x1x1xf32> to vector<8x16x1xf32>
    %549 = arith.divf %545, %548 : vector<8x16x1xf32>
    %c0_190 = arith.constant 0 : index
    %c0_191 = arith.constant 0 : index
    %c0_192 = arith.constant 0 : index
    %550 = vector.load %arg0[%c0_190, %c0_191, %c0_192] : memref<8x16x128xf32, #tpu.memory_space<vmem>>, vector<8x16x128xf32>
    %551 = vector.broadcast %549 : vector<8x16x1xf32> to vector<8x16x128xf32>
    %552 = arith.mulf %550, %551 : vector<8x16x128xf32>
    %cst_193 = arith.constant dense<0.000000e+00> : vector<8x128xf32>
    %553 = vector.multi_reduction <add>, %552, %cst_193 [1] : vector<8x16x128xf32> to vector<8x128xf32>
    %554 = arith.mulf %529, %553 : vector<8x128xf32>
    %555 = arith.truncf %554 : vector<8x128xf32> to vector<8x128xbf16>
    %556 = tpu.concatenate %517, %555 in 1 : vector<8x128xbf16>, vector<8x128xbf16> -> vector<8x256xbf16>
    %c0_194 = arith.constant 0 : index
    %c0_195 = arith.constant 0 : index
    %557 = vector.load %arg10[%c0_194, %c0_195] : memref<256x512xbf16, #tpu.memory_space<vmem>>, vector<256x512xbf16>
    %cst_196 = arith.constant dense<0.000000e+00> : vector<8x512xf32>
    %558 = tpu.matmul %556, %557, %cst_196 {dimension_numbers = #tpu.dot_dimension_numbers<[1], [0], [0], [1], [0, 0, 1, 1], [], []>} : vector<8x256xbf16>, vector<256x512xbf16>, vector<8x512xf32> -> vector<8x512xf32>
    %559 = vector.broadcast %1 : vector<1x512xf32> to vector<8x512xf32>
    %560 = arith.addf %558, %559 : vector<8x512xf32>
    %561 = arith.addf %560, %530 : vector<8x512xf32>
    %562 = vector.extract_strided_slice %561 {offsets = [0, 0], sizes = [8, 128], strides = [1, 1]} : vector<8x512xf32> to vector<8x128xf32>
    %563 = arith.negf %562 : vector<8x128xf32>
    %564 = math.exp %563 : vector<8x128xf32>
    %cst_197 = arith.constant 1.000000e+00 : f32
    %565 = vector.broadcast %cst_197 : f32 to vector<8x128xf32>
    %566 = arith.addf %565, %564 : vector<8x128xf32>
    %567 = arith.divf %565, %566 : vector<8x128xf32>
    %568 = vector.extract_strided_slice %561 {offsets = [0, 128], sizes = [8, 128], strides = [1, 1]} : vector<8x512xf32> to vector<8x128xf32>
    %569 = arith.negf %568 : vector<8x128xf32>
    %570 = math.exp %569 : vector<8x128xf32>
    %cst_198 = arith.constant 1.000000e+00 : f32
    %571 = vector.broadcast %cst_198 : f32 to vector<8x128xf32>
    %572 = arith.addf %571, %570 : vector<8x128xf32>
    %573 = arith.divf %571, %572 : vector<8x128xf32>
    %574 = vector.extract_strided_slice %561 {offsets = [0, 256], sizes = [8, 128], strides = [1, 1]} : vector<8x512xf32> to vector<8x128xf32>
    %575 = math.tanh %574 : vector<8x128xf32>
    %576 = vector.extract_strided_slice %561 {offsets = [0, 384], sizes = [8, 128], strides = [1, 1]} : vector<8x512xf32> to vector<8x128xf32>
    %577 = arith.negf %576 : vector<8x128xf32>
    %578 = math.exp %577 : vector<8x128xf32>
    %cst_199 = arith.constant 1.000000e+00 : f32
    %579 = vector.broadcast %cst_199 : f32 to vector<8x128xf32>
    %580 = arith.addf %579, %578 : vector<8x128xf32>
    %581 = arith.divf %579, %580 : vector<8x128xf32>
    %582 = arith.mulf %573, %487 : vector<8x128xf32>
    %583 = arith.mulf %567, %575 : vector<8x128xf32>
    %584 = arith.addf %582, %583 : vector<8x128xf32>
    %585 = math.tanh %584 : vector<8x128xf32>
    %586 = arith.mulf %581, %585 : vector<8x128xf32>
    %587 = arith.truncf %586 : vector<8x128xf32> to vector<8x128xbf16>
    %c0_200 = arith.constant 0 : index
    %c0_201 = arith.constant 0 : index
    %588 = vector.load %arg12[%c0_200, %c0_201] : memref<128x256xbf16, #tpu.memory_space<vmem>>, vector<128x256xbf16>
    %cst_202 = arith.constant dense<0.000000e+00> : vector<8x256xf32>
    %589 = tpu.matmul %587, %588, %cst_202 {dimension_numbers = #tpu.dot_dimension_numbers<[1], [0], [0], [1], [0, 0, 1, 1], [], []>} : vector<8x128xbf16>, vector<128x256xbf16>, vector<8x256xf32> -> vector<8x256xf32>
    %590 = vector.broadcast %2 : vector<1x256xf32> to vector<8x256xf32>
    %591 = arith.addf %589, %590 : vector<8x256xf32>
    %c5 = arith.constant 5 : index
    %c0_203 = arith.constant 0 : index
    %c0_204 = arith.constant 0 : index
    %592 = vector.load %arg14[%c5, %c0_203, %c0_204] : memref<7x8x256xf32, #tpu.memory_space<vmem>>, vector<1x8x256xf32>
    %593 = vector.shape_cast %592 : vector<1x8x256xf32> to vector<8x256xf32>
    %594 = vector.shape_cast %591 : vector<8x256xf32> to vector<1x8x256xf32>
    tpu.vector_store %arg14[%c5, %c0_203, %c0_204], %594 {strides = array<i32>} : memref<7x8x256xf32, #tpu.memory_space<vmem>>, vector<1x8x256xf32>,
    %595 = vector.shape_cast %549 : vector<8x16x1xf32> to vector<8x16xf32>
    %c5_205 = arith.constant 5 : index
    %c0_206 = arith.constant 0 : index
    %c0_207 = arith.constant 0 : index
    %596 = vector.load %arg15[%c5_205, %c0_206, %c0_207] : memref<7x8x16xf32, #tpu.memory_space<vmem>>, vector<1x8x16xf32>
    %597 = vector.shape_cast %596 : vector<1x8x16xf32> to vector<8x16xf32>
    %598 = vector.shape_cast %595 : vector<8x16xf32> to vector<1x8x16xf32>
    tpu.vector_store %arg15[%c5_205, %c0_206, %c0_207], %598 {strides = array<i32>} : memref<7x8x16xf32, #tpu.memory_space<vmem>>, vector<1x8x16xf32>,
    %cst_208 = arith.constant dense<0xFF800000> : vector<8xf32>
    %599 = vector.multi_reduction <maximumf>, %591, %cst_208 [1] : vector<8x256xf32> to vector<8xf32>
    %600 = vector.shape_cast %599 : vector<8xf32> to vector<8x1xf32>
    %601 = vector.broadcast %600 : vector<8x1xf32> to vector<8x256xf32>
    %602 = arith.cmpf oeq, %591, %601 : vector<8x256xf32>
    %c256_i32_209 = arith.constant 256 : i32
    %603 = vector.broadcast %c256_i32_209 : i32 to vector<8x256xi32>
    %604 = arith.select %602, %6, %603 : vector<8x256xi1>, vector<8x256xi32>
    %cst_210 = arith.constant dense<2147483647> : vector<8xi32>
    %605 = vector.multi_reduction <minsi>, %604, %cst_210 [1] : vector<8x256xi32> to vector<8xi32>
    %606 = vector.shape_cast %605 : vector<8xi32> to vector<8x1xi32>
    %607 = vector.broadcast %606 : vector<8x1xi32> to vector<8x256xi32>
    %608 = arith.cmpi eq, %6, %607 : vector<8x256xi32>
    %609 = arith.extui %608 : vector<8x256xi1> to vector<8x256xi32>
    %610 = arith.sitofp %609 : vector<8x256xi32> to vector<8x256xf32>
    %611 = arith.truncf %610 : vector<8x256xf32> to vector<8x256xbf16>
    %c0_211 = arith.constant 0 : index
    %c0_212 = arith.constant 0 : index
    %612 = vector.load %arg9[%c0_211, %c0_212] : memref<256x128xbf16, #tpu.memory_space<vmem>>, vector<256x128xbf16>
    %cst_213 = arith.constant dense<0.000000e+00> : vector<8x128xf32>
    %613 = tpu.matmul %611, %612, %cst_213 {dimension_numbers = #tpu.dot_dimension_numbers<[1], [0], [0], [1], [0, 0, 1, 1], [], []>} : vector<8x256xbf16>, vector<256x128xbf16>, vector<8x128xf32> -> vector<8x128xf32>
    %614 = arith.truncf %613 : vector<8x128xf32> to vector<8x128xbf16>
    %615 = arith.truncf %586 : vector<8x128xf32> to vector<8x128xbf16>
    %c0_214 = arith.constant 0 : index
    %c0_215 = arith.constant 0 : index
    %616 = vector.load %arg5[%c0_214, %c0_215] : memref<128x768xbf16, #tpu.memory_space<vmem>>, vector<128x768xbf16>
    %cst_216 = arith.constant dense<0.000000e+00> : vector<8x768xf32>
    %617 = tpu.matmul %615, %616, %cst_216 {dimension_numbers = #tpu.dot_dimension_numbers<[1], [0], [0], [1], [0, 0, 1, 1], [], []>} : vector<8x128xbf16>, vector<128x768xbf16>, vector<8x768xf32> -> vector<8x768xf32>
    %618 = vector.broadcast %0 : vector<1x768xf32> to vector<8x768xf32>
    %619 = arith.addf %617, %618 : vector<8x768xf32>
    %620 = vector.extract_strided_slice %619 {offsets = [0, 0], sizes = [8, 128], strides = [1, 1]} : vector<8x768xf32> to vector<8x128xf32>
    %621 = vector.extract_strided_slice %619 {offsets = [0, 128], sizes = [8, 128], strides = [1, 1]} : vector<8x768xf32> to vector<8x128xf32>
    %622 = arith.negf %621 : vector<8x128xf32>
    %623 = math.exp %622 : vector<8x128xf32>
    %cst_217 = arith.constant 1.000000e+00 : f32
    %624 = vector.broadcast %cst_217 : f32 to vector<8x128xf32>
    %625 = arith.addf %624, %623 : vector<8x128xf32>
    %626 = arith.divf %624, %625 : vector<8x128xf32>
    %627 = vector.extract_strided_slice %619 {offsets = [0, 256], sizes = [8, 512], strides = [1, 1]} : vector<8x768xf32> to vector<8x512xf32>
    %628 = vector.shape_cast %620 : vector<8x128xf32> to vector<8x1x128xf32>
    %629 = vector.broadcast %628 : vector<8x1x128xf32> to vector<8x16x128xf32>
    %630 = arith.addf %29, %629 : vector<8x16x128xf32>
    %631 = math.tanh %630 : vector<8x16x128xf32>
    %632 = vector.broadcast %4 : vector<1x1x128xf32> to vector<8x16x128xf32>
    %633 = arith.mulf %631, %632 : vector<8x16x128xf32>
    %cst_218 = arith.constant dense<0.000000e+00> : vector<8x16xf32>
    %634 = vector.multi_reduction <add>, %633, %cst_218 [2] : vector<8x16x128xf32> to vector<8x16xf32>
    %635 = vector.shape_cast %634 : vector<8x16xf32> to vector<8x16x1xf32>
    %636 = vector.broadcast %5 : f32 to vector<8x16x1xf32>
    %637 = arith.addf %635, %636 : vector<8x16x1xf32>
    %cst_219 = arith.constant dense<0xFF800000> : vector<8x1xf32>
    %638 = vector.multi_reduction <maximumf>, %637, %cst_219 [1] : vector<8x16x1xf32> to vector<8x1xf32>
    %639 = vector.shape_cast %638 : vector<8x1xf32> to vector<8x1x1xf32>
    %640 = vector.broadcast %639 : vector<8x1x1xf32> to vector<8x16x1xf32>
    %641 = arith.subf %637, %640 : vector<8x16x1xf32>
    %642 = math.exp %641 : vector<8x16x1xf32>
    %cst_220 = arith.constant dense<0.000000e+00> : vector<8x1xf32>
    %643 = vector.multi_reduction <add>, %642, %cst_220 [1] : vector<8x16x1xf32> to vector<8x1xf32>
    %644 = vector.shape_cast %643 : vector<8x1xf32> to vector<8x1x1xf32>
    %645 = vector.broadcast %644 : vector<8x1x1xf32> to vector<8x16x1xf32>
    %646 = arith.divf %642, %645 : vector<8x16x1xf32>
    %c0_221 = arith.constant 0 : index
    %c0_222 = arith.constant 0 : index
    %c0_223 = arith.constant 0 : index
    %647 = vector.load %arg0[%c0_221, %c0_222, %c0_223] : memref<8x16x128xf32, #tpu.memory_space<vmem>>, vector<8x16x128xf32>
    %648 = vector.broadcast %646 : vector<8x16x1xf32> to vector<8x16x128xf32>
    %649 = arith.mulf %647, %648 : vector<8x16x128xf32>
    %cst_224 = arith.constant dense<0.000000e+00> : vector<8x128xf32>
    %650 = vector.multi_reduction <add>, %649, %cst_224 [1] : vector<8x16x128xf32> to vector<8x128xf32>
    %651 = arith.mulf %626, %650 : vector<8x128xf32>
    %652 = arith.truncf %651 : vector<8x128xf32> to vector<8x128xbf16>
    %653 = tpu.concatenate %614, %652 in 1 : vector<8x128xbf16>, vector<8x128xbf16> -> vector<8x256xbf16>
    %c0_225 = arith.constant 0 : index
    %c0_226 = arith.constant 0 : index
    %654 = vector.load %arg10[%c0_225, %c0_226] : memref<256x512xbf16, #tpu.memory_space<vmem>>, vector<256x512xbf16>
    %cst_227 = arith.constant dense<0.000000e+00> : vector<8x512xf32>
    %655 = tpu.matmul %653, %654, %cst_227 {dimension_numbers = #tpu.dot_dimension_numbers<[1], [0], [0], [1], [0, 0, 1, 1], [], []>} : vector<8x256xbf16>, vector<256x512xbf16>, vector<8x512xf32> -> vector<8x512xf32>
    %656 = vector.broadcast %1 : vector<1x512xf32> to vector<8x512xf32>
    %657 = arith.addf %655, %656 : vector<8x512xf32>
    %658 = arith.addf %657, %627 : vector<8x512xf32>
    %659 = vector.extract_strided_slice %658 {offsets = [0, 0], sizes = [8, 128], strides = [1, 1]} : vector<8x512xf32> to vector<8x128xf32>
    %660 = arith.negf %659 : vector<8x128xf32>
    %661 = math.exp %660 : vector<8x128xf32>
    %cst_228 = arith.constant 1.000000e+00 : f32
    %662 = vector.broadcast %cst_228 : f32 to vector<8x128xf32>
    %663 = arith.addf %662, %661 : vector<8x128xf32>
    %664 = arith.divf %662, %663 : vector<8x128xf32>
    %665 = vector.extract_strided_slice %658 {offsets = [0, 128], sizes = [8, 128], strides = [1, 1]} : vector<8x512xf32> to vector<8x128xf32>
    %666 = arith.negf %665 : vector<8x128xf32>
    %667 = math.exp %666 : vector<8x128xf32>
    %cst_229 = arith.constant 1.000000e+00 : f32
    %668 = vector.broadcast %cst_229 : f32 to vector<8x128xf32>
    %669 = arith.addf %668, %667 : vector<8x128xf32>
    %670 = arith.divf %668, %669 : vector<8x128xf32>
    %671 = vector.extract_strided_slice %658 {offsets = [0, 256], sizes = [8, 128], strides = [1, 1]} : vector<8x512xf32> to vector<8x128xf32>
    %672 = math.tanh %671 : vector<8x128xf32>
    %673 = vector.extract_strided_slice %658 {offsets = [0, 384], sizes = [8, 128], strides = [1, 1]} : vector<8x512xf32> to vector<8x128xf32>
    %674 = arith.negf %673 : vector<8x128xf32>
    %675 = math.exp %674 : vector<8x128xf32>
    %cst_230 = arith.constant 1.000000e+00 : f32
    %676 = vector.broadcast %cst_230 : f32 to vector<8x128xf32>
    %677 = arith.addf %676, %675 : vector<8x128xf32>
    %678 = arith.divf %676, %677 : vector<8x128xf32>
    %679 = arith.mulf %670, %584 : vector<8x128xf32>
    %680 = arith.mulf %664, %672 : vector<8x128xf32>
    %681 = arith.addf %679, %680 : vector<8x128xf32>
    %682 = math.tanh %681 : vector<8x128xf32>
    %683 = arith.mulf %678, %682 : vector<8x128xf32>
    %684 = arith.truncf %683 : vector<8x128xf32> to vector<8x128xbf16>
    %c0_231 = arith.constant 0 : index
    %c0_232 = arith.constant 0 : index
    %685 = vector.load %arg12[%c0_231, %c0_232] : memref<128x256xbf16, #tpu.memory_space<vmem>>, vector<128x256xbf16>
    %cst_233 = arith.constant dense<0.000000e+00> : vector<8x256xf32>
    %686 = tpu.matmul %684, %685, %cst_233 {dimension_numbers = #tpu.dot_dimension_numbers<[1], [0], [0], [1], [0, 0, 1, 1], [], []>} : vector<8x128xbf16>, vector<128x256xbf16>, vector<8x256xf32> -> vector<8x256xf32>
    %687 = vector.broadcast %2 : vector<1x256xf32> to vector<8x256xf32>
    %688 = arith.addf %686, %687 : vector<8x256xf32>
    %c6 = arith.constant 6 : index
    %c0_234 = arith.constant 0 : index
    %c0_235 = arith.constant 0 : index
    %689 = vector.load %arg14[%c6, %c0_234, %c0_235] : memref<7x8x256xf32, #tpu.memory_space<vmem>>, vector<1x8x256xf32>
    %690 = vector.shape_cast %689 : vector<1x8x256xf32> to vector<8x256xf32>
    %691 = vector.shape_cast %688 : vector<8x256xf32> to vector<1x8x256xf32>
    tpu.vector_store %arg14[%c6, %c0_234, %c0_235], %691 {strides = array<i32>} : memref<7x8x256xf32, #tpu.memory_space<vmem>>, vector<1x8x256xf32>,
    %692 = vector.shape_cast %646 : vector<8x16x1xf32> to vector<8x16xf32>
    %c6_236 = arith.constant 6 : index
    %c0_237 = arith.constant 0 : index
    %c0_238 = arith.constant 0 : index
    %693 = vector.load %arg15[%c6_236, %c0_237, %c0_238] : memref<7x8x16xf32, #tpu.memory_space<vmem>>, vector<1x8x16xf32>
    %694 = vector.shape_cast %693 : vector<1x8x16xf32> to vector<8x16xf32>
    %695 = vector.shape_cast %692 : vector<8x16xf32> to vector<1x8x16xf32>
    tpu.vector_store %arg15[%c6_236, %c0_237, %c0_238], %695 {strides = array<i32>} : memref<7x8x16xf32, #tpu.memory_space<vmem>>, vector<1x8x16xf32>,
    return
  }
}

</mosaic_0001>

<llo_original>
// kernel: decoder_forward.1
$region0: #{decoder_forward.1}
  #allocation0 [shape = 'u32[]', space=smem, size = 0x4, offset = 0x4, fixed_abs, tag = 'smem constant byte address 0x4 - core index']
  #allocation1 [shape = 'u32[72,128]{1,0:T(1,128)}', space=vmem, size = 0x9000, scoped, tag = 'internal scratch']
  #allocation2 [shape = 'f32[1,1]{1,0:T(1,128)S(6)}', space=smem, size = 0x200, scoped, tag = 'scoped memory for decoder_forward.1']
  %s0 = inlined_call_operand.vmem [shape: f32[8,16,128], index: 0, kind: input, shape index: {}]
  %s1 = inlined_call_operand.vmem [shape: bf16[128,256], index: 1, kind: input, shape index: {}]
  %s2 = inlined_call_operand.vmem [shape: f32[1,256], index: 2, kind: input, shape index: {}]
  %s3 = inlined_call_operand.vmem [shape: bf16[128,128], index: 3, kind: input, shape index: {}]
  %s4 = inlined_call_operand.vmem [shape: f32[1,128], index: 4, kind: input, shape index: {}]
  %s5 = inlined_call_operand.vmem [shape: bf16[128,768], index: 5, kind: input, shape index: {}]
  %s6 = inlined_call_operand.vmem [shape: f32[1,768], index: 6, kind: input, shape index: {}]
  %s7 = inlined_call_operand.vmem [shape: f32[1,128], index: 7, kind: input, shape index: {}]
  %s8 = inlined_call_operand.<no memory space> [shape: f32[1,1], index: 8, kind: input, shape index: {}]
  %s9 = inlined_call_operand.vmem [shape: bf16[256,128], index: 9, kind: input, shape index: {}]
  %s10 = inlined_call_operand.vmem [shape: bf16[256,512], index: 10, kind: input, shape index: {}]
  %s11 = inlined_call_operand.vmem [shape: f32[1,512], index: 11, kind: input, shape index: {}]
  %s12 = inlined_call_operand.vmem [shape: bf16[128,256], index: 12, kind: input, shape index: {}]
  %s13 = inlined_call_operand.vmem [shape: f32[1,256], index: 13, kind: input, shape index: {}]
  %s14 = inlined_call_operand.vmem [shape: f32[7,8,256], index: 14, kind: output, shape index: {0}]
  %s15 = inlined_call_operand.vmem [shape: f32[7,8,16], index: 15, kind: output, shape index: {1}]
  %16 = xla_tuple %s14, %s15
  %s17 = sld [smem:[#allocation0]]
  $region74: #{decoder_forward.1} parent=0
    _
  %s19 = ssub.s32 1, %s17
  %s20 = scalar_select 0, %s19, %s17
  %21 = sst [smem:[#allocation2]] %s8
  // Predicated region
  $region2: #{decoder_forward.1} parent=0 // pred_check
    _
  $region3: #{decoder_forward.1} parent=0 // pred_check_branch
    %23 = sbr.rel (0) target = $region5
  $region4: #{decoder_forward.1} parent=0 // pred_region
    _
  $region5: #{decoder_forward.1} parent=0 // pred_fallthru
    _
  // Predicated region
  $region6: #{decoder_forward.1} parent=0 // pred_check
    _
  $region7: #{decoder_forward.1} parent=0 // pred_check_branch
    %25 = sbr.rel (0) target = $region9
  $region8: #{decoder_forward.1} parent=0 // pred_region
    _
  $region9: #{decoder_forward.1} parent=0 // pred_fallthru
    _
  // Predicated region
  $region10: #{decoder_forward.1} parent=0 // pred_check
    _
  $region11: #{decoder_forward.1} parent=0 // pred_check_branch
    %27 = sbr.rel (0) target = $region13
  $region12: #{decoder_forward.1} parent=0 // pred_region
    _
  $region13: #{decoder_forward.1} parent=0 // pred_fallthru
    _
  // Predicated region
  $region14: #{decoder_forward.1} parent=0 // pred_check
    _
  $region15: #{decoder_forward.1} parent=0 // pred_check_branch
    %29 = sbr.rel (0) target = $region17
  $region16: #{decoder_forward.1} parent=0 // pred_region
    _
  $region17: #{decoder_forward.1} parent=0 // pred_fallthru
    _
  // Predicated region
  $region18: #{decoder_forward.1} parent=0 // pred_check
    _
  $region19: #{decoder_forward.1} parent=0 // pred_check_branch
    %31 = sbr.rel (0) target = $region21
  $region20: #{decoder_forward.1} parent=0 // pred_region
    _
  $region21: #{decoder_forward.1} parent=0 // pred_fallthru
    _
  // Predicated region
  $region22: #{decoder_forward.1} parent=0 // pred_check
    _
  $region23: #{decoder_forward.1} parent=0 // pred_check_branch
    %33 = sbr.rel (0) target = $region25
  $region24: #{decoder_forward.1} parent=0 // pred_region
    _
  $region25: #{decoder_forward.1} parent=0 // pred_fallthru
    _
  // Predicated region
  $region26: #{decoder_forward.1} parent=0 // pred_check
    _
  $region27: #{decoder_forward.1} parent=0 // pred_check_branch
    %35 = sbr.rel (0) target = $region29
  $region28: #{decoder_forward.1} parent=0 // pred_region
    _
  $region29: #{decoder_forward.1} parent=0 // pred_fallthru
    _
  // Predicated region
  $region30: #{decoder_forward.1} parent=0 // pred_check
    _
  $region31: #{decoder_forward.1} parent=0 // pred_check_branch
    %37 = sbr.rel (0) target = $region33
  $region32: #{decoder_forward.1} parent=0 // pred_region
    _
  $region33: #{decoder_forward.1} parent=0 // pred_fallthru
    _
  // Predicated region
  $region34: #{decoder_forward.1} parent=0 // pred_check
    _
  $region35: #{decoder_forward.1} parent=0 // pred_check_branch
    %39 = sbr.rel (0) target = $region37
  $region36: #{decoder_forward.1} parent=0 // pred_region
    _
  $region37: #{decoder_forward.1} parent=0 // pred_fallthru
    _
  // Predicated region
  $region38: #{decoder_forward.1} parent=0 // pred_check
    _
  $region39: #{decoder_forward.1} parent=0 // pred_check_branch
    %41 = sbr.rel (0) target = $region41
  $region40: #{decoder_forward.1} parent=0 // pred_region
    _
  $region41: #{decoder_forward.1} parent=0 // pred_fallthru
    _
  // Predicated region
  $region42: #{decoder_forward.1} parent=0 // pred_check
    _
  $region43: #{decoder_forward.1} parent=0 // pred_check_branch
    %43 = sbr.rel (0) target = $region45
  $region44: #{decoder_forward.1} parent=0 // pred_region
    _
  $region45: #{decoder_forward.1} parent=0 // pred_fallthru
    _
  // Predicated region
  $region46: #{decoder_forward.1} parent=0 // pred_check
    _
  $region47: #{decoder_forward.1} parent=0 // pred_check_branch
    %45 = sbr.rel (0) target = $region49
  $region48: #{decoder_forward.1} parent=0 // pred_region
    _
  $region49: #{decoder_forward.1} parent=0 // pred_fallthru
    _
  // Predicated region
  $region50: #{decoder_forward.1} parent=0 // pred_check
    _
  $region51: #{decoder_forward.1} parent=0 // pred_check_branch
    %47 = sbr.rel (0) target = $region53
  $region52: #{decoder_forward.1} parent=0 // pred_region
    _
  $region53: #{decoder_forward.1} parent=0 // pred_fallthru
    _
  // Predicated region
  $region54: #{decoder_forward.1} parent=0 // pred_check
    _
  $region55: #{decoder_forward.1} parent=0 // pred_check_branch
    %49 = sbr.rel (0) target = $region57
  $region56: #{decoder_forward.1} parent=0 // pred_region
    _
  $region57: #{decoder_forward.1} parent=0 // pred_fallthru
    _
  %v50 = vld [vmem:[%s6] sm:$0x3f]
  %v51 = vld [vmem:[%s11] sm:$0xf]
  %v52 = vld [vmem:[%s13] sm:$0x3]
  %v53 = vld [vmem:[%s7] sm:$0x1]
  %s54 = sld [smem:[#allocation2]]
  %v55 = vlaneseq
  %v56 = vand.u32 %v55, 127
  %v57 = vadd.s32 %v56, 128
  %v58 = vld [vmem:[%s0] sm:$0xff]
  %v59 = vld [vmem:[%s0 + $0x8] sm:$0xff]
  %v60 = vld [vmem:[%s0 + $0x10] sm:$0xff]
  %v61 = vld [vmem:[%s0 + $0x18] sm:$0xff]
  %v62 = vld [vmem:[%s0 + $0x20] sm:$0xff]
  %v63 = vld [vmem:[%s0 + $0x28] sm:$0xff]
  %v64 = vld [vmem:[%s0 + $0x30] sm:$0xff]
  %v65 = vld [vmem:[%s0 + $0x38] sm:$0xff]
  %v66 = vld [vmem:[%s0 + $0x40] sm:$0xff]
  %v67 = vld [vmem:[%s0 + $0x48] sm:$0xff]
  %v68 = vld [vmem:[%s0 + $0x50] sm:$0xff]
  %v69 = vld [vmem:[%s0 + $0x58] sm:$0xff]
  %v70 = vld [vmem:[%s0 + $0x60] sm:$0xff]
  %v71 = vld [vmem:[%s0 + $0x68] sm:$0xff]
  %v72 = vld [vmem:[%s0 + $0x70] sm:$0xff]
  %v73 = vld [vmem:[%s0 + $0x78] sm:$0xff]
  %v74 = vadd.f32 %v58, %v59
  %v75 = vrot.slane %v74, 4
  %v76 = vadd.f32 %v74, %v75
  %v77 = vrot.slane %v76, 2
  %v78 = vadd.f32 %v76, %v77
  %v79 = vrot.slane %v78, 1
  %v80 = vadd.f32 %v78, %v79
  %v81 = vadd.f32 %v60, %v61
  %v82 = vrot.slane %v81, 4
  %v83 = vadd.f32 %v81, %v82
  %v84 = vrot.slane %v83, 2
  %v85 = vadd.f32 %v83, %v84
  %v86 = vrot.slane %v85, 1
  %v87 = vadd.f32 %v85, %v86
  %v88 = vadd.f32 %v62, %v63
  %v89 = vrot.slane %v88, 4
  %v90 = vadd.f32 %v88, %v89
  %v91 = vrot.slane %v90, 2
  %v92 = vadd.f32 %v90, %v91
  %v93 = vrot.slane %v92, 1
  %v94 = vadd.f32 %v92, %v93
  %v95 = vadd.f32 %v64, %v65
  %v96 = vrot.slane %v95, 4
  %v97 = vadd.f32 %v95, %v96
  %v98 = vrot.slane %v97, 2
  %v99 = vadd.f32 %v97, %v98
  %v100 = vrot.slane %v99, 1
  %v101 = vadd.f32 %v99, %v100
  %v102 = vadd.f32 %v66, %v67
  %v103 = vrot.slane %v102, 4
  %v104 = vadd.f32 %v102, %v103
  %v105 = vrot.slane %v104, 2
  %v106 = vadd.f32 %v104, %v105
  %v107 = vrot.slane %v106, 1
  %v108 = vadd.f32 %v106, %v107
  %v109 = vadd.f32 %v68, %v69
  %v110 = vrot.slane %v109, 4
  %v111 = vadd.f32 %v109, %v110
  %v112 = vrot.slane %v111, 2
  %v113 = vadd.f32 %v111, %v112
  %v114 = vrot.slane %v113, 1
  %v115 = vadd.f32 %v113, %v114
  %v116 = vadd.f32 %v70, %v71
  %v117 = vrot.slane %v116, 4
  %v118 = vadd.f32 %v116, %v117
  %v119 = vrot.slane %v118, 2
  %v120 = vadd.f32 %v118, %v119
  %v121 = vrot.slane %v120, 1
  %v122 = vadd.f32 %v120, %v121
  %v123 = vadd.f32 %v72, %v73
  %v124 = vrot.slane %v123, 4
  %v125 = vadd.f32 %v123, %v124
  %v126 = vrot.slane %v125, 2
  %v127 = vadd.f32 %v125, %v126
  %v128 = vrot.slane %v127, 1
  %v129 = vadd.f32 %v127, %v128
  %v130 = vrcp.pop 16.0
  %v131 = vmul.f32 16.0, %v130
  %v132 = vsub.f32 1.0, %v131
  %v133 = vmul.f32 %v130, %v132
  %v134 = vadd.f32 %v130, %v133
  %vm135 = vweird.f32 %v130
  %v136 = vsel %vm135, %v130, %v134
  %v137 = vmul.f32 %v80, %v136
  %v138 = vmul.f32 %v87, %v136
  %v139 = vmul.f32 %v94, %v136
  %v140 = vmul.f32 %v101, %v136
  %v141 = vmul.f32 %v108, %v136
  %v142 = vmul.f32 %v115, %v136
  %v143 = vmul.f32 %v122, %v136
  %v144 = vmul.f32 %v129, %v136
  %v145 = vpack.c.bf16 %v137, %v137
  %v146 = vpack.c.bf16 %v138, %v138
  %v147 = vpack.c.bf16 %v139, %v139
  %v148 = vpack.c.bf16 %v140, %v140
  %v149 = vpack.c.bf16 %v141, %v141
  %v150 = vpack.c.bf16 %v142, %v142
  %v151 = vpack.c.bf16 %v143, %v143
  %v152 = vpack.c.bf16 %v144, %v144
  %v153 = vld [vmem:[%s1] sm:$0xff]
  %v154 = vld [vmem:[%s1 + $0x8] sm:$0xff]
  %v155 = vld [vmem:[%s1 + $0x10] sm:$0xff]
  %v156 = vld [vmem:[%s1 + $0x18] sm:$0xff]
  %v157 = vld [vmem:[%s1 + $0x20] sm:$0xff]
  %v158 = vld [vmem:[%s1 + $0x28] sm:$0xff]
  %v159 = vld [vmem:[%s1 + $0x30] sm:$0xff]
  %v160 = vld [vmem:[%s1 + $0x38] sm:$0xff]
  %v161 = vld [vmem:[%s1 + $0x40] sm:$0xff]
  %v162 = vld [vmem:[%s1 + $0x48] sm:$0xff]
  %v163 = vld [vmem:[%s1 + $0x50] sm:$0xff]
  %v164 = vld [vmem:[%s1 + $0x58] sm:$0xff]
  %v165 = vld [vmem:[%s1 + $0x60] sm:$0xff]
  %v166 = vld [vmem:[%s1 + $0x68] sm:$0xff]
  %v167 = vld [vmem:[%s1 + $0x70] sm:$0xff]
  %v168 = vld [vmem:[%s1 + $0x78] sm:$0xff]
  %v169 = vld [vmem:[%s2] sm:$0x3]
  %v171 = vperm.slane %v169, 0
  %v172 = vperm.slane %v169, 1
  %v183 = vunpack.c.l.b16 %v145
  %v184 = vunpack.c.l.b16 %v146
  %v185 = vunpack.c.l.b16 %v147
  %v186 = vunpack.c.l.b16 %v148
  %v187 = vunpack.c.l.b16 %v149
  %v188 = vunpack.c.l.b16 %v150
  %v189 = vunpack.c.l.b16 %v151
  %v190 = vunpack.c.l.b16 %v152
  %vm191 = vcmask 1041409
  %v192 = vsel %vm191, %v184, %v183
  %vm193 = vcmask 1042434
  %v194 = vsel %vm193, %v185, %v192
  %vm195 = vcmask 1043459
  %v196 = vsel %vm195, %v186, %v194
  %vm197 = vcmask 1044484
  %v198 = vsel %vm197, %v187, %v196
  %vm199 = vcmask 1045509
  %v200 = vsel %vm199, %v188, %v198
  %vm201 = vcmask 1046534
  %v202 = vsel %vm201, %v189, %v200
  %vm203 = vcmask 1047559
  %v204 = vsel %vm203, %v190, %v202
  %v205 = vpack.c.b16 %v204, %v204
  %v223 = vunpack.c.l.b16 %v153
  %v224 = vunpack.c.h.b16 %v153
  %v225 = vunpack.c.l.b16 %v154
  %v226 = vunpack.c.h.b16 %v154
  %v227 = vunpack.c.l.b16 %v155
  %v228 = vunpack.c.h.b16 %v155
  %v229 = vunpack.c.l.b16 %v156
  %v230 = vunpack.c.h.b16 %v156
  %v231 = vunpack.c.l.b16 %v157
  %v232 = vunpack.c.h.b16 %v157
  %v233 = vunpack.c.l.b16 %v158
  %v234 = vunpack.c.h.b16 %v158
  %v235 = vunpack.c.l.b16 %v159
  %v236 = vunpack.c.h.b16 %v159
  %v237 = vunpack.c.l.b16 %v160
  %v238 = vunpack.c.h.b16 %v160
  %v239 = vunpack.c.l.b16 %v161
  %v240 = vunpack.c.h.b16 %v161
  %v241 = vunpack.c.l.b16 %v162
  %v242 = vunpack.c.h.b16 %v162
  %v243 = vunpack.c.l.b16 %v163
  %v244 = vunpack.c.h.b16 %v163
  %v245 = vunpack.c.l.b16 %v164
  %v246 = vunpack.c.h.b16 %v164
  %v247 = vunpack.c.l.b16 %v165
  %v248 = vunpack.c.h.b16 %v165
  %v249 = vunpack.c.l.b16 %v166
  %v250 = vunpack.c.h.b16 %v166
  %v251 = vunpack.c.l.b16 %v167
  %v252 = vunpack.c.h.b16 %v167
  %v253 = vunpack.c.l.b16 %v168
  %v254 = vunpack.c.h.b16 %v168
  %v255 = vpack.c.b16 %v225, %v223
  %v256 = vpack.c.b16 %v226, %v224
  %v257 = vpack.c.b16 %v229, %v227
  %v258 = vpack.c.b16 %v230, %v228
  %v259 = vpack.c.b16 %v233, %v231
  %v260 = vpack.c.b16 %v234, %v232
  %v261 = vpack.c.b16 %v237, %v235
  %v262 = vpack.c.b16 %v238, %v236
  %v263 = vpack.c.b16 %v241, %v239
  %v264 = vpack.c.b16 %v242, %v240
  %v265 = vpack.c.b16 %v245, %v243
  %v266 = vpack.c.b16 %v246, %v244
  %v267 = vpack.c.b16 %v249, %v247
  %v268 = vpack.c.b16 %v250, %v248
  %v269 = vpack.c.b16 %v253, %v251
  %v270 = vpack.c.b16 %v254, %v252
  %287 = vmatpush.bf16.msra.mxu0 %v269
  %288 = vmatpush.bf16.msra.mxu0 %v267
  %289 = vmatpush.bf16.msra.mxu0 %v265
  %290 = vmatpush.bf16.msra.mxu0 %v263
  %291 = vmatpush.bf16.msra.mxu0 %v261
  %292 = vmatpush.bf16.msra.mxu0 %v259
  %293 = vmatpush.bf16.msra.mxu0 %v257
  %294 = vmatpush.bf16.msra.mxu0 %v255
  %295 = vmatmul.bf16.gmra.mxu0 %v205
  %v296 = vpop.f32.mrf.mxu0
  %v297 = vadd.f32 %v171, %v296
  %v298 = vpop.f32.mrf.mxu0
  %299 = vdwg.mxu0
  %300 = vmatpush.bf16.msra.mxu0 %v270
  %301 = vmatpush.bf16.msra.mxu0 %v268
  %302 = vmatpush.bf16.msra.mxu0 %v266
  %303 = vmatpush.bf16.msra.mxu0 %v264
  %304 = vmatpush.bf16.msra.mxu0 %v262
  %305 = vmatpush.bf16.msra.mxu0 %v260
  %306 = vmatpush.bf16.msra.mxu0 %v258
  %307 = vmatpush.bf16.msra.mxu0 %v256
  %308 = vmatmul.bf16.gmra.mxu0 %v205
  %v309 = vpop.f32.mrf.mxu0
  %v310 = vadd.f32 %v172, %v309
  %v311 = vpop.f32.mrf.mxu0
  %312 = vdwg.mxu0
  %v313 = vtanh.pop %v297
  %v314 = vtanh.pop %v310
  %v315 = vpack.c.bf16 %v58, %v58
  %v316 = vpack.c.bf16 %v59, %v59
  %v317 = vpack.c.bf16 %v60, %v60
  %v318 = vpack.c.bf16 %v61, %v61
  %v319 = vpack.c.bf16 %v62, %v62
  %v320 = vpack.c.bf16 %v63, %v63
  %v321 = vpack.c.bf16 %v64, %v64
  %v322 = vpack.c.bf16 %v65, %v65
  %v323 = vpack.c.bf16 %v66, %v66
  %v324 = vpack.c.bf16 %v67, %v67
  %v325 = vpack.c.bf16 %v68, %v68
  %v326 = vpack.c.bf16 %v69, %v69
  %v327 = vpack.c.bf16 %v70, %v70
  %v328 = vpack.c.bf16 %v71, %v71
  %v329 = vpack.c.bf16 %v72, %v72
  %v330 = vpack.c.bf16 %v73, %v73
  %v331 = vld [vmem:[%s3] sm:$0xf]
  %v332 = vld [vmem:[%s3 + $0x4] sm:$0xf]
  %v333 = vld [vmem:[%s3 + $0x8] sm:$0xf]
  %v334 = vld [vmem:[%s3 + $0xc] sm:$0xf]
  %v335 = vld [vmem:[%s3 + $0x10] sm:$0xf]
  %v336 = vld [vmem:[%s3 + $0x14] sm:$0xf]
  %v337 = vld [vmem:[%s3 + $0x18] sm:$0xf]
  %v338 = vld [vmem:[%s3 + $0x1c] sm:$0xf]
  %v339 = vld [vmem:[%s3 + $0x20] sm:$0xf]
  %v340 = vld [vmem:[%s3 + $0x24] sm:$0xf]
  %v341 = vld [vmem:[%s3 + $0x28] sm:$0xf]
  %v342 = vld [vmem:[%s3 + $0x2c] sm:$0xf]
  %v343 = vld [vmem:[%s3 + $0x30] sm:$0xf]
  %v344 = vld [vmem:[%s3 + $0x34] sm:$0xf]
  %v345 = vld [vmem:[%s3 + $0x38] sm:$0xf]
  %v346 = vld [vmem:[%s3 + $0x3c] sm:$0xf]
  %v363 = vunpack.c.l.b16 %v315
  %v364 = vunpack.c.l.b16 %v316
  %v365 = vunpack.c.l.b16 %v317
  %v366 = vunpack.c.l.b16 %v318
  %v367 = vunpack.c.l.b16 %v319
  %v368 = vunpack.c.l.b16 %v320
  %v369 = vunpack.c.l.b16 %v321
  %v370 = vunpack.c.l.b16 %v322
  %v371 = vunpack.c.l.b16 %v323
  %v372 = vunpack.c.l.b16 %v324
  %v373 = vunpack.c.l.b16 %v325
  %v374 = vunpack.c.l.b16 %v326
  %v375 = vunpack.c.l.b16 %v327
  %v376 = vunpack.c.l.b16 %v328
  %v377 = vunpack.c.l.b16 %v329
  %v378 = vunpack.c.l.b16 %v330
  %v379 = vpack.c.b16 %v364, %v363
  %v380 = vpack.c.b16 %v366, %v365
  %v381 = vpack.c.b16 %v368, %v367
  %v382 = vpack.c.b16 %v370, %v369
  %v383 = vpack.c.b16 %v372, %v371
  %v384 = vpack.c.b16 %v374, %v373
  %v385 = vpack.c.b16 %v376, %v375
  %v386 = vpack.c.b16 %v378, %v377
  %v411 = vunpack.c.l.b16 %v331
  %v412 = vunpack.c.l.b16 %v332
  %v413 = vunpack.c.l.b16 %v333
  %v414 = vunpack.c.l.b16 %v334
  %v415 = vunpack.c.l.b16 %v335
  %v416 = vunpack.c.l.b16 %v336
  %v417 = vunpack.c.l.b16 %v337
  %v418 = vunpack.c.l.b16 %v338
  %v419 = vunpack.c.l.b16 %v339
  %v420 = vunpack.c.l.b16 %v340
  %v421 = vunpack.c.l.b16 %v341
  %v422 = vunpack.c.l.b16 %v342
  %v423 = vunpack.c.l.b16 %v343
  %v424 = vunpack.c.l.b16 %v344
  %v425 = vunpack.c.l.b16 %v345
  %v426 = vunpack.c.l.b16 %v346
  %v427 = vpack.c.b16 %v412, %v411
  %v428 = vpack.c.b16 %v414, %v413
  %v429 = vpack.c.b16 %v416, %v415
  %v430 = vpack.c.b16 %v418, %v417
  %v431 = vpack.c.b16 %v420, %v419
  %v432 = vpack.c.b16 %v422, %v421
  %v433 = vpack.c.b16 %v424, %v423
  %v434 = vpack.c.b16 %v426, %v425
  %443 = vmatpush.bf16.msra.mxu0 %v434
  %444 = vmatpush.bf16.msra.mxu0 %v433
  %445 = vmatpush.bf16.msra.mxu0 %v432
  %446 = vmatpush.bf16.msra.mxu0 %v431
  %447 = vmatpush.bf16.msra.mxu0 %v430
  %448 = vmatpush.bf16.msra.mxu0 %v429
  %449 = vmatpush.bf16.msra.mxu0 %v428
  %450 = vmatpush.bf16.msra.mxu0 %v427
  %451 = vmatmul.bf16.gmra.mxu0 %v379
  %v452 = vpop.f32.mrf.mxu0
  %v453 = vadd.f32 0.0, %v452
  %v454 = vpop.f32.mrf.mxu0
  %v455 = vadd.f32 0.0, %v454
  %456 = vmatmul.bf16.gmra.mxu0 %v380
  %v457 = vpop.f32.mrf.mxu0
  %v458 = vadd.f32 0.0, %v457
  %v459 = vpop.f32.mrf.mxu0
  %v460 = vadd.f32 0.0, %v459
  %461 = vmatmul.bf16.gmra.mxu0 %v381
  %v462 = vpop.f32.mrf.mxu0
  %v463 = vadd.f32 0.0, %v462
  %v464 = vpop.f32.mrf.mxu0
  %v465 = vadd.f32 0.0, %v464
  %466 = vmatmul.bf16.gmra.mxu0 %v382
  %v467 = vpop.f32.mrf.mxu0
  %v468 = vadd.f32 0.0, %v467
  %v469 = vpop.f32.mrf.mxu0
  %v470 = vadd.f32 0.0, %v469
  %471 = vmatmul.bf16.gmra.mxu0 %v383
  %v472 = vpop.f32.mrf.mxu0
  %v473 = vadd.f32 0.0, %v472
  %v474 = vpop.f32.mrf.mxu0
  %v475 = vadd.f32 0.0, %v474
  %476 = vmatmul.bf16.gmra.mxu0 %v384
  %v477 = vpop.f32.mrf.mxu0
  %v478 = vadd.f32 0.0, %v477
  %v479 = vpop.f32.mrf.mxu0
  %v480 = vadd.f32 0.0, %v479
  %481 = vmatmul.bf16.gmra.mxu0 %v385
  %v482 = vpop.f32.mrf.mxu0
  %v483 = vadd.f32 0.0, %v482
  %v484 = vpop.f32.mrf.mxu0
  %v485 = vadd.f32 0.0, %v484
  %486 = vmatmul.bf16.gmra.mxu0 %v386
  %v487 = vpop.f32.mrf.mxu0
  %v488 = vadd.f32 0.0, %v487
  %v489 = vpop.f32.mrf.mxu0
  %v490 = vadd.f32 0.0, %v489
  %491 = vdwg.mxu0
  %v492 = vld [vmem:[%s4] sm:$0x1]
  %v494 = vperm.slane %v492, 0
  %v496 = vadd.f32 %v453, %v494
  %v497 = vadd.f32 %v455, %v494
  %v498 = vadd.f32 %v458, %v494
  %v499 = vadd.f32 %v460, %v494
  %v500 = vadd.f32 %v463, %v494
  %v501 = vadd.f32 %v465, %v494
  %v502 = vadd.f32 %v468, %v494
  %v503 = vadd.f32 %v470, %v494
  %v504 = vadd.f32 %v473, %v494
  %v505 = vadd.f32 %v475, %v494
  %v506 = vadd.f32 %v478, %v494
  %v507 = vadd.f32 %v480, %v494
  %v508 = vadd.f32 %v483, %v494
  %v509 = vadd.f32 %v485, %v494
  %v510 = vadd.f32 %v488, %v494
  %v511 = vadd.f32 %v490, %v494
  %v512 = vld [vmem:[%s9] sm:$0x1]
  %v514 = vpack.i.b16 %v512, %v512
  %v516 = vperm.slane %v514, 0
  %v517 = vpack.c.bf16 %v313, %v313
  %v518 = vld [vmem:[%s5] sm:$0xff]
  %v519 = vld [vmem:[%s5 + $0x8] sm:$0xff]
  %v520 = vld [vmem:[%s5 + $0x10] sm:$0xff]
  %v521 = vld [vmem:[%s5 + $0x18] sm:$0xff]
  %v522 = vld [vmem:[%s5 + $0x20] sm:$0xff]
  %v523 = vld [vmem:[%s5 + $0x28] sm:$0xff]
  %v524 = vld [vmem:[%s5 + $0x30] sm:$0xff]
  %v525 = vld [vmem:[%s5 + $0x38] sm:$0xff]
  %v526 = vld [vmem:[%s5 + $0x40] sm:$0xff]
  %v527 = vld [vmem:[%s5 + $0x48] sm:$0xff]
  %v528 = vld [vmem:[%s5 + $0x50] sm:$0xff]
  %v529 = vld [vmem:[%s5 + $0x58] sm:$0xff]
  %v530 = vld [vmem:[%s5 + $0x60] sm:$0xff]
  %v531 = vld [vmem:[%s5 + $0x68] sm:$0xff]
  %v532 = vld [vmem:[%s5 + $0x70] sm:$0xff]
  %v533 = vld [vmem:[%s5 + $0x78] sm:$0xff]
  %v534 = vld [vmem:[%s5 + $0x80] sm:$0xff]
  %v535 = vld [vmem:[%s5 + $0x88] sm:$0xff]
  %v536 = vld [vmem:[%s5 + $0x90] sm:$0xff]
  %v537 = vld [vmem:[%s5 + $0x98] sm:$0xff]
  %v538 = vld [vmem:[%s5 + $0xa0] sm:$0xff]
  %v539 = vld [vmem:[%s5 + $0xa8] sm:$0xff]
  %v540 = vld [vmem:[%s5 + $0xb0] sm:$0xff]
  %v541 = vld [vmem:[%s5 + $0xb8] sm:$0xff]
  %v542 = vld [vmem:[%s5 + $0xc0] sm:$0xff]
  %v543 = vld [vmem:[%s5 + $0xc8] sm:$0xff]
  %v544 = vld [vmem:[%s5 + $0xd0] sm:$0xff]
  %v545 = vld [vmem:[%s5 + $0xd8] sm:$0xff]
  %v546 = vld [vmem:[%s5 + $0xe0] sm:$0xff]
  %v547 = vld [vmem:[%s5 + $0xe8] sm:$0xff]
  %v548 = vld [vmem:[%s5 + $0xf0] sm:$0xff]
  %v549 = vld [vmem:[%s5 + $0xf8] sm:$0xff]
  %v550 = vld [vmem:[%s5 + $0x100] sm:$0xff]
  %v551 = vld [vmem:[%s5 + $0x108] sm:$0xff]
  %v552 = vld [vmem:[%s5 + $0x110] sm:$0xff]
  %v553 = vld [vmem:[%s5 + $0x118] sm:$0xff]
  %v554 = vld [vmem:[%s5 + $0x120] sm:$0xff]
  %v555 = vld [vmem:[%s5 + $0x128] sm:$0xff]
  %v556 = vld [vmem:[%s5 + $0x130] sm:$0xff]
  %v557 = vld [vmem:[%s5 + $0x138] sm:$0xff]
  %v558 = vld [vmem:[%s5 + $0x140] sm:$0xff]
  %v559 = vld [vmem:[%s5 + $0x148] sm:$0xff]
  %v560 = vld [vmem:[%s5 + $0x150] sm:$0xff]
  %v561 = vld [vmem:[%s5 + $0x158] sm:$0xff]
  %v562 = vld [vmem:[%s5 + $0x160] sm:$0xff]
  %v563 = vld [vmem:[%s5 + $0x168] sm:$0xff]
  %v564 = vld [vmem:[%s5 + $0x170] sm:$0xff]
  %v565 = vld [vmem:[%s5 + $0x178] sm:$0xff]
  %v567 = vperm.slane %v50, 0
  %v568 = vperm.slane %v50, 1
  %v569 = vperm.slane %v50, 2
  %v570 = vperm.slane %v50, 3
  %v571 = vperm.slane %v50, 4
  %v572 = vperm.slane %v50, 5
  %v627 = vunpack.c.l.b16 %v518
  %v628 = vunpack.c.h.b16 %v518
  %v629 = vunpack.c.l.b16 %v519
  %v630 = vunpack.c.h.b16 %v519
  %v631 = vunpack.c.l.b16 %v520
  %v632 = vunpack.c.h.b16 %v520
  %v633 = vunpack.c.l.b16 %v521
  %v634 = vunpack.c.h.b16 %v521
  %v635 = vunpack.c.l.b16 %v522
  %v636 = vunpack.c.h.b16 %v522
  %v637 = vunpack.c.l.b16 %v523
  %v638 = vunpack.c.h.b16 %v523
  %v639 = vunpack.c.l.b16 %v524
  %v640 = vunpack.c.h.b16 %v524
  %v641 = vunpack.c.l.b16 %v525
  %v642 = vunpack.c.h.b16 %v525
  %v643 = vunpack.c.l.b16 %v526
  %v644 = vunpack.c.h.b16 %v526
  %v645 = vunpack.c.l.b16 %v527
  %v646 = vunpack.c.h.b16 %v527
  %v647 = vunpack.c.l.b16 %v528
  %v648 = vunpack.c.h.b16 %v528
  %v649 = vunpack.c.l.b16 %v529
  %v650 = vunpack.c.h.b16 %v529
  %v651 = vunpack.c.l.b16 %v530
  %v652 = vunpack.c.h.b16 %v530
  %v653 = vunpack.c.l.b16 %v531
  %v654 = vunpack.c.h.b16 %v531
  %v655 = vunpack.c.l.b16 %v532
  %v656 = vunpack.c.h.b16 %v532
  %v657 = vunpack.c.l.b16 %v533
  %v658 = vunpack.c.h.b16 %v533
  %v659 = vunpack.c.l.b16 %v534
  %v660 = vunpack.c.h.b16 %v534
  %v661 = vunpack.c.l.b16 %v535
  %v662 = vunpack.c.h.b16 %v535
  %v663 = vunpack.c.l.b16 %v536
  %v664 = vunpack.c.h.b16 %v536
  %v665 = vunpack.c.l.b16 %v537
  %v666 = vunpack.c.h.b16 %v537
  %v667 = vunpack.c.l.b16 %v538
  %v668 = vunpack.c.h.b16 %v538
  %v669 = vunpack.c.l.b16 %v539
  %v670 = vunpack.c.h.b16 %v539
  %v671 = vunpack.c.l.b16 %v540
  %v672 = vunpack.c.h.b16 %v540
  %v673 = vunpack.c.l.b16 %v541
  %v674 = vunpack.c.h.b16 %v541
  %v675 = vunpack.c.l.b16 %v542
  %v676 = vunpack.c.h.b16 %v542
  %v677 = vunpack.c.l.b16 %v543
  %v678 = vunpack.c.h.b16 %v543
  %v679 = vunpack.c.l.b16 %v544
  %v680 = vunpack.c.h.b16 %v544
  %v681 = vunpack.c.l.b16 %v545
  %v682 = vunpack.c.h.b16 %v545
  %v683 = vunpack.c.l.b16 %v546
  %v684 = vunpack.c.h.b16 %v546
  %v685 = vunpack.c.l.b16 %v547
  %v686 = vunpack.c.h.b16 %v547
  %v687 = vunpack.c.l.b16 %v548
  %v688 = vunpack.c.h.b16 %v548
  %v689 = vunpack.c.l.b16 %v549
  %v690 = vunpack.c.h.b16 %v549
  %v691 = vunpack.c.l.b16 %v550
  %v692 = vunpack.c.h.b16 %v550
  %v693 = vunpack.c.l.b16 %v551
  %v694 = vunpack.c.h.b16 %v551
  %v695 = vunpack.c.l.b16 %v552
  %v696 = vunpack.c.h.b16 %v552
  %v697 = vunpack.c.l.b16 %v553
  %v698 = vunpack.c.h.b16 %v553
  %v699 = vunpack.c.l.b16 %v554
  %v700 = vunpack.c.h.b16 %v554
  %v701 = vunpack.c.l.b16 %v555
  %v702 = vunpack.c.h.b16 %v555
  %v703 = vunpack.c.l.b16 %v556
  %v704 = vunpack.c.h.b16 %v556
  %v705 = vunpack.c.l.b16 %v557
  %v706 = vunpack.c.h.b16 %v557
  %v707 = vunpack.c.l.b16 %v558
  %v708 = vunpack.c.h.b16 %v558
  %v709 = vunpack.c.l.b16 %v559
  %v710 = vunpack.c.h.b16 %v559
  %v711 = vunpack.c.l.b16 %v560
  %v712 = vunpack.c.h.b16 %v560
  %v713 = vunpack.c.l.b16 %v561
  %v714 = vunpack.c.h.b16 %v561
  %v715 = vunpack.c.l.b16 %v562
  %v716 = vunpack.c.h.b16 %v562
  %v717 = vunpack.c.l.b16 %v563
  %v718 = vunpack.c.h.b16 %v563
  %v719 = vunpack.c.l.b16 %v564
  %v720 = vunpack.c.h.b16 %v564
  %v721 = vunpack.c.l.b16 %v565
  %v722 = vunpack.c.h.b16 %v565
  %v723 = vpack.c.b16 %v633, %v627
  %v724 = vpack.c.b16 %v634, %v628
  %v725 = vpack.c.b16 %v635, %v629
  %v726 = vpack.c.b16 %v636, %v630
  %v727 = vpack.c.b16 %v637, %v631
  %v728 = vpack.c.b16 %v638, %v632
  %v729 = vpack.c.b16 %v645, %v639
  %v730 = vpack.c.b16 %v646, %v640
  %v731 = vpack.c.b16 %v647, %v641
  %v732 = vpack.c.b16 %v648, %v642
  %v733 = vpack.c.b16 %v649, %v643
  %v734 = vpack.c.b16 %v650, %v644
  %v735 = vpack.c.b16 %v657, %v651
  %v736 = vpack.c.b16 %v658, %v652
  %v737 = vpack.c.b16 %v659, %v653
  %v738 = vpack.c.b16 %v660, %v654
  %v739 = vpack.c.b16 %v661, %v655
  %v740 = vpack.c.b16 %v662, %v656
  %v741 = vpack.c.b16 %v669, %v663
  %v742 = vpack.c.b16 %v670, %v664
  %v743 = vpack.c.b16 %v671, %v665
  %v744 = vpack.c.b16 %v672, %v666
  %v745 = vpack.c.b16 %v673, %v667
  %v746 = vpack.c.b16 %v674, %v668
  %v747 = vpack.c.b16 %v681, %v675
  %v748 = vpack.c.b16 %v682, %v676
  %v749 = vpack.c.b16 %v683, %v677
  %v750 = vpack.c.b16 %v684, %v678
  %v751 = vpack.c.b16 %v685, %v679
  %v752 = vpack.c.b16 %v686, %v680
  %v753 = vpack.c.b16 %v693, %v687
  %v754 = vpack.c.b16 %v694, %v688
  %v755 = vpack.c.b16 %v695, %v689
  %v756 = vpack.c.b16 %v696, %v690
  %v757 = vpack.c.b16 %v697, %v691
  %v758 = vpack.c.b16 %v698, %v692
  %v759 = vpack.c.b16 %v705, %v699
  %v760 = vpack.c.b16 %v706, %v700
  %v761 = vpack.c.b16 %v707, %v701
  %v762 = vpack.c.b16 %v708, %v702
  %v763 = vpack.c.b16 %v709, %v703
  %v764 = vpack.c.b16 %v710, %v704
  %v765 = vpack.c.b16 %v717, %v711
  %v766 = vpack.c.b16 %v718, %v712
  %v767 = vpack.c.b16 %v719, %v713
  %v768 = vpack.c.b16 %v720, %v714
  %v769 = vpack.c.b16 %v721, %v715
  %v770 = vpack.c.b16 %v722, %v716
  %819 = vmatpush.bf16.msra.mxu0 %v765
  %820 = vmatpush.bf16.msra.mxu0 %v759
  %821 = vmatpush.bf16.msra.mxu0 %v753
  %822 = vmatpush.bf16.msra.mxu0 %v747
  %823 = vmatpush.bf16.msra.mxu0 %v741
  %824 = vmatpush.bf16.msra.mxu0 %v735
  %825 = vmatpush.bf16.msra.mxu0 %v729
  %826 = vmatpush.bf16.msra.mxu0 %v723
  %827 = vmatmul.bf16.gmra.mxu0 %v517
  %v828 = vpop.f32.mrf.mxu0
  %v829 = vadd.f32 %v567, %v828
  %v830 = vpop.f32.mrf.mxu0
  %831 = vdwg.mxu0
  %832 = vmatpush.bf16.msra.mxu0 %v766
  %833 = vmatpush.bf16.msra.mxu0 %v760
  %834 = vmatpush.bf16.msra.mxu0 %v754
  %835 = vmatpush.bf16.msra.mxu0 %v748
  %836 = vmatpush.bf16.msra.mxu0 %v742
  %837 = vmatpush.bf16.msra.mxu0 %v736
  %838 = vmatpush.bf16.msra.mxu0 %v730
  %839 = vmatpush.bf16.msra.mxu0 %v724
  %840 = vmatmul.bf16.gmra.mxu0 %v517
  %v841 = vpop.f32.mrf.mxu0
  %v842 = vadd.f32 %v568, %v841
  %v843 = vpop.f32.mrf.mxu0
  %844 = vdwg.mxu0
  %845 = vmatpush.bf16.msra.mxu0 %v767
  %846 = vmatpush.bf16.msra.mxu0 %v761
  %847 = vmatpush.bf16.msra.mxu0 %v755
  %848 = vmatpush.bf16.msra.mxu0 %v749
  %849 = vmatpush.bf16.msra.mxu0 %v743
  %850 = vmatpush.bf16.msra.mxu0 %v737
  %851 = vmatpush.bf16.msra.mxu0 %v731
  %852 = vmatpush.bf16.msra.mxu0 %v725
  %853 = vmatmul.bf16.gmra.mxu0 %v517
  %v854 = vpop.f32.mrf.mxu0
  %v855 = vadd.f32 %v569, %v854
  %v856 = vpop.f32.mrf.mxu0
  %857 = vdwg.mxu0
  %858 = vmatpush.bf16.msra.mxu0 %v768
  %859 = vmatpush.bf16.msra.mxu0 %v762
  %860 = vmatpush.bf16.msra.mxu0 %v756
  %861 = vmatpush.bf16.msra.mxu0 %v750
  %862 = vmatpush.bf16.msra.mxu0 %v744
  %863 = vmatpush.bf16.msra.mxu0 %v738
  %864 = vmatpush.bf16.msra.mxu0 %v732
  %865 = vmatpush.bf16.msra.mxu0 %v726
  %866 = vmatmul.bf16.gmra.mxu0 %v517
  %v867 = vpop.f32.mrf.mxu0
  %v868 = vadd.f32 %v570, %v867
  %v869 = vpop.f32.mrf.mxu0
  %870 = vdwg.mxu0
  %871 = vmatpush.bf16.msra.mxu0 %v769
  %872 = vmatpush.bf16.msra.mxu0 %v763
  %873 = vmatpush.bf16.msra.mxu0 %v757
  %874 = vmatpush.bf16.msra.mxu0 %v751
  %875 = vmatpush.bf16.msra.mxu0 %v745
  %876 = vmatpush.bf16.msra.mxu0 %v739
  %877 = vmatpush.bf16.msra.mxu0 %v733
  %878 = vmatpush.bf16.msra.mxu0 %v727
  %879 = vmatmul.bf16.gmra.mxu0 %v517
  %v880 = vpop.f32.mrf.mxu0
  %v881 = vadd.f32 %v571, %v880
  %v882 = vpop.f32.mrf.mxu0
  %883 = vdwg.mxu0
  %884 = vmatpush.bf16.msra.mxu0 %v770
  %885 = vmatpush.bf16.msra.mxu0 %v764
  %886 = vmatpush.bf16.msra.mxu0 %v758
  %887 = vmatpush.bf16.msra.mxu0 %v752
  %888 = vmatpush.bf16.msra.mxu0 %v746
  %889 = vmatpush.bf16.msra.mxu0 %v740
  %890 = vmatpush.bf16.msra.mxu0 %v734
  %891 = vmatpush.bf16.msra.mxu0 %v728
  %892 = vmatmul.bf16.gmra.mxu0 %v517
  %v893 = vpop.f32.mrf.mxu0
  %v894 = vadd.f32 %v572, %v893
  %v895 = vpop.f32.mrf.mxu0
  %896 = vdwg.mxu0
  %v897 = vxor.u32 %v842, 2147483648
  %v898 = vmul.f32 %v897, 1.442695
  %v899 = vpow.pop %v898
  %v900 = vadd.f32 %v899, 1.0
  %v901 = vrcp.pop %v900
  %v902 = vmul.f32 %v900, %v901
  %v903 = vsub.f32 1.0, %v902
  %v904 = vmul.f32 %v901, %v903
  %v905 = vadd.f32 %v901, %v904
  %vm906 = vweird.f32 %v900
  %vm907 = vweird.f32 %v901
  %vm908 = vmor %vm906, %vm907
  %v909 = vsel %vm908, %v901, %v905
  %v910 = vand.u32 2147483647, %v900
  %vm911 = vcmp.eq.f32.partialorder %v910, 8.507059e+37
  %v912 = vand.u32 %v900, 2147483648
  %v913 = vor.u32 1.1754944e-38, %v912
  %v914 = vsel %vm911, %v913, %v909
  %v915 = vmul.f32 1.0, %v914
  %v917 = vrot.slane %v829, 1
  %v918 = vrot.slane %v829, 2
  %v919 = vrot.slane %v829, 3
  %v920 = vrot.slane %v829, 4
  %v921 = vrot.slane %v829, 5
  %v922 = vrot.slane %v829, 6
  %v923 = vrot.slane %v829, 7
  %v924 = vperm.slane %v829, 0
  %v925 = vperm.slane %v917, 0
  %v926 = vperm.slane %v918, 0
  %v927 = vperm.slane %v919, 0
  %v928 = vperm.slane %v920, 0
  %v929 = vperm.slane %v921, 0
  %v930 = vperm.slane %v922, 0
  %v931 = vperm.slane %v923, 0
  %v940 = vadd.f32 %v496, %v924
  %v941 = vadd.f32 %v497, %v924
  %v942 = vadd.f32 %v498, %v925
  %v943 = vadd.f32 %v499, %v925
  %v944 = vadd.f32 %v500, %v926
  %v945 = vadd.f32 %v501, %v926
  %v946 = vadd.f32 %v502, %v927
  %v947 = vadd.f32 %v503, %v927
  %v948 = vadd.f32 %v504, %v928
  %v949 = vadd.f32 %v505, %v928
  %v950 = vadd.f32 %v506, %v929
  %v951 = vadd.f32 %v507, %v929
  %v952 = vadd.f32 %v508, %v930
  %v953 = vadd.f32 %v509, %v930
  %v954 = vadd.f32 %v510, %v931
  %v955 = vadd.f32 %v511, %v931
  %v956 = vtanh.pop %v940
  %v957 = vtanh.pop %v941
  %v958 = vtanh.pop %v942
  %v959 = vtanh.pop %v943
  %v960 = vtanh.pop %v944
  %v961 = vtanh.pop %v945
  %v962 = vtanh.pop %v946
  %v963 = vtanh.pop %v947
  %v964 = vtanh.pop %v948
  %v965 = vtanh.pop %v949
  %v966 = vtanh.pop %v950
  %v967 = vtanh.pop %v951
  %v968 = vtanh.pop %v952
  %v969 = vtanh.pop %v953
  %v970 = vtanh.pop %v954
  %v971 = vtanh.pop %v955
  %v973 = vperm.slane %v53, 0
  %v975 = vmul.f32 %v956, %v973
  %v976 = vmul.f32 %v957, %v973
  %v977 = vmul.f32 %v958, %v973
  %v978 = vmul.f32 %v959, %v973
  %v979 = vmul.f32 %v960, %v973
  %v980 = vmul.f32 %v961, %v973
  %v981 = vmul.f32 %v962, %v973
  %v982 = vmul.f32 %v963, %v973
  %v983 = vmul.f32 %v964, %v973
  %v984 = vmul.f32 %v965, %v973
  %v985 = vmul.f32 %v966, %v973
  %v986 = vmul.f32 %v967, %v973
  %v987 = vmul.f32 %v968, %v973
  %v988 = vmul.f32 %v969, %v973
  %v989 = vmul.f32 %v970, %v973
  %v990 = vmul.f32 %v971, %v973
  %991 = vadd.xlane.f32.xlu0 %v975
  %v992 = vpop.xlane.xlu0 %991
  %993 = vadd.xlane.f32.xlu0 %v976
  %v994 = vpop.xlane.xlu0 %993
  %995 = vadd.xlane.f32.xlu0 %v977
  %v996 = vpop.xlane.xlu0 %995
  %997 = vadd.xlane.f32.xlu0 %v978
  %v998 = vpop.xlane.xlu0 %997
  %999 = vadd.xlane.f32.xlu0 %v979
  %v1000 = vpop.xlane.xlu0 %999
  %1001 = vadd.xlane.f32.xlu0 %v980
  %v1002 = vpop.xlane.xlu0 %1001
  %1003 = vadd.xlane.f32.xlu0 %v981
  %v1004 = vpop.xlane.xlu0 %1003
  %1005 = vadd.xlane.f32.xlu0 %v982
  %v1006 = vpop.xlane.xlu0 %1005
  %1007 = vadd.xlane.f32.xlu0 %v983
  %v1008 = vpop.xlane.xlu0 %1007
  %1009 = vadd.xlane.f32.xlu0 %v984
  %v1010 = vpop.xlane.xlu0 %1009
  %1011 = vadd.xlane.f32.xlu0 %v985
  %v1012 = vpop.xlane.xlu0 %1011
  %1013 = vadd.xlane.f32.xlu0 %v986
  %v1014 = vpop.xlane.xlu0 %1013
  %1015 = vadd.xlane.f32.xlu0 %v987
  %v1016 = vpop.xlane.xlu0 %1015
  %1017 = vadd.xlane.f32.xlu0 %v988
  %v1018 = vpop.xlane.xlu0 %1017
  %1019 = vadd.xlane.f32.xlu0 %v989
  %v1020 = vpop.xlane.xlu0 %1019
  %1021 = vadd.xlane.f32.xlu0 %v990
  %v1022 = vpop.xlane.xlu0 %1021
  %v1023 = vstv %s54
  %v1024 = vadd.f32 %v992, %v1023
  %v1025 = vadd.f32 %v994, %v1023
  %v1026 = vadd.f32 %v996, %v1023
  %v1027 = vadd.f32 %v998, %v1023
  %v1028 = vadd.f32 %v1000, %v1023
  %v1029 = vadd.f32 %v1002, %v1023
  %v1030 = vadd.f32 %v1004, %v1023
  %v1031 = vadd.f32 %v1006, %v1023
  %v1032 = vadd.f32 %v1008, %v1023
  %v1033 = vadd.f32 %v1010, %v1023
  %v1034 = vadd.f32 %v1012, %v1023
  %v1035 = vadd.f32 %v1014, %v1023
  %v1036 = vadd.f32 %v1016, %v1023
  %v1037 = vadd.f32 %v1018, %v1023
  %v1038 = vadd.f32 %v1020, %v1023
  %v1039 = vadd.f32 %v1022, %v1023
  %v1040 = vmax.f32 %v1024, %v1025
  %v1041 = vrot.slane %v1040, 4
  %v1042 = vmax.f32 %v1040, %v1041
  %v1043 = vrot.slane %v1042, 2
  %v1044 = vmax.f32 %v1042, %v1043
  %v1045 = vrot.slane %v1044, 1
  %v1046 = vmax.f32 %v1044, %v1045
  %v1047 = vmax.f32 %v1026, %v1027
  %v1048 = vrot.slane %v1047, 4
  %v1049 = vmax.f32 %v1047, %v1048
  %v1050 = vrot.slane %v1049, 2
  %v1051 = vmax.f32 %v1049, %v1050
  %v1052 = vrot.slane %v1051, 1
  %v1053 = vmax.f32 %v1051, %v1052
  %v1054 = vmax.f32 %v1028, %v1029
  %v1055 = vrot.slane %v1054, 4
  %v1056 = vmax.f32 %v1054, %v1055
  %v1057 = vrot.slane %v1056, 2
  %v1058 = vmax.f32 %v1056, %v1057
  %v1059 = vrot.slane %v1058, 1
  %v1060 = vmax.f32 %v1058, %v1059
  %v1061 = vmax.f32 %v1030, %v1031
  %v1062 = vrot.slane %v1061, 4
  %v1063 = vmax.f32 %v1061, %v1062
  %v1064 = vrot.slane %v1063, 2
  %v1065 = vmax.f32 %v1063, %v1064
  %v1066 = vrot.slane %v1065, 1
  %v1067 = vmax.f32 %v1065, %v1066
  %v1068 = vmax.f32 %v1032, %v1033
  %v1069 = vrot.slane %v1068, 4
  %v1070 = vmax.f32 %v1068, %v1069
  %v1071 = vrot.slane %v1070, 2
  %v1072 = vmax.f32 %v1070, %v1071
  %v1073 = vrot.slane %v1072, 1
  %v1074 = vmax.f32 %v1072, %v1073
  %v1075 = vmax.f32 %v1034, %v1035
  %v1076 = vrot.slane %v1075, 4
  %v1077 = vmax.f32 %v1075, %v1076
  %v1078 = vrot.slane %v1077, 2
  %v1079 = vmax.f32 %v1077, %v1078
  %v1080 = vrot.slane %v1079, 1
  %v1081 = vmax.f32 %v1079, %v1080
  %v1082 = vmax.f32 %v1036, %v1037
  %v1083 = vrot.slane %v1082, 4
  %v1084 = vmax.f32 %v1082, %v1083
  %v1085 = vrot.slane %v1084, 2
  %v1086 = vmax.f32 %v1084, %v1085
  %v1087 = vrot.slane %v1086, 1
  %v1088 = vmax.f32 %v1086, %v1087
  %v1089 = vmax.f32 %v1038, %v1039
  %v1090 = vrot.slane %v1089, 4
  %v1091 = vmax.f32 %v1089, %v1090
  %v1092 = vrot.slane %v1091, 2
  %v1093 = vmax.f32 %v1091, %v1092
  %v1094 = vrot.slane %v1093, 1
  %v1095 = vmax.f32 %v1093, %v1094
  %v1096 = vsub.f32 %v1024, %v1046
  %v1097 = vsub.f32 %v1025, %v1046
  %v1098 = vsub.f32 %v1026, %v1053
  %v1099 = vsub.f32 %v1027, %v1053
  %v1100 = vsub.f32 %v1028, %v1060
  %v1101 = vsub.f32 %v1029, %v1060
  %v1102 = vsub.f32 %v1030, %v1067
  %v1103 = vsub.f32 %v1031, %v1067
  %v1104 = vsub.f32 %v1032, %v1074
  %v1105 = vsub.f32 %v1033, %v1074
  %v1106 = vsub.f32 %v1034, %v1081
  %v1107 = vsub.f32 %v1035, %v1081
  %v1108 = vsub.f32 %v1036, %v1088
  %v1109 = vsub.f32 %v1037, %v1088
  %v1110 = vsub.f32 %v1038, %v1095
  %v1111 = vsub.f32 %v1039, %v1095
  %v1112 = vmul.f32 %v1096, 1.442695
  %v1113 = vpow.pop %v1112
  %v1114 = vmul.f32 %v1097, 1.442695
  %v1115 = vpow.pop %v1114
  %v1116 = vmul.f32 %v1098, 1.442695
  %v1117 = vpow.pop %v1116
  %v1118 = vmul.f32 %v1099, 1.442695
  %v1119 = vpow.pop %v1118
  %v1120 = vmul.f32 %v1100, 1.442695
  %v1121 = vpow.pop %v1120
  %v1122 = vmul.f32 %v1101, 1.442695
  %v1123 = vpow.pop %v1122
  %v1124 = vmul.f32 %v1102, 1.442695
  %v1125 = vpow.pop %v1124
  %v1126 = vmul.f32 %v1103, 1.442695
  %v1127 = vpow.pop %v1126
  %v1128 = vmul.f32 %v1104, 1.442695
  %v1129 = vpow.pop %v1128
  %v1130 = vmul.f32 %v1105, 1.442695
  %v1131 = vpow.pop %v1130
  %v1132 = vmul.f32 %v1106, 1.442695
  %v1133 = vpow.pop %v1132
  %v1134 = vmul.f32 %v1107, 1.442695
  %v1135 = vpow.pop %v1134
  %v1136 = vmul.f32 %v1108, 1.442695
  %v1137 = vpow.pop %v1136
  %v1138 = vmul.f32 %v1109, 1.442695
  %v1139 = vpow.pop %v1138
  %v1140 = vmul.f32 %v1110, 1.442695
  %v1141 = vpow.pop %v1140
  %v1142 = vmul.f32 %v1111, 1.442695
  %v1143 = vpow.pop %v1142
  %v1144 = vadd.f32 %v1113, %v1115
  %v1145 = vrot.slane %v1144, 4
  %v1146 = vadd.f32 %v1144, %v1145
  %v1147 = vrot.slane %v1146, 2
  %v1148 = vadd.f32 %v1146, %v1147
  %v1149 = vrot.slane %v1148, 1
  %v1150 = vadd.f32 %v1148, %v1149
  %v1151 = vadd.f32 %v1117, %v1119
  %v1152 = vrot.slane %v1151, 4
  %v1153 = vadd.f32 %v1151, %v1152
  %v1154 = vrot.slane %v1153, 2
  %v1155 = vadd.f32 %v1153, %v1154
  %v1156 = vrot.slane %v1155, 1
  %v1157 = vadd.f32 %v1155, %v1156
  %v1158 = vadd.f32 %v1121, %v1123
  %v1159 = vrot.slane %v1158, 4
  %v1160 = vadd.f32 %v1158, %v1159
  %v1161 = vrot.slane %v1160, 2
  %v1162 = vadd.f32 %v1160, %v1161
  %v1163 = vrot.slane %v1162, 1
  %v1164 = vadd.f32 %v1162, %v1163
  %v1165 = vadd.f32 %v1125, %v1127
  %v1166 = vrot.slane %v1165, 4
  %v1167 = vadd.f32 %v1165, %v1166
  %v1168 = vrot.slane %v1167, 2
  %v1169 = vadd.f32 %v1167, %v1168
  %v1170 = vrot.slane %v1169, 1
  %v1171 = vadd.f32 %v1169, %v1170
  %v1172 = vadd.f32 %v1129, %v1131
  %v1173 = vrot.slane %v1172, 4
  %v1174 = vadd.f32 %v1172, %v1173
  %v1175 = vrot.slane %v1174, 2
  %v1176 = vadd.f32 %v1174, %v1175
  %v1177 = vrot.slane %v1176, 1
  %v1178 = vadd.f32 %v1176, %v1177
  %v1179 = vadd.f32 %v1133, %v1135
  %v1180 = vrot.slane %v1179, 4
  %v1181 = vadd.f32 %v1179, %v1180
  %v1182 = vrot.slane %v1181, 2
  %v1183 = vadd.f32 %v1181, %v1182
  %v1184 = vrot.slane %v1183, 1
  %v1185 = vadd.f32 %v1183, %v1184
  %v1186 = vadd.f32 %v1137, %v1139
  %v1187 = vrot.slane %v1186, 4
  %v1188 = vadd.f32 %v1186, %v1187
  %v1189 = vrot.slane %v1188, 2
  %v1190 = vadd.f32 %v1188, %v1189
  %v1191 = vrot.slane %v1190, 1
  %v1192 = vadd.f32 %v1190, %v1191
  %v1193 = vadd.f32 %v1141, %v1143
  %v1194 = vrot.slane %v1193, 4
  %v1195 = vadd.f32 %v1193, %v1194
  %v1196 = vrot.slane %v1195, 2
  %v1197 = vadd.f32 %v1195, %v1196
  %v1198 = vrot.slane %v1197, 1
  %v1199 = vadd.f32 %v1197, %v1198
  %v1200 = vrcp.pop %v1150
  %v1201 = vmul.f32 %v1150, %v1200
  %v1202 = vsub.f32 1.0, %v1201
  %v1203 = vmul.f32 %v1200, %v1202
  %v1204 = vadd.f32 %v1200, %v1203
  %vm1205 = vweird.f32 %v1150
  %vm1206 = vweird.f32 %v1200
  %vm1207 = vmor %vm1205, %vm1206
  %v1208 = vsel %vm1207, %v1200, %v1204
  %v1209 = vand.u32 2147483647, %v1150
  %vm1210 = vcmp.eq.f32.partialorder %v1209, 8.507059e+37
  %v1211 = vand.u32 %v1150, 2147483648
  %v1212 = vor.u32 1.1754944e-38, %v1211
  %v1213 = vsel %vm1210, %v1212, %v1208
  %v1214 = vmul.f32 %v1113, %v1213
  %v1215 = vmul.f32 %v1115, %v1213
  %v1216 = vrcp.pop %v1157
  %v1217 = vmul.f32 %v1157, %v1216
  %v1218 = vsub.f32 1.0, %v1217
  %v1219 = vmul.f32 %v1216, %v1218
  %v1220 = vadd.f32 %v1216, %v1219
  %vm1221 = vweird.f32 %v1157
  %vm1222 = vweird.f32 %v1216
  %vm1223 = vmor %vm1221, %vm1222
  %v1224 = vsel %vm1223, %v1216, %v1220
  %v1225 = vand.u32 2147483647, %v1157
  %vm1226 = vcmp.eq.f32.partialorder %v1225, 8.507059e+37
  %v1227 = vand.u32 %v1157, 2147483648
  %v1228 = vor.u32 1.1754944e-38, %v1227
  %v1229 = vsel %vm1226, %v1228, %v1224
  %v1230 = vmul.f32 %v1117, %v1229
  %v1231 = vmul.f32 %v1119, %v1229
  %v1232 = vrcp.pop %v1164
  %v1233 = vmul.f32 %v1164, %v1232
  %v1234 = vsub.f32 1.0, %v1233
  %v1235 = vmul.f32 %v1232, %v1234
  %v1236 = vadd.f32 %v1232, %v1235
  %vm1237 = vweird.f32 %v1164
  %vm1238 = vweird.f32 %v1232
  %vm1239 = vmor %vm1237, %vm1238
  %v1240 = vsel %vm1239, %v1232, %v1236
  %v1241 = vand.u32 2147483647, %v1164
  %vm1242 = vcmp.eq.f32.partialorder %v1241, 8.507059e+37
  %v1243 = vand.u32 %v1164, 2147483648
  %v1244 = vor.u32 1.1754944e-38, %v1243
  %v1245 = vsel %vm1242, %v1244, %v1240
  %v1246 = vmul.f32 %v1121, %v1245
  %v1247 = vmul.f32 %v1123, %v1245
  %v1248 = vrcp.pop %v1171
  %v1249 = vmul.f32 %v1171, %v1248
  %v1250 = vsub.f32 1.0, %v1249
  %v1251 = vmul.f32 %v1248, %v1250
  %v1252 = vadd.f32 %v1248, %v1251
  %vm1253 = vweird.f32 %v1171
  %vm1254 = vweird.f32 %v1248
  %vm1255 = vmor %vm1253, %vm1254
  %v1256 = vsel %vm1255, %v1248, %v1252
  %v1257 = vand.u32 2147483647, %v1171
  %vm1258 = vcmp.eq.f32.partialorder %v1257, 8.507059e+37
  %v1259 = vand.u32 %v1171, 2147483648
  %v1260 = vor.u32 1.1754944e-38, %v1259
  %v1261 = vsel %vm1258, %v1260, %v1256
  %v1262 = vmul.f32 %v1125, %v1261
  %v1263 = vmul.f32 %v1127, %v1261
  %v1264 = vrcp.pop %v1178
  %v1265 = vmul.f32 %v1178, %v1264
  %v1266 = vsub.f32 1.0, %v1265
  %v1267 = vmul.f32 %v1264, %v1266
  %v1268 = vadd.f32 %v1264, %v1267
  %vm1269 = vweird.f32 %v1178
  %vm1270 = vweird.f32 %v1264
  %vm1271 = vmor %vm1269, %vm1270
  %v1272 = vsel %vm1271, %v1264, %v1268
  %v1273 = vand.u32 2147483647, %v1178
  %vm1274 = vcmp.eq.f32.partialorder %v1273, 8.507059e+37
  %v1275 = vand.u32 %v1178, 2147483648
  %v1276 = vor.u32 1.1754944e-38, %v1275
  %v1277 = vsel %vm1274, %v1276, %v1272
  %v1278 = vmul.f32 %v1129, %v1277
  %v1279 = vmul.f32 %v1131, %v1277
  %v1280 = vrcp.pop %v1185
  %v1281 = vmul.f32 %v1185, %v1280
  %v1282 = vsub.f32 1.0, %v1281
  %v1283 = vmul.f32 %v1280, %v1282
  %v1284 = vadd.f32 %v1280, %v1283
  %vm1285 = vweird.f32 %v1185
  %vm1286 = vweird.f32 %v1280
  %vm1287 = vmor %vm1285, %vm1286
  %v1288 = vsel %vm1287, %v1280, %v1284
  %v1289 = vand.u32 2147483647, %v1185
  %vm1290 = vcmp.eq.f32.partialorder %v1289, 8.507059e+37
  %v1291 = vand.u32 %v1185, 2147483648
  %v1292 = vor.u32 1.1754944e-38, %v1291
  %v1293 = vsel %vm1290, %v1292, %v1288
  %v1294 = vmul.f32 %v1133, %v1293
  %v1295 = vmul.f32 %v1135, %v1293
  %v1296 = vrcp.pop %v1192
  %v1297 = vmul.f32 %v1192, %v1296
  %v1298 = vsub.f32 1.0, %v1297
  %v1299 = vmul.f32 %v1296, %v1298
  %v1300 = vadd.f32 %v1296, %v1299
  %vm1301 = vweird.f32 %v1192
  %vm1302 = vweird.f32 %v1296
  %vm1303 = vmor %vm1301, %vm1302
  %v1304 = vsel %vm1303, %v1296, %v1300
  %v1305 = vand.u32 2147483647, %v1192
  %vm1306 = vcmp.eq.f32.partialorder %v1305, 8.507059e+37
  %v1307 = vand.u32 %v1192, 2147483648
  %v1308 = vor.u32 1.1754944e-38, %v1307
  %v1309 = vsel %vm1306, %v1308, %v1304
  %v1310 = vmul.f32 %v1137, %v1309
  %v1311 = vmul.f32 %v1139, %v1309
  %v1312 = vrcp.pop %v1199
  %v1313 = vmul.f32 %v1199, %v1312
  %v1314 = vsub.f32 1.0, %v1313
  %v1315 = vmul.f32 %v1312, %v1314
  %v1316 = vadd.f32 %v1312, %v1315
  %vm1317 = vweird.f32 %v1199
  %vm1318 = vweird.f32 %v1312
  %vm1319 = vmor %vm1317, %vm1318
  %v1320 = vsel %vm1319, %v1312, %v1316
  %v1321 = vand.u32 2147483647, %v1199
  %vm1322 = vcmp.eq.f32.partialorder %v1321, 8.507059e+37
  %v1323 = vand.u32 %v1199, 2147483648
  %v1324 = vor.u32 1.1754944e-38, %v1323
  %v1325 = vsel %vm1322, %v1324, %v1320
  %v1326 = vmul.f32 %v1141, %v1325
  %v1327 = vmul.f32 %v1143, %v1325
  %v1328 = vmul.f32 %v58, %v1214
  %v1329 = vmul.f32 %v59, %v1215
  %v1330 = vmul.f32 %v60, %v1230
  %v1331 = vmul.f32 %v61, %v1231
  %v1332 = vmul.f32 %v62, %v1246
  %v1333 = vmul.f32 %v63, %v1247
  %v1334 = vmul.f32 %v64, %v1262
  %v1335 = vmul.f32 %v65, %v1263
  %v1336 = vmul.f32 %v66, %v1278
  %v1337 = vmul.f32 %v67, %v1279
  %v1338 = vmul.f32 %v68, %v1294
  %v1339 = vmul.f32 %v69, %v1295
  %v1340 = vmul.f32 %v70, %v1310
  %v1341 = vmul.f32 %v71, %v1311
  %v1342 = vmul.f32 %v72, %v1326
  %v1343 = vmul.f32 %v73, %v1327
  %v1344 = vadd.f32 %v1328, %v1329
  %v1345 = vrot.slane %v1344, 4
  %v1346 = vadd.f32 %v1344, %v1345
  %v1347 = vrot.slane %v1346, 2
  %v1348 = vadd.f32 %v1346, %v1347
  %v1349 = vrot.slane %v1348, 1
  %v1350 = vadd.f32 %v1348, %v1349
  %v1351 = vadd.f32 %v1330, %v1331
  %v1352 = vrot.slane %v1351, 4
  %v1353 = vadd.f32 %v1351, %v1352
  %v1354 = vrot.slane %v1353, 2
  %v1355 = vadd.f32 %v1353, %v1354
  %v1356 = vrot.slane %v1355, 1
  %v1357 = vadd.f32 %v1355, %v1356
  %v1358 = vadd.f32 %v1332, %v1333
  %v1359 = vrot.slane %v1358, 4
  %v1360 = vadd.f32 %v1358, %v1359
  %v1361 = vrot.slane %v1360, 2
  %v1362 = vadd.f32 %v1360, %v1361
  %v1363 = vrot.slane %v1362, 1
  %v1364 = vadd.f32 %v1362, %v1363
  %v1365 = vadd.f32 %v1334, %v1335
  %v1366 = vrot.slane %v1365, 4
  %v1367 = vadd.f32 %v1365, %v1366
  %v1368 = vrot.slane %v1367, 2
  %v1369 = vadd.f32 %v1367, %v1368
  %v1370 = vrot.slane %v1369, 1
  %v1371 = vadd.f32 %v1369, %v1370
  %v1372 = vadd.f32 %v1336, %v1337
  %v1373 = vrot.slane %v1372, 4
  %v1374 = vadd.f32 %v1372, %v1373
  %v1375 = vrot.slane %v1374, 2
  %v1376 = vadd.f32 %v1374, %v1375
  %v1377 = vrot.slane %v1376, 1
  %v1378 = vadd.f32 %v1376, %v1377
  %v1379 = vadd.f32 %v1338, %v1339
  %v1380 = vrot.slane %v1379, 4
  %v1381 = vadd.f32 %v1379, %v1380
  %v1382 = vrot.slane %v1381, 2
  %v1383 = vadd.f32 %v1381, %v1382
  %v1384 = vrot.slane %v1383, 1
  %v1385 = vadd.f32 %v1383, %v1384
  %v1386 = vadd.f32 %v1340, %v1341
  %v1387 = vrot.slane %v1386, 4
  %v1388 = vadd.f32 %v1386, %v1387
  %v1389 = vrot.slane %v1388, 2
  %v1390 = vadd.f32 %v1388, %v1389
  %v1391 = vrot.slane %v1390, 1
  %v1392 = vadd.f32 %v1390, %v1391
  %v1393 = vadd.f32 %v1342, %v1343
  %v1394 = vrot.slane %v1393, 4
  %v1395 = vadd.f32 %v1393, %v1394
  %v1396 = vrot.slane %v1395, 2
  %v1397 = vadd.f32 %v1395, %v1396
  %v1398 = vrot.slane %v1397, 1
  %v1399 = vadd.f32 %v1397, %v1398
  %v1408 = vsel %vm191, %v1357, %v1350
  %v1409 = vsel %vm193, %v1364, %v1408
  %v1410 = vsel %vm195, %v1371, %v1409
  %v1411 = vsel %vm197, %v1378, %v1410
  %v1412 = vsel %vm199, %v1385, %v1411
  %v1413 = vsel %vm201, %v1392, %v1412
  %v1414 = vsel %vm203, %v1399, %v1413
  %v1416 = vmul.f32 %v915, %v1414
  %v1417 = vpack.c.bf16 %v1416, %v1416
  %v1418 = vld [vmem:[%s10] sm:$0xff]
  %v1419 = vld [vmem:[%s10 + $0x8] sm:$0xff]
  %v1420 = vld [vmem:[%s10 + $0x10] sm:$0xff]
  %v1421 = vld [vmem:[%s10 + $0x18] sm:$0xff]
  %v1422 = vld [vmem:[%s10 + $0x20] sm:$0xff]
  %v1423 = vld [vmem:[%s10 + $0x28] sm:$0xff]
  %v1424 = vld [vmem:[%s10 + $0x30] sm:$0xff]
  %v1425 = vld [vmem:[%s10 + $0x38] sm:$0xff]
  %v1426 = vld [vmem:[%s10 + $0x40] sm:$0xff]
  %v1427 = vld [vmem:[%s10 + $0x48] sm:$0xff]
  %v1428 = vld [vmem:[%s10 + $0x50] sm:$0xff]
  %v1429 = vld [vmem:[%s10 + $0x58] sm:$0xff]
  %v1430 = vld [vmem:[%s10 + $0x60] sm:$0xff]
  %v1431 = vld [vmem:[%s10 + $0x68] sm:$0xff]
  %v1432 = vld [vmem:[%s10 + $0x70] sm:$0xff]
  %v1433 = vld [vmem:[%s10 + $0x78] sm:$0xff]
  %v1434 = vld [vmem:[%s10 + $0x80] sm:$0xff]
  %v1435 = vld [vmem:[%s10 + $0x88] sm:$0xff]
  %v1436 = vld [vmem:[%s10 + $0x90] sm:$0xff]
  %v1437 = vld [vmem:[%s10 + $0x98] sm:$0xff]
  %v1438 = vld [vmem:[%s10 + $0xa0] sm:$0xff]
  %v1439 = vld [vmem:[%s10 + $0xa8] sm:$0xff]
  %v1440 = vld [vmem:[%s10 + $0xb0] sm:$0xff]
  %v1441 = vld [vmem:[%s10 + $0xb8] sm:$0xff]
  %v1442 = vld [vmem:[%s10 + $0xc0] sm:$0xff]
  %v1443 = vld [vmem:[%s10 + $0xc8] sm:$0xff]
  %v1444 = vld [vmem:[%s10 + $0xd0] sm:$0xff]
  %v1445 = vld [vmem:[%s10 + $0xd8] sm:$0xff]
  %v1446 = vld [vmem:[%s10 + $0xe0] sm:$0xff]
  %v1447 = vld [vmem:[%s10 + $0xe8] sm:$0xff]
  %v1448 = vld [vmem:[%s10 + $0xf0] sm:$0xff]
  %v1449 = vld [vmem:[%s10 + $0xf8] sm:$0xff]
  %v1450 = vld [vmem:[%s10 + $0x100] sm:$0xff]
  %v1451 = vld [vmem:[%s10 + $0x108] sm:$0xff]
  %v1452 = vld [vmem:[%s10 + $0x110] sm:$0xff]
  %v1453 = vld [vmem:[%s10 + $0x118] sm:$0xff]
  %v1454 = vld [vmem:[%s10 + $0x120] sm:$0xff]
  %v1455 = vld [vmem:[%s10 + $0x128] sm:$0xff]
  %v1456 = vld [vmem:[%s10 + $0x130] sm:$0xff]
  %v1457 = vld [vmem:[%s10 + $0x138] sm:$0xff]
  %v1458 = vld [vmem:[%s10 + $0x140] sm:$0xff]
  %v1459 = vld [vmem:[%s10 + $0x148] sm:$0xff]
  %v1460 = vld [vmem:[%s10 + $0x150] sm:$0xff]
  %v1461 = vld [vmem:[%s10 + $0x158] sm:$0xff]
  %v1462 = vld [vmem:[%s10 + $0x160] sm:$0xff]
  %v1463 = vld [vmem:[%s10 + $0x168] sm:$0xff]
  %v1464 = vld [vmem:[%s10 + $0x170] sm:$0xff]
  %v1465 = vld [vmem:[%s10 + $0x178] sm:$0xff]
  %v1466 = vld [vmem:[%s10 + $0x180] sm:$0xff]
  %v1467 = vld [vmem:[%s10 + $0x188] sm:$0xff]
  %v1468 = vld [vmem:[%s10 + $0x190] sm:$0xff]
  %v1469 = vld [vmem:[%s10 + $0x198] sm:$0xff]
  %v1470 = vld [vmem:[%s10 + $0x1a0] sm:$0xff]
  %v1471 = vld [vmem:[%s10 + $0x1a8] sm:$0xff]
  %v1472 = vld [vmem:[%s10 + $0x1b0] sm:$0xff]
  %v1473 = vld [vmem:[%s10 + $0x1b8] sm:$0xff]
  %v1474 = vld [vmem:[%s10 + $0x1c0] sm:$0xff]
  %v1475 = vld [vmem:[%s10 + $0x1c8] sm:$0xff]
  %v1476 = vld [vmem:[%s10 + $0x1d0] sm:$0xff]
  %v1477 = vld [vmem:[%s10 + $0x1d8] sm:$0xff]
  %v1478 = vld [vmem:[%s10 + $0x1e0] sm:$0xff]
  %v1479 = vld [vmem:[%s10 + $0x1e8] sm:$0xff]
  %v1480 = vld [vmem:[%s10 + $0x1f0] sm:$0xff]
  %v1481 = vld [vmem:[%s10 + $0x1f8] sm:$0xff]
  %v1483 = vperm.slane %v51, 0
  %v1484 = vperm.slane %v51, 1
  %v1485 = vperm.slane %v51, 2
  %v1486 = vperm.slane %v51, 3
  %v1555 = vunpack.c.l.b16 %v1418
  %v1556 = vunpack.c.h.b16 %v1418
  %v1557 = vunpack.c.l.b16 %v1419
  %v1558 = vunpack.c.h.b16 %v1419
  %v1559 = vunpack.c.l.b16 %v1420
  %v1560 = vunpack.c.h.b16 %v1420
  %v1561 = vunpack.c.l.b16 %v1421
  %v1562 = vunpack.c.h.b16 %v1421
  %v1563 = vunpack.c.l.b16 %v1422
  %v1564 = vunpack.c.h.b16 %v1422
  %v1565 = vunpack.c.l.b16 %v1423
  %v1566 = vunpack.c.h.b16 %v1423
  %v1567 = vunpack.c.l.b16 %v1424
  %v1568 = vunpack.c.h.b16 %v1424
  %v1569 = vunpack.c.l.b16 %v1425
  %v1570 = vunpack.c.h.b16 %v1425
  %v1571 = vunpack.c.l.b16 %v1426
  %v1572 = vunpack.c.h.b16 %v1426
  %v1573 = vunpack.c.l.b16 %v1427
  %v1574 = vunpack.c.h.b16 %v1427
  %v1575 = vunpack.c.l.b16 %v1428
  %v1576 = vunpack.c.h.b16 %v1428
  %v1577 = vunpack.c.l.b16 %v1429
  %v1578 = vunpack.c.h.b16 %v1429
  %v1579 = vunpack.c.l.b16 %v1430
  %v1580 = vunpack.c.h.b16 %v1430
  %v1581 = vunpack.c.l.b16 %v1431
  %v1582 = vunpack.c.h.b16 %v1431
  %v1583 = vunpack.c.l.b16 %v1432
  %v1584 = vunpack.c.h.b16 %v1432
  %v1585 = vunpack.c.l.b16 %v1433
  %v1586 = vunpack.c.h.b16 %v1433
  %v1587 = vunpack.c.l.b16 %v1434
  %v1588 = vunpack.c.h.b16 %v1434
  %v1589 = vunpack.c.l.b16 %v1435
  %v1590 = vunpack.c.h.b16 %v1435
  %v1591 = vunpack.c.l.b16 %v1436
  %v1592 = vunpack.c.h.b16 %v1436
  %v1593 = vunpack.c.l.b16 %v1437
  %v1594 = vunpack.c.h.b16 %v1437
  %v1595 = vunpack.c.l.b16 %v1438
  %v1596 = vunpack.c.h.b16 %v1438
  %v1597 = vunpack.c.l.b16 %v1439
  %v1598 = vunpack.c.h.b16 %v1439
  %v1599 = vunpack.c.l.b16 %v1440
  %v1600 = vunpack.c.h.b16 %v1440
  %v1601 = vunpack.c.l.b16 %v1441
  %v1602 = vunpack.c.h.b16 %v1441
  %v1603 = vunpack.c.l.b16 %v1442
  %v1604 = vunpack.c.h.b16 %v1442
  %v1605 = vunpack.c.l.b16 %v1443
  %v1606 = vunpack.c.h.b16 %v1443
  %v1607 = vunpack.c.l.b16 %v1444
  %v1608 = vunpack.c.h.b16 %v1444
  %v1609 = vunpack.c.l.b16 %v1445
  %v1610 = vunpack.c.h.b16 %v1445
  %v1611 = vunpack.c.l.b16 %v1446
  %v1612 = vunpack.c.h.b16 %v1446
  %v1613 = vunpack.c.l.b16 %v1447
  %v1614 = vunpack.c.h.b16 %v1447
  %v1615 = vunpack.c.l.b16 %v1448
  %v1616 = vunpack.c.h.b16 %v1448
  %v1617 = vunpack.c.l.b16 %v1449
  %v1618 = vunpack.c.h.b16 %v1449
  %v1619 = vunpack.c.l.b16 %v1450
  %v1620 = vunpack.c.h.b16 %v1450
  %v1621 = vunpack.c.l.b16 %v1451
  %v1622 = vunpack.c.h.b16 %v1451
  %v1623 = vunpack.c.l.b16 %v1452
  %v1624 = vunpack.c.h.b16 %v1452
  %v1625 = vunpack.c.l.b16 %v1453
  %v1626 = vunpack.c.h.b16 %v1453
  %v1627 = vunpack.c.l.b16 %v1454
  %v1628 = vunpack.c.h.b16 %v1454
  %v1629 = vunpack.c.l.b16 %v1455
  %v1630 = vunpack.c.h.b16 %v1455
  %v1631 = vunpack.c.l.b16 %v1456
  %v1632 = vunpack.c.h.b16 %v1456
  %v1633 = vunpack.c.l.b16 %v1457
  %v1634 = vunpack.c.h.b16 %v1457
  %v1635 = vunpack.c.l.b16 %v1458
  %v1636 = vunpack.c.h.b16 %v1458
  %v1637 = vunpack.c.l.b16 %v1459
  %v1638 = vunpack.c.h.b16 %v1459
  %v1639 = vunpack.c.l.b16 %v1460
  %v1640 = vunpack.c.h.b16 %v1460
  %v1641 = vunpack.c.l.b16 %v1461
  %v1642 = vunpack.c.h.b16 %v1461
  %v1643 = vunpack.c.l.b16 %v1462
  %v1644 = vunpack.c.h.b16 %v1462
  %v1645 = vunpack.c.l.b16 %v1463
  %v1646 = vunpack.c.h.b16 %v1463
  %v1647 = vunpack.c.l.b16 %v1464
  %v1648 = vunpack.c.h.b16 %v1464
  %v1649 = vunpack.c.l.b16 %v1465
  %v1650 = vunpack.c.h.b16 %v1465
  %v1651 = vunpack.c.l.b16 %v1466
  %v1652 = vunpack.c.h.b16 %v1466
  %v1653 = vunpack.c.l.b16 %v1467
  %v1654 = vunpack.c.h.b16 %v1467
  %v1655 = vunpack.c.l.b16 %v1468
  %v1656 = vunpack.c.h.b16 %v1468
  %v1657 = vunpack.c.l.b16 %v1469
  %v1658 = vunpack.c.h.b16 %v1469
  %v1659 = vunpack.c.l.b16 %v1470
  %v1660 = vunpack.c.h.b16 %v1470
  %v1661 = vunpack.c.l.b16 %v1471
  %v1662 = vunpack.c.h.b16 %v1471
  %v1663 = vunpack.c.l.b16 %v1472
  %v1664 = vunpack.c.h.b16 %v1472
  %v1665 = vunpack.c.l.b16 %v1473
  %v1666 = vunpack.c.h.b16 %v1473
  %v1667 = vunpack.c.l.b16 %v1474
  %v1668 = vunpack.c.h.b16 %v1474
  %v1669 = vunpack.c.l.b16 %v1475
  %v1670 = vunpack.c.h.b16 %v1475
  %v1671 = vunpack.c.l.b16 %v1476
  %v1672 = vunpack.c.h.b16 %v1476
  %v1673 = vunpack.c.l.b16 %v1477
  %v1674 = vunpack.c.h.b16 %v1477
  %v1675 = vunpack.c.l.b16 %v1478
  %v1676 = vunpack.c.h.b16 %v1478
  %v1677 = vunpack.c.l.b16 %v1479
  %v1678 = vunpack.c.h.b16 %v1479
  %v1679 = vunpack.c.l.b16 %v1480
  %v1680 = vunpack.c.h.b16 %v1480
  %v1681 = vunpack.c.l.b16 %v1481
  %v1682 = vunpack.c.h.b16 %v1481
  %v1683 = vpack.c.b16 %v1559, %v1555
  %v1684 = vpack.c.b16 %v1560, %v1556
  %v1685 = vpack.c.b16 %v1561, %v1557
  %v1686 = vpack.c.b16 %v1562, %v1558
  %v1687 = vpack.c.b16 %v1567, %v1563
  %v1688 = vpack.c.b16 %v1568, %v1564
  %v1689 = vpack.c.b16 %v1569, %v1565
  %v1690 = vpack.c.b16 %v1570, %v1566
  %v1691 = vpack.c.b16 %v1575, %v1571
  %v1692 = vpack.c.b16 %v1576, %v1572
  %v1693 = vpack.c.b16 %v1577, %v1573
  %v1694 = vpack.c.b16 %v1578, %v1574
  %v1695 = vpack.c.b16 %v1583, %v1579
  %v1696 = vpack.c.b16 %v1584, %v1580
  %v1697 = vpack.c.b16 %v1585, %v1581
  %v1698 = vpack.c.b16 %v1586, %v1582
  %v1699 = vpack.c.b16 %v1591, %v1587
  %v1700 = vpack.c.b16 %v1592, %v1588
  %v1701 = vpack.c.b16 %v1593, %v1589
  %v1702 = vpack.c.b16 %v1594, %v1590
  %v1703 = vpack.c.b16 %v1599, %v1595
  %v1704 = vpack.c.b16 %v1600, %v1596
  %v1705 = vpack.c.b16 %v1601, %v1597
  %v1706 = vpack.c.b16 %v1602, %v1598
  %v1707 = vpack.c.b16 %v1607, %v1603
  %v1708 = vpack.c.b16 %v1608, %v1604
  %v1709 = vpack.c.b16 %v1609, %v1605
  %v1710 = vpack.c.b16 %v1610, %v1606
  %v1711 = vpack.c.b16 %v1615, %v1611
  %v1712 = vpack.c.b16 %v1616, %v1612
  %v1713 = vpack.c.b16 %v1617, %v1613
  %v1714 = vpack.c.b16 %v1618, %v1614
  %v1715 = vpack.c.b16 %v1623, %v1619
  %v1716 = vpack.c.b16 %v1624, %v1620
  %v1717 = vpack.c.b16 %v1625, %v1621
  %v1718 = vpack.c.b16 %v1626, %v1622
  %v1719 = vpack.c.b16 %v1631, %v1627
  %v1720 = vpack.c.b16 %v1632, %v1628
  %v1721 = vpack.c.b16 %v1633, %v1629
  %v1722 = vpack.c.b16 %v1634, %v1630
  %v1723 = vpack.c.b16 %v1639, %v1635
  %v1724 = vpack.c.b16 %v1640, %v1636
  %v1725 = vpack.c.b16 %v1641, %v1637
  %v1726 = vpack.c.b16 %v1642, %v1638
  %v1727 = vpack.c.b16 %v1647, %v1643
  %v1728 = vpack.c.b16 %v1648, %v1644
  %v1729 = vpack.c.b16 %v1649, %v1645
  %v1730 = vpack.c.b16 %v1650, %v1646
  %v1731 = vpack.c.b16 %v1655, %v1651
  %v1732 = vpack.c.b16 %v1656, %v1652
  %v1733 = vpack.c.b16 %v1657, %v1653
  %v1734 = vpack.c.b16 %v1658, %v1654
  %v1735 = vpack.c.b16 %v1663, %v1659
  %v1736 = vpack.c.b16 %v1664, %v1660
  %v1737 = vpack.c.b16 %v1665, %v1661
  %v1738 = vpack.c.b16 %v1666, %v1662
  %v1739 = vpack.c.b16 %v1671, %v1667
  %v1740 = vpack.c.b16 %v1672, %v1668
  %v1741 = vpack.c.b16 %v1673, %v1669
  %v1742 = vpack.c.b16 %v1674, %v1670
  %v1743 = vpack.c.b16 %v1679, %v1675
  %v1744 = vpack.c.b16 %v1680, %v1676
  %v1745 = vpack.c.b16 %v1681, %v1677
  %v1746 = vpack.c.b16 %v1682, %v1678
  %1811 = vmatpush.bf16.msra.mxu0 %v1711
  %1812 = vmatpush.bf16.msra.mxu0 %v1707
  %1813 = vmatpush.bf16.msra.mxu0 %v1703
  %1814 = vmatpush.bf16.msra.mxu0 %v1699
  %1815 = vmatpush.bf16.msra.mxu0 %v1695
  %1816 = vmatpush.bf16.msra.mxu0 %v1691
  %1817 = vmatpush.bf16.msra.mxu0 %v1687
  %1818 = vmatpush.bf16.msra.mxu0 %v1683
  %1819 = vmatmul.bf16.gmra.mxu0 %v516
  %v1820 = vpop.f32.mrf.mxu0
  %v1821 = vadd.f32 %v1483, %v1820
  %v1822 = vpop.f32.mrf.mxu0
  %1823 = vdwg.mxu0
  %1824 = vmatpush.bf16.msra.mxu0 %v1743
  %1825 = vmatpush.bf16.msra.mxu0 %v1739
  %1826 = vmatpush.bf16.msra.mxu0 %v1735
  %1827 = vmatpush.bf16.msra.mxu0 %v1731
  %1828 = vmatpush.bf16.msra.mxu0 %v1727
  %1829 = vmatpush.bf16.msra.mxu0 %v1723
  %1830 = vmatpush.bf16.msra.mxu0 %v1719
  %1831 = vmatpush.bf16.msra.mxu0 %v1715
  %1832 = vmatmul.bf16.gmra.mxu0 %v1417
  %v1833 = vpop.f32.mrf.mxu0
  %v1834 = vadd.f32 %v1821, %v1833
  %v1835 = vpop.f32.mrf.mxu0
  %1836 = vdwg.mxu0
  %1837 = vmatpush.bf16.msra.mxu0 %v1712
  %1838 = vmatpush.bf16.msra.mxu0 %v1708
  %1839 = vmatpush.bf16.msra.mxu0 %v1704
  %1840 = vmatpush.bf16.msra.mxu0 %v1700
  %1841 = vmatpush.bf16.msra.mxu0 %v1696
  %1842 = vmatpush.bf16.msra.mxu0 %v1692
  %1843 = vmatpush.bf16.msra.mxu0 %v1688
  %1844 = vmatpush.bf16.msra.mxu0 %v1684
  %1845 = vmatmul.bf16.gmra.mxu0 %v516
  %v1846 = vpop.f32.mrf.mxu0
  %v1847 = vadd.f32 %v1484, %v1846
  %v1848 = vpop.f32.mrf.mxu0
  %1849 = vdwg.mxu0
  %1850 = vmatpush.bf16.msra.mxu0 %v1744
  %1851 = vmatpush.bf16.msra.mxu0 %v1740
  %1852 = vmatpush.bf16.msra.mxu0 %v1736
  %1853 = vmatpush.bf16.msra.mxu0 %v1732
  %1854 = vmatpush.bf16.msra.mxu0 %v1728
  %1855 = vmatpush.bf16.msra.mxu0 %v1724
  %1856 = vmatpush.bf16.msra.mxu0 %v1720
  %1857 = vmatpush.bf16.msra.mxu0 %v1716
  %1858 = vmatmul.bf16.gmra.mxu0 %v1417
  %v1859 = vpop.f32.mrf.mxu0
  %v1860 = vadd.f32 %v1847, %v1859
  %v1861 = vpop.f32.mrf.mxu0
  %1862 = vdwg.mxu0
  %1863 = vmatpush.bf16.msra.mxu0 %v1713
  %1864 = vmatpush.bf16.msra.mxu0 %v1709
  %1865 = vmatpush.bf16.msra.mxu0 %v1705
  %1866 = vmatpush.bf16.msra.mxu0 %v1701
  %1867 = vmatpush.bf16.msra.mxu0 %v1697
  %1868 = vmatpush.bf16.msra.mxu0 %v1693
  %1869 = vmatpush.bf16.msra.mxu0 %v1689
  %1870 = vmatpush.bf16.msra.mxu0 %v1685
  %1871 = vmatmul.bf16.gmra.mxu0 %v516
  %v1872 = vpop.f32.mrf.mxu0
  %v1873 = vadd.f32 %v1485, %v1872
  %v1874 = vpop.f32.mrf.mxu0
  %1875 = vdwg.mxu0
  %1876 = vmatpush.bf16.msra.mxu0 %v1745
  %1877 = vmatpush.bf16.msra.mxu0 %v1741
  %1878 = vmatpush.bf16.msra.mxu0 %v1737
  %1879 = vmatpush.bf16.msra.mxu0 %v1733
  %1880 = vmatpush.bf16.msra.mxu0 %v1729
  %1881 = vmatpush.bf16.msra.mxu0 %v1725
  %1882 = vmatpush.bf16.msra.mxu0 %v1721
  %1883 = vmatpush.bf16.msra.mxu0 %v1717
  %1884 = vmatmul.bf16.gmra.mxu0 %v1417
  %v1885 = vpop.f32.mrf.mxu0
  %v1886 = vadd.f32 %v1873, %v1885
  %v1887 = vpop.f32.mrf.mxu0
  %1888 = vdwg.mxu0
  %1889 = vmatpush.bf16.msra.mxu0 %v1714
  %1890 = vmatpush.bf16.msra.mxu0 %v1710
  %1891 = vmatpush.bf16.msra.mxu0 %v1706
  %1892 = vmatpush.bf16.msra.mxu0 %v1702
  %1893 = vmatpush.bf16.msra.mxu0 %v1698
  %1894 = vmatpush.bf16.msra.mxu0 %v1694
  %1895 = vmatpush.bf16.msra.mxu0 %v1690
  %1896 = vmatpush.bf16.msra.mxu0 %v1686
  %1897 = vmatmul.bf16.gmra.mxu0 %v516
  %v1898 = vpop.f32.mrf.mxu0
  %v1899 = vadd.f32 %v1486, %v1898
  %v1900 = vpop.f32.mrf.mxu0
  %1901 = vdwg.mxu0
  %1902 = vmatpush.bf16.msra.mxu0 %v1746
  %1903 = vmatpush.bf16.msra.mxu0 %v1742
  %1904 = vmatpush.bf16.msra.mxu0 %v1738
  %1905 = vmatpush.bf16.msra.mxu0 %v1734
  %1906 = vmatpush.bf16.msra.mxu0 %v1730
  %1907 = vmatpush.bf16.msra.mxu0 %v1726
  %1908 = vmatpush.bf16.msra.mxu0 %v1722
  %1909 = vmatpush.bf16.msra.mxu0 %v1718
  %1910 = vmatmul.bf16.gmra.mxu0 %v1417
  %v1911 = vpop.f32.mrf.mxu0
  %v1912 = vadd.f32 %v1899, %v1911
  %v1913 = vpop.f32.mrf.mxu0
  %1914 = vdwg.mxu0
  %v1915 = vadd.f32 %v1834, %v855
  %v1916 = vadd.f32 %v1860, %v868
  %v1917 = vadd.f32 %v1886, %v881
  %v1918 = vadd.f32 %v1912, %v894
  %v1919 = vxor.u32 %v1915, 2147483648
  %v1920 = vmul.f32 %v1919, 1.442695
  %v1921 = vpow.pop %v1920
  %v1922 = vadd.f32 %v1921, 1.0
  %v1923 = vrcp.pop %v1922
  %v1924 = vmul.f32 %v1922, %v1923
  %v1925 = vsub.f32 1.0, %v1924
  %v1926 = vmul.f32 %v1923, %v1925
  %v1927 = vadd.f32 %v1923, %v1926
  %vm1928 = vweird.f32 %v1922
  %vm1929 = vweird.f32 %v1923
  %vm1930 = vmor %vm1928, %vm1929
  %v1931 = vsel %vm1930, %v1923, %v1927
  %v1932 = vand.u32 2147483647, %v1922
  %vm1933 = vcmp.eq.f32.partialorder %v1932, 8.507059e+37
  %v1934 = vand.u32 %v1922, 2147483648
  %v1935 = vor.u32 1.1754944e-38, %v1934
  %v1936 = vsel %vm1933, %v1935, %v1931
  %v1937 = vmul.f32 1.0, %v1936
  %v1938 = vxor.u32 %v1916, 2147483648
  %v1939 = vmul.f32 %v1938, 1.442695
  %v1940 = vpow.pop %v1939
  %v1941 = vadd.f32 %v1940, 1.0
  %v1942 = vrcp.pop %v1941
  %v1943 = vmul.f32 %v1941, %v1942
  %v1944 = vsub.f32 1.0, %v1943
  %v1945 = vmul.f32 %v1942, %v1944
  %v1946 = vadd.f32 %v1942, %v1945
  %vm1947 = vweird.f32 %v1941
  %vm1948 = vweird.f32 %v1942
  %vm1949 = vmor %vm1947, %vm1948
  %v1950 = vsel %vm1949, %v1942, %v1946
  %v1951 = vand.u32 2147483647, %v1941
  %vm1952 = vcmp.eq.f32.partialorder %v1951, 8.507059e+37
  %v1953 = vand.u32 %v1941, 2147483648
  %v1954 = vor.u32 1.1754944e-38, %v1953
  %v1955 = vsel %vm1952, %v1954, %v1950
  %v1956 = vmul.f32 1.0, %v1955
  %v1957 = vtanh.pop %v1917
  %v1958 = vxor.u32 %v1918, 2147483648
  %v1959 = vmul.f32 %v1958, 1.442695
  %v1960 = vpow.pop %v1959
  %v1961 = vadd.f32 %v1960, 1.0
  %v1962 = vrcp.pop %v1961
  %v1963 = vmul.f32 %v1961, %v1962
  %v1964 = vsub.f32 1.0, %v1963
  %v1965 = vmul.f32 %v1962, %v1964
  %v1966 = vadd.f32 %v1962, %v1965
  %vm1967 = vweird.f32 %v1961
  %vm1968 = vweird.f32 %v1962
  %vm1969 = vmor %vm1967, %vm1968
  %v1970 = vsel %vm1969, %v1962, %v1966
  %v1971 = vand.u32 2147483647, %v1961
  %vm1972 = vcmp.eq.f32.partialorder %v1971, 8.507059e+37
  %v1973 = vand.u32 %v1961, 2147483648
  %v1974 = vor.u32 1.1754944e-38, %v1973
  %v1975 = vsel %vm1972, %v1974, %v1970
  %v1976 = vmul.f32 1.0, %v1975
  %v1977 = vmul.f32 %v1956, %v314
  %v1978 = vmul.f32 %v1937, %v1957
  %v1979 = vadd.f32 %v1977, %v1978
  %v1980 = vtanh.pop %v1979
  %v1981 = vmul.f32 %v1976, %v1980
  %v1982 = vpack.c.bf16 %v1981, %v1981
  %v1983 = vld [vmem:[%s12] sm:$0xff]
  %v1984 = vld [vmem:[%s12 + $0x8] sm:$0xff]
  %v1985 = vld [vmem:[%s12 + $0x10] sm:$0xff]
  %v1986 = vld [vmem:[%s12 + $0x18] sm:$0xff]
  %v1987 = vld [vmem:[%s12 + $0x20] sm:$0xff]
  %v1988 = vld [vmem:[%s12 + $0x28] sm:$0xff]
  %v1989 = vld [vmem:[%s12 + $0x30] sm:$0xff]
  %v1990 = vld [vmem:[%s12 + $0x38] sm:$0xff]
  %v1991 = vld [vmem:[%s12 + $0x40] sm:$0xff]
  %v1992 = vld [vmem:[%s12 + $0x48] sm:$0xff]
  %v1993 = vld [vmem:[%s12 + $0x50] sm:$0xff]
  %v1994 = vld [vmem:[%s12 + $0x58] sm:$0xff]
  %v1995 = vld [vmem:[%s12 + $0x60] sm:$0xff]
  %v1996 = vld [vmem:[%s12 + $0x68] sm:$0xff]
  %v1997 = vld [vmem:[%s12 + $0x70] sm:$0xff]
  %v1998 = vld [vmem:[%s12 + $0x78] sm:$0xff]
  %v2000 = vperm.slane %v52, 0
  %v2001 = vperm.slane %v52, 1
  %v2020 = vunpack.c.l.b16 %v1983
  %v2021 = vunpack.c.h.b16 %v1983
  %v2022 = vunpack.c.l.b16 %v1984
  %v2023 = vunpack.c.h.b16 %v1984
  %v2024 = vunpack.c.l.b16 %v1985
  %v2025 = vunpack.c.h.b16 %v1985
  %v2026 = vunpack.c.l.b16 %v1986
  %v2027 = vunpack.c.h.b16 %v1986
  %v2028 = vunpack.c.l.b16 %v1987
  %v2029 = vunpack.c.h.b16 %v1987
  %v2030 = vunpack.c.l.b16 %v1988
  %v2031 = vunpack.c.h.b16 %v1988
  %v2032 = vunpack.c.l.b16 %v1989
  %v2033 = vunpack.c.h.b16 %v1989
  %v2034 = vunpack.c.l.b16 %v1990
  %v2035 = vunpack.c.h.b16 %v1990
  %v2036 = vunpack.c.l.b16 %v1991
  %v2037 = vunpack.c.h.b16 %v1991
  %v2038 = vunpack.c.l.b16 %v1992
  %v2039 = vunpack.c.h.b16 %v1992
  %v2040 = vunpack.c.l.b16 %v1993
  %v2041 = vunpack.c.h.b16 %v1993
  %v2042 = vunpack.c.l.b16 %v1994
  %v2043 = vunpack.c.h.b16 %v1994
  %v2044 = vunpack.c.l.b16 %v1995
  %v2045 = vunpack.c.h.b16 %v1995
  %v2046 = vunpack.c.l.b16 %v1996
  %v2047 = vunpack.c.h.b16 %v1996
  %v2048 = vunpack.c.l.b16 %v1997
  %v2049 = vunpack.c.h.b16 %v1997
  %v2050 = vunpack.c.l.b16 %v1998
  %v2051 = vunpack.c.h.b16 %v1998
  %v2052 = vpack.c.b16 %v2022, %v2020
  %v2053 = vpack.c.b16 %v2023, %v2021
  %v2054 = vpack.c.b16 %v2026, %v2024
  %v2055 = vpack.c.b16 %v2027, %v2025
  %v2056 = vpack.c.b16 %v2030, %v2028
  %v2057 = vpack.c.b16 %v2031, %v2029
  %v2058 = vpack.c.b16 %v2034, %v2032
  %v2059 = vpack.c.b16 %v2035, %v2033
  %v2060 = vpack.c.b16 %v2038, %v2036
  %v2061 = vpack.c.b16 %v2039, %v2037
  %v2062 = vpack.c.b16 %v2042, %v2040
  %v2063 = vpack.c.b16 %v2043, %v2041
  %v2064 = vpack.c.b16 %v2046, %v2044
  %v2065 = vpack.c.b16 %v2047, %v2045
  %v2066 = vpack.c.b16 %v2050, %v2048
  %v2067 = vpack.c.b16 %v2051, %v2049
  %2084 = vmatpush.bf16.msra.mxu0 %v2066
  %2085 = vmatpush.bf16.msra.mxu0 %v2064
  %2086 = vmatpush.bf16.msra.mxu0 %v2062
  %2087 = vmatpush.bf16.msra.mxu0 %v2060
  %2088 = vmatpush.bf16.msra.mxu0 %v2058
  %2089 = vmatpush.bf16.msra.mxu0 %v2056
  %2090 = vmatpush.bf16.msra.mxu0 %v2054
  %2091 = vmatpush.bf16.msra.mxu0 %v2052
  %2092 = vmatmul.bf16.gmra.mxu0 %v1982
  %v2093 = vpop.f32.mrf.mxu0
  %v2094 = vadd.f32 %v2000, %v2093
  %v2095 = vpop.f32.mrf.mxu0
  %2096 = vdwg.mxu0
  %2097 = vmatpush.bf16.msra.mxu0 %v2067
  %2098 = vmatpush.bf16.msra.mxu0 %v2065
  %2099 = vmatpush.bf16.msra.mxu0 %v2063
  %2100 = vmatpush.bf16.msra.mxu0 %v2061
  %2101 = vmatpush.bf16.msra.mxu0 %v2059
  %2102 = vmatpush.bf16.msra.mxu0 %v2057
  %2103 = vmatpush.bf16.msra.mxu0 %v2055
  %2104 = vmatpush.bf16.msra.mxu0 %v2053
  %2105 = vmatmul.bf16.gmra.mxu0 %v1982
  %v2106 = vpop.f32.mrf.mxu0
  %v2107 = vadd.f32 %v2001, %v2106
  %v2108 = vpop.f32.mrf.mxu0
  %2109 = vdwg.mxu0
  %2110 = vst [vmem:[%s14] sm:$0xff] %v2094
  %2111 = vst [vmem:[%s14 + $0x8] sm:$0xff] %v2107
  %v2128 = vperm.slane %v1214, %v56
  %v2129 = vadd.s32 %v56, 4294967288
  %v2130 = vperm.slane %v1215, %v2129
  %vm2131 = vcmask 130112
  %v2132 = vsel %vm2131, %v2130, %v2128
  %v2133 = vperm.slane %v1230, %v56
  %v2134 = vperm.slane %v1231, %v2129
  %v2135 = vsel %vm2131, %v2134, %v2133
  %v2136 = vperm.slane %v1246, %v56
  %v2137 = vperm.slane %v1247, %v2129
  %v2138 = vsel %vm2131, %v2137, %v2136
  %v2139 = vperm.slane %v1262, %v56
  %v2140 = vperm.slane %v1263, %v2129
  %v2141 = vsel %vm2131, %v2140, %v2139
  %v2142 = vperm.slane %v1278, %v56
  %v2143 = vperm.slane %v1279, %v2129
  %v2144 = vsel %vm2131, %v2143, %v2142
  %v2145 = vperm.slane %v1294, %v56
  %v2146 = vperm.slane %v1295, %v2129
  %v2147 = vsel %vm2131, %v2146, %v2145
  %v2148 = vperm.slane %v1310, %v56
  %v2149 = vperm.slane %v1311, %v2129
  %v2150 = vsel %vm2131, %v2149, %v2148
  %v2151 = vperm.slane %v1326, %v56
  %v2152 = vperm.slane %v1327, %v2129
  %v2153 = vsel %vm2131, %v2152, %v2151
  %v2154 = vsel %vm191, %v2135, %v2132
  %v2155 = vsel %vm193, %v2138, %v2154
  %v2156 = vsel %vm195, %v2141, %v2155
  %v2157 = vsel %vm197, %v2144, %v2156
  %v2158 = vsel %vm199, %v2147, %v2157
  %v2159 = vsel %vm201, %v2150, %v2158
  %v2160 = vsel %vm203, %v2153, %v2159
  %vm2162 = vcmask 130048
  %2163 = vst.msk [vmem:[%s15] sm:$0xff] %vm2162, %v2160
  %v2164 = vmax.f32 %v2094, %v2107
  %2165 = vmax.xlane.f32.xlu0 %v2164
  %v2166 = vpop.xlane.xlu0 %2165
  %vm2167 = vcmp.eq.f32.partialorder %v2094, %v2166
  %vm2168 = vcmp.eq.f32.partialorder %v2107, %v2166
  %v2169 = vsel %vm2167, %v56, 256
  %v2170 = vsel %vm2168, %v57, 256
  %vm2171 = vcmp.lt.s32.totalorder %v2169, %v2170
  %v2172 = vsel %vm2171, %v2169, %v2170
  %v2173 = vand.u32 %v2172, 65535
  %v2174 = vshra.s32 %v2172, 16
  %v2175 = vcvt.s32.f32 %v2173
  %v2176 = vcvt.s32.f32 %v2174
  %2177 = vmin.xlane.f32.xlu0 %v2176
  %v2178 = vpop.xlane.xlu0 %2177
  %vm2179 = vcmp.eq.f32.partialorder %v2176, %v2178
  %v2180 = vsel %vm2179, %v2175, inf
  %2181 = vmin.xlane.f32.xlu0 %v2180
  %v2182 = vpop.xlane.xlu0 %2181
  %v2183 = vcvt.f32.s32 %v2182
  %v2184 = vcvt.f32.s32 %v2178
  %v2185 = vshll.u32 %v2184, 16
  %v2186 = vadd.s32 %v2185, %v2183
  %vm2187 = vcmp.eq.s32.totalorder %v56, %v2186
  %vm2188 = vcmp.eq.s32.totalorder %v57, %v2186
  %v2189 = vsel %vm2187, 1, 0
  %v2190 = vsel %vm2188, 1, 0
  %v2191 = vcvt.s32.f32 %v2189
  %v2192 = vcvt.s32.f32 %v2190
  %v2193 = vpack.c.bf16 %v2191, %v2191
  %v2194 = vpack.c.bf16 %v2192, %v2192
  %v2195 = vld [vmem:[%s9] sm:$0xf]
  %v2196 = vld [vmem:[%s9 + $0x4] sm:$0xf]
  %v2197 = vld [vmem:[%s9 + $0x8] sm:$0xf]
  %v2198 = vld [vmem:[%s9 + $0xc] sm:$0xf]
  %v2199 = vld [vmem:[%s9 + $0x10] sm:$0xf]
  %v2200 = vld [vmem:[%s9 + $0x14] sm:$0xf]
  %v2201 = vld [vmem:[%s9 + $0x18] sm:$0xf]
  %v2202 = vld [vmem:[%s9 + $0x1c] sm:$0xf]
  %v2203 = vld [vmem:[%s9 + $0x20] sm:$0xf]
  %v2204 = vld [vmem:[%s9 + $0x24] sm:$0xf]
  %v2205 = vld [vmem:[%s9 + $0x28] sm:$0xf]
  %v2206 = vld [vmem:[%s9 + $0x2c] sm:$0xf]
  %v2207 = vld [vmem:[%s9 + $0x30] sm:$0xf]
  %v2208 = vld [vmem:[%s9 + $0x34] sm:$0xf]
  %v2209 = vld [vmem:[%s9 + $0x38] sm:$0xf]
  %v2210 = vld [vmem:[%s9 + $0x3c] sm:$0xf]
  %v2211 = vld [vmem:[%s9 + $0x40] sm:$0xf]
  %v2212 = vld [vmem:[%s9 + $0x44] sm:$0xf]
  %v2213 = vld [vmem:[%s9 + $0x48] sm:$0xf]
  %v2214 = vld [vmem:[%s9 + $0x4c] sm:$0xf]
  %v2215 = vld [vmem:[%s9 + $0x50] sm:$0xf]
  %v2216 = vld [vmem:[%s9 + $0x54] sm:$0xf]
  %v2217 = vld [vmem:[%s9 + $0x58] sm:$0xf]
  %v2218 = vld [vmem:[%s9 + $0x5c] sm:$0xf]
  %v2219 = vld [vmem:[%s9 + $0x60] sm:$0xf]
  %v2220 = vld [vmem:[%s9 + $0x64] sm:$0xf]
  %v2221 = vld [vmem:[%s9 + $0x68] sm:$0xf]
  %v2222 = vld [vmem:[%s9 + $0x6c] sm:$0xf]
  %v2223 = vld [vmem:[%s9 + $0x70] sm:$0xf]
  %v2224 = vld [vmem:[%s9 + $0x74] sm:$0xf]
  %v2225 = vld [vmem:[%s9 + $0x78] sm:$0xf]
  %v2226 = vld [vmem:[%s9 + $0x7c] sm:$0xf]
  %v2259 = vunpack.c.l.b16 %v2195
  %v2260 = vunpack.c.l.b16 %v2196
  %v2261 = vunpack.c.l.b16 %v2197
  %v2262 = vunpack.c.l.b16 %v2198
  %v2263 = vunpack.c.l.b16 %v2199
  %v2264 = vunpack.c.l.b16 %v2200
  %v2265 = vunpack.c.l.b16 %v2201
  %v2266 = vunpack.c.l.b16 %v2202
  %v2267 = vunpack.c.l.b16 %v2203
  %v2268 = vunpack.c.l.b16 %v2204
  %v2269 = vunpack.c.l.b16 %v2205
  %v2270 = vunpack.c.l.b16 %v2206
  %v2271 = vunpack.c.l.b16 %v2207
  %v2272 = vunpack.c.l.b16 %v2208
  %v2273 = vunpack.c.l.b16 %v2209
  %v2274 = vunpack.c.l.b16 %v2210
  %v2275 = vunpack.c.l.b16 %v2211
  %v2276 = vunpack.c.l.b16 %v2212
  %v2277 = vunpack.c.l.b16 %v2213
  %v2278 = vunpack.c.l.b16 %v2214
  %v2279 = vunpack.c.l.b16 %v2215
  %v2280 = vunpack.c.l.b16 %v2216
  %v2281 = vunpack.c.l.b16 %v2217
  %v2282 = vunpack.c.l.b16 %v2218
  %v2283 = vunpack.c.l.b16 %v2219
  %v2284 = vunpack.c.l.b16 %v2220
  %v2285 = vunpack.c.l.b16 %v2221
  %v2286 = vunpack.c.l.b16 %v2222
  %v2287 = vunpack.c.l.b16 %v2223
  %v2288 = vunpack.c.l.b16 %v2224
  %v2289 = vunpack.c.l.b16 %v2225
  %v2290 = vunpack.c.l.b16 %v2226
  %v2291 = vpack.c.b16 %v2260, %v2259
  %v2292 = vpack.c.b16 %v2262, %v2261
  %v2293 = vpack.c.b16 %v2264, %v2263
  %v2294 = vpack.c.b16 %v2266, %v2265
  %v2295 = vpack.c.b16 %v2268, %v2267
  %v2296 = vpack.c.b16 %v2270, %v2269
  %v2297 = vpack.c.b16 %v2272, %v2271
  %v2298 = vpack.c.b16 %v2274, %v2273
  %v2299 = vpack.c.b16 %v2276, %v2275
  %v2300 = vpack.c.b16 %v2278, %v2277
  %v2301 = vpack.c.b16 %v2280, %v2279
  %v2302 = vpack.c.b16 %v2282, %v2281
  %v2303 = vpack.c.b16 %v2284, %v2283
  %v2304 = vpack.c.b16 %v2286, %v2285
  %v2305 = vpack.c.b16 %v2288, %v2287
  %v2306 = vpack.c.b16 %v2290, %v2289
  %2323 = vmatpush.bf16.msra.mxu0 %v2298
  %2324 = vmatpush.bf16.msra.mxu0 %v2297
  %2325 = vmatpush.bf16.msra.mxu0 %v2296
  %2326 = vmatpush.bf16.msra.mxu0 %v2295
  %2327 = vmatpush.bf16.msra.mxu0 %v2294
  %2328 = vmatpush.bf16.msra.mxu0 %v2293
  %2329 = vmatpush.bf16.msra.mxu0 %v2292
  %2330 = vmatpush.bf16.msra.mxu0 %v2291
  %2331 = vmatmul.bf16.gmra.mxu0 %v2193
  %v2332 = vpop.f32.mrf.mxu0
  %v2333 = vadd.f32 0.0, %v2332
  %v2334 = vpop.f32.mrf.mxu0
  %2335 = vdwg.mxu0
  %2336 = vmatpush.bf16.msra.mxu0 %v2306
  %2337 = vmatpush.bf16.msra.mxu0 %v2305
  %2338 = vmatpush.bf16.msra.mxu0 %v2304
  %2339 = vmatpush.bf16.msra.mxu0 %v2303
  %2340 = vmatpush.bf16.msra.mxu0 %v2302
  %2341 = vmatpush.bf16.msra.mxu0 %v2301
  %2342 = vmatpush.bf16.msra.mxu0 %v2300
  %2343 = vmatpush.bf16.msra.mxu0 %v2299
  %2344 = vmatmul.bf16.gmra.mxu0 %v2194
  %v2345 = vpop.f32.mrf.mxu0
  %v2346 = vadd.f32 %v2333, %v2345
  %v2347 = vpop.f32.mrf.mxu0
  %2348 = vdwg.mxu0
  %v2349 = vpack.c.bf16 %v2346, %v2346
  %v2350 = vld [vmem:[%s5] sm:$0xff]
  %v2351 = vld [vmem:[%s5 + $0x8] sm:$0xff]
  %v2352 = vld [vmem:[%s5 + $0x10] sm:$0xff]
  %v2353 = vld [vmem:[%s5 + $0x18] sm:$0xff]
  %v2354 = vld [vmem:[%s5 + $0x20] sm:$0xff]
  %v2355 = vld [vmem:[%s5 + $0x28] sm:$0xff]
  %v2356 = vld [vmem:[%s5 + $0x30] sm:$0xff]
  %v2357 = vld [vmem:[%s5 + $0x38] sm:$0xff]
  %v2358 = vld [vmem:[%s5 + $0x40] sm:$0xff]
  %v2359 = vld [vmem:[%s5 + $0x48] sm:$0xff]
  %v2360 = vld [vmem:[%s5 + $0x50] sm:$0xff]
  %v2361 = vld [vmem:[%s5 + $0x58] sm:$0xff]
  %v2362 = vld [vmem:[%s5 + $0x60] sm:$0xff]
  %v2363 = vld [vmem:[%s5 + $0x68] sm:$0xff]
  %v2364 = vld [vmem:[%s5 + $0x70] sm:$0xff]
  %v2365 = vld [vmem:[%s5 + $0x78] sm:$0xff]
  %v2366 = vld [vmem:[%s5 + $0x80] sm:$0xff]
  %v2367 = vld [vmem:[%s5 + $0x88] sm:$0xff]
  %v2368 = vld [vmem:[%s5 + $0x90] sm:$0xff]
  %v2369 = vld [vmem:[%s5 + $0x98] sm:$0xff]
  %v2370 = vld [vmem:[%s5 + $0xa0] sm:$0xff]
  %v2371 = vld [vmem:[%s5 + $0xa8] sm:$0xff]
  %v2372 = vld [vmem:[%s5 + $0xb0] sm:$0xff]
  %v2373 = vld [vmem:[%s5 + $0xb8] sm:$0xff]
  %v2374 = vld [vmem:[%s5 + $0xc0] sm:$0xff]
  %v2375 = vld [vmem:[%s5 + $0xc8] sm:$0xff]
  %v2376 = vld [vmem:[%s5 + $0xd0] sm:$0xff]
  %v2377 = vld [vmem:[%s5 + $0xd8] sm:$0xff]
  %v2378 = vld [vmem:[%s5 + $0xe0] sm:$0xff]
  %v2379 = vld [vmem:[%s5 + $0xe8] sm:$0xff]
  %v2380 = vld [vmem:[%s5 + $0xf0] sm:$0xff]
  %v2381 = vld [vmem:[%s5 + $0xf8] sm:$0xff]
  %v2382 = vld [vmem:[%s5 + $0x100] sm:$0xff]
  %v2383 = vld [vmem:[%s5 + $0x108] sm:$0xff]
  %v2384 = vld [vmem:[%s5 + $0x110] sm:$0xff]
  %v2385 = vld [vmem:[%s5 + $0x118] sm:$0xff]
  %v2386 = vld [vmem:[%s5 + $0x120] sm:$0xff]
  %v2387 = vld [vmem:[%s5 + $0x128] sm:$0xff]
  %v2388 = vld [vmem:[%s5 + $0x130] sm:$0xff]
  %v2389 = vld [vmem:[%s5 + $0x138] sm:$0xff]
  %v2390 = vld [vmem:[%s5 + $0x140] sm:$0xff]
  %v2391 = vld [vmem:[%s5 + $0x148] sm:$0xff]
  %v2392 = vld [vmem:[%s5 + $0x150] sm:$0xff]
  %v2393 = vld [vmem:[%s5 + $0x158] sm:$0xff]
  %v2394 = vld [vmem:[%s5 + $0x160] sm:$0xff]
  %v2395 = vld [vmem:[%s5 + $0x168] sm:$0xff]
  %v2396 = vld [vmem:[%s5 + $0x170] sm:$0xff]
  %v2397 = vld [vmem:[%s5 + $0x178] sm:$0xff]
  %v2446 = vunpack.c.l.b16 %v2350
  %v2447 = vunpack.c.h.b16 %v2350
  %v2448 = vunpack.c.l.b16 %v2351
  %v2449 = vunpack.c.h.b16 %v2351
  %v2450 = vunpack.c.l.b16 %v2352
  %v2451 = vunpack.c.h.b16 %v2352
  %v2452 = vunpack.c.l.b16 %v2353
  %v2453 = vunpack.c.h.b16 %v2353
  %v2454 = vunpack.c.l.b16 %v2354
  %v2455 = vunpack.c.h.b16 %v2354
  %v2456 = vunpack.c.l.b16 %v2355
  %v2457 = vunpack.c.h.b16 %v2355
  %v2458 = vunpack.c.l.b16 %v2356
  %v2459 = vunpack.c.h.b16 %v2356
  %v2460 = vunpack.c.l.b16 %v2357
  %v2461 = vunpack.c.h.b16 %v2357
  %v2462 = vunpack.c.l.b16 %v2358
  %v2463 = vunpack.c.h.b16 %v2358
  %v2464 = vunpack.c.l.b16 %v2359
  %v2465 = vunpack.c.h.b16 %v2359
  %v2466 = vunpack.c.l.b16 %v2360
  %v2467 = vunpack.c.h.b16 %v2360
  %v2468 = vunpack.c.l.b16 %v2361
  %v2469 = vunpack.c.h.b16 %v2361
  %v2470 = vunpack.c.l.b16 %v2362
  %v2471 = vunpack.c.h.b16 %v2362
  %v2472 = vunpack.c.l.b16 %v2363
  %v2473 = vunpack.c.h.b16 %v2363
  %v2474 = vunpack.c.l.b16 %v2364
  %v2475 = vunpack.c.h.b16 %v2364
  %v2476 = vunpack.c.l.b16 %v2365
  %v2477 = vunpack.c.h.b16 %v2365
  %v2478 = vunpack.c.l.b16 %v2366
  %v2479 = vunpack.c.h.b16 %v2366
  %v2480 = vunpack.c.l.b16 %v2367
  %v2481 = vunpack.c.h.b16 %v2367
  %v2482 = vunpack.c.l.b16 %v2368
  %v2483 = vunpack.c.h.b16 %v2368
  %v2484 = vunpack.c.l.b16 %v2369
  %v2485 = vunpack.c.h.b16 %v2369
  %v2486 = vunpack.c.l.b16 %v2370
  %v2487 = vunpack.c.h.b16 %v2370
  %v2488 = vunpack.c.l.b16 %v2371
  %v2489 = vunpack.c.h.b16 %v2371
  %v2490 = vunpack.c.l.b16 %v2372
  %v2491 = vunpack.c.h.b16 %v2372
  %v2492 = vunpack.c.l.b16 %v2373
  %v2493 = vunpack.c.h.b16 %v2373
  %v2494 = vunpack.c.l.b16 %v2374
  %v2495 = vunpack.c.h.b16 %v2374
  %v2496 = vunpack.c.l.b16 %v2375
  %v2497 = vunpack.c.h.b16 %v2375
  %v2498 = vunpack.c.l.b16 %v2376
  %v2499 = vunpack.c.h.b16 %v2376
  %v2500 = vunpack.c.l.b16 %v2377
  %v2501 = vunpack.c.h.b16 %v2377
  %v2502 = vunpack.c.l.b16 %v2378
  %v2503 = vunpack.c.h.b16 %v2378
  %v2504 = vunpack.c.l.b16 %v2379
  %v2505 = vunpack.c.h.b16 %v2379
  %v2506 = vunpack.c.l.b16 %v2380
  %v2507 = vunpack.c.h.b16 %v2380
  %v2508 = vunpack.c.l.b16 %v2381
  %v2509 = vunpack.c.h.b16 %v2381
  %v2510 = vunpack.c.l.b16 %v2382
  %v2511 = vunpack.c.h.b16 %v2382
  %v2512 = vunpack.c.l.b16 %v2383
  %v2513 = vunpack.c.h.b16 %v2383
  %v2514 = vunpack.c.l.b16 %v2384
  %v2515 = vunpack.c.h.b16 %v2384
  %v2516 = vunpack.c.l.b16 %v2385
  %v2517 = vunpack.c.h.b16 %v2385
  %v2518 = vunpack.c.l.b16 %v2386
  %v2519 = vunpack.c.h.b16 %v2386
  %v2520 = vunpack.c.l.b16 %v2387
  %v2521 = vunpack.c.h.b16 %v2387
  %v2522 = vunpack.c.l.b16 %v2388
  %v2523 = vunpack.c.h.b16 %v2388
  %v2524 = vunpack.c.l.b16 %v2389
  %v2525 = vunpack.c.h.b16 %v2389
  %v2526 = vunpack.c.l.b16 %v2390
  %v2527 = vunpack.c.h.b16 %v2390
  %v2528 = vunpack.c.l.b16 %v2391
  %v2529 = vunpack.c.h.b16 %v2391
  %v2530 = vunpack.c.l.b16 %v2392
  %v2531 = vunpack.c.h.b16 %v2392
  %v2532 = vunpack.c.l.b16 %v2393
  %v2533 = vunpack.c.h.b16 %v2393
  %v2534 = vunpack.c.l.b16 %v2394
  %v2535 = vunpack.c.h.b16 %v2394
  %v2536 = vunpack.c.l.b16 %v2395
  %v2537 = vunpack.c.h.b16 %v2395
  %v2538 = vunpack.c.l.b16 %v2396
  %v2539 = vunpack.c.h.b16 %v2396
  %v2540 = vunpack.c.l.b16 %v2397
  %v2541 = vunpack.c.h.b16 %v2397
  %v2542 = vpack.c.b16 %v2452, %v2446
  %v2543 = vpack.c.b16 %v2453, %v2447
  %v2544 = vpack.c.b16 %v2454, %v2448
  %v2545 = vpack.c.b16 %v2455, %v2449
  %v2546 = vpack.c.b16 %v2456, %v2450
  %v2547 = vpack.c.b16 %v2457, %v2451
  %v2548 = vpack.c.b16 %v2464, %v2458
  %v2549 = vpack.c.b16 %v2465, %v2459
  %v2550 = vpack.c.b16 %v2466, %v2460
  %v2551 = vpack.c.b16 %v2467, %v2461
  %v2552 = vpack.c.b16 %v2468, %v2462
  %v2553 = vpack.c.b16 %v2469, %v2463
  %v2554 = vpack.c.b16 %v2476, %v2470
  %v2555 = vpack.c.b16 %v2477, %v2471
  %v2556 = vpack.c.b16 %v2478, %v2472
  %v2557 = vpack.c.b16 %v2479, %v2473
  %v2558 = vpack.c.b16 %v2480, %v2474
  %v2559 = vpack.c.b16 %v2481, %v2475
  %v2560 = vpack.c.b16 %v2488, %v2482
  %v2561 = vpack.c.b16 %v2489, %v2483
  %v2562 = vpack.c.b16 %v2490, %v2484
  %v2563 = vpack.c.b16 %v2491, %v2485
  %v2564 = vpack.c.b16 %v2492, %v2486
  %v2565 = vpack.c.b16 %v2493, %v2487
  %v2566 = vpack.c.b16 %v2500, %v2494
  %v2567 = vpack.c.b16 %v2501, %v2495
  %v2568 = vpack.c.b16 %v2502, %v2496
  %v2569 = vpack.c.b16 %v2503, %v2497
  %v2570 = vpack.c.b16 %v2504, %v2498
  %v2571 = vpack.c.b16 %v2505, %v2499
  %v2572 = vpack.c.b16 %v2512, %v2506
  %v2573 = vpack.c.b16 %v2513, %v2507
  %v2574 = vpack.c.b16 %v2514, %v2508
  %v2575 = vpack.c.b16 %v2515, %v2509
  %v2576 = vpack.c.b16 %v2516, %v2510
  %v2577 = vpack.c.b16 %v2517, %v2511
  %v2578 = vpack.c.b16 %v2524, %v2518
  %v2579 = vpack.c.b16 %v2525, %v2519
  %v2580 = vpack.c.b16 %v2526, %v2520
  %v2581 = vpack.c.b16 %v2527, %v2521
  %v2582 = vpack.c.b16 %v2528, %v2522
  %v2583 = vpack.c.b16 %v2529, %v2523
  %v2584 = vpack.c.b16 %v2536, %v2530
  %v2585 = vpack.c.b16 %v2537, %v2531
  %v2586 = vpack.c.b16 %v2538, %v2532
  %v2587 = vpack.c.b16 %v2539, %v2533
  %v2588 = vpack.c.b16 %v2540, %v2534
  %v2589 = vpack.c.b16 %v2541, %v2535
  %2638 = vmatpush.bf16.msra.mxu0 %v2584
  %2639 = vmatpush.bf16.msra.mxu0 %v2578
  %2640 = vmatpush.bf16.msra.mxu0 %v2572
  %2641 = vmatpush.bf16.msra.mxu0 %v2566
  %2642 = vmatpush.bf16.msra.mxu0 %v2560
  %2643 = vmatpush.bf16.msra.mxu0 %v2554
  %2644 = vmatpush.bf16.msra.mxu0 %v2548
  %2645 = vmatpush.bf16.msra.mxu0 %v2542
  %2646 = vmatmul.bf16.gmra.mxu0 %v1982
  %v2647 = vpop.f32.mrf.mxu0
  %v2648 = vadd.f32 %v567, %v2647
  %v2649 = vpop.f32.mrf.mxu0
  %2650 = vdwg.mxu0
  %2651 = vmatpush.bf16.msra.mxu0 %v2585
  %2652 = vmatpush.bf16.msra.mxu0 %v2579
  %2653 = vmatpush.bf16.msra.mxu0 %v2573
  %2654 = vmatpush.bf16.msra.mxu0 %v2567
  %2655 = vmatpush.bf16.msra.mxu0 %v2561
  %2656 = vmatpush.bf16.msra.mxu0 %v2555
  %2657 = vmatpush.bf16.msra.mxu0 %v2549
  %2658 = vmatpush.bf16.msra.mxu0 %v2543
  %2659 = vmatmul.bf16.gmra.mxu0 %v1982
  %v2660 = vpop.f32.mrf.mxu0
  %v2661 = vadd.f32 %v568, %v2660
  %v2662 = vpop.f32.mrf.mxu0
  %2663 = vdwg.mxu0
  %2664 = vmatpush.bf16.msra.mxu0 %v2586
  %2665 = vmatpush.bf16.msra.mxu0 %v2580
  %2666 = vmatpush.bf16.msra.mxu0 %v2574
  %2667 = vmatpush.bf16.msra.mxu0 %v2568
  %2668 = vmatpush.bf16.msra.mxu0 %v2562
  %2669 = vmatpush.bf16.msra.mxu0 %v2556
  %2670 = vmatpush.bf16.msra.mxu0 %v2550
  %2671 = vmatpush.bf16.msra.mxu0 %v2544
  %2672 = vmatmul.bf16.gmra.mxu0 %v1982
  %v2673 = vpop.f32.mrf.mxu0
  %v2674 = vadd.f32 %v569, %v2673
  %v2675 = vpop.f32.mrf.mxu0
  %2676 = vdwg.mxu0
  %2677 = vmatpush.bf16.msra.mxu0 %v2587
  %2678 = vmatpush.bf16.msra.mxu0 %v2581
  %2679 = vmatpush.bf16.msra.mxu0 %v2575
  %2680 = vmatpush.bf16.msra.mxu0 %v2569
  %2681 = vmatpush.bf16.msra.mxu0 %v2563
  %2682 = vmatpush.bf16.msra.mxu0 %v2557
  %2683 = vmatpush.bf16.msra.mxu0 %v2551
  %2684 = vmatpush.bf16.msra.mxu0 %v2545
  %2685 = vmatmul.bf16.gmra.mxu0 %v1982
  %v2686 = vpop.f32.mrf.mxu0
  %v2687 = vadd.f32 %v570, %v2686
  %v2688 = vpop.f32.mrf.mxu0
  %2689 = vdwg.mxu0
  %2690 = vmatpush.bf16.msra.mxu0 %v2588
  %2691 = vmatpush.bf16.msra.mxu0 %v2582
  %2692 = vmatpush.bf16.msra.mxu0 %v2576
  %2693 = vmatpush.bf16.msra.mxu0 %v2570
  %2694 = vmatpush.bf16.msra.mxu0 %v2564
  %2695 = vmatpush.bf16.msra.mxu0 %v2558
  %2696 = vmatpush.bf16.msra.mxu0 %v2552
  %2697 = vmatpush.bf16.msra.mxu0 %v2546
  %2698 = vmatmul.bf16.gmra.mxu0 %v1982
  %v2699 = vpop.f32.mrf.mxu0
  %v2700 = vadd.f32 %v571, %v2699
  %v2701 = vpop.f32.mrf.mxu0
  %2702 = vdwg.mxu0
  %2703 = vmatpush.bf16.msra.mxu0 %v2589
  %2704 = vmatpush.bf16.msra.mxu0 %v2583
  %2705 = vmatpush.bf16.msra.mxu0 %v2577
  %2706 = vmatpush.bf16.msra.mxu0 %v2571
  %2707 = vmatpush.bf16.msra.mxu0 %v2565
  %2708 = vmatpush.bf16.msra.mxu0 %v2559
  %2709 = vmatpush.bf16.msra.mxu0 %v2553
  %2710 = vmatpush.bf16.msra.mxu0 %v2547
  %2711 = vmatmul.bf16.gmra.mxu0 %v1982
  %v2712 = vpop.f32.mrf.mxu0
  %v2713 = vadd.f32 %v572, %v2712
  %v2714 = vpop.f32.mrf.mxu0
  %2715 = vdwg.mxu0
  %v2716 = vxor.u32 %v2661, 2147483648
  %v2717 = vmul.f32 %v2716, 1.442695
  %v2718 = vpow.pop %v2717
  %v2719 = vadd.f32 %v2718, 1.0
  %v2720 = vrcp.pop %v2719
  %v2721 = vmul.f32 %v2719, %v2720
  %v2722 = vsub.f32 1.0, %v2721
  %v2723 = vmul.f32 %v2720, %v2722
  %v2724 = vadd.f32 %v2720, %v2723
  %vm2725 = vweird.f32 %v2719
  %vm2726 = vweird.f32 %v2720
  %vm2727 = vmor %vm2725, %vm2726
  %v2728 = vsel %vm2727, %v2720, %v2724
  %v2729 = vand.u32 2147483647, %v2719
  %vm2730 = vcmp.eq.f32.partialorder %v2729, 8.507059e+37
  %v2731 = vand.u32 %v2719, 2147483648
  %v2732 = vor.u32 1.1754944e-38, %v2731
  %v2733 = vsel %vm2730, %v2732, %v2728
  %v2734 = vmul.f32 1.0, %v2733
  %v2736 = vrot.slane %v2648, 1
  %v2737 = vrot.slane %v2648, 2
  %v2738 = vrot.slane %v2648, 3
  %v2739 = vrot.slane %v2648, 4
  %v2740 = vrot.slane %v2648, 5
  %v2741 = vrot.slane %v2648, 6
  %v2742 = vrot.slane %v2648, 7
  %v2743 = vperm.slane %v2648, 0
  %v2744 = vperm.slane %v2736, 0
  %v2745 = vperm.slane %v2737, 0
  %v2746 = vperm.slane %v2738, 0
  %v2747 = vperm.slane %v2739, 0
  %v2748 = vperm.slane %v2740, 0
  %v2749 = vperm.slane %v2741, 0
  %v2750 = vperm.slane %v2742, 0
  %v2759 = vadd.f32 %v496, %v2743
  %v2760 = vadd.f32 %v497, %v2743
  %v2761 = vadd.f32 %v498, %v2744
  %v2762 = vadd.f32 %v499, %v2744
  %v2763 = vadd.f32 %v500, %v2745
  %v2764 = vadd.f32 %v501, %v2745
  %v2765 = vadd.f32 %v502, %v2746
  %v2766 = vadd.f32 %v503, %v2746
  %v2767 = vadd.f32 %v504, %v2747
  %v2768 = vadd.f32 %v505, %v2747
  %v2769 = vadd.f32 %v506, %v2748
  %v2770 = vadd.f32 %v507, %v2748
  %v2771 = vadd.f32 %v508, %v2749
  %v2772 = vadd.f32 %v509, %v2749
  %v2773 = vadd.f32 %v510, %v2750
  %v2774 = vadd.f32 %v511, %v2750
  %v2775 = vtanh.pop %v2759
  %v2776 = vtanh.pop %v2760
  %v2777 = vtanh.pop %v2761
  %v2778 = vtanh.pop %v2762
  %v2779 = vtanh.pop %v2763
  %v2780 = vtanh.pop %v2764
  %v2781 = vtanh.pop %v2765
  %v2782 = vtanh.pop %v2766
  %v2783 = vtanh.pop %v2767
  %v2784 = vtanh.pop %v2768
  %v2785 = vtanh.pop %v2769
  %v2786 = vtanh.pop %v2770
  %v2787 = vtanh.pop %v2771
  %v2788 = vtanh.pop %v2772
  %v2789 = vtanh.pop %v2773
  %v2790 = vtanh.pop %v2774
  %v2791 = vmul.f32 %v2775, %v973
  %v2792 = vmul.f32 %v2776, %v973
  %v2793 = vmul.f32 %v2777, %v973
  %v2794 = vmul.f32 %v2778, %v973
  %v2795 = vmul.f32 %v2779, %v973
  %v2796 = vmul.f32 %v2780, %v973
  %v2797 = vmul.f32 %v2781, %v973
  %v2798 = vmul.f32 %v2782, %v973
  %v2799 = vmul.f32 %v2783, %v973
  %v2800 = vmul.f32 %v2784, %v973
  %v2801 = vmul.f32 %v2785, %v973
  %v2802 = vmul.f32 %v2786, %v973
  %v2803 = vmul.f32 %v2787, %v973
  %v2804 = vmul.f32 %v2788, %v973
  %v2805 = vmul.f32 %v2789, %v973
  %v2806 = vmul.f32 %v2790, %v973
  %2807 = vadd.xlane.f32.xlu0 %v2791
  %v2808 = vpop.xlane.xlu0 %2807
  %2809 = vadd.xlane.f32.xlu0 %v2792
  %v2810 = vpop.xlane.xlu0 %2809
  %2811 = vadd.xlane.f32.xlu0 %v2793
  %v2812 = vpop.xlane.xlu0 %2811
  %2813 = vadd.xlane.f32.xlu0 %v2794
  %v2814 = vpop.xlane.xlu0 %2813
  %2815 = vadd.xlane.f32.xlu0 %v2795
  %v2816 = vpop.xlane.xlu0 %2815
  %2817 = vadd.xlane.f32.xlu0 %v2796
  %v2818 = vpop.xlane.xlu0 %2817
  %2819 = vadd.xlane.f32.xlu0 %v2797
  %v2820 = vpop.xlane.xlu0 %2819
  %2821 = vadd.xlane.f32.xlu0 %v2798
  %v2822 = vpop.xlane.xlu0 %2821
  %2823 = vadd.xlane.f32.xlu0 %v2799
  %v2824 = vpop.xlane.xlu0 %2823
  %2825 = vadd.xlane.f32.xlu0 %v2800
  %v2826 = vpop.xlane.xlu0 %2825
  %2827 = vadd.xlane.f32.xlu0 %v2801
  %v2828 = vpop.xlane.xlu0 %2827
  %2829 = vadd.xlane.f32.xlu0 %v2802
  %v2830 = vpop.xlane.xlu0 %2829
  %2831 = vadd.xlane.f32.xlu0 %v2803
  %v2832 = vpop.xlane.xlu0 %2831
  %2833 = vadd.xlane.f32.xlu0 %v2804
  %v2834 = vpop.xlane.xlu0 %2833
  %2835 = vadd.xlane.f32.xlu0 %v2805
  %v2836 = vpop.xlane.xlu0 %2835
  %2837 = vadd.xlane.f32.xlu0 %v2806
  %v2838 = vpop.xlane.xlu0 %2837
  %v2839 = vadd.f32 %v2808, %v1023
  %v2840 = vadd.f32 %v2810, %v1023
  %v2841 = vadd.f32 %v2812, %v1023
  %v2842 = vadd.f32 %v2814, %v1023
  %v2843 = vadd.f32 %v2816, %v1023
  %v2844 = vadd.f32 %v2818, %v1023
  %v2845 = vadd.f32 %v2820, %v1023
  %v2846 = vadd.f32 %v2822, %v1023
  %v2847 = vadd.f32 %v2824, %v1023
  %v2848 = vadd.f32 %v2826, %v1023
  %v2849 = vadd.f32 %v2828, %v1023
  %v2850 = vadd.f32 %v2830, %v1023
  %v2851 = vadd.f32 %v2832, %v1023
  %v2852 = vadd.f32 %v2834, %v1023
  %v2853 = vadd.f32 %v2836, %v1023
  %v2854 = vadd.f32 %v2838, %v1023
  %v2855 = vmax.f32 %v2839, %v2840
  %v2856 = vrot.slane %v2855, 4
  %v2857 = vmax.f32 %v2855, %v2856
  %v2858 = vrot.slane %v2857, 2
  %v2859 = vmax.f32 %v2857, %v2858
  %v2860 = vrot.slane %v2859, 1
  %v2861 = vmax.f32 %v2859, %v2860
  %v2862 = vmax.f32 %v2841, %v2842
  %v2863 = vrot.slane %v2862, 4
  %v2864 = vmax.f32 %v2862, %v2863
  %v2865 = vrot.slane %v2864, 2
  %v2866 = vmax.f32 %v2864, %v2865
  %v2867 = vrot.slane %v2866, 1
  %v2868 = vmax.f32 %v2866, %v2867
  %v2869 = vmax.f32 %v2843, %v2844
  %v2870 = vrot.slane %v2869, 4
  %v2871 = vmax.f32 %v2869, %v2870
  %v2872 = vrot.slane %v2871, 2
  %v2873 = vmax.f32 %v2871, %v2872
  %v2874 = vrot.slane %v2873, 1
  %v2875 = vmax.f32 %v2873, %v2874
  %v2876 = vmax.f32 %v2845, %v2846
  %v2877 = vrot.slane %v2876, 4
  %v2878 = vmax.f32 %v2876, %v2877
  %v2879 = vrot.slane %v2878, 2
  %v2880 = vmax.f32 %v2878, %v2879
  %v2881 = vrot.slane %v2880, 1
  %v2882 = vmax.f32 %v2880, %v2881
  %v2883 = vmax.f32 %v2847, %v2848
  %v2884 = vrot.slane %v2883, 4
  %v2885 = vmax.f32 %v2883, %v2884
  %v2886 = vrot.slane %v2885, 2
  %v2887 = vmax.f32 %v2885, %v2886
  %v2888 = vrot.slane %v2887, 1
  %v2889 = vmax.f32 %v2887, %v2888
  %v2890 = vmax.f32 %v2849, %v2850
  %v2891 = vrot.slane %v2890, 4
  %v2892 = vmax.f32 %v2890, %v2891
  %v2893 = vrot.slane %v2892, 2
  %v2894 = vmax.f32 %v2892, %v2893
  %v2895 = vrot.slane %v2894, 1
  %v2896 = vmax.f32 %v2894, %v2895
  %v2897 = vmax.f32 %v2851, %v2852
  %v2898 = vrot.slane %v2897, 4
  %v2899 = vmax.f32 %v2897, %v2898
  %v2900 = vrot.slane %v2899, 2
  %v2901 = vmax.f32 %v2899, %v2900
  %v2902 = vrot.slane %v2901, 1
  %v2903 = vmax.f32 %v2901, %v2902
  %v2904 = vmax.f32 %v2853, %v2854
  %v2905 = vrot.slane %v2904, 4
  %v2906 = vmax.f32 %v2904, %v2905
  %v2907 = vrot.slane %v2906, 2
  %v2908 = vmax.f32 %v2906, %v2907
  %v2909 = vrot.slane %v2908, 1
  %v2910 = vmax.f32 %v2908, %v2909
  %v2911 = vsub.f32 %v2839, %v2861
  %v2912 = vsub.f32 %v2840, %v2861
  %v2913 = vsub.f32 %v2841, %v2868
  %v2914 = vsub.f32 %v2842, %v2868
  %v2915 = vsub.f32 %v2843, %v2875
  %v2916 = vsub.f32 %v2844, %v2875
  %v2917 = vsub.f32 %v2845, %v2882
  %v2918 = vsub.f32 %v2846, %v2882
  %v2919 = vsub.f32 %v2847, %v2889
  %v2920 = vsub.f32 %v2848, %v2889
  %v2921 = vsub.f32 %v2849, %v2896
  %v2922 = vsub.f32 %v2850, %v2896
  %v2923 = vsub.f32 %v2851, %v2903
  %v2924 = vsub.f32 %v2852, %v2903
  %v2925 = vsub.f32 %v2853, %v2910
  %v2926 = vsub.f32 %v2854, %v2910
  %v2927 = vmul.f32 %v2911, 1.442695
  %v2928 = vpow.pop %v2927
  %v2929 = vmul.f32 %v2912, 1.442695
  %v2930 = vpow.pop %v2929
  %v2931 = vmul.f32 %v2913, 1.442695
  %v2932 = vpow.pop %v2931
  %v2933 = vmul.f32 %v2914, 1.442695
  %v2934 = vpow.pop %v2933
  %v2935 = vmul.f32 %v2915, 1.442695
  %v2936 = vpow.pop %v2935
  %v2937 = vmul.f32 %v2916, 1.442695
  %v2938 = vpow.pop %v2937
  %v2939 = vmul.f32 %v2917, 1.442695
  %v2940 = vpow.pop %v2939
  %v2941 = vmul.f32 %v2918, 1.442695
  %v2942 = vpow.pop %v2941
  %v2943 = vmul.f32 %v2919, 1.442695
  %v2944 = vpow.pop %v2943
  %v2945 = vmul.f32 %v2920, 1.442695
  %v2946 = vpow.pop %v2945
  %v2947 = vmul.f32 %v2921, 1.442695
  %v2948 = vpow.pop %v2947
  %v2949 = vmul.f32 %v2922, 1.442695
  %v2950 = vpow.pop %v2949
  %v2951 = vmul.f32 %v2923, 1.442695
  %v2952 = vpow.pop %v2951
  %v2953 = vmul.f32 %v2924, 1.442695
  %v2954 = vpow.pop %v2953
  %v2955 = vmul.f32 %v2925, 1.442695
  %v2956 = vpow.pop %v2955
  %v2957 = vmul.f32 %v2926, 1.442695
  %v2958 = vpow.pop %v2957
  %v2959 = vadd.f32 %v2928, %v2930
  %v2960 = vrot.slane %v2959, 4
  %v2961 = vadd.f32 %v2959, %v2960
  %v2962 = vrot.slane %v2961, 2
  %v2963 = vadd.f32 %v2961, %v2962
  %v2964 = vrot.slane %v2963, 1
  %v2965 = vadd.f32 %v2963, %v2964
  %v2966 = vadd.f32 %v2932, %v2934
  %v2967 = vrot.slane %v2966, 4
  %v2968 = vadd.f32 %v2966, %v2967
  %v2969 = vrot.slane %v2968, 2
  %v2970 = vadd.f32 %v2968, %v2969
  %v2971 = vrot.slane %v2970, 1
  %v2972 = vadd.f32 %v2970, %v2971
  %v2973 = vadd.f32 %v2936, %v2938
  %v2974 = vrot.slane %v2973, 4
  %v2975 = vadd.f32 %v2973, %v2974
  %v2976 = vrot.slane %v2975, 2
  %v2977 = vadd.f32 %v2975, %v2976
  %v2978 = vrot.slane %v2977, 1
  %v2979 = vadd.f32 %v2977, %v2978
  %v2980 = vadd.f32 %v2940, %v2942
  %v2981 = vrot.slane %v2980, 4
  %v2982 = vadd.f32 %v2980, %v2981
  %v2983 = vrot.slane %v2982, 2
  %v2984 = vadd.f32 %v2982, %v2983
  %v2985 = vrot.slane %v2984, 1
  %v2986 = vadd.f32 %v2984, %v2985
  %v2987 = vadd.f32 %v2944, %v2946
  %v2988 = vrot.slane %v2987, 4
  %v2989 = vadd.f32 %v2987, %v2988
  %v2990 = vrot.slane %v2989, 2
  %v2991 = vadd.f32 %v2989, %v2990
  %v2992 = vrot.slane %v2991, 1
  %v2993 = vadd.f32 %v2991, %v2992
  %v2994 = vadd.f32 %v2948, %v2950
  %v2995 = vrot.slane %v2994, 4
  %v2996 = vadd.f32 %v2994, %v2995
  %v2997 = vrot.slane %v2996, 2
  %v2998 = vadd.f32 %v2996, %v2997
  %v2999 = vrot.slane %v2998, 1
  %v3000 = vadd.f32 %v2998, %v2999
  %v3001 = vadd.f32 %v2952, %v2954
  %v3002 = vrot.slane %v3001, 4
  %v3003 = vadd.f32 %v3001, %v3002
  %v3004 = vrot.slane %v3003, 2
  %v3005 = vadd.f32 %v3003, %v3004
  %v3006 = vrot.slane %v3005, 1
  %v3007 = vadd.f32 %v3005, %v3006
  %v3008 = vadd.f32 %v2956, %v2958
  %v3009 = vrot.slane %v3008, 4
  %v3010 = vadd.f32 %v3008, %v3009
  %v3011 = vrot.slane %v3010, 2
  %v3012 = vadd.f32 %v3010, %v3011
  %v3013 = vrot.slane %v3012, 1
  %v3014 = vadd.f32 %v3012, %v3013
  %v3015 = vrcp.pop %v2965
  %v3016 = vmul.f32 %v2965, %v3015
  %v3017 = vsub.f32 1.0, %v3016
  %v3018 = vmul.f32 %v3015, %v3017
  %v3019 = vadd.f32 %v3015, %v3018
  %vm3020 = vweird.f32 %v2965
  %vm3021 = vweird.f32 %v3015
  %vm3022 = vmor %vm3020, %vm3021
  %v3023 = vsel %vm3022, %v3015, %v3019
  %v3024 = vand.u32 2147483647, %v2965
  %vm3025 = vcmp.eq.f32.partialorder %v3024, 8.507059e+37
  %v3026 = vand.u32 %v2965, 2147483648
  %v3027 = vor.u32 1.1754944e-38, %v3026
  %v3028 = vsel %vm3025, %v3027, %v3023
  %v3029 = vmul.f32 %v2928, %v3028
  %v3030 = vmul.f32 %v2930, %v3028
  %v3031 = vrcp.pop %v2972
  %v3032 = vmul.f32 %v2972, %v3031
  %v3033 = vsub.f32 1.0, %v3032
  %v3034 = vmul.f32 %v3031, %v3033
  %v3035 = vadd.f32 %v3031, %v3034
  %vm3036 = vweird.f32 %v2972
  %vm3037 = vweird.f32 %v3031
  %vm3038 = vmor %vm3036, %vm3037
  %v3039 = vsel %vm3038, %v3031, %v3035
  %v3040 = vand.u32 2147483647, %v2972
  %vm3041 = vcmp.eq.f32.partialorder %v3040, 8.507059e+37
  %v3042 = vand.u32 %v2972, 2147483648
  %v3043 = vor.u32 1.1754944e-38, %v3042
  %v3044 = vsel %vm3041, %v3043, %v3039
  %v3045 = vmul.f32 %v2932, %v3044
  %v3046 = vmul.f32 %v2934, %v3044
  %v3047 = vrcp.pop %v2979
  %v3048 = vmul.f32 %v2979, %v3047
  %v3049 = vsub.f32 1.0, %v3048
  %v3050 = vmul.f32 %v3047, %v3049
  %v3051 = vadd.f32 %v3047, %v3050
  %vm3052 = vweird.f32 %v2979
  %vm3053 = vweird.f32 %v3047
  %vm3054 = vmor %vm3052, %vm3053
  %v3055 = vsel %vm3054, %v3047, %v3051
  %v3056 = vand.u32 2147483647, %v2979
  %vm3057 = vcmp.eq.f32.partialorder %v3056, 8.507059e+37
  %v3058 = vand.u32 %v2979, 2147483648
  %v3059 = vor.u32 1.1754944e-38, %v3058
  %v3060 = vsel %vm3057, %v3059, %v3055
  %v3061 = vmul.f32 %v2936, %v3060
  %v3062 = vmul.f32 %v2938, %v3060
  %v3063 = vrcp.pop %v2986
  %v3064 = vmul.f32 %v2986, %v3063
  %v3065 = vsub.f32 1.0, %v3064
  %v3066 = vmul.f32 %v3063, %v3065
  %v3067 = vadd.f32 %v3063, %v3066
  %vm3068 = vweird.f32 %v2986
  %vm3069 = vweird.f32 %v3063
  %vm3070 = vmor %vm3068, %vm3069
  %v3071 = vsel %vm3070, %v3063, %v3067
  %v3072 = vand.u32 2147483647, %v2986
  %vm3073 = vcmp.eq.f32.partialorder %v3072, 8.507059e+37
  %v3074 = vand.u32 %v2986, 2147483648
  %v3075 = vor.u32 1.1754944e-38, %v3074
  %v3076 = vsel %vm3073, %v3075, %v3071
  %v3077 = vmul.f32 %v2940, %v3076
  %v3078 = vmul.f32 %v2942, %v3076
  %v3079 = vrcp.pop %v2993
  %v3080 = vmul.f32 %v2993, %v3079
  %v3081 = vsub.f32 1.0, %v3080
  %v3082 = vmul.f32 %v3079, %v3081
  %v3083 = vadd.f32 %v3079, %v3082
  %vm3084 = vweird.f32 %v2993
  %vm3085 = vweird.f32 %v3079
  %vm3086 = vmor %vm3084, %vm3085
  %v3087 = vsel %vm3086, %v3079, %v3083
  %v3088 = vand.u32 2147483647, %v2993
  %vm3089 = vcmp.eq.f32.partialorder %v3088, 8.507059e+37
  %v3090 = vand.u32 %v2993, 2147483648
  %v3091 = vor.u32 1.1754944e-38, %v3090
  %v3092 = vsel %vm3089, %v3091, %v3087
  %v3093 = vmul.f32 %v2944, %v3092
  %v3094 = vmul.f32 %v2946, %v3092
  %v3095 = vrcp.pop %v3000
  %v3096 = vmul.f32 %v3000, %v3095
  %v3097 = vsub.f32 1.0, %v3096
  %v3098 = vmul.f32 %v3095, %v3097
  %v3099 = vadd.f32 %v3095, %v3098
  %vm3100 = vweird.f32 %v3000
  %vm3101 = vweird.f32 %v3095
  %vm3102 = vmor %vm3100, %vm3101
  %v3103 = vsel %vm3102, %v3095, %v3099
  %v3104 = vand.u32 2147483647, %v3000
  %vm3105 = vcmp.eq.f32.partialorder %v3104, 8.507059e+37
  %v3106 = vand.u32 %v3000, 2147483648
  %v3107 = vor.u32 1.1754944e-38, %v3106
  %v3108 = vsel %vm3105, %v3107, %v3103
  %v3109 = vmul.f32 %v2948, %v3108
  %v3110 = vmul.f32 %v2950, %v3108
  %v3111 = vrcp.pop %v3007
  %v3112 = vmul.f32 %v3007, %v3111
  %v3113 = vsub.f32 1.0, %v3112
  %v3114 = vmul.f32 %v3111, %v3113
  %v3115 = vadd.f32 %v3111, %v3114
  %vm3116 = vweird.f32 %v3007
  %vm3117 = vweird.f32 %v3111
  %vm3118 = vmor %vm3116, %vm3117
  %v3119 = vsel %vm3118, %v3111, %v3115
  %v3120 = vand.u32 2147483647, %v3007
  %vm3121 = vcmp.eq.f32.partialorder %v3120, 8.507059e+37
  %v3122 = vand.u32 %v3007, 2147483648
  %v3123 = vor.u32 1.1754944e-38, %v3122
  %v3124 = vsel %vm3121, %v3123, %v3119
  %v3125 = vmul.f32 %v2952, %v3124
  %v3126 = vmul.f32 %v2954, %v3124
  %v3127 = vrcp.pop %v3014
  %v3128 = vmul.f32 %v3014, %v3127
  %v3129 = vsub.f32 1.0, %v3128
  %v3130 = vmul.f32 %v3127, %v3129
  %v3131 = vadd.f32 %v3127, %v3130
  %vm3132 = vweird.f32 %v3014
  %vm3133 = vweird.f32 %v3127
  %vm3134 = vmor %vm3132, %vm3133
  %v3135 = vsel %vm3134, %v3127, %v3131
  %v3136 = vand.u32 2147483647, %v3014
  %vm3137 = vcmp.eq.f32.partialorder %v3136, 8.507059e+37
  %v3138 = vand.u32 %v3014, 2147483648
  %v3139 = vor.u32 1.1754944e-38, %v3138
  %v3140 = vsel %vm3137, %v3139, %v3135
  %v3141 = vmul.f32 %v2956, %v3140
  %v3142 = vmul.f32 %v2958, %v3140
  %v3143 = vld [vmem:[%s0] sm:$0xff]
  %v3144 = vld [vmem:[%s0 + $0x8] sm:$0xff]
  %v3145 = vld [vmem:[%s0 + $0x10] sm:$0xff]
  %v3146 = vld [vmem:[%s0 + $0x18] sm:$0xff]
  %v3147 = vld [vmem:[%s0 + $0x20] sm:$0xff]
  %v3148 = vld [vmem:[%s0 + $0x28] sm:$0xff]
  %v3149 = vld [vmem:[%s0 + $0x30] sm:$0xff]
  %v3150 = vld [vmem:[%s0 + $0x38] sm:$0xff]
  %v3151 = vld [vmem:[%s0 + $0x40] sm:$0xff]
  %v3152 = vld [vmem:[%s0 + $0x48] sm:$0xff]
  %v3153 = vld [vmem:[%s0 + $0x50] sm:$0xff]
  %v3154 = vld [vmem:[%s0 + $0x58] sm:$0xff]
  %v3155 = vld [vmem:[%s0 + $0x60] sm:$0xff]
  %v3156 = vld [vmem:[%s0 + $0x68] sm:$0xff]
  %v3157 = vld [vmem:[%s0 + $0x70] sm:$0xff]
  %v3158 = vld [vmem:[%s0 + $0x78] sm:$0xff]
  %v3159 = vmul.f32 %v3143, %v3029
  %v3160 = vmul.f32 %v3144, %v3030
  %v3161 = vmul.f32 %v3145, %v3045
  %v3162 = vmul.f32 %v3146, %v3046
  %v3163 = vmul.f32 %v3147, %v3061
  %v3164 = vmul.f32 %v3148, %v3062
  %v3165 = vmul.f32 %v3149, %v3077
  %v3166 = vmul.f32 %v3150, %v3078
  %v3167 = vmul.f32 %v3151, %v3093
  %v3168 = vmul.f32 %v3152, %v3094
  %v3169 = vmul.f32 %v3153, %v3109
  %v3170 = vmul.f32 %v3154, %v3110
  %v3171 = vmul.f32 %v3155, %v3125
  %v3172 = vmul.f32 %v3156, %v3126
  %v3173 = vmul.f32 %v3157, %v3141
  %v3174 = vmul.f32 %v3158, %v3142
  %v3175 = vadd.f32 %v3159, %v3160
  %v3176 = vrot.slane %v3175, 4
  %v3177 = vadd.f32 %v3175, %v3176
  %v3178 = vrot.slane %v3177, 2
  %v3179 = vadd.f32 %v3177, %v3178
  %v3180 = vrot.slane %v3179, 1
  %v3181 = vadd.f32 %v3179, %v3180
  %v3182 = vadd.f32 %v3161, %v3162
  %v3183 = vrot.slane %v3182, 4
  %v3184 = vadd.f32 %v3182, %v3183
  %v3185 = vrot.slane %v3184, 2
  %v3186 = vadd.f32 %v3184, %v3185
  %v3187 = vrot.slane %v3186, 1
  %v3188 = vadd.f32 %v3186, %v3187
  %v3189 = vadd.f32 %v3163, %v3164
  %v3190 = vrot.slane %v3189, 4
  %v3191 = vadd.f32 %v3189, %v3190
  %v3192 = vrot.slane %v3191, 2
  %v3193 = vadd.f32 %v3191, %v3192
  %v3194 = vrot.slane %v3193, 1
  %v3195 = vadd.f32 %v3193, %v3194
  %v3196 = vadd.f32 %v3165, %v3166
  %v3197 = vrot.slane %v3196, 4
  %v3198 = vadd.f32 %v3196, %v3197
  %v3199 = vrot.slane %v3198, 2
  %v3200 = vadd.f32 %v3198, %v3199
  %v3201 = vrot.slane %v3200, 1
  %v3202 = vadd.f32 %v3200, %v3201
  %v3203 = vadd.f32 %v3167, %v3168
  %v3204 = vrot.slane %v3203, 4
  %v3205 = vadd.f32 %v3203, %v3204
  %v3206 = vrot.slane %v3205, 2
  %v3207 = vadd.f32 %v3205, %v3206
  %v3208 = vrot.slane %v3207, 1
  %v3209 = vadd.f32 %v3207, %v3208
  %v3210 = vadd.f32 %v3169, %v3170
  %v3211 = vrot.slane %v3210, 4
  %v3212 = vadd.f32 %v3210, %v3211
  %v3213 = vrot.slane %v3212, 2
  %v3214 = vadd.f32 %v3212, %v3213
  %v3215 = vrot.slane %v3214, 1
  %v3216 = vadd.f32 %v3214, %v3215
  %v3217 = vadd.f32 %v3171, %v3172
  %v3218 = vrot.slane %v3217, 4
  %v3219 = vadd.f32 %v3217, %v3218
  %v3220 = vrot.slane %v3219, 2
  %v3221 = vadd.f32 %v3219, %v3220
  %v3222 = vrot.slane %v3221, 1
  %v3223 = vadd.f32 %v3221, %v3222
  %v3224 = vadd.f32 %v3173, %v3174
  %v3225 = vrot.slane %v3224, 4
  %v3226 = vadd.f32 %v3224, %v3225
  %v3227 = vrot.slane %v3226, 2
  %v3228 = vadd.f32 %v3226, %v3227
  %v3229 = vrot.slane %v3228, 1
  %v3230 = vadd.f32 %v3228, %v3229
  %v3239 = vsel %vm191, %v3188, %v3181
  %v3240 = vsel %vm193, %v3195, %v3239
  %v3241 = vsel %vm195, %v3202, %v3240
  %v3242 = vsel %vm197, %v3209, %v3241
  %v3243 = vsel %vm199, %v3216, %v3242
  %v3244 = vsel %vm201, %v3223, %v3243
  %v3245 = vsel %vm203, %v3230, %v3244
  %v3247 = vmul.f32 %v2734, %v3245
  %v3248 = vpack.c.bf16 %v3247, %v3247
  %v3249 = vld [vmem:[%s10] sm:$0xff]
  %v3250 = vld [vmem:[%s10 + $0x8] sm:$0xff]
  %v3251 = vld [vmem:[%s10 + $0x10] sm:$0xff]
  %v3252 = vld [vmem:[%s10 + $0x18] sm:$0xff]
  %v3253 = vld [vmem:[%s10 + $0x20] sm:$0xff]
  %v3254 = vld [vmem:[%s10 + $0x28] sm:$0xff]
  %v3255 = vld [vmem:[%s10 + $0x30] sm:$0xff]
  %v3256 = vld [vmem:[%s10 + $0x38] sm:$0xff]
  %v3257 = vld [vmem:[%s10 + $0x40] sm:$0xff]
  %v3258 = vld [vmem:[%s10 + $0x48] sm:$0xff]
  %v3259 = vld [vmem:[%s10 + $0x50] sm:$0xff]
  %v3260 = vld [vmem:[%s10 + $0x58] sm:$0xff]
  %v3261 = vld [vmem:[%s10 + $0x60] sm:$0xff]
  %v3262 = vld [vmem:[%s10 + $0x68] sm:$0xff]
  %v3263 = vld [vmem:[%s10 + $0x70] sm:$0xff]
  %v3264 = vld [vmem:[%s10 + $0x78] sm:$0xff]
  %v3265 = vld [vmem:[%s10 + $0x80] sm:$0xff]
  %v3266 = vld [vmem:[%s10 + $0x88] sm:$0xff]
  %v3267 = vld [vmem:[%s10 + $0x90] sm:$0xff]
  %v3268 = vld [vmem:[%s10 + $0x98] sm:$0xff]
  %v3269 = vld [vmem:[%s10 + $0xa0] sm:$0xff]
  %v3270 = vld [vmem:[%s10 + $0xa8] sm:$0xff]
  %v3271 = vld [vmem:[%s10 + $0xb0] sm:$0xff]
  %v3272 = vld [vmem:[%s10 + $0xb8] sm:$0xff]
  %v3273 = vld [vmem:[%s10 + $0xc0] sm:$0xff]
  %v3274 = vld [vmem:[%s10 + $0xc8] sm:$0xff]
  %v3275 = vld [vmem:[%s10 + $0xd0] sm:$0xff]
  %v3276 = vld [vmem:[%s10 + $0xd8] sm:$0xff]
  %v3277 = vld [vmem:[%s10 + $0xe0] sm:$0xff]
  %v3278 = vld [vmem:[%s10 + $0xe8] sm:$0xff]
  %v3279 = vld [vmem:[%s10 + $0xf0] sm:$0xff]
  %v3280 = vld [vmem:[%s10 + $0xf8] sm:$0xff]
  %v3281 = vld [vmem:[%s10 + $0x100] sm:$0xff]
  %v3282 = vld [vmem:[%s10 + $0x108] sm:$0xff]
  %v3283 = vld [vmem:[%s10 + $0x110] sm:$0xff]
  %v3284 = vld [vmem:[%s10 + $0x118] sm:$0xff]
  %v3285 = vld [vmem:[%s10 + $0x120] sm:$0xff]
  %v3286 = vld [vmem:[%s10 + $0x128] sm:$0xff]
  %v3287 = vld [vmem:[%s10 + $0x130] sm:$0xff]
  %v3288 = vld [vmem:[%s10 + $0x138] sm:$0xff]
  %v3289 = vld [vmem:[%s10 + $0x140] sm:$0xff]
  %v3290 = vld [vmem:[%s10 + $0x148] sm:$0xff]
  %v3291 = vld [vmem:[%s10 + $0x150] sm:$0xff]
  %v3292 = vld [vmem:[%s10 + $0x158] sm:$0xff]
  %v3293 = vld [vmem:[%s10 + $0x160] sm:$0xff]
  %v3294 = vld [vmem:[%s10 + $0x168] sm:$0xff]
  %v3295 = vld [vmem:[%s10 + $0x170] sm:$0xff]
  %v3296 = vld [vmem:[%s10 + $0x178] sm:$0xff]
  %v3297 = vld [vmem:[%s10 + $0x180] sm:$0xff]
  %v3298 = vld [vmem:[%s10 + $0x188] sm:$0xff]
  %v3299 = vld [vmem:[%s10 + $0x190] sm:$0xff]
  %v3300 = vld [vmem:[%s10 + $0x198] sm:$0xff]
  %v3301 = vld [vmem:[%s10 + $0x1a0] sm:$0xff]
  %v3302 = vld [vmem:[%s10 + $0x1a8] sm:$0xff]
  %v3303 = vld [vmem:[%s10 + $0x1b0] sm:$0xff]
  %v3304 = vld [vmem:[%s10 + $0x1b8] sm:$0xff]
  %v3305 = vld [vmem:[%s10 + $0x1c0] sm:$0xff]
  %v3306 = vld [vmem:[%s10 + $0x1c8] sm:$0xff]
  %v3307 = vld [vmem:[%s10 + $0x1d0] sm:$0xff]
  %v3308 = vld [vmem:[%s10 + $0x1d8] sm:$0xff]
  %v3309 = vld [vmem:[%s10 + $0x1e0] sm:$0xff]
  %v3310 = vld [vmem:[%s10 + $0x1e8] sm:$0xff]
  %v3311 = vld [vmem:[%s10 + $0x1f0] sm:$0xff]
  %v3312 = vld [vmem:[%s10 + $0x1f8] sm:$0xff]
  %v3377 = vunpack.c.l.b16 %v3249
  %v3378 = vunpack.c.h.b16 %v3249
  %v3379 = vunpack.c.l.b16 %v3250
  %v3380 = vunpack.c.h.b16 %v3250
  %v3381 = vunpack.c.l.b16 %v3251
  %v3382 = vunpack.c.h.b16 %v3251
  %v3383 = vunpack.c.l.b16 %v3252
  %v3384 = vunpack.c.h.b16 %v3252
  %v3385 = vunpack.c.l.b16 %v3253
  %v3386 = vunpack.c.h.b16 %v3253
  %v3387 = vunpack.c.l.b16 %v3254
  %v3388 = vunpack.c.h.b16 %v3254
  %v3389 = vunpack.c.l.b16 %v3255
  %v3390 = vunpack.c.h.b16 %v3255
  %v3391 = vunpack.c.l.b16 %v3256
  %v3392 = vunpack.c.h.b16 %v3256
  %v3393 = vunpack.c.l.b16 %v3257
  %v3394 = vunpack.c.h.b16 %v3257
  %v3395 = vunpack.c.l.b16 %v3258
  %v3396 = vunpack.c.h.b16 %v3258
  %v3397 = vunpack.c.l.b16 %v3259
  %v3398 = vunpack.c.h.b16 %v3259
  %v3399 = vunpack.c.l.b16 %v3260
  %v3400 = vunpack.c.h.b16 %v3260
  %v3401 = vunpack.c.l.b16 %v3261
  %v3402 = vunpack.c.h.b16 %v3261
  %v3403 = vunpack.c.l.b16 %v3262
  %v3404 = vunpack.c.h.b16 %v3262
  %v3405 = vunpack.c.l.b16 %v3263
  %v3406 = vunpack.c.h.b16 %v3263
  %v3407 = vunpack.c.l.b16 %v3264
  %v3408 = vunpack.c.h.b16 %v3264
  %v3409 = vunpack.c.l.b16 %v3265
  %v3410 = vunpack.c.h.b16 %v3265
  %v3411 = vunpack.c.l.b16 %v3266
  %v3412 = vunpack.c.h.b16 %v3266
  %v3413 = vunpack.c.l.b16 %v3267
  %v3414 = vunpack.c.h.b16 %v3267
  %v3415 = vunpack.c.l.b16 %v3268
  %v3416 = vunpack.c.h.b16 %v3268
  %v3417 = vunpack.c.l.b16 %v3269
  %v3418 = vunpack.c.h.b16 %v3269
  %v3419 = vunpack.c.l.b16 %v3270
  %v3420 = vunpack.c.h.b16 %v3270
  %v3421 = vunpack.c.l.b16 %v3271
  %v3422 = vunpack.c.h.b16 %v3271
  %v3423 = vunpack.c.l.b16 %v3272
  %v3424 = vunpack.c.h.b16 %v3272
  %v3425 = vunpack.c.l.b16 %v3273
  %v3426 = vunpack.c.h.b16 %v3273
  %v3427 = vunpack.c.l.b16 %v3274
  %v3428 = vunpack.c.h.b16 %v3274
  %v3429 = vunpack.c.l.b16 %v3275
  %v3430 = vunpack.c.h.b16 %v3275
  %v3431 = vunpack.c.l.b16 %v3276
  %v3432 = vunpack.c.h.b16 %v3276
  %v3433 = vunpack.c.l.b16 %v3277
  %v3434 = vunpack.c.h.b16 %v3277
  %v3435 = vunpack.c.l.b16 %v3278
  %v3436 = vunpack.c.h.b16 %v3278
  %v3437 = vunpack.c.l.b16 %v3279
  %v3438 = vunpack.c.h.b16 %v3279
  %v3439 = vunpack.c.l.b16 %v3280
  %v3440 = vunpack.c.h.b16 %v3280
  %v3441 = vunpack.c.l.b16 %v3281
  %v3442 = vunpack.c.h.b16 %v3281
  %v3443 = vunpack.c.l.b16 %v3282
  %v3444 = vunpack.c.h.b16 %v3282
  %v3445 = vunpack.c.l.b16 %v3283
  %v3446 = vunpack.c.h.b16 %v3283
  %v3447 = vunpack.c.l.b16 %v3284
  %v3448 = vunpack.c.h.b16 %v3284
  %v3449 = vunpack.c.l.b16 %v3285
  %v3450 = vunpack.c.h.b16 %v3285
  %v3451 = vunpack.c.l.b16 %v3286
  %v3452 = vunpack.c.h.b16 %v3286
  %v3453 = vunpack.c.l.b16 %v3287
  %v3454 = vunpack.c.h.b16 %v3287
  %v3455 = vunpack.c.l.b16 %v3288
  %v3456 = vunpack.c.h.b16 %v3288
  %v3457 = vunpack.c.l.b16 %v3289
  %v3458 = vunpack.c.h.b16 %v3289
  %v3459 = vunpack.c.l.b16 %v3290
  %v3460 = vunpack.c.h.b16 %v3290
  %v3461 = vunpack.c.l.b16 %v3291
  %v3462 = vunpack.c.h.b16 %v3291
  %v3463 = vunpack.c.l.b16 %v3292
  %v3464 = vunpack.c.h.b16 %v3292
  %v3465 = vunpack.c.l.b16 %v3293
  %v3466 = vunpack.c.h.b16 %v3293
  %v3467 = vunpack.c.l.b16 %v3294
  %v3468 = vunpack.c.h.b16 %v3294
  %v3469 = vunpack.c.l.b16 %v3295
  %v3470 = vunpack.c.h.b16 %v3295
  %v3471 = vunpack.c.l.b16 %v3296
  %v3472 = vunpack.c.h.b16 %v3296
  %v3473 = vunpack.c.l.b16 %v3297
  %v3474 = vunpack.c.h.b16 %v3297
  %v3475 = vunpack.c.l.b16 %v3298
  %v3476 = vunpack.c.h.b16 %v3298
  %v3477 = vunpack.c.l.b16 %v3299
  %v3478 = vunpack.c.h.b16 %v3299
  %v3479 = vunpack.c.l.b16 %v3300
  %v3480 = vunpack.c.h.b16 %v3300
  %v3481 = vunpack.c.l.b16 %v3301
  %v3482 = vunpack.c.h.b16 %v3301
  %v3483 = vunpack.c.l.b16 %v3302
  %v3484 = vunpack.c.h.b16 %v3302
  %v3485 = vunpack.c.l.b16 %v3303
  %v3486 = vunpack.c.h.b16 %v3303
  %v3487 = vunpack.c.l.b16 %v3304
  %v3488 = vunpack.c.h.b16 %v3304
  %v3489 = vunpack.c.l.b16 %v3305
  %v3490 = vunpack.c.h.b16 %v3305
  %v3491 = vunpack.c.l.b16 %v3306
  %v3492 = vunpack.c.h.b16 %v3306
  %v3493 = vunpack.c.l.b16 %v3307
  %v3494 = vunpack.c.h.b16 %v3307
  %v3495 = vunpack.c.l.b16 %v3308
  %v3496 = vunpack.c.h.b16 %v3308
  %v3497 = vunpack.c.l.b16 %v3309
  %v3498 = vunpack.c.h.b16 %v3309
  %v3499 = vunpack.c.l.b16 %v3310
  %v3500 = vunpack.c.h.b16 %v3310
  %v3501 = vunpack.c.l.b16 %v3311
  %v3502 = vunpack.c.h.b16 %v3311
  %v3503 = vunpack.c.l.b16 %v3312
  %v3504 = vunpack.c.h.b16 %v3312
  %v3505 = vpack.c.b16 %v3381, %v3377
  %v3506 = vpack.c.b16 %v3382, %v3378
  %v3507 = vpack.c.b16 %v3383, %v3379
  %v3508 = vpack.c.b16 %v3384, %v3380
  %v3509 = vpack.c.b16 %v3389, %v3385
  %v3510 = vpack.c.b16 %v3390, %v3386
  %v3511 = vpack.c.b16 %v3391, %v3387
  %v3512 = vpack.c.b16 %v3392, %v3388
  %v3513 = vpack.c.b16 %v3397, %v3393
  %v3514 = vpack.c.b16 %v3398, %v3394
  %v3515 = vpack.c.b16 %v3399, %v3395
  %v3516 = vpack.c.b16 %v3400, %v3396
  %v3517 = vpack.c.b16 %v3405, %v3401
  %v3518 = vpack.c.b16 %v3406, %v3402
  %v3519 = vpack.c.b16 %v3407, %v3403
  %v3520 = vpack.c.b16 %v3408, %v3404
  %v3521 = vpack.c.b16 %v3413, %v3409
  %v3522 = vpack.c.b16 %v3414, %v3410
  %v3523 = vpack.c.b16 %v3415, %v3411
  %v3524 = vpack.c.b16 %v3416, %v3412
  %v3525 = vpack.c.b16 %v3421, %v3417
  %v3526 = vpack.c.b16 %v3422, %v3418
  %v3527 = vpack.c.b16 %v3423, %v3419
  %v3528 = vpack.c.b16 %v3424, %v3420
  %v3529 = vpack.c.b16 %v3429, %v3425
  %v3530 = vpack.c.b16 %v3430, %v3426
  %v3531 = vpack.c.b16 %v3431, %v3427
  %v3532 = vpack.c.b16 %v3432, %v3428
  %v3533 = vpack.c.b16 %v3437, %v3433
  %v3534 = vpack.c.b16 %v3438, %v3434
  %v3535 = vpack.c.b16 %v3439, %v3435
  %v3536 = vpack.c.b16 %v3440, %v3436
  %v3537 = vpack.c.b16 %v3445, %v3441
  %v3538 = vpack.c.b16 %v3446, %v3442
  %v3539 = vpack.c.b16 %v3447, %v3443
  %v3540 = vpack.c.b16 %v3448, %v3444
  %v3541 = vpack.c.b16 %v3453, %v3449
  %v3542 = vpack.c.b16 %v3454, %v3450
  %v3543 = vpack.c.b16 %v3455, %v3451
  %v3544 = vpack.c.b16 %v3456, %v3452
  %v3545 = vpack.c.b16 %v3461, %v3457
  %v3546 = vpack.c.b16 %v3462, %v3458
  %v3547 = vpack.c.b16 %v3463, %v3459
  %v3548 = vpack.c.b16 %v3464, %v3460
  %v3549 = vpack.c.b16 %v3469, %v3465
  %v3550 = vpack.c.b16 %v3470, %v3466
  %v3551 = vpack.c.b16 %v3471, %v3467
  %v3552 = vpack.c.b16 %v3472, %v3468
  %v3553 = vpack.c.b16 %v3477, %v3473
  %v3554 = vpack.c.b16 %v3478, %v3474
  %v3555 = vpack.c.b16 %v3479, %v3475
  %v3556 = vpack.c.b16 %v3480, %v3476
  %v3557 = vpack.c.b16 %v3485, %v3481
  %v3558 = vpack.c.b16 %v3486, %v3482
  %v3559 = vpack.c.b16 %v3487, %v3483
  %v3560 = vpack.c.b16 %v3488, %v3484
  %v3561 = vpack.c.b16 %v3493, %v3489
  %v3562 = vpack.c.b16 %v3494, %v3490
  %v3563 = vpack.c.b16 %v3495, %v3491
  %v3564 = vpack.c.b16 %v3496, %v3492
  %v3565 = vpack.c.b16 %v3501, %v3497
  %v3566 = vpack.c.b16 %v3502, %v3498
  %v3567 = vpack.c.b16 %v3503, %v3499
  %v3568 = vpack.c.b16 %v3504, %v3500
  %3633 = vmatpush.bf16.msra.mxu0 %v3533
  %3634 = vmatpush.bf16.msra.mxu0 %v3529
  %3635 = vmatpush.bf16.msra.mxu0 %v3525
  %3636 = vmatpush.bf16.msra.mxu0 %v3521
  %3637 = vmatpush.bf16.msra.mxu0 %v3517
  %3638 = vmatpush.bf16.msra.mxu0 %v3513
  %3639 = vmatpush.bf16.msra.mxu0 %v3509
  %3640 = vmatpush.bf16.msra.mxu0 %v3505
  %3641 = vmatmul.bf16.gmra.mxu0 %v2349
  %v3642 = vpop.f32.mrf.mxu0
  %v3643 = vadd.f32 %v1483, %v3642
  %v3644 = vpop.f32.mrf.mxu0
  %3645 = vdwg.mxu0
  %3646 = vmatpush.bf16.msra.mxu0 %v3565
  %3647 = vmatpush.bf16.msra.mxu0 %v3561
  %3648 = vmatpush.bf16.msra.mxu0 %v3557
  %3649 = vmatpush.bf16.msra.mxu0 %v3553
  %3650 = vmatpush.bf16.msra.mxu0 %v3549
  %3651 = vmatpush.bf16.msra.mxu0 %v3545
  %3652 = vmatpush.bf16.msra.mxu0 %v3541
  %3653 = vmatpush.bf16.msra.mxu0 %v3537
  %3654 = vmatmul.bf16.gmra.mxu0 %v3248
  %v3655 = vpop.f32.mrf.mxu0
  %v3656 = vadd.f32 %v3643, %v3655
  %v3657 = vpop.f32.mrf.mxu0
  %3658 = vdwg.mxu0
  %3659 = vmatpush.bf16.msra.mxu0 %v3534
  %3660 = vmatpush.bf16.msra.mxu0 %v3530
  %3661 = vmatpush.bf16.msra.mxu0 %v3526
  %3662 = vmatpush.bf16.msra.mxu0 %v3522
  %3663 = vmatpush.bf16.msra.mxu0 %v3518
  %3664 = vmatpush.bf16.msra.mxu0 %v3514
  %3665 = vmatpush.bf16.msra.mxu0 %v3510
  %3666 = vmatpush.bf16.msra.mxu0 %v3506
  %3667 = vmatmul.bf16.gmra.mxu0 %v2349
  %v3668 = vpop.f32.mrf.mxu0
  %v3669 = vadd.f32 %v1484, %v3668
  %v3670 = vpop.f32.mrf.mxu0
  %3671 = vdwg.mxu0
  %3672 = vmatpush.bf16.msra.mxu0 %v3566
  %3673 = vmatpush.bf16.msra.mxu0 %v3562
  %3674 = vmatpush.bf16.msra.mxu0 %v3558
  %3675 = vmatpush.bf16.msra.mxu0 %v3554
  %3676 = vmatpush.bf16.msra.mxu0 %v3550
  %3677 = vmatpush.bf16.msra.mxu0 %v3546
  %3678 = vmatpush.bf16.msra.mxu0 %v3542
  %3679 = vmatpush.bf16.msra.mxu0 %v3538
  %3680 = vmatmul.bf16.gmra.mxu0 %v3248
  %v3681 = vpop.f32.mrf.mxu0
  %v3682 = vadd.f32 %v3669, %v3681
  %v3683 = vpop.f32.mrf.mxu0
  %3684 = vdwg.mxu0
  %3685 = vmatpush.bf16.msra.mxu0 %v3535
  %3686 = vmatpush.bf16.msra.mxu0 %v3531
  %3687 = vmatpush.bf16.msra.mxu0 %v3527
  %3688 = vmatpush.bf16.msra.mxu0 %v3523
  %3689 = vmatpush.bf16.msra.mxu0 %v3519
  %3690 = vmatpush.bf16.msra.mxu0 %v3515
  %3691 = vmatpush.bf16.msra.mxu0 %v3511
  %3692 = vmatpush.bf16.msra.mxu0 %v3507
  %3693 = vmatmul.bf16.gmra.mxu0 %v2349
  %v3694 = vpop.f32.mrf.mxu0
  %v3695 = vadd.f32 %v1485, %v3694
  %v3696 = vpop.f32.mrf.mxu0
  %3697 = vdwg.mxu0
  %3698 = vmatpush.bf16.msra.mxu0 %v3567
  %3699 = vmatpush.bf16.msra.mxu0 %v3563
  %3700 = vmatpush.bf16.msra.mxu0 %v3559
  %3701 = vmatpush.bf16.msra.mxu0 %v3555
  %3702 = vmatpush.bf16.msra.mxu0 %v3551
  %3703 = vmatpush.bf16.msra.mxu0 %v3547
  %3704 = vmatpush.bf16.msra.mxu0 %v3543
  %3705 = vmatpush.bf16.msra.mxu0 %v3539
  %3706 = vmatmul.bf16.gmra.mxu0 %v3248
  %v3707 = vpop.f32.mrf.mxu0
  %v3708 = vadd.f32 %v3695, %v3707
  %v3709 = vpop.f32.mrf.mxu0
  %3710 = vdwg.mxu0
  %3711 = vmatpush.bf16.msra.mxu0 %v3536
  %3712 = vmatpush.bf16.msra.mxu0 %v3532
  %3713 = vmatpush.bf16.msra.mxu0 %v3528
  %3714 = vmatpush.bf16.msra.mxu0 %v3524
  %3715 = vmatpush.bf16.msra.mxu0 %v3520
  %3716 = vmatpush.bf16.msra.mxu0 %v3516
  %3717 = vmatpush.bf16.msra.mxu0 %v3512
  %3718 = vmatpush.bf16.msra.mxu0 %v3508
  %3719 = vmatmul.bf16.gmra.mxu0 %v2349
  %v3720 = vpop.f32.mrf.mxu0
  %v3721 = vadd.f32 %v1486, %v3720
  %v3722 = vpop.f32.mrf.mxu0
  %3723 = vdwg.mxu0
  %3724 = vmatpush.bf16.msra.mxu0 %v3568
  %3725 = vmatpush.bf16.msra.mxu0 %v3564
  %3726 = vmatpush.bf16.msra.mxu0 %v3560
  %3727 = vmatpush.bf16.msra.mxu0 %v3556
  %3728 = vmatpush.bf16.msra.mxu0 %v3552
  %3729 = vmatpush.bf16.msra.mxu0 %v3548
  %3730 = vmatpush.bf16.msra.mxu0 %v3544
  %3731 = vmatpush.bf16.msra.mxu0 %v3540
  %3732 = vmatmul.bf16.gmra.mxu0 %v3248
  %v3733 = vpop.f32.mrf.mxu0
  %v3734 = vadd.f32 %v3721, %v3733
  %v3735 = vpop.f32.mrf.mxu0
  %3736 = vdwg.mxu0
  %v3737 = vadd.f32 %v3656, %v2674
  %v3738 = vadd.f32 %v3682, %v2687
  %v3739 = vadd.f32 %v3708, %v2700
  %v3740 = vadd.f32 %v3734, %v2713
  %v3741 = vxor.u32 %v3737, 2147483648
  %v3742 = vmul.f32 %v3741, 1.442695
  %v3743 = vpow.pop %v3742
  %v3744 = vadd.f32 %v3743, 1.0
  %v3745 = vrcp.pop %v3744
  %v3746 = vmul.f32 %v3744, %v3745
  %v3747 = vsub.f32 1.0, %v3746
  %v3748 = vmul.f32 %v3745, %v3747
  %v3749 = vadd.f32 %v3745, %v3748
  %vm3750 = vweird.f32 %v3744
  %vm3751 = vweird.f32 %v3745
  %vm3752 = vmor %vm3750, %vm3751
  %v3753 = vsel %vm3752, %v3745, %v3749
  %v3754 = vand.u32 2147483647, %v3744
  %vm3755 = vcmp.eq.f32.partialorder %v3754, 8.507059e+37
  %v3756 = vand.u32 %v3744, 2147483648
  %v3757 = vor.u32 1.1754944e-38, %v3756
  %v3758 = vsel %vm3755, %v3757, %v3753
  %v3759 = vmul.f32 1.0, %v3758
  %v3760 = vxor.u32 %v3738, 2147483648
  %v3761 = vmul.f32 %v3760, 1.442695
  %v3762 = vpow.pop %v3761
  %v3763 = vadd.f32 %v3762, 1.0
  %v3764 = vrcp.pop %v3763
  %v3765 = vmul.f32 %v3763, %v3764
  %v3766 = vsub.f32 1.0, %v3765
  %v3767 = vmul.f32 %v3764, %v3766
  %v3768 = vadd.f32 %v3764, %v3767
  %vm3769 = vweird.f32 %v3763
  %vm3770 = vweird.f32 %v3764
  %vm3771 = vmor %vm3769, %vm3770
  %v3772 = vsel %vm3771, %v3764, %v3768
  %v3773 = vand.u32 2147483647, %v3763
  %vm3774 = vcmp.eq.f32.partialorder %v3773, 8.507059e+37
  %v3775 = vand.u32 %v3763, 2147483648
  %v3776 = vor.u32 1.1754944e-38, %v3775
  %v3777 = vsel %vm3774, %v3776, %v3772
  %v3778 = vmul.f32 1.0, %v3777
  %v3779 = vtanh.pop %v3739
  %v3780 = vxor.u32 %v3740, 2147483648
  %v3781 = vmul.f32 %v3780, 1.442695
  %v3782 = vpow.pop %v3781
  %v3783 = vadd.f32 %v3782, 1.0
  %v3784 = vrcp.pop %v3783
  %v3785 = vmul.f32 %v3783, %v3784
  %v3786 = vsub.f32 1.0, %v3785
  %v3787 = vmul.f32 %v3784, %v3786
  %v3788 = vadd.f32 %v3784, %v3787
  %vm3789 = vweird.f32 %v3783
  %vm3790 = vweird.f32 %v3784
  %vm3791 = vmor %vm3789, %vm3790
  %v3792 = vsel %vm3791, %v3784, %v3788
  %v3793 = vand.u32 2147483647, %v3783
  %vm3794 = vcmp.eq.f32.partialorder %v3793, 8.507059e+37
  %v3795 = vand.u32 %v3783, 2147483648
  %v3796 = vor.u32 1.1754944e-38, %v3795
  %v3797 = vsel %vm3794, %v3796, %v3792
  %v3798 = vmul.f32 1.0, %v3797
  %v3799 = vmul.f32 %v3778, %v1979
  %v3800 = vmul.f32 %v3759, %v3779
  %v3801 = vadd.f32 %v3799, %v3800
  %v3802 = vtanh.pop %v3801
  %v3803 = vmul.f32 %v3798, %v3802
  %v3804 = vpack.c.bf16 %v3803, %v3803
  %v3805 = vld [vmem:[%s12] sm:$0xff]
  %v3806 = vld [vmem:[%s12 + $0x8] sm:$0xff]
  %v3807 = vld [vmem:[%s12 + $0x10] sm:$0xff]
  %v3808 = vld [vmem:[%s12 + $0x18] sm:$0xff]
  %v3809 = vld [vmem:[%s12 + $0x20] sm:$0xff]
  %v3810 = vld [vmem:[%s12 + $0x28] sm:$0xff]
  %v3811 = vld [vmem:[%s12 + $0x30] sm:$0xff]
  %v3812 = vld [vmem:[%s12 + $0x38] sm:$0xff]
  %v3813 = vld [vmem:[%s12 + $0x40] sm:$0xff]
  %v3814 = vld [vmem:[%s12 + $0x48] sm:$0xff]
  %v3815 = vld [vmem:[%s12 + $0x50] sm:$0xff]
  %v3816 = vld [vmem:[%s12 + $0x58] sm:$0xff]
  %v3817 = vld [vmem:[%s12 + $0x60] sm:$0xff]
  %v3818 = vld [vmem:[%s12 + $0x68] sm:$0xff]
  %v3819 = vld [vmem:[%s12 + $0x70] sm:$0xff]
  %v3820 = vld [vmem:[%s12 + $0x78] sm:$0xff]
  %v3837 = vunpack.c.l.b16 %v3805
  %v3838 = vunpack.c.h.b16 %v3805
  %v3839 = vunpack.c.l.b16 %v3806
  %v3840 = vunpack.c.h.b16 %v3806
  %v3841 = vunpack.c.l.b16 %v3807
  %v3842 = vunpack.c.h.b16 %v3807
  %v3843 = vunpack.c.l.b16 %v3808
  %v3844 = vunpack.c.h.b16 %v3808
  %v3845 = vunpack.c.l.b16 %v3809
  %v3846 = vunpack.c.h.b16 %v3809
  %v3847 = vunpack.c.l.b16 %v3810
  %v3848 = vunpack.c.h.b16 %v3810
  %v3849 = vunpack.c.l.b16 %v3811
  %v3850 = vunpack.c.h.b16 %v3811
  %v3851 = vunpack.c.l.b16 %v3812
  %v3852 = vunpack.c.h.b16 %v3812
  %v3853 = vunpack.c.l.b16 %v3813
  %v3854 = vunpack.c.h.b16 %v3813
  %v3855 = vunpack.c.l.b16 %v3814
  %v3856 = vunpack.c.h.b16 %v3814
  %v3857 = vunpack.c.l.b16 %v3815
  %v3858 = vunpack.c.h.b16 %v3815
  %v3859 = vunpack.c.l.b16 %v3816
  %v3860 = vunpack.c.h.b16 %v3816
  %v3861 = vunpack.c.l.b16 %v3817
  %v3862 = vunpack.c.h.b16 %v3817
  %v3863 = vunpack.c.l.b16 %v3818
  %v3864 = vunpack.c.h.b16 %v3818
  %v3865 = vunpack.c.l.b16 %v3819
  %v3866 = vunpack.c.h.b16 %v3819
  %v3867 = vunpack.c.l.b16 %v3820
  %v3868 = vunpack.c.h.b16 %v3820
  %v3869 = vpack.c.b16 %v3839, %v3837
  %v3870 = vpack.c.b16 %v3840, %v3838
  %v3871 = vpack.c.b16 %v3843, %v3841
  %v3872 = vpack.c.b16 %v3844, %v3842
  %v3873 = vpack.c.b16 %v3847, %v3845
  %v3874 = vpack.c.b16 %v3848, %v3846
  %v3875 = vpack.c.b16 %v3851, %v3849
  %v3876 = vpack.c.b16 %v3852, %v3850
  %v3877 = vpack.c.b16 %v3855, %v3853
  %v3878 = vpack.c.b16 %v3856, %v3854
  %v3879 = vpack.c.b16 %v3859, %v3857
  %v3880 = vpack.c.b16 %v3860, %v3858
  %v3881 = vpack.c.b16 %v3863, %v3861
  %v3882 = vpack.c.b16 %v3864, %v3862
  %v3883 = vpack.c.b16 %v3867, %v3865
  %v3884 = vpack.c.b16 %v3868, %v3866
  %3901 = vmatpush.bf16.msra.mxu0 %v3883
  %3902 = vmatpush.bf16.msra.mxu0 %v3881
  %3903 = vmatpush.bf16.msra.mxu0 %v3879
  %3904 = vmatpush.bf16.msra.mxu0 %v3877
  %3905 = vmatpush.bf16.msra.mxu0 %v3875
  %3906 = vmatpush.bf16.msra.mxu0 %v3873
  %3907 = vmatpush.bf16.msra.mxu0 %v3871
  %3908 = vmatpush.bf16.msra.mxu0 %v3869
  %3909 = vmatmul.bf16.gmra.mxu0 %v3804
  %v3910 = vpop.f32.mrf.mxu0
  %v3911 = vadd.f32 %v2000, %v3910
  %v3912 = vpop.f32.mrf.mxu0
  %3913 = vdwg.mxu0
  %3914 = vmatpush.bf16.msra.mxu0 %v3884
  %3915 = vmatpush.bf16.msra.mxu0 %v3882
  %3916 = vmatpush.bf16.msra.mxu0 %v3880
  %3917 = vmatpush.bf16.msra.mxu0 %v3878
  %3918 = vmatpush.bf16.msra.mxu0 %v3876
  %3919 = vmatpush.bf16.msra.mxu0 %v3874
  %3920 = vmatpush.bf16.msra.mxu0 %v3872
  %3921 = vmatpush.bf16.msra.mxu0 %v3870
  %3922 = vmatmul.bf16.gmra.mxu0 %v3804
  %v3923 = vpop.f32.mrf.mxu0
  %v3924 = vadd.f32 %v2001, %v3923
  %v3925 = vpop.f32.mrf.mxu0
  %3926 = vdwg.mxu0
  %s3927 = scalar_lea.vmem %s14, 16
  %3928 = vst [vmem:[%s3927] sm:$0xff] %v3911
  %3929 = vst [vmem:[%s3927 + $0x8] sm:$0xff] %v3924
  %v3946 = vperm.slane %v3029, %v56
  %v3947 = vperm.slane %v3030, %v2129
  %v3948 = vsel %vm2131, %v3947, %v3946
  %v3949 = vperm.slane %v3045, %v56
  %v3950 = vperm.slane %v3046, %v2129
  %v3951 = vsel %vm2131, %v3950, %v3949
  %v3952 = vperm.slane %v3061, %v56
  %v3953 = vperm.slane %v3062, %v2129
  %v3954 = vsel %vm2131, %v3953, %v3952
  %v3955 = vperm.slane %v3077, %v56
  %v3956 = vperm.slane %v3078, %v2129
  %v3957 = vsel %vm2131, %v3956, %v3955
  %v3958 = vperm.slane %v3093, %v56
  %v3959 = vperm.slane %v3094, %v2129
  %v3960 = vsel %vm2131, %v3959, %v3958
  %v3961 = vperm.slane %v3109, %v56
  %v3962 = vperm.slane %v3110, %v2129
  %v3963 = vsel %vm2131, %v3962, %v3961
  %v3964 = vperm.slane %v3125, %v56
  %v3965 = vperm.slane %v3126, %v2129
  %v3966 = vsel %vm2131, %v3965, %v3964
  %v3967 = vperm.slane %v3141, %v56
  %v3968 = vperm.slane %v3142, %v2129
  %v3969 = vsel %vm2131, %v3968, %v3967
  %v3970 = vsel %vm191, %v3951, %v3948
  %v3971 = vsel %vm193, %v3954, %v3970
  %v3972 = vsel %vm195, %v3957, %v3971
  %v3973 = vsel %vm197, %v3960, %v3972
  %v3974 = vsel %vm199, %v3963, %v3973
  %v3975 = vsel %vm201, %v3966, %v3974
  %v3976 = vsel %vm203, %v3969, %v3975
  %s3978 = scalar_lea.vmem %s15, 8
  %3979 = vst.msk [vmem:[%s3978] sm:$0xff] %vm2162, %v3976
  %v3980 = vmax.f32 %v3911, %v3924
  %3981 = vmax.xlane.f32.xlu0 %v3980
  %v3982 = vpop.xlane.xlu0 %3981
  %vm3983 = vcmp.eq.f32.partialorder %v3911, %v3982
  %vm3984 = vcmp.eq.f32.partialorder %v3924, %v3982
  %v3985 = vsel %vm3983, %v56, 256
  %v3986 = vsel %vm3984, %v57, 256
  %vm3987 = vcmp.lt.s32.totalorder %v3985, %v3986
  %v3988 = vsel %vm3987, %v3985, %v3986
  %v3989 = vand.u32 %v3988, 65535
  %v3990 = vshra.s32 %v3988, 16
  %v3991 = vcvt.s32.f32 %v3989
  %v3992 = vcvt.s32.f32 %v3990
  %3993 = vmin.xlane.f32.xlu0 %v3992
  %v3994 = vpop.xlane.xlu0 %3993
  %vm3995 = vcmp.eq.f32.partialorder %v3992, %v3994
  %v3996 = vsel %vm3995, %v3991, inf
  %3997 = vmin.xlane.f32.xlu0 %v3996
  %v3998 = vpop.xlane.xlu0 %3997
  %v3999 = vcvt.f32.s32 %v3998
  %v4000 = vcvt.f32.s32 %v3994
  %v4001 = vshll.u32 %v4000, 16
  %v4002 = vadd.s32 %v4001, %v3999
  %vm4003 = vcmp.eq.s32.totalorder %v56, %v4002
  %vm4004 = vcmp.eq.s32.totalorder %v57, %v4002
  %v4005 = vsel %vm4003, 1, 0
  %v4006 = vsel %vm4004, 1, 0
  %v4007 = vcvt.s32.f32 %v4005
  %v4008 = vcvt.s32.f32 %v4006
  %v4009 = vpack.c.bf16 %v4007, %v4007
  %v4010 = vpack.c.bf16 %v4008, %v4008
  %v4011 = vld [vmem:[%s9] sm:$0xf]
  %v4012 = vld [vmem:[%s9 + $0x4] sm:$0xf]
  %v4013 = vld [vmem:[%s9 + $0x8] sm:$0xf]
  %v4014 = vld [vmem:[%s9 + $0xc] sm:$0xf]
  %v4015 = vld [vmem:[%s9 + $0x10] sm:$0xf]
  %v4016 = vld [vmem:[%s9 + $0x14] sm:$0xf]
  %v4017 = vld [vmem:[%s9 + $0x18] sm:$0xf]
  %v4018 = vld [vmem:[%s9 + $0x1c] sm:$0xf]
  %v4019 = vld [vmem:[%s9 + $0x20] sm:$0xf]
  %v4020 = vld [vmem:[%s9 + $0x24] sm:$0xf]
  %v4021 = vld [vmem:[%s9 + $0x28] sm:$0xf]
  %v4022 = vld [vmem:[%s9 + $0x2c] sm:$0xf]
  %v4023 = vld [vmem:[%s9 + $0x30] sm:$0xf]
  %v4024 = vld [vmem:[%s9 + $0x34] sm:$0xf]
  %v4025 = vld [vmem:[%s9 + $0x38] sm:$0xf]
  %v4026 = vld [vmem:[%s9 + $0x3c] sm:$0xf]
  %v4027 = vld [vmem:[%s9 + $0x40] sm:$0xf]
  %v4028 = vld [vmem:[%s9 + $0x44] sm:$0xf]
  %v4029 = vld [vmem:[%s9 + $0x48] sm:$0xf]
  %v4030 = vld [vmem:[%s9 + $0x4c] sm:$0xf]
  %v4031 = vld [vmem:[%s9 + $0x50] sm:$0xf]
  %v4032 = vld [vmem:[%s9 + $0x54] sm:$0xf]
  %v4033 = vld [vmem:[%s9 + $0x58] sm:$0xf]
  %v4034 = vld [vmem:[%s9 + $0x5c] sm:$0xf]
  %v4035 = vld [vmem:[%s9 + $0x60] sm:$0xf]
  %v4036 = vld [vmem:[%s9 + $0x64] sm:$0xf]
  %v4037 = vld [vmem:[%s9 + $0x68] sm:$0xf]
  %v4038 = vld [vmem:[%s9 + $0x6c] sm:$0xf]
  %v4039 = vld [vmem:[%s9 + $0x70] sm:$0xf]
  %v4040 = vld [vmem:[%s9 + $0x74] sm:$0xf]
  %v4041 = vld [vmem:[%s9 + $0x78] sm:$0xf]
  %v4042 = vld [vmem:[%s9 + $0x7c] sm:$0xf]
  %v4075 = vunpack.c.l.b16 %v4011
  %v4076 = vunpack.c.l.b16 %v4012
  %v4077 = vunpack.c.l.b16 %v4013
  %v4078 = vunpack.c.l.b16 %v4014
  %v4079 = vunpack.c.l.b16 %v4015
  %v4080 = vunpack.c.l.b16 %v4016
  %v4081 = vunpack.c.l.b16 %v4017
  %v4082 = vunpack.c.l.b16 %v4018
  %v4083 = vunpack.c.l.b16 %v4019
  %v4084 = vunpack.c.l.b16 %v4020
  %v4085 = vunpack.c.l.b16 %v4021
  %v4086 = vunpack.c.l.b16 %v4022
  %v4087 = vunpack.c.l.b16 %v4023
  %v4088 = vunpack.c.l.b16 %v4024
  %v4089 = vunpack.c.l.b16 %v4025
  %v4090 = vunpack.c.l.b16 %v4026
  %v4091 = vunpack.c.l.b16 %v4027
  %v4092 = vunpack.c.l.b16 %v4028
  %v4093 = vunpack.c.l.b16 %v4029
  %v4094 = vunpack.c.l.b16 %v4030
  %v4095 = vunpack.c.l.b16 %v4031
  %v4096 = vunpack.c.l.b16 %v4032
  %v4097 = vunpack.c.l.b16 %v4033
  %v4098 = vunpack.c.l.b16 %v4034
  %v4099 = vunpack.c.l.b16 %v4035
  %v4100 = vunpack.c.l.b16 %v4036
  %v4101 = vunpack.c.l.b16 %v4037
  %v4102 = vunpack.c.l.b16 %v4038
  %v4103 = vunpack.c.l.b16 %v4039
  %v4104 = vunpack.c.l.b16 %v4040
  %v4105 = vunpack.c.l.b16 %v4041
  %v4106 = vunpack.c.l.b16 %v4042
  %v4107 = vpack.c.b16 %v4076, %v4075
  %v4108 = vpack.c.b16 %v4078, %v4077
  %v4109 = vpack.c.b16 %v4080, %v4079
  %v4110 = vpack.c.b16 %v4082, %v4081
  %v4111 = vpack.c.b16 %v4084, %v4083
  %v4112 = vpack.c.b16 %v4086, %v4085
  %v4113 = vpack.c.b16 %v4088, %v4087
  %v4114 = vpack.c.b16 %v4090, %v4089
  %v4115 = vpack.c.b16 %v4092, %v4091
  %v4116 = vpack.c.b16 %v4094, %v4093
  %v4117 = vpack.c.b16 %v4096, %v4095
  %v4118 = vpack.c.b16 %v4098, %v4097
  %v4119 = vpack.c.b16 %v4100, %v4099
  %v4120 = vpack.c.b16 %v4102, %v4101
  %v4121 = vpack.c.b16 %v4104, %v4103
  %v4122 = vpack.c.b16 %v4106, %v4105
  %4139 = vmatpush.bf16.msra.mxu0 %v4114
  %4140 = vmatpush.bf16.msra.mxu0 %v4113
  %4141 = vmatpush.bf16.msra.mxu0 %v4112
  %4142 = vmatpush.bf16.msra.mxu0 %v4111
  %4143 = vmatpush.bf16.msra.mxu0 %v4110
  %4144 = vmatpush.bf16.msra.mxu0 %v4109
  %4145 = vmatpush.bf16.msra.mxu0 %v4108
  %4146 = vmatpush.bf16.msra.mxu0 %v4107
  %4147 = vmatmul.bf16.gmra.mxu0 %v4009
  %v4148 = vpop.f32.mrf.mxu0
  %v4149 = vadd.f32 0.0, %v4148
  %v4150 = vpop.f32.mrf.mxu0
  %4151 = vdwg.mxu0
  %4152 = vmatpush.bf16.msra.mxu0 %v4122
  %4153 = vmatpush.bf16.msra.mxu0 %v4121
  %4154 = vmatpush.bf16.msra.mxu0 %v4120
  %4155 = vmatpush.bf16.msra.mxu0 %v4119
  %4156 = vmatpush.bf16.msra.mxu0 %v4118
  %4157 = vmatpush.bf16.msra.mxu0 %v4117
  %4158 = vmatpush.bf16.msra.mxu0 %v4116
  %4159 = vmatpush.bf16.msra.mxu0 %v4115
  %4160 = vmatmul.bf16.gmra.mxu0 %v4010
  %v4161 = vpop.f32.mrf.mxu0
  %v4162 = vadd.f32 %v4149, %v4161
  %v4163 = vpop.f32.mrf.mxu0
  %4164 = vdwg.mxu0
  %v4165 = vpack.c.bf16 %v4162, %v4162
  %v4166 = vld [vmem:[%s5] sm:$0xff]
  %v4167 = vld [vmem:[%s5 + $0x8] sm:$0xff]
  %v4168 = vld [vmem:[%s5 + $0x10] sm:$0xff]
  %v4169 = vld [vmem:[%s5 + $0x18] sm:$0xff]
  %v4170 = vld [vmem:[%s5 + $0x20] sm:$0xff]
  %v4171 = vld [vmem:[%s5 + $0x28] sm:$0xff]
  %v4172 = vld [vmem:[%s5 + $0x30] sm:$0xff]
  %v4173 = vld [vmem:[%s5 + $0x38] sm:$0xff]
  %v4174 = vld [vmem:[%s5 + $0x40] sm:$0xff]
  %v4175 = vld [vmem:[%s5 + $0x48] sm:$0xff]
  %v4176 = vld [vmem:[%s5 + $0x50] sm:$0xff]
  %v4177 = vld [vmem:[%s5 + $0x58] sm:$0xff]
  %v4178 = vld [vmem:[%s5 + $0x60] sm:$0xff]
  %v4179 = vld [vmem:[%s5 + $0x68] sm:$0xff]
  %v4180 = vld [vmem:[%s5 + $0x70] sm:$0xff]
  %v4181 = vld [vmem:[%s5 + $0x78] sm:$0xff]
  %v4182 = vld [vmem:[%s5 + $0x80] sm:$0xff]
  %v4183 = vld [vmem:[%s5 + $0x88] sm:$0xff]
  %v4184 = vld [vmem:[%s5 + $0x90] sm:$0xff]
  %v4185 = vld [vmem:[%s5 + $0x98] sm:$0xff]
  %v4186 = vld [vmem:[%s5 + $0xa0] sm:$0xff]
  %v4187 = vld [vmem:[%s5 + $0xa8] sm:$0xff]
  %v4188 = vld [vmem:[%s5 + $0xb0] sm:$0xff]
  %v4189 = vld [vmem:[%s5 + $0xb8] sm:$0xff]
  %v4190 = vld [vmem:[%s5 + $0xc0] sm:$0xff]
  %v4191 = vld [vmem:[%s5 + $0xc8] sm:$0xff]
  %v4192 = vld [vmem:[%s5 + $0xd0] sm:$0xff]
  %v4193 = vld [vmem:[%s5 + $0xd8] sm:$0xff]
  %v4194 = vld [vmem:[%s5 + $0xe0] sm:$0xff]
  %v4195 = vld [vmem:[%s5 + $0xe8] sm:$0xff]
  %v4196 = vld [vmem:[%s5 + $0xf0] sm:$0xff]
  %v4197 = vld [vmem:[%s5 + $0xf8] sm:$0xff]
  %v4198 = vld [vmem:[%s5 + $0x100] sm:$0xff]
  %v4199 = vld [vmem:[%s5 + $0x108] sm:$0xff]
  %v4200 = vld [vmem:[%s5 + $0x110] sm:$0xff]
  %v4201 = vld [vmem:[%s5 + $0x118] sm:$0xff]
  %v4202 = vld [vmem:[%s5 + $0x120] sm:$0xff]
  %v4203 = vld [vmem:[%s5 + $0x128] sm:$0xff]
  %v4204 = vld [vmem:[%s5 + $0x130] sm:$0xff]
  %v4205 = vld [vmem:[%s5 + $0x138] sm:$0xff]
  %v4206 = vld [vmem:[%s5 + $0x140] sm:$0xff]
  %v4207 = vld [vmem:[%s5 + $0x148] sm:$0xff]
  %v4208 = vld [vmem:[%s5 + $0x150] sm:$0xff]
  %v4209 = vld [vmem:[%s5 + $0x158] sm:$0xff]
  %v4210 = vld [vmem:[%s5 + $0x160] sm:$0xff]
  %v4211 = vld [vmem:[%s5 + $0x168] sm:$0xff]
  %v4212 = vld [vmem:[%s5 + $0x170] sm:$0xff]
  %v4213 = vld [vmem:[%s5 + $0x178] sm:$0xff]
  %v4262 = vunpack.c.l.b16 %v4166
  %v4263 = vunpack.c.h.b16 %v4166
  %v4264 = vunpack.c.l.b16 %v4167
  %v4265 = vunpack.c.h.b16 %v4167
  %v4266 = vunpack.c.l.b16 %v4168
  %v4267 = vunpack.c.h.b16 %v4168
  %v4268 = vunpack.c.l.b16 %v4169
  %v4269 = vunpack.c.h.b16 %v4169
  %v4270 = vunpack.c.l.b16 %v4170
  %v4271 = vunpack.c.h.b16 %v4170
  %v4272 = vunpack.c.l.b16 %v4171
  %v4273 = vunpack.c.h.b16 %v4171
  %v4274 = vunpack.c.l.b16 %v4172
  %v4275 = vunpack.c.h.b16 %v4172
  %v4276 = vunpack.c.l.b16 %v4173
  %v4277 = vunpack.c.h.b16 %v4173
  %v4278 = vunpack.c.l.b16 %v4174
  %v4279 = vunpack.c.h.b16 %v4174
  %v4280 = vunpack.c.l.b16 %v4175
  %v4281 = vunpack.c.h.b16 %v4175
  %v4282 = vunpack.c.l.b16 %v4176
  %v4283 = vunpack.c.h.b16 %v4176
  %v4284 = vunpack.c.l.b16 %v4177
  %v4285 = vunpack.c.h.b16 %v4177
  %v4286 = vunpack.c.l.b16 %v4178
  %v4287 = vunpack.c.h.b16 %v4178
  %v4288 = vunpack.c.l.b16 %v4179
  %v4289 = vunpack.c.h.b16 %v4179
  %v4290 = vunpack.c.l.b16 %v4180
  %v4291 = vunpack.c.h.b16 %v4180
  %v4292 = vunpack.c.l.b16 %v4181
  %v4293 = vunpack.c.h.b16 %v4181
  %v4294 = vunpack.c.l.b16 %v4182
  %v4295 = vunpack.c.h.b16 %v4182
  %v4296 = vunpack.c.l.b16 %v4183
  %v4297 = vunpack.c.h.b16 %v4183
  %v4298 = vunpack.c.l.b16 %v4184
  %v4299 = vunpack.c.h.b16 %v4184
  %v4300 = vunpack.c.l.b16 %v4185
  %v4301 = vunpack.c.h.b16 %v4185
  %v4302 = vunpack.c.l.b16 %v4186
  %v4303 = vunpack.c.h.b16 %v4186
  %v4304 = vunpack.c.l.b16 %v4187
  %v4305 = vunpack.c.h.b16 %v4187
  %v4306 = vunpack.c.l.b16 %v4188
  %v4307 = vunpack.c.h.b16 %v4188
  %v4308 = vunpack.c.l.b16 %v4189
  %v4309 = vunpack.c.h.b16 %v4189
  %v4310 = vunpack.c.l.b16 %v4190
  %v4311 = vunpack.c.h.b16 %v4190
  %v4312 = vunpack.c.l.b16 %v4191
  %v4313 = vunpack.c.h.b16 %v4191
  %v4314 = vunpack.c.l.b16 %v4192
  %v4315 = vunpack.c.h.b16 %v4192
  %v4316 = vunpack.c.l.b16 %v4193
  %v4317 = vunpack.c.h.b16 %v4193
  %v4318 = vunpack.c.l.b16 %v4194
  %v4319 = vunpack.c.h.b16 %v4194
  %v4320 = vunpack.c.l.b16 %v4195
  %v4321 = vunpack.c.h.b16 %v4195
  %v4322 = vunpack.c.l.b16 %v4196
  %v4323 = vunpack.c.h.b16 %v4196
  %v4324 = vunpack.c.l.b16 %v4197
  %v4325 = vunpack.c.h.b16 %v4197
  %v4326 = vunpack.c.l.b16 %v4198
  %v4327 = vunpack.c.h.b16 %v4198
  %v4328 = vunpack.c.l.b16 %v4199
  %v4329 = vunpack.c.h.b16 %v4199
  %v4330 = vunpack.c.l.b16 %v4200
  %v4331 = vunpack.c.h.b16 %v4200
  %v4332 = vunpack.c.l.b16 %v4201
  %v4333 = vunpack.c.h.b16 %v4201
  %v4334 = vunpack.c.l.b16 %v4202
  %v4335 = vunpack.c.h.b16 %v4202
  %v4336 = vunpack.c.l.b16 %v4203
  %v4337 = vunpack.c.h.b16 %v4203
  %v4338 = vunpack.c.l.b16 %v4204
  %v4339 = vunpack.c.h.b16 %v4204
  %v4340 = vunpack.c.l.b16 %v4205
  %v4341 = vunpack.c.h.b16 %v4205
  %v4342 = vunpack.c.l.b16 %v4206
  %v4343 = vunpack.c.h.b16 %v4206
  %v4344 = vunpack.c.l.b16 %v4207
  %v4345 = vunpack.c.h.b16 %v4207
  %v4346 = vunpack.c.l.b16 %v4208
  %v4347 = vunpack.c.h.b16 %v4208
  %v4348 = vunpack.c.l.b16 %v4209
  %v4349 = vunpack.c.h.b16 %v4209
  %v4350 = vunpack.c.l.b16 %v4210
  %v4351 = vunpack.c.h.b16 %v4210
  %v4352 = vunpack.c.l.b16 %v4211
  %v4353 = vunpack.c.h.b16 %v4211
  %v4354 = vunpack.c.l.b16 %v4212
  %v4355 = vunpack.c.h.b16 %v4212
  %v4356 = vunpack.c.l.b16 %v4213
  %v4357 = vunpack.c.h.b16 %v4213
  %v4358 = vpack.c.b16 %v4268, %v4262
  %v4359 = vpack.c.b16 %v4269, %v4263
  %v4360 = vpack.c.b16 %v4270, %v4264
  %v4361 = vpack.c.b16 %v4271, %v4265
  %v4362 = vpack.c.b16 %v4272, %v4266
  %v4363 = vpack.c.b16 %v4273, %v4267
  %v4364 = vpack.c.b16 %v4280, %v4274
  %v4365 = vpack.c.b16 %v4281, %v4275
  %v4366 = vpack.c.b16 %v4282, %v4276
  %v4367 = vpack.c.b16 %v4283, %v4277
  %v4368 = vpack.c.b16 %v4284, %v4278
  %v4369 = vpack.c.b16 %v4285, %v4279
  %v4370 = vpack.c.b16 %v4292, %v4286
  %v4371 = vpack.c.b16 %v4293, %v4287
  %v4372 = vpack.c.b16 %v4294, %v4288
  %v4373 = vpack.c.b16 %v4295, %v4289
  %v4374 = vpack.c.b16 %v4296, %v4290
  %v4375 = vpack.c.b16 %v4297, %v4291
  %v4376 = vpack.c.b16 %v4304, %v4298
  %v4377 = vpack.c.b16 %v4305, %v4299
  %v4378 = vpack.c.b16 %v4306, %v4300
  %v4379 = vpack.c.b16 %v4307, %v4301
  %v4380 = vpack.c.b16 %v4308, %v4302
  %v4381 = vpack.c.b16 %v4309, %v4303
  %v4382 = vpack.c.b16 %v4316, %v4310
  %v4383 = vpack.c.b16 %v4317, %v4311
  %v4384 = vpack.c.b16 %v4318, %v4312
  %v4385 = vpack.c.b16 %v4319, %v4313
  %v4386 = vpack.c.b16 %v4320, %v4314
  %v4387 = vpack.c.b16 %v4321, %v4315
  %v4388 = vpack.c.b16 %v4328, %v4322
  %v4389 = vpack.c.b16 %v4329, %v4323
  %v4390 = vpack.c.b16 %v4330, %v4324
  %v4391 = vpack.c.b16 %v4331, %v4325
  %v4392 = vpack.c.b16 %v4332, %v4326
  %v4393 = vpack.c.b16 %v4333, %v4327
  %v4394 = vpack.c.b16 %v4340, %v4334
  %v4395 = vpack.c.b16 %v4341, %v4335
  %v4396 = vpack.c.b16 %v4342, %v4336
  %v4397 = vpack.c.b16 %v4343, %v4337
  %v4398 = vpack.c.b16 %v4344, %v4338
  %v4399 = vpack.c.b16 %v4345, %v4339
  %v4400 = vpack.c.b16 %v4352, %v4346
  %v4401 = vpack.c.b16 %v4353, %v4347
  %v4402 = vpack.c.b16 %v4354, %v4348
  %v4403 = vpack.c.b16 %v4355, %v4349
  %v4404 = vpack.c.b16 %v4356, %v4350
  %v4405 = vpack.c.b16 %v4357, %v4351
  %4454 = vmatpush.bf16.msra.mxu0 %v4400
  %4455 = vmatpush.bf16.msra.mxu0 %v4394
  %4456 = vmatpush.bf16.msra.mxu0 %v4388
  %4457 = vmatpush.bf16.msra.mxu0 %v4382
  %4458 = vmatpush.bf16.msra.mxu0 %v4376
  %4459 = vmatpush.bf16.msra.mxu0 %v4370
  %4460 = vmatpush.bf16.msra.mxu0 %v4364
  %4461 = vmatpush.bf16.msra.mxu0 %v4358
  %4462 = vmatmul.bf16.gmra.mxu0 %v3804
  %v4463 = vpop.f32.mrf.mxu0
  %v4464 = vadd.f32 %v567, %v4463
  %v4465 = vpop.f32.mrf.mxu0
  %4466 = vdwg.mxu0
  %4467 = vmatpush.bf16.msra.mxu0 %v4401
  %4468 = vmatpush.bf16.msra.mxu0 %v4395
  %4469 = vmatpush.bf16.msra.mxu0 %v4389
  %4470 = vmatpush.bf16.msra.mxu0 %v4383
  %4471 = vmatpush.bf16.msra.mxu0 %v4377
  %4472 = vmatpush.bf16.msra.mxu0 %v4371
  %4473 = vmatpush.bf16.msra.mxu0 %v4365
  %4474 = vmatpush.bf16.msra.mxu0 %v4359
  %4475 = vmatmul.bf16.gmra.mxu0 %v3804
  %v4476 = vpop.f32.mrf.mxu0
  %v4477 = vadd.f32 %v568, %v4476
  %v4478 = vpop.f32.mrf.mxu0
  %4479 = vdwg.mxu0
  %4480 = vmatpush.bf16.msra.mxu0 %v4402
  %4481 = vmatpush.bf16.msra.mxu0 %v4396
  %4482 = vmatpush.bf16.msra.mxu0 %v4390
  %4483 = vmatpush.bf16.msra.mxu0 %v4384
  %4484 = vmatpush.bf16.msra.mxu0 %v4378
  %4485 = vmatpush.bf16.msra.mxu0 %v4372
  %4486 = vmatpush.bf16.msra.mxu0 %v4366
  %4487 = vmatpush.bf16.msra.mxu0 %v4360
  %4488 = vmatmul.bf16.gmra.mxu0 %v3804
  %v4489 = vpop.f32.mrf.mxu0
  %v4490 = vadd.f32 %v569, %v4489
  %v4491 = vpop.f32.mrf.mxu0
  %4492 = vdwg.mxu0
  %4493 = vmatpush.bf16.msra.mxu0 %v4403
  %4494 = vmatpush.bf16.msra.mxu0 %v4397
  %4495 = vmatpush.bf16.msra.mxu0 %v4391
  %4496 = vmatpush.bf16.msra.mxu0 %v4385
  %4497 = vmatpush.bf16.msra.mxu0 %v4379
  %4498 = vmatpush.bf16.msra.mxu0 %v4373
  %4499 = vmatpush.bf16.msra.mxu0 %v4367
  %4500 = vmatpush.bf16.msra.mxu0 %v4361
  %4501 = vmatmul.bf16.gmra.mxu0 %v3804
  %v4502 = vpop.f32.mrf.mxu0
  %v4503 = vadd.f32 %v570, %v4502
  %v4504 = vpop.f32.mrf.mxu0
  %4505 = vdwg.mxu0
  %4506 = vmatpush.bf16.msra.mxu0 %v4404
  %4507 = vmatpush.bf16.msra.mxu0 %v4398
  %4508 = vmatpush.bf16.msra.mxu0 %v4392
  %4509 = vmatpush.bf16.msra.mxu0 %v4386
  %4510 = vmatpush.bf16.msra.mxu0 %v4380
  %4511 = vmatpush.bf16.msra.mxu0 %v4374
  %4512 = vmatpush.bf16.msra.mxu0 %v4368
  %4513 = vmatpush.bf16.msra.mxu0 %v4362
  %4514 = vmatmul.bf16.gmra.mxu0 %v3804
  %v4515 = vpop.f32.mrf.mxu0
  %v4516 = vadd.f32 %v571, %v4515
  %v4517 = vpop.f32.mrf.mxu0
  %4518 = vdwg.mxu0
  %4519 = vmatpush.bf16.msra.mxu0 %v4405
  %4520 = vmatpush.bf16.msra.mxu0 %v4399
  %4521 = vmatpush.bf16.msra.mxu0 %v4393
  %4522 = vmatpush.bf16.msra.mxu0 %v4387
  %4523 = vmatpush.bf16.msra.mxu0 %v4381
  %4524 = vmatpush.bf16.msra.mxu0 %v4375
  %4525 = vmatpush.bf16.msra.mxu0 %v4369
  %4526 = vmatpush.bf16.msra.mxu0 %v4363
  %4527 = vmatmul.bf16.gmra.mxu0 %v3804
  %v4528 = vpop.f32.mrf.mxu0
  %v4529 = vadd.f32 %v572, %v4528
  %v4530 = vpop.f32.mrf.mxu0
  %4531 = vdwg.mxu0
  %v4532 = vxor.u32 %v4477, 2147483648
  %v4533 = vmul.f32 %v4532, 1.442695
  %v4534 = vpow.pop %v4533
  %v4535 = vadd.f32 %v4534, 1.0
  %v4536 = vrcp.pop %v4535
  %v4537 = vmul.f32 %v4535, %v4536
  %v4538 = vsub.f32 1.0, %v4537
  %v4539 = vmul.f32 %v4536, %v4538
  %v4540 = vadd.f32 %v4536, %v4539
  %vm4541 = vweird.f32 %v4535
  %vm4542 = vweird.f32 %v4536
  %vm4543 = vmor %vm4541, %vm4542
  %v4544 = vsel %vm4543, %v4536, %v4540
  %v4545 = vand.u32 2147483647, %v4535
  %vm4546 = vcmp.eq.f32.partialorder %v4545, 8.507059e+37
  %v4547 = vand.u32 %v4535, 2147483648
  %v4548 = vor.u32 1.1754944e-38, %v4547
  %v4549 = vsel %vm4546, %v4548, %v4544
  %v4550 = vmul.f32 1.0, %v4549
  %v4552 = vrot.slane %v4464, 1
  %v4553 = vrot.slane %v4464, 2
  %v4554 = vrot.slane %v4464, 3
  %v4555 = vrot.slane %v4464, 4
  %v4556 = vrot.slane %v4464, 5
  %v4557 = vrot.slane %v4464, 6
  %v4558 = vrot.slane %v4464, 7
  %v4559 = vperm.slane %v4464, 0
  %v4560 = vperm.slane %v4552, 0
  %v4561 = vperm.slane %v4553, 0
  %v4562 = vperm.slane %v4554, 0
  %v4563 = vperm.slane %v4555, 0
  %v4564 = vperm.slane %v4556, 0
  %v4565 = vperm.slane %v4557, 0
  %v4566 = vperm.slane %v4558, 0
  %v4575 = vadd.f32 %v496, %v4559
  %v4576 = vadd.f32 %v497, %v4559
  %v4577 = vadd.f32 %v498, %v4560
  %v4578 = vadd.f32 %v499, %v4560
  %v4579 = vadd.f32 %v500, %v4561
  %v4580 = vadd.f32 %v501, %v4561
  %v4581 = vadd.f32 %v502, %v4562
  %v4582 = vadd.f32 %v503, %v4562
  %v4583 = vadd.f32 %v504, %v4563
  %v4584 = vadd.f32 %v505, %v4563
  %v4585 = vadd.f32 %v506, %v4564
  %v4586 = vadd.f32 %v507, %v4564
  %v4587 = vadd.f32 %v508, %v4565
  %v4588 = vadd.f32 %v509, %v4565
  %v4589 = vadd.f32 %v510, %v4566
  %v4590 = vadd.f32 %v511, %v4566
  %v4591 = vtanh.pop %v4575
  %v4592 = vtanh.pop %v4576
  %v4593 = vtanh.pop %v4577
  %v4594 = vtanh.pop %v4578
  %v4595 = vtanh.pop %v4579
  %v4596 = vtanh.pop %v4580
  %v4597 = vtanh.pop %v4581
  %v4598 = vtanh.pop %v4582
  %v4599 = vtanh.pop %v4583
  %v4600 = vtanh.pop %v4584
  %v4601 = vtanh.pop %v4585
  %v4602 = vtanh.pop %v4586
  %v4603 = vtanh.pop %v4587
  %v4604 = vtanh.pop %v4588
  %v4605 = vtanh.pop %v4589
  %v4606 = vtanh.pop %v4590
  %v4607 = vmul.f32 %v4591, %v973
  %v4608 = vmul.f32 %v4592, %v973
  %v4609 = vmul.f32 %v4593, %v973
  %v4610 = vmul.f32 %v4594, %v973
  %v4611 = vmul.f32 %v4595, %v973
  %v4612 = vmul.f32 %v4596, %v973
  %v4613 = vmul.f32 %v4597, %v973
  %v4614 = vmul.f32 %v4598, %v973
  %v4615 = vmul.f32 %v4599, %v973
  %v4616 = vmul.f32 %v4600, %v973
  %v4617 = vmul.f32 %v4601, %v973
  %v4618 = vmul.f32 %v4602, %v973
  %v4619 = vmul.f32 %v4603, %v973
  %v4620 = vmul.f32 %v4604, %v973
  %v4621 = vmul.f32 %v4605, %v973
  %v4622 = vmul.f32 %v4606, %v973
  %4623 = vadd.xlane.f32.xlu0 %v4607
  %v4624 = vpop.xlane.xlu0 %4623
  %4625 = vadd.xlane.f32.xlu0 %v4608
  %v4626 = vpop.xlane.xlu0 %4625
  %4627 = vadd.xlane.f32.xlu0 %v4609
  %v4628 = vpop.xlane.xlu0 %4627
  %4629 = vadd.xlane.f32.xlu0 %v4610
  %v4630 = vpop.xlane.xlu0 %4629
  %4631 = vadd.xlane.f32.xlu0 %v4611
  %v4632 = vpop.xlane.xlu0 %4631
  %4633 = vadd.xlane.f32.xlu0 %v4612
  %v4634 = vpop.xlane.xlu0 %4633
  %4635 = vadd.xlane.f32.xlu0 %v4613
  %v4636 = vpop.xlane.xlu0 %4635
  %4637 = vadd.xlane.f32.xlu0 %v4614
  %v4638 = vpop.xlane.xlu0 %4637
  %4639 = vadd.xlane.f32.xlu0 %v4615
  %v4640 = vpop.xlane.xlu0 %4639
  %4641 = vadd.xlane.f32.xlu0 %v4616
  %v4642 = vpop.xlane.xlu0 %4641
  %4643 = vadd.xlane.f32.xlu0 %v4617
  %v4644 = vpop.xlane.xlu0 %4643
  %4645 = vadd.xlane.f32.xlu0 %v4618
  %v4646 = vpop.xlane.xlu0 %4645
  %4647 = vadd.xlane.f32.xlu0 %v4619
  %v4648 = vpop.xlane.xlu0 %4647
  %4649 = vadd.xlane.f32.xlu0 %v4620
  %v4650 = vpop.xlane.xlu0 %4649
  %4651 = vadd.xlane.f32.xlu0 %v4621
  %v4652 = vpop.xlane.xlu0 %4651
  %4653 = vadd.xlane.f32.xlu0 %v4622
  %v4654 = vpop.xlane.xlu0 %4653
  %v4655 = vadd.f32 %v4624, %v1023
  %v4656 = vadd.f32 %v4626, %v1023
  %v4657 = vadd.f32 %v4628, %v1023
  %v4658 = vadd.f32 %v4630, %v1023
  %v4659 = vadd.f32 %v4632, %v1023
  %v4660 = vadd.f32 %v4634, %v1023
  %v4661 = vadd.f32 %v4636, %v1023
  %v4662 = vadd.f32 %v4638, %v1023
  %v4663 = vadd.f32 %v4640, %v1023
  %v4664 = vadd.f32 %v4642, %v1023
  %v4665 = vadd.f32 %v4644, %v1023
  %v4666 = vadd.f32 %v4646, %v1023
  %v4667 = vadd.f32 %v4648, %v1023
  %v4668 = vadd.f32 %v4650, %v1023
  %v4669 = vadd.f32 %v4652, %v1023
  %v4670 = vadd.f32 %v4654, %v1023
  %v4671 = vmax.f32 %v4655, %v4656
  %v4672 = vrot.slane %v4671, 4
  %v4673 = vmax.f32 %v4671, %v4672
  %v4674 = vrot.slane %v4673, 2
  %v4675 = vmax.f32 %v4673, %v4674
  %v4676 = vrot.slane %v4675, 1
  %v4677 = vmax.f32 %v4675, %v4676
  %v4678 = vmax.f32 %v4657, %v4658
  %v4679 = vrot.slane %v4678, 4
  %v4680 = vmax.f32 %v4678, %v4679
  %v4681 = vrot.slane %v4680, 2
  %v4682 = vmax.f32 %v4680, %v4681
  %v4683 = vrot.slane %v4682, 1
  %v4684 = vmax.f32 %v4682, %v4683
  %v4685 = vmax.f32 %v4659, %v4660
  %v4686 = vrot.slane %v4685, 4
  %v4687 = vmax.f32 %v4685, %v4686
  %v4688 = vrot.slane %v4687, 2
  %v4689 = vmax.f32 %v4687, %v4688
  %v4690 = vrot.slane %v4689, 1
  %v4691 = vmax.f32 %v4689, %v4690
  %v4692 = vmax.f32 %v4661, %v4662
  %v4693 = vrot.slane %v4692, 4
  %v4694 = vmax.f32 %v4692, %v4693
  %v4695 = vrot.slane %v4694, 2
  %v4696 = vmax.f32 %v4694, %v4695
  %v4697 = vrot.slane %v4696, 1
  %v4698 = vmax.f32 %v4696, %v4697
  %v4699 = vmax.f32 %v4663, %v4664
  %v4700 = vrot.slane %v4699, 4
  %v4701 = vmax.f32 %v4699, %v4700
  %v4702 = vrot.slane %v4701, 2
  %v4703 = vmax.f32 %v4701, %v4702
  %v4704 = vrot.slane %v4703, 1
  %v4705 = vmax.f32 %v4703, %v4704
  %v4706 = vmax.f32 %v4665, %v4666
  %v4707 = vrot.slane %v4706, 4
  %v4708 = vmax.f32 %v4706, %v4707
  %v4709 = vrot.slane %v4708, 2
  %v4710 = vmax.f32 %v4708, %v4709
  %v4711 = vrot.slane %v4710, 1
  %v4712 = vmax.f32 %v4710, %v4711
  %v4713 = vmax.f32 %v4667, %v4668
  %v4714 = vrot.slane %v4713, 4
  %v4715 = vmax.f32 %v4713, %v4714
  %v4716 = vrot.slane %v4715, 2
  %v4717 = vmax.f32 %v4715, %v4716
  %v4718 = vrot.slane %v4717, 1
  %v4719 = vmax.f32 %v4717, %v4718
  %v4720 = vmax.f32 %v4669, %v4670
  %v4721 = vrot.slane %v4720, 4
  %v4722 = vmax.f32 %v4720, %v4721
  %v4723 = vrot.slane %v4722, 2
  %v4724 = vmax.f32 %v4722, %v4723
  %v4725 = vrot.slane %v4724, 1
  %v4726 = vmax.f32 %v4724, %v4725
  %v4727 = vsub.f32 %v4655, %v4677
  %v4728 = vsub.f32 %v4656, %v4677
  %v4729 = vsub.f32 %v4657, %v4684
  %v4730 = vsub.f32 %v4658, %v4684
  %v4731 = vsub.f32 %v4659, %v4691
  %v4732 = vsub.f32 %v4660, %v4691
  %v4733 = vsub.f32 %v4661, %v4698
  %v4734 = vsub.f32 %v4662, %v4698
  %v4735 = vsub.f32 %v4663, %v4705
  %v4736 = vsub.f32 %v4664, %v4705
  %v4737 = vsub.f32 %v4665, %v4712
  %v4738 = vsub.f32 %v4666, %v4712
  %v4739 = vsub.f32 %v4667, %v4719
  %v4740 = vsub.f32 %v4668, %v4719
  %v4741 = vsub.f32 %v4669, %v4726
  %v4742 = vsub.f32 %v4670, %v4726
  %v4743 = vmul.f32 %v4727, 1.442695
  %v4744 = vpow.pop %v4743
  %v4745 = vmul.f32 %v4728, 1.442695
  %v4746 = vpow.pop %v4745
  %v4747 = vmul.f32 %v4729, 1.442695
  %v4748 = vpow.pop %v4747
  %v4749 = vmul.f32 %v4730, 1.442695
  %v4750 = vpow.pop %v4749
  %v4751 = vmul.f32 %v4731, 1.442695
  %v4752 = vpow.pop %v4751
  %v4753 = vmul.f32 %v4732, 1.442695
  %v4754 = vpow.pop %v4753
  %v4755 = vmul.f32 %v4733, 1.442695
  %v4756 = vpow.pop %v4755
  %v4757 = vmul.f32 %v4734, 1.442695
  %v4758 = vpow.pop %v4757
  %v4759 = vmul.f32 %v4735, 1.442695
  %v4760 = vpow.pop %v4759
  %v4761 = vmul.f32 %v4736, 1.442695
  %v4762 = vpow.pop %v4761
  %v4763 = vmul.f32 %v4737, 1.442695
  %v4764 = vpow.pop %v4763
  %v4765 = vmul.f32 %v4738, 1.442695
  %v4766 = vpow.pop %v4765
  %v4767 = vmul.f32 %v4739, 1.442695
  %v4768 = vpow.pop %v4767
  %v4769 = vmul.f32 %v4740, 1.442695
  %v4770 = vpow.pop %v4769
  %v4771 = vmul.f32 %v4741, 1.442695
  %v4772 = vpow.pop %v4771
  %v4773 = vmul.f32 %v4742, 1.442695
  %v4774 = vpow.pop %v4773
  %v4775 = vadd.f32 %v4744, %v4746
  %v4776 = vrot.slane %v4775, 4
  %v4777 = vadd.f32 %v4775, %v4776
  %v4778 = vrot.slane %v4777, 2
  %v4779 = vadd.f32 %v4777, %v4778
  %v4780 = vrot.slane %v4779, 1
  %v4781 = vadd.f32 %v4779, %v4780
  %v4782 = vadd.f32 %v4748, %v4750
  %v4783 = vrot.slane %v4782, 4
  %v4784 = vadd.f32 %v4782, %v4783
  %v4785 = vrot.slane %v4784, 2
  %v4786 = vadd.f32 %v4784, %v4785
  %v4787 = vrot.slane %v4786, 1
  %v4788 = vadd.f32 %v4786, %v4787
  %v4789 = vadd.f32 %v4752, %v4754
  %v4790 = vrot.slane %v4789, 4
  %v4791 = vadd.f32 %v4789, %v4790
  %v4792 = vrot.slane %v4791, 2
  %v4793 = vadd.f32 %v4791, %v4792
  %v4794 = vrot.slane %v4793, 1
  %v4795 = vadd.f32 %v4793, %v4794
  %v4796 = vadd.f32 %v4756, %v4758
  %v4797 = vrot.slane %v4796, 4
  %v4798 = vadd.f32 %v4796, %v4797
  %v4799 = vrot.slane %v4798, 2
  %v4800 = vadd.f32 %v4798, %v4799
  %v4801 = vrot.slane %v4800, 1
  %v4802 = vadd.f32 %v4800, %v4801
  %v4803 = vadd.f32 %v4760, %v4762
  %v4804 = vrot.slane %v4803, 4
  %v4805 = vadd.f32 %v4803, %v4804
  %v4806 = vrot.slane %v4805, 2
  %v4807 = vadd.f32 %v4805, %v4806
  %v4808 = vrot.slane %v4807, 1
  %v4809 = vadd.f32 %v4807, %v4808
  %v4810 = vadd.f32 %v4764, %v4766
  %v4811 = vrot.slane %v4810, 4
  %v4812 = vadd.f32 %v4810, %v4811
  %v4813 = vrot.slane %v4812, 2
  %v4814 = vadd.f32 %v4812, %v4813
  %v4815 = vrot.slane %v4814, 1
  %v4816 = vadd.f32 %v4814, %v4815
  %v4817 = vadd.f32 %v4768, %v4770
  %v4818 = vrot.slane %v4817, 4
  %v4819 = vadd.f32 %v4817, %v4818
  %v4820 = vrot.slane %v4819, 2
  %v4821 = vadd.f32 %v4819, %v4820
  %v4822 = vrot.slane %v4821, 1
  %v4823 = vadd.f32 %v4821, %v4822
  %v4824 = vadd.f32 %v4772, %v4774
  %v4825 = vrot.slane %v4824, 4
  %v4826 = vadd.f32 %v4824, %v4825
  %v4827 = vrot.slane %v4826, 2
  %v4828 = vadd.f32 %v4826, %v4827
  %v4829 = vrot.slane %v4828, 1
  %v4830 = vadd.f32 %v4828, %v4829
  %v4831 = vrcp.pop %v4781
  %v4832 = vmul.f32 %v4781, %v4831
  %v4833 = vsub.f32 1.0, %v4832
  %v4834 = vmul.f32 %v4831, %v4833
  %v4835 = vadd.f32 %v4831, %v4834
  %vm4836 = vweird.f32 %v4781
  %vm4837 = vweird.f32 %v4831
  %vm4838 = vmor %vm4836, %vm4837
  %v4839 = vsel %vm4838, %v4831, %v4835
  %v4840 = vand.u32 2147483647, %v4781
  %vm4841 = vcmp.eq.f32.partialorder %v4840, 8.507059e+37
  %v4842 = vand.u32 %v4781, 2147483648
  %v4843 = vor.u32 1.1754944e-38, %v4842
  %v4844 = vsel %vm4841, %v4843, %v4839
  %v4845 = vmul.f32 %v4744, %v4844
  %v4846 = vmul.f32 %v4746, %v4844
  %v4847 = vrcp.pop %v4788
  %v4848 = vmul.f32 %v4788, %v4847
  %v4849 = vsub.f32 1.0, %v4848
  %v4850 = vmul.f32 %v4847, %v4849
  %v4851 = vadd.f32 %v4847, %v4850
  %vm4852 = vweird.f32 %v4788
  %vm4853 = vweird.f32 %v4847
  %vm4854 = vmor %vm4852, %vm4853
  %v4855 = vsel %vm4854, %v4847, %v4851
  %v4856 = vand.u32 2147483647, %v4788
  %vm4857 = vcmp.eq.f32.partialorder %v4856, 8.507059e+37
  %v4858 = vand.u32 %v4788, 2147483648
  %v4859 = vor.u32 1.1754944e-38, %v4858
  %v4860 = vsel %vm4857, %v4859, %v4855
  %v4861 = vmul.f32 %v4748, %v4860
  %v4862 = vmul.f32 %v4750, %v4860
  %v4863 = vrcp.pop %v4795
  %v4864 = vmul.f32 %v4795, %v4863
  %v4865 = vsub.f32 1.0, %v4864
  %v4866 = vmul.f32 %v4863, %v4865
  %v4867 = vadd.f32 %v4863, %v4866
  %vm4868 = vweird.f32 %v4795
  %vm4869 = vweird.f32 %v4863
  %vm4870 = vmor %vm4868, %vm4869
  %v4871 = vsel %vm4870, %v4863, %v4867
  %v4872 = vand.u32 2147483647, %v4795
  %vm4873 = vcmp.eq.f32.partialorder %v4872, 8.507059e+37
  %v4874 = vand.u32 %v4795, 2147483648
  %v4875 = vor.u32 1.1754944e-38, %v4874
  %v4876 = vsel %vm4873, %v4875, %v4871
  %v4877 = vmul.f32 %v4752, %v4876
  %v4878 = vmul.f32 %v4754, %v4876
  %v4879 = vrcp.pop %v4802
  %v4880 = vmul.f32 %v4802, %v4879
  %v4881 = vsub.f32 1.0, %v4880
  %v4882 = vmul.f32 %v4879, %v4881
  %v4883 = vadd.f32 %v4879, %v4882
  %vm4884 = vweird.f32 %v4802
  %vm4885 = vweird.f32 %v4879
  %vm4886 = vmor %vm4884, %vm4885
  %v4887 = vsel %vm4886, %v4879, %v4883
  %v4888 = vand.u32 2147483647, %v4802
  %vm4889 = vcmp.eq.f32.partialorder %v4888, 8.507059e+37
  %v4890 = vand.u32 %v4802, 2147483648
  %v4891 = vor.u32 1.1754944e-38, %v4890
  %v4892 = vsel %vm4889, %v4891, %v4887
  %v4893 = vmul.f32 %v4756, %v4892
  %v4894 = vmul.f32 %v4758, %v4892
  %v4895 = vrcp.pop %v4809
  %v4896 = vmul.f32 %v4809, %v4895
  %v4897 = vsub.f32 1.0, %v4896
  %v4898 = vmul.f32 %v4895, %v4897
  %v4899 = vadd.f32 %v4895, %v4898
  %vm4900 = vweird.f32 %v4809
  %vm4901 = vweird.f32 %v4895
  %vm4902 = vmor %vm4900, %vm4901
  %v4903 = vsel %vm4902, %v4895, %v4899
  %v4904 = vand.u32 2147483647, %v4809
  %vm4905 = vcmp.eq.f32.partialorder %v4904, 8.507059e+37
  %v4906 = vand.u32 %v4809, 2147483648
  %v4907 = vor.u32 1.1754944e-38, %v4906
  %v4908 = vsel %vm4905, %v4907, %v4903
  %v4909 = vmul.f32 %v4760, %v4908
  %v4910 = vmul.f32 %v4762, %v4908
  %v4911 = vrcp.pop %v4816
  %v4912 = vmul.f32 %v4816, %v4911
  %v4913 = vsub.f32 1.0, %v4912
  %v4914 = vmul.f32 %v4911, %v4913
  %v4915 = vadd.f32 %v4911, %v4914
  %vm4916 = vweird.f32 %v4816
  %vm4917 = vweird.f32 %v4911
  %vm4918 = vmor %vm4916, %vm4917
  %v4919 = vsel %vm4918, %v4911, %v4915
  %v4920 = vand.u32 2147483647, %v4816
  %vm4921 = vcmp.eq.f32.partialorder %v4920, 8.507059e+37
  %v4922 = vand.u32 %v4816, 2147483648
  %v4923 = vor.u32 1.1754944e-38, %v4922
  %v4924 = vsel %vm4921, %v4923, %v4919
  %v4925 = vmul.f32 %v4764, %v4924
  %v4926 = vmul.f32 %v4766, %v4924
  %v4927 = vrcp.pop %v4823
  %v4928 = vmul.f32 %v4823, %v4927
  %v4929 = vsub.f32 1.0, %v4928
  %v4930 = vmul.f32 %v4927, %v4929
  %v4931 = vadd.f32 %v4927, %v4930
  %vm4932 = vweird.f32 %v4823
  %vm4933 = vweird.f32 %v4927
  %vm4934 = vmor %vm4932, %vm4933
  %v4935 = vsel %vm4934, %v4927, %v4931
  %v4936 = vand.u32 2147483647, %v4823
  %vm4937 = vcmp.eq.f32.partialorder %v4936, 8.507059e+37
  %v4938 = vand.u32 %v4823, 2147483648
  %v4939 = vor.u32 1.1754944e-38, %v4938
  %v4940 = vsel %vm4937, %v4939, %v4935
  %v4941 = vmul.f32 %v4768, %v4940
  %v4942 = vmul.f32 %v4770, %v4940
  %v4943 = vrcp.pop %v4830
  %v4944 = vmul.f32 %v4830, %v4943
  %v4945 = vsub.f32 1.0, %v4944
  %v4946 = vmul.f32 %v4943, %v4945
  %v4947 = vadd.f32 %v4943, %v4946
  %vm4948 = vweird.f32 %v4830
  %vm4949 = vweird.f32 %v4943
  %vm4950 = vmor %vm4948, %vm4949
  %v4951 = vsel %vm4950, %v4943, %v4947
  %v4952 = vand.u32 2147483647, %v4830
  %vm4953 = vcmp.eq.f32.partialorder %v4952, 8.507059e+37
  %v4954 = vand.u32 %v4830, 2147483648
  %v4955 = vor.u32 1.1754944e-38, %v4954
  %v4956 = vsel %vm4953, %v4955, %v4951
  %v4957 = vmul.f32 %v4772, %v4956
  %v4958 = vmul.f32 %v4774, %v4956
  %v4959 = vld [vmem:[%s0] sm:$0xff]
  %v4960 = vld [vmem:[%s0 + $0x8] sm:$0xff]
  %v4961 = vld [vmem:[%s0 + $0x10] sm:$0xff]
  %v4962 = vld [vmem:[%s0 + $0x18] sm:$0xff]
  %v4963 = vld [vmem:[%s0 + $0x20] sm:$0xff]
  %v4964 = vld [vmem:[%s0 + $0x28] sm:$0xff]
  %v4965 = vld [vmem:[%s0 + $0x30] sm:$0xff]
  %v4966 = vld [vmem:[%s0 + $0x38] sm:$0xff]
  %v4967 = vld [vmem:[%s0 + $0x40] sm:$0xff]
  %v4968 = vld [vmem:[%s0 + $0x48] sm:$0xff]
  %v4969 = vld [vmem:[%s0 + $0x50] sm:$0xff]
  %v4970 = vld [vmem:[%s0 + $0x58] sm:$0xff]
  %v4971 = vld [vmem:[%s0 + $0x60] sm:$0xff]
  %v4972 = vld [vmem:[%s0 + $0x68] sm:$0xff]
  %v4973 = vld [vmem:[%s0 + $0x70] sm:$0xff]
  %v4974 = vld [vmem:[%s0 + $0x78] sm:$0xff]
  %v4975 = vmul.f32 %v4959, %v4845
  %v4976 = vmul.f32 %v4960, %v4846
  %v4977 = vmul.f32 %v4961, %v4861
  %v4978 = vmul.f32 %v4962, %v4862
  %v4979 = vmul.f32 %v4963, %v4877
  %v4980 = vmul.f32 %v4964, %v4878
  %v4981 = vmul.f32 %v4965, %v4893
  %v4982 = vmul.f32 %v4966, %v4894
  %v4983 = vmul.f32 %v4967, %v4909
  %v4984 = vmul.f32 %v4968, %v4910
  %v4985 = vmul.f32 %v4969, %v4925
  %v4986 = vmul.f32 %v4970, %v4926
  %v4987 = vmul.f32 %v4971, %v4941
  %v4988 = vmul.f32 %v4972, %v4942
  %v4989 = vmul.f32 %v4973, %v4957
  %v4990 = vmul.f32 %v4974, %v4958
  %v4991 = vadd.f32 %v4975, %v4976
  %v4992 = vrot.slane %v4991, 4
  %v4993 = vadd.f32 %v4991, %v4992
  %v4994 = vrot.slane %v4993, 2
  %v4995 = vadd.f32 %v4993, %v4994
  %v4996 = vrot.slane %v4995, 1
  %v4997 = vadd.f32 %v4995, %v4996
  %v4998 = vadd.f32 %v4977, %v4978
  %v4999 = vrot.slane %v4998, 4
  %v5000 = vadd.f32 %v4998, %v4999
  %v5001 = vrot.slane %v5000, 2
  %v5002 = vadd.f32 %v5000, %v5001
  %v5003 = vrot.slane %v5002, 1
  %v5004 = vadd.f32 %v5002, %v5003
  %v5005 = vadd.f32 %v4979, %v4980
  %v5006 = vrot.slane %v5005, 4
  %v5007 = vadd.f32 %v5005, %v5006
  %v5008 = vrot.slane %v5007, 2
  %v5009 = vadd.f32 %v5007, %v5008
  %v5010 = vrot.slane %v5009, 1
  %v5011 = vadd.f32 %v5009, %v5010
  %v5012 = vadd.f32 %v4981, %v4982
  %v5013 = vrot.slane %v5012, 4
  %v5014 = vadd.f32 %v5012, %v5013
  %v5015 = vrot.slane %v5014, 2
  %v5016 = vadd.f32 %v5014, %v5015
  %v5017 = vrot.slane %v5016, 1
  %v5018 = vadd.f32 %v5016, %v5017
  %v5019 = vadd.f32 %v4983, %v4984
  %v5020 = vrot.slane %v5019, 4
  %v5021 = vadd.f32 %v5019, %v5020
  %v5022 = vrot.slane %v5021, 2
  %v5023 = vadd.f32 %v5021, %v5022
  %v5024 = vrot.slane %v5023, 1
  %v5025 = vadd.f32 %v5023, %v5024
  %v5026 = vadd.f32 %v4985, %v4986
  %v5027 = vrot.slane %v5026, 4
  %v5028 = vadd.f32 %v5026, %v5027
  %v5029 = vrot.slane %v5028, 2
  %v5030 = vadd.f32 %v5028, %v5029
  %v5031 = vrot.slane %v5030, 1
  %v5032 = vadd.f32 %v5030, %v5031
  %v5033 = vadd.f32 %v4987, %v4988
  %v5034 = vrot.slane %v5033, 4
  %v5035 = vadd.f32 %v5033, %v5034
  %v5036 = vrot.slane %v5035, 2
  %v5037 = vadd.f32 %v5035, %v5036
  %v5038 = vrot.slane %v5037, 1
  %v5039 = vadd.f32 %v5037, %v5038
  %v5040 = vadd.f32 %v4989, %v4990
  %v5041 = vrot.slane %v5040, 4
  %v5042 = vadd.f32 %v5040, %v5041
  %v5043 = vrot.slane %v5042, 2
  %v5044 = vadd.f32 %v5042, %v5043
  %v5045 = vrot.slane %v5044, 1
  %v5046 = vadd.f32 %v5044, %v5045
  %v5055 = vsel %vm191, %v5004, %v4997
  %v5056 = vsel %vm193, %v5011, %v5055
  %v5057 = vsel %vm195, %v5018, %v5056
  %v5058 = vsel %vm197, %v5025, %v5057
  %v5059 = vsel %vm199, %v5032, %v5058
  %v5060 = vsel %vm201, %v5039, %v5059
  %v5061 = vsel %vm203, %v5046, %v5060
  %v5063 = vmul.f32 %v4550, %v5061
  %v5064 = vpack.c.bf16 %v5063, %v5063
  %v5065 = vld [vmem:[%s10] sm:$0xff]
  %v5066 = vld [vmem:[%s10 + $0x8] sm:$0xff]
  %v5067 = vld [vmem:[%s10 + $0x10] sm:$0xff]
  %v5068 = vld [vmem:[%s10 + $0x18] sm:$0xff]
  %v5069 = vld [vmem:[%s10 + $0x20] sm:$0xff]
  %v5070 = vld [vmem:[%s10 + $0x28] sm:$0xff]
  %v5071 = vld [vmem:[%s10 + $0x30] sm:$0xff]
  %v5072 = vld [vmem:[%s10 + $0x38] sm:$0xff]
  %v5073 = vld [vmem:[%s10 + $0x40] sm:$0xff]
  %v5074 = vld [vmem:[%s10 + $0x48] sm:$0xff]
  %v5075 = vld [vmem:[%s10 + $0x50] sm:$0xff]
  %v5076 = vld [vmem:[%s10 + $0x58] sm:$0xff]
  %v5077 = vld [vmem:[%s10 + $0x60] sm:$0xff]
  %v5078 = vld [vmem:[%s10 + $0x68] sm:$0xff]
  %v5079 = vld [vmem:[%s10 + $0x70] sm:$0xff]
  %v5080 = vld [vmem:[%s10 + $0x78] sm:$0xff]
  %v5081 = vld [vmem:[%s10 + $0x80] sm:$0xff]
  %v5082 = vld [vmem:[%s10 + $0x88] sm:$0xff]
  %v5083 = vld [vmem:[%s10 + $0x90] sm:$0xff]
  %v5084 = vld [vmem:[%s10 + $0x98] sm:$0xff]
  %v5085 = vld [vmem:[%s10 + $0xa0] sm:$0xff]
  %v5086 = vld [vmem:[%s10 + $0xa8] sm:$0xff]
  %v5087 = vld [vmem:[%s10 + $0xb0] sm:$0xff]
  %v5088 = vld [vmem:[%s10 + $0xb8] sm:$0xff]
  %v5089 = vld [vmem:[%s10 + $0xc0] sm:$0xff]
  %v5090 = vld [vmem:[%s10 + $0xc8] sm:$0xff]
  %v5091 = vld [vmem:[%s10 + $0xd0] sm:$0xff]
  %v5092 = vld [vmem:[%s10 + $0xd8] sm:$0xff]
  %v5093 = vld [vmem:[%s10 + $0xe0] sm:$0xff]
  %v5094 = vld [vmem:[%s10 + $0xe8] sm:$0xff]
  %v5095 = vld [vmem:[%s10 + $0xf0] sm:$0xff]
  %v5096 = vld [vmem:[%s10 + $0xf8] sm:$0xff]
  %v5097 = vld [vmem:[%s10 + $0x100] sm:$0xff]
  %v5098 = vld [vmem:[%s10 + $0x108] sm:$0xff]
  %v5099 = vld [vmem:[%s10 + $0x110] sm:$0xff]
  %v5100 = vld [vmem:[%s10 + $0x118] sm:$0xff]
  %v5101 = vld [vmem:[%s10 + $0x120] sm:$0xff]
  %v5102 = vld [vmem:[%s10 + $0x128] sm:$0xff]
  %v5103 = vld [vmem:[%s10 + $0x130] sm:$0xff]
  %v5104 = vld [vmem:[%s10 + $0x138] sm:$0xff]
  %v5105 = vld [vmem:[%s10 + $0x140] sm:$0xff]
  %v5106 = vld [vmem:[%s10 + $0x148] sm:$0xff]
  %v5107 = vld [vmem:[%s10 + $0x150] sm:$0xff]
  %v5108 = vld [vmem:[%s10 + $0x158] sm:$0xff]
  %v5109 = vld [vmem:[%s10 + $0x160] sm:$0xff]
  %v5110 = vld [vmem:[%s10 + $0x168] sm:$0xff]
  %v5111 = vld [vmem:[%s10 + $0x170] sm:$0xff]
  %v5112 = vld [vmem:[%s10 + $0x178] sm:$0xff]
  %v5113 = vld [vmem:[%s10 + $0x180] sm:$0xff]
  %v5114 = vld [vmem:[%s10 + $0x188] sm:$0xff]
  %v5115 = vld [vmem:[%s10 + $0x190] sm:$0xff]
  %v5116 = vld [vmem:[%s10 + $0x198] sm:$0xff]
  %v5117 = vld [vmem:[%s10 + $0x1a0] sm:$0xff]
  %v5118 = vld [vmem:[%s10 + $0x1a8] sm:$0xff]
  %v5119 = vld [vmem:[%s10 + $0x1b0] sm:$0xff]
  %v5120 = vld [vmem:[%s10 + $0x1b8] sm:$0xff]
  %v5121 = vld [vmem:[%s10 + $0x1c0] sm:$0xff]
  %v5122 = vld [vmem:[%s10 + $0x1c8] sm:$0xff]
  %v5123 = vld [vmem:[%s10 + $0x1d0] sm:$0xff]
  %v5124 = vld [vmem:[%s10 + $0x1d8] sm:$0xff]
  %v5125 = vld [vmem:[%s10 + $0x1e0] sm:$0xff]
  %v5126 = vld [vmem:[%s10 + $0x1e8] sm:$0xff]
  %v5127 = vld [vmem:[%s10 + $0x1f0] sm:$0xff]
  %v5128 = vld [vmem:[%s10 + $0x1f8] sm:$0xff]
  %v5193 = vunpack.c.l.b16 %v5065
  %v5194 = vunpack.c.h.b16 %v5065
  %v5195 = vunpack.c.l.b16 %v5066
  %v5196 = vunpack.c.h.b16 %v5066
  %v5197 = vunpack.c.l.b16 %v5067
  %v5198 = vunpack.c.h.b16 %v5067
  %v5199 = vunpack.c.l.b16 %v5068
  %v5200 = vunpack.c.h.b16 %v5068
  %v5201 = vunpack.c.l.b16 %v5069
  %v5202 = vunpack.c.h.b16 %v5069
  %v5203 = vunpack.c.l.b16 %v5070
  %v5204 = vunpack.c.h.b16 %v5070
  %v5205 = vunpack.c.l.b16 %v5071
  %v5206 = vunpack.c.h.b16 %v5071
  %v5207 = vunpack.c.l.b16 %v5072
  %v5208 = vunpack.c.h.b16 %v5072
  %v5209 = vunpack.c.l.b16 %v5073
  %v5210 = vunpack.c.h.b16 %v5073
  %v5211 = vunpack.c.l.b16 %v5074
  %v5212 = vunpack.c.h.b16 %v5074
  %v5213 = vunpack.c.l.b16 %v5075
  %v5214 = vunpack.c.h.b16 %v5075
  %v5215 = vunpack.c.l.b16 %v5076
  %v5216 = vunpack.c.h.b16 %v5076
  %v5217 = vunpack.c.l.b16 %v5077
  %v5218 = vunpack.c.h.b16 %v5077
  %v5219 = vunpack.c.l.b16 %v5078
  %v5220 = vunpack.c.h.b16 %v5078
  %v5221 = vunpack.c.l.b16 %v5079
  %v5222 = vunpack.c.h.b16 %v5079
  %v5223 = vunpack.c.l.b16 %v5080
  %v5224 = vunpack.c.h.b16 %v5080
  %v5225 = vunpack.c.l.b16 %v5081
  %v5226 = vunpack.c.h.b16 %v5081
  %v5227 = vunpack.c.l.b16 %v5082
  %v5228 = vunpack.c.h.b16 %v5082
  %v5229 = vunpack.c.l.b16 %v5083
  %v5230 = vunpack.c.h.b16 %v5083
  %v5231 = vunpack.c.l.b16 %v5084
  %v5232 = vunpack.c.h.b16 %v5084
  %v5233 = vunpack.c.l.b16 %v5085
  %v5234 = vunpack.c.h.b16 %v5085
  %v5235 = vunpack.c.l.b16 %v5086
  %v5236 = vunpack.c.h.b16 %v5086
  %v5237 = vunpack.c.l.b16 %v5087
  %v5238 = vunpack.c.h.b16 %v5087
  %v5239 = vunpack.c.l.b16 %v5088
  %v5240 = vunpack.c.h.b16 %v5088
  %v5241 = vunpack.c.l.b16 %v5089
  %v5242 = vunpack.c.h.b16 %v5089
  %v5243 = vunpack.c.l.b16 %v5090
  %v5244 = vunpack.c.h.b16 %v5090
  %v5245 = vunpack.c.l.b16 %v5091
  %v5246 = vunpack.c.h.b16 %v5091
  %v5247 = vunpack.c.l.b16 %v5092
  %v5248 = vunpack.c.h.b16 %v5092
  %v5249 = vunpack.c.l.b16 %v5093
  %v5250 = vunpack.c.h.b16 %v5093
  %v5251 = vunpack.c.l.b16 %v5094
  %v5252 = vunpack.c.h.b16 %v5094
  %v5253 = vunpack.c.l.b16 %v5095
  %v5254 = vunpack.c.h.b16 %v5095
  %v5255 = vunpack.c.l.b16 %v5096
  %v5256 = vunpack.c.h.b16 %v5096
  %v5257 = vunpack.c.l.b16 %v5097
  %v5258 = vunpack.c.h.b16 %v5097
  %v5259 = vunpack.c.l.b16 %v5098
  %v5260 = vunpack.c.h.b16 %v5098
  %v5261 = vunpack.c.l.b16 %v5099
  %v5262 = vunpack.c.h.b16 %v5099
  %v5263 = vunpack.c.l.b16 %v5100
  %v5264 = vunpack.c.h.b16 %v5100
  %v5265 = vunpack.c.l.b16 %v5101
  %v5266 = vunpack.c.h.b16 %v5101
  %v5267 = vunpack.c.l.b16 %v5102
  %v5268 = vunpack.c.h.b16 %v5102
  %v5269 = vunpack.c.l.b16 %v5103
  %v5270 = vunpack.c.h.b16 %v5103
  %v5271 = vunpack.c.l.b16 %v5104
  %v5272 = vunpack.c.h.b16 %v5104
  %v5273 = vunpack.c.l.b16 %v5105
  %v5274 = vunpack.c.h.b16 %v5105
  %v5275 = vunpack.c.l.b16 %v5106
  %v5276 = vunpack.c.h.b16 %v5106
  %v5277 = vunpack.c.l.b16 %v5107
  %v5278 = vunpack.c.h.b16 %v5107
  %v5279 = vunpack.c.l.b16 %v5108
  %v5280 = vunpack.c.h.b16 %v5108
  %v5281 = vunpack.c.l.b16 %v5109
  %v5282 = vunpack.c.h.b16 %v5109
  %v5283 = vunpack.c.l.b16 %v5110
  %v5284 = vunpack.c.h.b16 %v5110
  %v5285 = vunpack.c.l.b16 %v5111
  %v5286 = vunpack.c.h.b16 %v5111
  %v5287 = vunpack.c.l.b16 %v5112
  %v5288 = vunpack.c.h.b16 %v5112
  %v5289 = vunpack.c.l.b16 %v5113
  %v5290 = vunpack.c.h.b16 %v5113
  %v5291 = vunpack.c.l.b16 %v5114
  %v5292 = vunpack.c.h.b16 %v5114
  %v5293 = vunpack.c.l.b16 %v5115
  %v5294 = vunpack.c.h.b16 %v5115
  %v5295 = vunpack.c.l.b16 %v5116
  %v5296 = vunpack.c.h.b16 %v5116
  %v5297 = vunpack.c.l.b16 %v5117
  %v5298 = vunpack.c.h.b16 %v5117
  %v5299 = vunpack.c.l.b16 %v5118
  %v5300 = vunpack.c.h.b16 %v5118
  %v5301 = vunpack.c.l.b16 %v5119
  %v5302 = vunpack.c.h.b16 %v5119
  %v5303 = vunpack.c.l.b16 %v5120
  %v5304 = vunpack.c.h.b16 %v5120
  %v5305 = vunpack.c.l.b16 %v5121
  %v5306 = vunpack.c.h.b16 %v5121
  %v5307 = vunpack.c.l.b16 %v5122
  %v5308 = vunpack.c.h.b16 %v5122
  %v5309 = vunpack.c.l.b16 %v5123
  %v5310 = vunpack.c.h.b16 %v5123
  %v5311 = vunpack.c.l.b16 %v5124
  %v5312 = vunpack.c.h.b16 %v5124
  %v5313 = vunpack.c.l.b16 %v5125
  %v5314 = vunpack.c.h.b16 %v5125
  %v5315 = vunpack.c.l.b16 %v5126
  %v5316 = vunpack.c.h.b16 %v5126
  %v5317 = vunpack.c.l.b16 %v5127
  %v5318 = vunpack.c.h.b16 %v5127
  %v5319 = vunpack.c.l.b16 %v5128
  %v5320 = vunpack.c.h.b16 %v5128
  %v5321 = vpack.c.b16 %v5197, %v5193
  %v5322 = vpack.c.b16 %v5198, %v5194
  %v5323 = vpack.c.b16 %v5199, %v5195
  %v5324 = vpack.c.b16 %v5200, %v5196
  %v5325 = vpack.c.b16 %v5205, %v5201
  %v5326 = vpack.c.b16 %v5206, %v5202
  %v5327 = vpack.c.b16 %v5207, %v5203
  %v5328 = vpack.c.b16 %v5208, %v5204
  %v5329 = vpack.c.b16 %v5213, %v5209
  %v5330 = vpack.c.b16 %v5214, %v5210
  %v5331 = vpack.c.b16 %v5215, %v5211
  %v5332 = vpack.c.b16 %v5216, %v5212
  %v5333 = vpack.c.b16 %v5221, %v5217
  %v5334 = vpack.c.b16 %v5222, %v5218
  %v5335 = vpack.c.b16 %v5223, %v5219
  %v5336 = vpack.c.b16 %v5224, %v5220
  %v5337 = vpack.c.b16 %v5229, %v5225
  %v5338 = vpack.c.b16 %v5230, %v5226
  %v5339 = vpack.c.b16 %v5231, %v5227
  %v5340 = vpack.c.b16 %v5232, %v5228
  %v5341 = vpack.c.b16 %v5237, %v5233
  %v5342 = vpack.c.b16 %v5238, %v5234
  %v5343 = vpack.c.b16 %v5239, %v5235
  %v5344 = vpack.c.b16 %v5240, %v5236
  %v5345 = vpack.c.b16 %v5245, %v5241
  %v5346 = vpack.c.b16 %v5246, %v5242
  %v5347 = vpack.c.b16 %v5247, %v5243
  %v5348 = vpack.c.b16 %v5248, %v5244
  %v5349 = vpack.c.b16 %v5253, %v5249
  %v5350 = vpack.c.b16 %v5254, %v5250
  %v5351 = vpack.c.b16 %v5255, %v5251
  %v5352 = vpack.c.b16 %v5256, %v5252
  %v5353 = vpack.c.b16 %v5261, %v5257
  %v5354 = vpack.c.b16 %v5262, %v5258
  %v5355 = vpack.c.b16 %v5263, %v5259
  %v5356 = vpack.c.b16 %v5264, %v5260
  %v5357 = vpack.c.b16 %v5269, %v5265
  %v5358 = vpack.c.b16 %v5270, %v5266
  %v5359 = vpack.c.b16 %v5271, %v5267
  %v5360 = vpack.c.b16 %v5272, %v5268
  %v5361 = vpack.c.b16 %v5277, %v5273
  %v5362 = vpack.c.b16 %v5278, %v5274
  %v5363 = vpack.c.b16 %v5279, %v5275
  %v5364 = vpack.c.b16 %v5280, %v5276
  %v5365 = vpack.c.b16 %v5285, %v5281
  %v5366 = vpack.c.b16 %v5286, %v5282
  %v5367 = vpack.c.b16 %v5287, %v5283
  %v5368 = vpack.c.b16 %v5288, %v5284
  %v5369 = vpack.c.b16 %v5293, %v5289
  %v5370 = vpack.c.b16 %v5294, %v5290
  %v5371 = vpack.c.b16 %v5295, %v5291
  %v5372 = vpack.c.b16 %v5296, %v5292
  %v5373 = vpack.c.b16 %v5301, %v5297
  %v5374 = vpack.c.b16 %v5302, %v5298
  %v5375 = vpack.c.b16 %v5303, %v5299
  %v5376 = vpack.c.b16 %v5304, %v5300
  %v5377 = vpack.c.b16 %v5309, %v5305
  %v5378 = vpack.c.b16 %v5310, %v5306
  %v5379 = vpack.c.b16 %v5311, %v5307
  %v5380 = vpack.c.b16 %v5312, %v5308
  %v5381 = vpack.c.b16 %v5317, %v5313
  %v5382 = vpack.c.b16 %v5318, %v5314
  %v5383 = vpack.c.b16 %v5319, %v5315
  %v5384 = vpack.c.b16 %v5320, %v5316
  %5449 = vmatpush.bf16.msra.mxu0 %v5349
  %5450 = vmatpush.bf16.msra.mxu0 %v5345
  %5451 = vmatpush.bf16.msra.mxu0 %v5341
  %5452 = vmatpush.bf16.msra.mxu0 %v5337
  %5453 = vmatpush.bf16.msra.mxu0 %v5333
  %5454 = vmatpush.bf16.msra.mxu0 %v5329
  %5455 = vmatpush.bf16.msra.mxu0 %v5325
  %5456 = vmatpush.bf16.msra.mxu0 %v5321
  %5457 = vmatmul.bf16.gmra.mxu0 %v4165
  %v5458 = vpop.f32.mrf.mxu0
  %v5459 = vadd.f32 %v1483, %v5458
  %v5460 = vpop.f32.mrf.mxu0
  %5461 = vdwg.mxu0
  %5462 = vmatpush.bf16.msra.mxu0 %v5381
  %5463 = vmatpush.bf16.msra.mxu0 %v5377
  %5464 = vmatpush.bf16.msra.mxu0 %v5373
  %5465 = vmatpush.bf16.msra.mxu0 %v5369
  %5466 = vmatpush.bf16.msra.mxu0 %v5365
  %5467 = vmatpush.bf16.msra.mxu0 %v5361
  %5468 = vmatpush.bf16.msra.mxu0 %v5357
  %5469 = vmatpush.bf16.msra.mxu0 %v5353
  %5470 = vmatmul.bf16.gmra.mxu0 %v5064
  %v5471 = vpop.f32.mrf.mxu0
  %v5472 = vadd.f32 %v5459, %v5471
  %v5473 = vpop.f32.mrf.mxu0
  %5474 = vdwg.mxu0
  %5475 = vmatpush.bf16.msra.mxu0 %v5350
  %5476 = vmatpush.bf16.msra.mxu0 %v5346
  %5477 = vmatpush.bf16.msra.mxu0 %v5342
  %5478 = vmatpush.bf16.msra.mxu0 %v5338
  %5479 = vmatpush.bf16.msra.mxu0 %v5334
  %5480 = vmatpush.bf16.msra.mxu0 %v5330
  %5481 = vmatpush.bf16.msra.mxu0 %v5326
  %5482 = vmatpush.bf16.msra.mxu0 %v5322
  %5483 = vmatmul.bf16.gmra.mxu0 %v4165
  %v5484 = vpop.f32.mrf.mxu0
  %v5485 = vadd.f32 %v1484, %v5484
  %v5486 = vpop.f32.mrf.mxu0
  %5487 = vdwg.mxu0
  %5488 = vmatpush.bf16.msra.mxu0 %v5382
  %5489 = vmatpush.bf16.msra.mxu0 %v5378
  %5490 = vmatpush.bf16.msra.mxu0 %v5374
  %5491 = vmatpush.bf16.msra.mxu0 %v5370
  %5492 = vmatpush.bf16.msra.mxu0 %v5366
  %5493 = vmatpush.bf16.msra.mxu0 %v5362
  %5494 = vmatpush.bf16.msra.mxu0 %v5358
  %5495 = vmatpush.bf16.msra.mxu0 %v5354
  %5496 = vmatmul.bf16.gmra.mxu0 %v5064
  %v5497 = vpop.f32.mrf.mxu0
  %v5498 = vadd.f32 %v5485, %v5497
  %v5499 = vpop.f32.mrf.mxu0
  %5500 = vdwg.mxu0
  %5501 = vmatpush.bf16.msra.mxu0 %v5351
  %5502 = vmatpush.bf16.msra.mxu0 %v5347
  %5503 = vmatpush.bf16.msra.mxu0 %v5343
  %5504 = vmatpush.bf16.msra.mxu0 %v5339
  %5505 = vmatpush.bf16.msra.mxu0 %v5335
  %5506 = vmatpush.bf16.msra.mxu0 %v5331
  %5507 = vmatpush.bf16.msra.mxu0 %v5327
  %5508 = vmatpush.bf16.msra.mxu0 %v5323
  %5509 = vmatmul.bf16.gmra.mxu0 %v4165
  %v5510 = vpop.f32.mrf.mxu0
  %v5511 = vadd.f32 %v1485, %v5510
  %v5512 = vpop.f32.mrf.mxu0
  %5513 = vdwg.mxu0
  %5514 = vmatpush.bf16.msra.mxu0 %v5383
  %5515 = vmatpush.bf16.msra.mxu0 %v5379
  %5516 = vmatpush.bf16.msra.mxu0 %v5375
  %5517 = vmatpush.bf16.msra.mxu0 %v5371
  %5518 = vmatpush.bf16.msra.mxu0 %v5367
  %5519 = vmatpush.bf16.msra.mxu0 %v5363
  %5520 = vmatpush.bf16.msra.mxu0 %v5359
  %5521 = vmatpush.bf16.msra.mxu0 %v5355
  %5522 = vmatmul.bf16.gmra.mxu0 %v5064
  %v5523 = vpop.f32.mrf.mxu0
  %v5524 = vadd.f32 %v5511, %v5523
  %v5525 = vpop.f32.mrf.mxu0
  %5526 = vdwg.mxu0
  %5527 = vmatpush.bf16.msra.mxu0 %v5352
  %5528 = vmatpush.bf16.msra.mxu0 %v5348
  %5529 = vmatpush.bf16.msra.mxu0 %v5344
  %5530 = vmatpush.bf16.msra.mxu0 %v5340
  %5531 = vmatpush.bf16.msra.mxu0 %v5336
  %5532 = vmatpush.bf16.msra.mxu0 %v5332
  %5533 = vmatpush.bf16.msra.mxu0 %v5328
  %5534 = vmatpush.bf16.msra.mxu0 %v5324
  %5535 = vmatmul.bf16.gmra.mxu0 %v4165
  %v5536 = vpop.f32.mrf.mxu0
  %v5537 = vadd.f32 %v1486, %v5536
  %v5538 = vpop.f32.mrf.mxu0
  %5539 = vdwg.mxu0
  %5540 = vmatpush.bf16.msra.mxu0 %v5384
  %5541 = vmatpush.bf16.msra.mxu0 %v5380
  %5542 = vmatpush.bf16.msra.mxu0 %v5376
  %5543 = vmatpush.bf16.msra.mxu0 %v5372
  %5544 = vmatpush.bf16.msra.mxu0 %v5368
  %5545 = vmatpush.bf16.msra.mxu0 %v5364
  %5546 = vmatpush.bf16.msra.mxu0 %v5360
  %5547 = vmatpush.bf16.msra.mxu0 %v5356
  %5548 = vmatmul.bf16.gmra.mxu0 %v5064
  %v5549 = vpop.f32.mrf.mxu0
  %v5550 = vadd.f32 %v5537, %v5549
  %v5551 = vpop.f32.mrf.mxu0
  %5552 = vdwg.mxu0
  %v5553 = vadd.f32 %v5472, %v4490
  %v5554 = vadd.f32 %v5498, %v4503
  %v5555 = vadd.f32 %v5524, %v4516
  %v5556 = vadd.f32 %v5550, %v4529
  %v5557 = vxor.u32 %v5553, 2147483648
  %v5558 = vmul.f32 %v5557, 1.442695
  %v5559 = vpow.pop %v5558
  %v5560 = vadd.f32 %v5559, 1.0
  %v5561 = vrcp.pop %v5560
  %v5562 = vmul.f32 %v5560, %v5561
  %v5563 = vsub.f32 1.0, %v5562
  %v5564 = vmul.f32 %v5561, %v5563
  %v5565 = vadd.f32 %v5561, %v5564
  %vm5566 = vweird.f32 %v5560
  %vm5567 = vweird.f32 %v5561
  %vm5568 = vmor %vm5566, %vm5567
  %v5569 = vsel %vm5568, %v5561, %v5565
  %v5570 = vand.u32 2147483647, %v5560
  %vm5571 = vcmp.eq.f32.partialorder %v5570, 8.507059e+37
  %v5572 = vand.u32 %v5560, 2147483648
  %v5573 = vor.u32 1.1754944e-38, %v5572
  %v5574 = vsel %vm5571, %v5573, %v5569
  %v5575 = vmul.f32 1.0, %v5574
  %v5576 = vxor.u32 %v5554, 2147483648
  %v5577 = vmul.f32 %v5576, 1.442695
  %v5578 = vpow.pop %v5577
  %v5579 = vadd.f32 %v5578, 1.0
  %v5580 = vrcp.pop %v5579
  %v5581 = vmul.f32 %v5579, %v5580
  %v5582 = vsub.f32 1.0, %v5581
  %v5583 = vmul.f32 %v5580, %v5582
  %v5584 = vadd.f32 %v5580, %v5583
  %vm5585 = vweird.f32 %v5579
  %vm5586 = vweird.f32 %v5580
  %vm5587 = vmor %vm5585, %vm5586
  %v5588 = vsel %vm5587, %v5580, %v5584
  %v5589 = vand.u32 2147483647, %v5579
  %vm5590 = vcmp.eq.f32.partialorder %v5589, 8.507059e+37
  %v5591 = vand.u32 %v5579, 2147483648
  %v5592 = vor.u32 1.1754944e-38, %v5591
  %v5593 = vsel %vm5590, %v5592, %v5588
  %v5594 = vmul.f32 1.0, %v5593
  %v5595 = vtanh.pop %v5555
  %v5596 = vxor.u32 %v5556, 2147483648
  %v5597 = vmul.f32 %v5596, 1.442695
  %v5598 = vpow.pop %v5597
  %v5599 = vadd.f32 %v5598, 1.0
  %v5600 = vrcp.pop %v5599
  %v5601 = vmul.f32 %v5599, %v5600
  %v5602 = vsub.f32 1.0, %v5601
  %v5603 = vmul.f32 %v5600, %v5602
  %v5604 = vadd.f32 %v5600, %v5603
  %vm5605 = vweird.f32 %v5599
  %vm5606 = vweird.f32 %v5600
  %vm5607 = vmor %vm5605, %vm5606
  %v5608 = vsel %vm5607, %v5600, %v5604
  %v5609 = vand.u32 2147483647, %v5599
  %vm5610 = vcmp.eq.f32.partialorder %v5609, 8.507059e+37
  %v5611 = vand.u32 %v5599, 2147483648
  %v5612 = vor.u32 1.1754944e-38, %v5611
  %v5613 = vsel %vm5610, %v5612, %v5608
  %v5614 = vmul.f32 1.0, %v5613
  %v5615 = vmul.f32 %v5594, %v3801
  %v5616 = vmul.f32 %v5575, %v5595
  %v5617 = vadd.f32 %v5615, %v5616
  %v5618 = vtanh.pop %v5617
  %v5619 = vmul.f32 %v5614, %v5618
  %v5620 = vpack.c.bf16 %v5619, %v5619
  %v5621 = vld [vmem:[%s12] sm:$0xff]
  %v5622 = vld [vmem:[%s12 + $0x8] sm:$0xff]
  %v5623 = vld [vmem:[%s12 + $0x10] sm:$0xff]
  %v5624 = vld [vmem:[%s12 + $0x18] sm:$0xff]
  %v5625 = vld [vmem:[%s12 + $0x20] sm:$0xff]
  %v5626 = vld [vmem:[%s12 + $0x28] sm:$0xff]
  %v5627 = vld [vmem:[%s12 + $0x30] sm:$0xff]
  %v5628 = vld [vmem:[%s12 + $0x38] sm:$0xff]
  %v5629 = vld [vmem:[%s12 + $0x40] sm:$0xff]
  %v5630 = vld [vmem:[%s12 + $0x48] sm:$0xff]
  %v5631 = vld [vmem:[%s12 + $0x50] sm:$0xff]
  %v5632 = vld [vmem:[%s12 + $0x58] sm:$0xff]
  %v5633 = vld [vmem:[%s12 + $0x60] sm:$0xff]
  %v5634 = vld [vmem:[%s12 + $0x68] sm:$0xff]
  %v5635 = vld [vmem:[%s12 + $0x70] sm:$0xff]
  %v5636 = vld [vmem:[%s12 + $0x78] sm:$0xff]
  %v5653 = vunpack.c.l.b16 %v5621
  %v5654 = vunpack.c.h.b16 %v5621
  %v5655 = vunpack.c.l.b16 %v5622
  %v5656 = vunpack.c.h.b16 %v5622
  %v5657 = vunpack.c.l.b16 %v5623
  %v5658 = vunpack.c.h.b16 %v5623
  %v5659 = vunpack.c.l.b16 %v5624
  %v5660 = vunpack.c.h.b16 %v5624
  %v5661 = vunpack.c.l.b16 %v5625
  %v5662 = vunpack.c.h.b16 %v5625
  %v5663 = vunpack.c.l.b16 %v5626
  %v5664 = vunpack.c.h.b16 %v5626
  %v5665 = vunpack.c.l.b16 %v5627
  %v5666 = vunpack.c.h.b16 %v5627
  %v5667 = vunpack.c.l.b16 %v5628
  %v5668 = vunpack.c.h.b16 %v5628
  %v5669 = vunpack.c.l.b16 %v5629
  %v5670 = vunpack.c.h.b16 %v5629
  %v5671 = vunpack.c.l.b16 %v5630
  %v5672 = vunpack.c.h.b16 %v5630
  %v5673 = vunpack.c.l.b16 %v5631
  %v5674 = vunpack.c.h.b16 %v5631
  %v5675 = vunpack.c.l.b16 %v5632
  %v5676 = vunpack.c.h.b16 %v5632
  %v5677 = vunpack.c.l.b16 %v5633
  %v5678 = vunpack.c.h.b16 %v5633
  %v5679 = vunpack.c.l.b16 %v5634
  %v5680 = vunpack.c.h.b16 %v5634
  %v5681 = vunpack.c.l.b16 %v5635
  %v5682 = vunpack.c.h.b16 %v5635
  %v5683 = vunpack.c.l.b16 %v5636
  %v5684 = vunpack.c.h.b16 %v5636
  %v5685 = vpack.c.b16 %v5655, %v5653
  %v5686 = vpack.c.b16 %v5656, %v5654
  %v5687 = vpack.c.b16 %v5659, %v5657
  %v5688 = vpack.c.b16 %v5660, %v5658
  %v5689 = vpack.c.b16 %v5663, %v5661
  %v5690 = vpack.c.b16 %v5664, %v5662
  %v5691 = vpack.c.b16 %v5667, %v5665
  %v5692 = vpack.c.b16 %v5668, %v5666
  %v5693 = vpack.c.b16 %v5671, %v5669
  %v5694 = vpack.c.b16 %v5672, %v5670
  %v5695 = vpack.c.b16 %v5675, %v5673
  %v5696 = vpack.c.b16 %v5676, %v5674
  %v5697 = vpack.c.b16 %v5679, %v5677
  %v5698 = vpack.c.b16 %v5680, %v5678
  %v5699 = vpack.c.b16 %v5683, %v5681
  %v5700 = vpack.c.b16 %v5684, %v5682
  %5717 = vmatpush.bf16.msra.mxu0 %v5699
  %5718 = vmatpush.bf16.msra.mxu0 %v5697
  %5719 = vmatpush.bf16.msra.mxu0 %v5695
  %5720 = vmatpush.bf16.msra.mxu0 %v5693
  %5721 = vmatpush.bf16.msra.mxu0 %v5691
  %5722 = vmatpush.bf16.msra.mxu0 %v5689
  %5723 = vmatpush.bf16.msra.mxu0 %v5687
  %5724 = vmatpush.bf16.msra.mxu0 %v5685
  %5725 = vmatmul.bf16.gmra.mxu0 %v5620
  %v5726 = vpop.f32.mrf.mxu0
  %v5727 = vadd.f32 %v2000, %v5726
  %v5728 = vpop.f32.mrf.mxu0
  %5729 = vdwg.mxu0
  %5730 = vmatpush.bf16.msra.mxu0 %v5700
  %5731 = vmatpush.bf16.msra.mxu0 %v5698
  %5732 = vmatpush.bf16.msra.mxu0 %v5696
  %5733 = vmatpush.bf16.msra.mxu0 %v5694
  %5734 = vmatpush.bf16.msra.mxu0 %v5692
  %5735 = vmatpush.bf16.msra.mxu0 %v5690
  %5736 = vmatpush.bf16.msra.mxu0 %v5688
  %5737 = vmatpush.bf16.msra.mxu0 %v5686
  %5738 = vmatmul.bf16.gmra.mxu0 %v5620
  %v5739 = vpop.f32.mrf.mxu0
  %v5740 = vadd.f32 %v2001, %v5739
  %v5741 = vpop.f32.mrf.mxu0
  %5742 = vdwg.mxu0
  %s5743 = scalar_lea.vmem %s14, 32
  %5744 = vst [vmem:[%s5743] sm:$0xff] %v5727
  %5745 = vst [vmem:[%s5743 + $0x8] sm:$0xff] %v5740
  %v5762 = vperm.slane %v4845, %v56
  %v5763 = vperm.slane %v4846, %v2129
  %v5764 = vsel %vm2131, %v5763, %v5762
  %v5765 = vperm.slane %v4861, %v56
  %v5766 = vperm.slane %v4862, %v2129
  %v5767 = vsel %vm2131, %v5766, %v5765
  %v5768 = vperm.slane %v4877, %v56
  %v5769 = vperm.slane %v4878, %v2129
  %v5770 = vsel %vm2131, %v5769, %v5768
  %v5771 = vperm.slane %v4893, %v56
  %v5772 = vperm.slane %v4894, %v2129
  %v5773 = vsel %vm2131, %v5772, %v5771
  %v5774 = vperm.slane %v4909, %v56
  %v5775 = vperm.slane %v4910, %v2129
  %v5776 = vsel %vm2131, %v5775, %v5774
  %v5777 = vperm.slane %v4925, %v56
  %v5778 = vperm.slane %v4926, %v2129
  %v5779 = vsel %vm2131, %v5778, %v5777
  %v5780 = vperm.slane %v4941, %v56
  %v5781 = vperm.slane %v4942, %v2129
  %v5782 = vsel %vm2131, %v5781, %v5780
  %v5783 = vperm.slane %v4957, %v56
  %v5784 = vperm.slane %v4958, %v2129
  %v5785 = vsel %vm2131, %v5784, %v5783
  %v5786 = vsel %vm191, %v5767, %v5764
  %v5787 = vsel %vm193, %v5770, %v5786
  %v5788 = vsel %vm195, %v5773, %v5787
  %v5789 = vsel %vm197, %v5776, %v5788
  %v5790 = vsel %vm199, %v5779, %v5789
  %v5791 = vsel %vm201, %v5782, %v5790
  %v5792 = vsel %vm203, %v5785, %v5791
  %s5794 = scalar_lea.vmem %s15, 16
  %5795 = vst.msk [vmem:[%s5794] sm:$0xff] %vm2162, %v5792
  %v5796 = vmax.f32 %v5727, %v5740
  %5797 = vmax.xlane.f32.xlu0 %v5796
  %v5798 = vpop.xlane.xlu0 %5797
  %vm5799 = vcmp.eq.f32.partialorder %v5727, %v5798
  %vm5800 = vcmp.eq.f32.partialorder %v5740, %v5798
  %v5801 = vsel %vm5799, %v56, 256
  %v5802 = vsel %vm5800, %v57, 256
  %vm5803 = vcmp.lt.s32.totalorder %v5801, %v5802
  %v5804 = vsel %vm5803, %v5801, %v5802
  %v5805 = vand.u32 %v5804, 65535
  %v5806 = vshra.s32 %v5804, 16
  %v5807 = vcvt.s32.f32 %v5805
  %v5808 = vcvt.s32.f32 %v5806
  %5809 = vmin.xlane.f32.xlu0 %v5808
  %v5810 = vpop.xlane.xlu0 %5809
  %vm5811 = vcmp.eq.f32.partialorder %v5808, %v5810
  %v5812 = vsel %vm5811, %v5807, inf
  %5813 = vmin.xlane.f32.xlu0 %v5812
  %v5814 = vpop.xlane.xlu0 %5813
  %v5815 = vcvt.f32.s32 %v5814
  %v5816 = vcvt.f32.s32 %v5810
  %v5817 = vshll.u32 %v5816, 16
  %v5818 = vadd.s32 %v5817, %v5815
  %vm5819 = vcmp.eq.s32.totalorder %v56, %v5818
  %vm5820 = vcmp.eq.s32.totalorder %v57, %v5818
  %v5821 = vsel %vm5819, 1, 0
  %v5822 = vsel %vm5820, 1, 0
  %v5823 = vcvt.s32.f32 %v5821
  %v5824 = vcvt.s32.f32 %v5822
  %v5825 = vpack.c.bf16 %v5823, %v5823
  %v5826 = vpack.c.bf16 %v5824, %v5824
  %v5827 = vld [vmem:[%s9] sm:$0xf]
  %v5828 = vld [vmem:[%s9 + $0x4] sm:$0xf]
  %v5829 = vld [vmem:[%s9 + $0x8] sm:$0xf]
  %v5830 = vld [vmem:[%s9 + $0xc] sm:$0xf]
  %v5831 = vld [vmem:[%s9 + $0x10] sm:$0xf]
  %v5832 = vld [vmem:[%s9 + $0x14] sm:$0xf]
  %v5833 = vld [vmem:[%s9 + $0x18] sm:$0xf]
  %v5834 = vld [vmem:[%s9 + $0x1c] sm:$0xf]
  %v5835 = vld [vmem:[%s9 + $0x20] sm:$0xf]
  %v5836 = vld [vmem:[%s9 + $0x24] sm:$0xf]
  %v5837 = vld [vmem:[%s9 + $0x28] sm:$0xf]
  %v5838 = vld [vmem:[%s9 + $0x2c] sm:$0xf]
  %v5839 = vld [vmem:[%s9 + $0x30] sm:$0xf]
  %v5840 = vld [vmem:[%s9 + $0x34] sm:$0xf]
  %v5841 = vld [vmem:[%s9 + $0x38] sm:$0xf]
  %v5842 = vld [vmem:[%s9 + $0x3c] sm:$0xf]
  %v5843 = vld [vmem:[%s9 + $0x40] sm:$0xf]
  %v5844 = vld [vmem:[%s9 + $0x44] sm:$0xf]
  %v5845 = vld [vmem:[%s9 + $0x48] sm:$0xf]
  %v5846 = vld [vmem:[%s9 + $0x4c] sm:$0xf]
  %v5847 = vld [vmem:[%s9 + $0x50] sm:$0xf]
  %v5848 = vld [vmem:[%s9 + $0x54] sm:$0xf]
  %v5849 = vld [vmem:[%s9 + $0x58] sm:$0xf]
  %v5850 = vld [vmem:[%s9 + $0x5c] sm:$0xf]
  %v5851 = vld [vmem:[%s9 + $0x60] sm:$0xf]
  %v5852 = vld [vmem:[%s9 + $0x64] sm:$0xf]
  %v5853 = vld [vmem:[%s9 + $0x68] sm:$0xf]
  %v5854 = vld [vmem:[%s9 + $0x6c] sm:$0xf]
  %v5855 = vld [vmem:[%s9 + $0x70] sm:$0xf]
  %v5856 = vld [vmem:[%s9 + $0x74] sm:$0xf]
  %v5857 = vld [vmem:[%s9 + $0x78] sm:$0xf]
  %v5858 = vld [vmem:[%s9 + $0x7c] sm:$0xf]
  %v5891 = vunpack.c.l.b16 %v5827
  %v5892 = vunpack.c.l.b16 %v5828
  %v5893 = vunpack.c.l.b16 %v5829
  %v5894 = vunpack.c.l.b16 %v5830
  %v5895 = vunpack.c.l.b16 %v5831
  %v5896 = vunpack.c.l.b16 %v5832
  %v5897 = vunpack.c.l.b16 %v5833
  %v5898 = vunpack.c.l.b16 %v5834
  %v5899 = vunpack.c.l.b16 %v5835
  %v5900 = vunpack.c.l.b16 %v5836
  %v5901 = vunpack.c.l.b16 %v5837
  %v5902 = vunpack.c.l.b16 %v5838
  %v5903 = vunpack.c.l.b16 %v5839
  %v5904 = vunpack.c.l.b16 %v5840
  %v5905 = vunpack.c.l.b16 %v5841
  %v5906 = vunpack.c.l.b16 %v5842
  %v5907 = vunpack.c.l.b16 %v5843
  %v5908 = vunpack.c.l.b16 %v5844
  %v5909 = vunpack.c.l.b16 %v5845
  %v5910 = vunpack.c.l.b16 %v5846
  %v5911 = vunpack.c.l.b16 %v5847
  %v5912 = vunpack.c.l.b16 %v5848
  %v5913 = vunpack.c.l.b16 %v5849
  %v5914 = vunpack.c.l.b16 %v5850
  %v5915 = vunpack.c.l.b16 %v5851
  %v5916 = vunpack.c.l.b16 %v5852
  %v5917 = vunpack.c.l.b16 %v5853
  %v5918 = vunpack.c.l.b16 %v5854
  %v5919 = vunpack.c.l.b16 %v5855
  %v5920 = vunpack.c.l.b16 %v5856
  %v5921 = vunpack.c.l.b16 %v5857
  %v5922 = vunpack.c.l.b16 %v5858
  %v5923 = vpack.c.b16 %v5892, %v5891
  %v5924 = vpack.c.b16 %v5894, %v5893
  %v5925 = vpack.c.b16 %v5896, %v5895
  %v5926 = vpack.c.b16 %v5898, %v5897
  %v5927 = vpack.c.b16 %v5900, %v5899
  %v5928 = vpack.c.b16 %v5902, %v5901
  %v5929 = vpack.c.b16 %v5904, %v5903
  %v5930 = vpack.c.b16 %v5906, %v5905
  %v5931 = vpack.c.b16 %v5908, %v5907
  %v5932 = vpack.c.b16 %v5910, %v5909
  %v5933 = vpack.c.b16 %v5912, %v5911
  %v5934 = vpack.c.b16 %v5914, %v5913
  %v5935 = vpack.c.b16 %v5916, %v5915
  %v5936 = vpack.c.b16 %v5918, %v5917
  %v5937 = vpack.c.b16 %v5920, %v5919
  %v5938 = vpack.c.b16 %v5922, %v5921
  %5955 = vmatpush.bf16.msra.mxu0 %v5930
  %5956 = vmatpush.bf16.msra.mxu0 %v5929
  %5957 = vmatpush.bf16.msra.mxu0 %v5928
  %5958 = vmatpush.bf16.msra.mxu0 %v5927
  %5959 = vmatpush.bf16.msra.mxu0 %v5926
  %5960 = vmatpush.bf16.msra.mxu0 %v5925
  %5961 = vmatpush.bf16.msra.mxu0 %v5924
  %5962 = vmatpush.bf16.msra.mxu0 %v5923
  %5963 = vmatmul.bf16.gmra.mxu0 %v5825
  %v5964 = vpop.f32.mrf.mxu0
  %v5965 = vadd.f32 0.0, %v5964
  %v5966 = vpop.f32.mrf.mxu0
  %5967 = vdwg.mxu0
  %5968 = vmatpush.bf16.msra.mxu0 %v5938
  %5969 = vmatpush.bf16.msra.mxu0 %v5937
  %5970 = vmatpush.bf16.msra.mxu0 %v5936
  %5971 = vmatpush.bf16.msra.mxu0 %v5935
  %5972 = vmatpush.bf16.msra.mxu0 %v5934
  %5973 = vmatpush.bf16.msra.mxu0 %v5933
  %5974 = vmatpush.bf16.msra.mxu0 %v5932
  %5975 = vmatpush.bf16.msra.mxu0 %v5931
  %5976 = vmatmul.bf16.gmra.mxu0 %v5826
  %v5977 = vpop.f32.mrf.mxu0
  %v5978 = vadd.f32 %v5965, %v5977
  %v5979 = vpop.f32.mrf.mxu0
  %5980 = vdwg.mxu0
  %v5981 = vpack.c.bf16 %v5978, %v5978
  %v5982 = vld [vmem:[%s5] sm:$0xff]
  %v5983 = vld [vmem:[%s5 + $0x8] sm:$0xff]
  %v5984 = vld [vmem:[%s5 + $0x10] sm:$0xff]
  %v5985 = vld [vmem:[%s5 + $0x18] sm:$0xff]
  %v5986 = vld [vmem:[%s5 + $0x20] sm:$0xff]
  %v5987 = vld [vmem:[%s5 + $0x28] sm:$0xff]
  %v5988 = vld [vmem:[%s5 + $0x30] sm:$0xff]
  %v5989 = vld [vmem:[%s5 + $0x38] sm:$0xff]
  %v5990 = vld [vmem:[%s5 + $0x40] sm:$0xff]
  %v5991 = vld [vmem:[%s5 + $0x48] sm:$0xff]
  %v5992 = vld [vmem:[%s5 + $0x50] sm:$0xff]
  %v5993 = vld [vmem:[%s5 + $0x58] sm:$0xff]
  %v5994 = vld [vmem:[%s5 + $0x60] sm:$0xff]
  %v5995 = vld [vmem:[%s5 + $0x68] sm:$0xff]
  %v5996 = vld [vmem:[%s5 + $0x70] sm:$0xff]
  %v5997 = vld [vmem:[%s5 + $0x78] sm:$0xff]
  %v5998 = vld [vmem:[%s5 + $0x80] sm:$0xff]
  %v5999 = vld [vmem:[%s5 + $0x88] sm:$0xff]
  %v6000 = vld [vmem:[%s5 + $0x90] sm:$0xff]
  %v6001 = vld [vmem:[%s5 + $0x98] sm:$0xff]
  %v6002 = vld [vmem:[%s5 + $0xa0] sm:$0xff]
  %v6003 = vld [vmem:[%s5 + $0xa8] sm:$0xff]
  %v6004 = vld [vmem:[%s5 + $0xb0] sm:$0xff]
  %v6005 = vld [vmem:[%s5 + $0xb8] sm:$0xff]
  %v6006 = vld [vmem:[%s5 + $0xc0] sm:$0xff]
  %v6007 = vld [vmem:[%s5 + $0xc8] sm:$0xff]
  %v6008 = vld [vmem:[%s5 + $0xd0] sm:$0xff]
  %v6009 = vld [vmem:[%s5 + $0xd8] sm:$0xff]
  %v6010 = vld [vmem:[%s5 + $0xe0] sm:$0xff]
  %v6011 = vld [vmem:[%s5 + $0xe8] sm:$0xff]
  %v6012 = vld [vmem:[%s5 + $0xf0] sm:$0xff]
  %v6013 = vld [vmem:[%s5 + $0xf8] sm:$0xff]
  %v6014 = vld [vmem:[%s5 + $0x100] sm:$0xff]
  %v6015 = vld [vmem:[%s5 + $0x108] sm:$0xff]
  %v6016 = vld [vmem:[%s5 + $0x110] sm:$0xff]
  %v6017 = vld [vmem:[%s5 + $0x118] sm:$0xff]
  %v6018 = vld [vmem:[%s5 + $0x120] sm:$0xff]
  %v6019 = vld [vmem:[%s5 + $0x128] sm:$0xff]
  %v6020 = vld [vmem:[%s5 + $0x130] sm:$0xff]
  %v6021 = vld [vmem:[%s5 + $0x138] sm:$0xff]
  %v6022 = vld [vmem:[%s5 + $0x140] sm:$0xff]
  %v6023 = vld [vmem:[%s5 + $0x148] sm:$0xff]
  %v6024 = vld [vmem:[%s5 + $0x150] sm:$0xff]
  %v6025 = vld [vmem:[%s5 + $0x158] sm:$0xff]
  %v6026 = vld [vmem:[%s5 + $0x160] sm:$0xff]
  %v6027 = vld [vmem:[%s5 + $0x168] sm:$0xff]
  %v6028 = vld [vmem:[%s5 + $0x170] sm:$0xff]
  %v6029 = vld [vmem:[%s5 + $0x178] sm:$0xff]
  %v6078 = vunpack.c.l.b16 %v5982
  %v6079 = vunpack.c.h.b16 %v5982
  %v6080 = vunpack.c.l.b16 %v5983
  %v6081 = vunpack.c.h.b16 %v5983
  %v6082 = vunpack.c.l.b16 %v5984
  %v6083 = vunpack.c.h.b16 %v5984
  %v6084 = vunpack.c.l.b16 %v5985
  %v6085 = vunpack.c.h.b16 %v5985
  %v6086 = vunpack.c.l.b16 %v5986
  %v6087 = vunpack.c.h.b16 %v5986
  %v6088 = vunpack.c.l.b16 %v5987
  %v6089 = vunpack.c.h.b16 %v5987
  %v6090 = vunpack.c.l.b16 %v5988
  %v6091 = vunpack.c.h.b16 %v5988
  %v6092 = vunpack.c.l.b16 %v5989
  %v6093 = vunpack.c.h.b16 %v5989
  %v6094 = vunpack.c.l.b16 %v5990
  %v6095 = vunpack.c.h.b16 %v5990
  %v6096 = vunpack.c.l.b16 %v5991
  %v6097 = vunpack.c.h.b16 %v5991
  %v6098 = vunpack.c.l.b16 %v5992
  %v6099 = vunpack.c.h.b16 %v5992
  %v6100 = vunpack.c.l.b16 %v5993
  %v6101 = vunpack.c.h.b16 %v5993
  %v6102 = vunpack.c.l.b16 %v5994
  %v6103 = vunpack.c.h.b16 %v5994
  %v6104 = vunpack.c.l.b16 %v5995
  %v6105 = vunpack.c.h.b16 %v5995
  %v6106 = vunpack.c.l.b16 %v5996
  %v6107 = vunpack.c.h.b16 %v5996
  %v6108 = vunpack.c.l.b16 %v5997
  %v6109 = vunpack.c.h.b16 %v5997
  %v6110 = vunpack.c.l.b16 %v5998
  %v6111 = vunpack.c.h.b16 %v5998
  %v6112 = vunpack.c.l.b16 %v5999
  %v6113 = vunpack.c.h.b16 %v5999
  %v6114 = vunpack.c.l.b16 %v6000
  %v6115 = vunpack.c.h.b16 %v6000
  %v6116 = vunpack.c.l.b16 %v6001
  %v6117 = vunpack.c.h.b16 %v6001
  %v6118 = vunpack.c.l.b16 %v6002
  %v6119 = vunpack.c.h.b16 %v6002
  %v6120 = vunpack.c.l.b16 %v6003
  %v6121 = vunpack.c.h.b16 %v6003
  %v6122 = vunpack.c.l.b16 %v6004
  %v6123 = vunpack.c.h.b16 %v6004
  %v6124 = vunpack.c.l.b16 %v6005
  %v6125 = vunpack.c.h.b16 %v6005
  %v6126 = vunpack.c.l.b16 %v6006
  %v6127 = vunpack.c.h.b16 %v6006
  %v6128 = vunpack.c.l.b16 %v6007
  %v6129 = vunpack.c.h.b16 %v6007
  %v6130 = vunpack.c.l.b16 %v6008
  %v6131 = vunpack.c.h.b16 %v6008
  %v6132 = vunpack.c.l.b16 %v6009
  %v6133 = vunpack.c.h.b16 %v6009
  %v6134 = vunpack.c.l.b16 %v6010
  %v6135 = vunpack.c.h.b16 %v6010
  %v6136 = vunpack.c.l.b16 %v6011
  %v6137 = vunpack.c.h.b16 %v6011
  %v6138 = vunpack.c.l.b16 %v6012
  %v6139 = vunpack.c.h.b16 %v6012
  %v6140 = vunpack.c.l.b16 %v6013
  %v6141 = vunpack.c.h.b16 %v6013
  %v6142 = vunpack.c.l.b16 %v6014
  %v6143 = vunpack.c.h.b16 %v6014
  %v6144 = vunpack.c.l.b16 %v6015
  %v6145 = vunpack.c.h.b16 %v6015
  %v6146 = vunpack.c.l.b16 %v6016
  %v6147 = vunpack.c.h.b16 %v6016
  %v6148 = vunpack.c.l.b16 %v6017
  %v6149 = vunpack.c.h.b16 %v6017
  %v6150 = vunpack.c.l.b16 %v6018
  %v6151 = vunpack.c.h.b16 %v6018
  %v6152 = vunpack.c.l.b16 %v6019
  %v6153 = vunpack.c.h.b16 %v6019
  %v6154 = vunpack.c.l.b16 %v6020
  %v6155 = vunpack.c.h.b16 %v6020
  %v6156 = vunpack.c.l.b16 %v6021
  %v6157 = vunpack.c.h.b16 %v6021
  %v6158 = vunpack.c.l.b16 %v6022
  %v6159 = vunpack.c.h.b16 %v6022
  %v6160 = vunpack.c.l.b16 %v6023
  %v6161 = vunpack.c.h.b16 %v6023
  %v6162 = vunpack.c.l.b16 %v6024
  %v6163 = vunpack.c.h.b16 %v6024
  %v6164 = vunpack.c.l.b16 %v6025
  %v6165 = vunpack.c.h.b16 %v6025
  %v6166 = vunpack.c.l.b16 %v6026
  %v6167 = vunpack.c.h.b16 %v6026
  %v6168 = vunpack.c.l.b16 %v6027
  %v6169 = vunpack.c.h.b16 %v6027
  %v6170 = vunpack.c.l.b16 %v6028
  %v6171 = vunpack.c.h.b16 %v6028
  %v6172 = vunpack.c.l.b16 %v6029
  %v6173 = vunpack.c.h.b16 %v6029
  %v6174 = vpack.c.b16 %v6084, %v6078
  %v6175 = vpack.c.b16 %v6085, %v6079
  %v6176 = vpack.c.b16 %v6086, %v6080
  %v6177 = vpack.c.b16 %v6087, %v6081
  %v6178 = vpack.c.b16 %v6088, %v6082
  %v6179 = vpack.c.b16 %v6089, %v6083
  %v6180 = vpack.c.b16 %v6096, %v6090
  %v6181 = vpack.c.b16 %v6097, %v6091
  %v6182 = vpack.c.b16 %v6098, %v6092
  %v6183 = vpack.c.b16 %v6099, %v6093
  %v6184 = vpack.c.b16 %v6100, %v6094
  %v6185 = vpack.c.b16 %v6101, %v6095
  %v6186 = vpack.c.b16 %v6108, %v6102
  %v6187 = vpack.c.b16 %v6109, %v6103
  %v6188 = vpack.c.b16 %v6110, %v6104
  %v6189 = vpack.c.b16 %v6111, %v6105
  %v6190 = vpack.c.b16 %v6112, %v6106
  %v6191 = vpack.c.b16 %v6113, %v6107
  %v6192 = vpack.c.b16 %v6120, %v6114
  %v6193 = vpack.c.b16 %v6121, %v6115
  %v6194 = vpack.c.b16 %v6122, %v6116
  %v6195 = vpack.c.b16 %v6123, %v6117
  %v6196 = vpack.c.b16 %v6124, %v6118
  %v6197 = vpack.c.b16 %v6125, %v6119
  %v6198 = vpack.c.b16 %v6132, %v6126
  %v6199 = vpack.c.b16 %v6133, %v6127
  %v6200 = vpack.c.b16 %v6134, %v6128
  %v6201 = vpack.c.b16 %v6135, %v6129
  %v6202 = vpack.c.b16 %v6136, %v6130
  %v6203 = vpack.c.b16 %v6137, %v6131
  %v6204 = vpack.c.b16 %v6144, %v6138
  %v6205 = vpack.c.b16 %v6145, %v6139
  %v6206 = vpack.c.b16 %v6146, %v6140
  %v6207 = vpack.c.b16 %v6147, %v6141
  %v6208 = vpack.c.b16 %v6148, %v6142
  %v6209 = vpack.c.b16 %v6149, %v6143
  %v6210 = vpack.c.b16 %v6156, %v6150
  %v6211 = vpack.c.b16 %v6157, %v6151
  %v6212 = vpack.c.b16 %v6158, %v6152
  %v6213 = vpack.c.b16 %v6159, %v6153
  %v6214 = vpack.c.b16 %v6160, %v6154
  %v6215 = vpack.c.b16 %v6161, %v6155
  %v6216 = vpack.c.b16 %v6168, %v6162
  %v6217 = vpack.c.b16 %v6169, %v6163
  %v6218 = vpack.c.b16 %v6170, %v6164
  %v6219 = vpack.c.b16 %v6171, %v6165
  %v6220 = vpack.c.b16 %v6172, %v6166
  %v6221 = vpack.c.b16 %v6173, %v6167
  %6270 = vmatpush.bf16.msra.mxu0 %v6216
  %6271 = vmatpush.bf16.msra.mxu0 %v6210
  %6272 = vmatpush.bf16.msra.mxu0 %v6204
  %6273 = vmatpush.bf16.msra.mxu0 %v6198
  %6274 = vmatpush.bf16.msra.mxu0 %v6192
  %6275 = vmatpush.bf16.msra.mxu0 %v6186
  %6276 = vmatpush.bf16.msra.mxu0 %v6180
  %6277 = vmatpush.bf16.msra.mxu0 %v6174
  %6278 = vmatmul.bf16.gmra.mxu0 %v5620
  %v6279 = vpop.f32.mrf.mxu0
  %v6280 = vadd.f32 %v567, %v6279
  %v6281 = vpop.f32.mrf.mxu0
  %6282 = vdwg.mxu0
  %6283 = vmatpush.bf16.msra.mxu0 %v6217
  %6284 = vmatpush.bf16.msra.mxu0 %v6211
  %6285 = vmatpush.bf16.msra.mxu0 %v6205
  %6286 = vmatpush.bf16.msra.mxu0 %v6199
  %6287 = vmatpush.bf16.msra.mxu0 %v6193
  %6288 = vmatpush.bf16.msra.mxu0 %v6187
  %6289 = vmatpush.bf16.msra.mxu0 %v6181
  %6290 = vmatpush.bf16.msra.mxu0 %v6175
  %6291 = vmatmul.bf16.gmra.mxu0 %v5620
  %v6292 = vpop.f32.mrf.mxu0
  %v6293 = vadd.f32 %v568, %v6292
  %v6294 = vpop.f32.mrf.mxu0
  %6295 = vdwg.mxu0
  %6296 = vmatpush.bf16.msra.mxu0 %v6218
  %6297 = vmatpush.bf16.msra.mxu0 %v6212
  %6298 = vmatpush.bf16.msra.mxu0 %v6206
  %6299 = vmatpush.bf16.msra.mxu0 %v6200
  %6300 = vmatpush.bf16.msra.mxu0 %v6194
  %6301 = vmatpush.bf16.msra.mxu0 %v6188
  %6302 = vmatpush.bf16.msra.mxu0 %v6182
  %6303 = vmatpush.bf16.msra.mxu0 %v6176
  %6304 = vmatmul.bf16.gmra.mxu0 %v5620
  %v6305 = vpop.f32.mrf.mxu0
  %v6306 = vadd.f32 %v569, %v6305
  %v6307 = vpop.f32.mrf.mxu0
  %6308 = vdwg.mxu0
  %6309 = vmatpush.bf16.msra.mxu0 %v6219
  %6310 = vmatpush.bf16.msra.mxu0 %v6213
  %6311 = vmatpush.bf16.msra.mxu0 %v6207
  %6312 = vmatpush.bf16.msra.mxu0 %v6201
  %6313 = vmatpush.bf16.msra.mxu0 %v6195
  %6314 = vmatpush.bf16.msra.mxu0 %v6189
  %6315 = vmatpush.bf16.msra.mxu0 %v6183
  %6316 = vmatpush.bf16.msra.mxu0 %v6177
  %6317 = vmatmul.bf16.gmra.mxu0 %v5620
  %v6318 = vpop.f32.mrf.mxu0
  %v6319 = vadd.f32 %v570, %v6318
  %v6320 = vpop.f32.mrf.mxu0
  %6321 = vdwg.mxu0
  %6322 = vmatpush.bf16.msra.mxu0 %v6220
  %6323 = vmatpush.bf16.msra.mxu0 %v6214
  %6324 = vmatpush.bf16.msra.mxu0 %v6208
  %6325 = vmatpush.bf16.msra.mxu0 %v6202
  %6326 = vmatpush.bf16.msra.mxu0 %v6196
  %6327 = vmatpush.bf16.msra.mxu0 %v6190
  %6328 = vmatpush.bf16.msra.mxu0 %v6184
  %6329 = vmatpush.bf16.msra.mxu0 %v6178
  %6330 = vmatmul.bf16.gmra.mxu0 %v5620
  %v6331 = vpop.f32.mrf.mxu0
  %v6332 = vadd.f32 %v571, %v6331
  %v6333 = vpop.f32.mrf.mxu0
  %6334 = vdwg.mxu0
  %6335 = vmatpush.bf16.msra.mxu0 %v6221
  %6336 = vmatpush.bf16.msra.mxu0 %v6215
  %6337 = vmatpush.bf16.msra.mxu0 %v6209
  %6338 = vmatpush.bf16.msra.mxu0 %v6203
  %6339 = vmatpush.bf16.msra.mxu0 %v6197
  %6340 = vmatpush.bf16.msra.mxu0 %v6191
  %6341 = vmatpush.bf16.msra.mxu0 %v6185
  %6342 = vmatpush.bf16.msra.mxu0 %v6179
  %6343 = vmatmul.bf16.gmra.mxu0 %v5620
  %v6344 = vpop.f32.mrf.mxu0
  %v6345 = vadd.f32 %v572, %v6344
  %v6346 = vpop.f32.mrf.mxu0
  %6347 = vdwg.mxu0
  %v6348 = vxor.u32 %v6293, 2147483648
  %v6349 = vmul.f32 %v6348, 1.442695
  %v6350 = vpow.pop %v6349
  %v6351 = vadd.f32 %v6350, 1.0
  %v6352 = vrcp.pop %v6351
  %v6353 = vmul.f32 %v6351, %v6352
  %v6354 = vsub.f32 1.0, %v6353
  %v6355 = vmul.f32 %v6352, %v6354
  %v6356 = vadd.f32 %v6352, %v6355
  %vm6357 = vweird.f32 %v6351
  %vm6358 = vweird.f32 %v6352
  %vm6359 = vmor %vm6357, %vm6358
  %v6360 = vsel %vm6359, %v6352, %v6356
  %v6361 = vand.u32 2147483647, %v6351
  %vm6362 = vcmp.eq.f32.partialorder %v6361, 8.507059e+37
  %v6363 = vand.u32 %v6351, 2147483648
  %v6364 = vor.u32 1.1754944e-38, %v6363
  %v6365 = vsel %vm6362, %v6364, %v6360
  %v6366 = vmul.f32 1.0, %v6365
  %v6368 = vrot.slane %v6280, 1
  %v6369 = vrot.slane %v6280, 2
  %v6370 = vrot.slane %v6280, 3
  %v6371 = vrot.slane %v6280, 4
  %v6372 = vrot.slane %v6280, 5
  %v6373 = vrot.slane %v6280, 6
  %v6374 = vrot.slane %v6280, 7
  %v6375 = vperm.slane %v6280, 0
  %v6376 = vperm.slane %v6368, 0
  %v6377 = vperm.slane %v6369, 0
  %v6378 = vperm.slane %v6370, 0
  %v6379 = vperm.slane %v6371, 0
  %v6380 = vperm.slane %v6372, 0
  %v6381 = vperm.slane %v6373, 0
  %v6382 = vperm.slane %v6374, 0
  %v6391 = vadd.f32 %v496, %v6375
  %v6392 = vadd.f32 %v497, %v6375
  %v6393 = vadd.f32 %v498, %v6376
  %v6394 = vadd.f32 %v499, %v6376
  %v6395 = vadd.f32 %v500, %v6377
  %v6396 = vadd.f32 %v501, %v6377
  %v6397 = vadd.f32 %v502, %v6378
  %v6398 = vadd.f32 %v503, %v6378
  %v6399 = vadd.f32 %v504, %v6379
  %v6400 = vadd.f32 %v505, %v6379
  %v6401 = vadd.f32 %v506, %v6380
  %v6402 = vadd.f32 %v507, %v6380
  %v6403 = vadd.f32 %v508, %v6381
  %v6404 = vadd.f32 %v509, %v6381
  %v6405 = vadd.f32 %v510, %v6382
  %v6406 = vadd.f32 %v511, %v6382
  %v6407 = vtanh.pop %v6391
  %v6408 = vtanh.pop %v6392
  %v6409 = vtanh.pop %v6393
  %v6410 = vtanh.pop %v6394
  %v6411 = vtanh.pop %v6395
  %v6412 = vtanh.pop %v6396
  %v6413 = vtanh.pop %v6397
  %v6414 = vtanh.pop %v6398
  %v6415 = vtanh.pop %v6399
  %v6416 = vtanh.pop %v6400
  %v6417 = vtanh.pop %v6401
  %v6418 = vtanh.pop %v6402
  %v6419 = vtanh.pop %v6403
  %v6420 = vtanh.pop %v6404
  %v6421 = vtanh.pop %v6405
  %v6422 = vtanh.pop %v6406
  %v6423 = vmul.f32 %v6407, %v973
  %v6424 = vmul.f32 %v6408, %v973
  %v6425 = vmul.f32 %v6409, %v973
  %v6426 = vmul.f32 %v6410, %v973
  %v6427 = vmul.f32 %v6411, %v973
  %v6428 = vmul.f32 %v6412, %v973
  %v6429 = vmul.f32 %v6413, %v973
  %v6430 = vmul.f32 %v6414, %v973
  %v6431 = vmul.f32 %v6415, %v973
  %v6432 = vmul.f32 %v6416, %v973
  %v6433 = vmul.f32 %v6417, %v973
  %v6434 = vmul.f32 %v6418, %v973
  %v6435 = vmul.f32 %v6419, %v973
  %v6436 = vmul.f32 %v6420, %v973
  %v6437 = vmul.f32 %v6421, %v973
  %v6438 = vmul.f32 %v6422, %v973
  %6439 = vadd.xlane.f32.xlu0 %v6423
  %v6440 = vpop.xlane.xlu0 %6439
  %6441 = vadd.xlane.f32.xlu0 %v6424
  %v6442 = vpop.xlane.xlu0 %6441
  %6443 = vadd.xlane.f32.xlu0 %v6425
  %v6444 = vpop.xlane.xlu0 %6443
  %6445 = vadd.xlane.f32.xlu0 %v6426
  %v6446 = vpop.xlane.xlu0 %6445
  %6447 = vadd.xlane.f32.xlu0 %v6427
  %v6448 = vpop.xlane.xlu0 %6447
  %6449 = vadd.xlane.f32.xlu0 %v6428
  %v6450 = vpop.xlane.xlu0 %6449
  %6451 = vadd.xlane.f32.xlu0 %v6429
  %v6452 = vpop.xlane.xlu0 %6451
  %6453 = vadd.xlane.f32.xlu0 %v6430
  %v6454 = vpop.xlane.xlu0 %6453
  %6455 = vadd.xlane.f32.xlu0 %v6431
  %v6456 = vpop.xlane.xlu0 %6455
  %6457 = vadd.xlane.f32.xlu0 %v6432
  %v6458 = vpop.xlane.xlu0 %6457
  %6459 = vadd.xlane.f32.xlu0 %v6433
  %v6460 = vpop.xlane.xlu0 %6459
  %6461 = vadd.xlane.f32.xlu0 %v6434
  %v6462 = vpop.xlane.xlu0 %6461
  %6463 = vadd.xlane.f32.xlu0 %v6435
  %v6464 = vpop.xlane.xlu0 %6463
  %6465 = vadd.xlane.f32.xlu0 %v6436
  %v6466 = vpop.xlane.xlu0 %6465
  %6467 = vadd.xlane.f32.xlu0 %v6437
  %v6468 = vpop.xlane.xlu0 %6467
  %6469 = vadd.xlane.f32.xlu0 %v6438
  %v6470 = vpop.xlane.xlu0 %6469
  %v6471 = vadd.f32 %v6440, %v1023
  %v6472 = vadd.f32 %v6442, %v1023
  %v6473 = vadd.f32 %v6444, %v1023
  %v6474 = vadd.f32 %v6446, %v1023
  %v6475 = vadd.f32 %v6448, %v1023
  %v6476 = vadd.f32 %v6450, %v1023
  %v6477 = vadd.f32 %v6452, %v1023
  %v6478 = vadd.f32 %v6454, %v1023
  %v6479 = vadd.f32 %v6456, %v1023
  %v6480 = vadd.f32 %v6458, %v1023
  %v6481 = vadd.f32 %v6460, %v1023
  %v6482 = vadd.f32 %v6462, %v1023
  %v6483 = vadd.f32 %v6464, %v1023
  %v6484 = vadd.f32 %v6466, %v1023
  %v6485 = vadd.f32 %v6468, %v1023
  %v6486 = vadd.f32 %v6470, %v1023
  %v6487 = vmax.f32 %v6471, %v6472
  %v6488 = vrot.slane %v6487, 4
  %v6489 = vmax.f32 %v6487, %v6488
  %v6490 = vrot.slane %v6489, 2
  %v6491 = vmax.f32 %v6489, %v6490
  %v6492 = vrot.slane %v6491, 1
  %v6493 = vmax.f32 %v6491, %v6492
  %v6494 = vmax.f32 %v6473, %v6474
  %v6495 = vrot.slane %v6494, 4
  %v6496 = vmax.f32 %v6494, %v6495
  %v6497 = vrot.slane %v6496, 2
  %v6498 = vmax.f32 %v6496, %v6497
  %v6499 = vrot.slane %v6498, 1
  %v6500 = vmax.f32 %v6498, %v6499
  %v6501 = vmax.f32 %v6475, %v6476
  %v6502 = vrot.slane %v6501, 4
  %v6503 = vmax.f32 %v6501, %v6502
  %v6504 = vrot.slane %v6503, 2
  %v6505 = vmax.f32 %v6503, %v6504
  %v6506 = vrot.slane %v6505, 1
  %v6507 = vmax.f32 %v6505, %v6506
  %v6508 = vmax.f32 %v6477, %v6478
  %v6509 = vrot.slane %v6508, 4
  %v6510 = vmax.f32 %v6508, %v6509
  %v6511 = vrot.slane %v6510, 2
  %v6512 = vmax.f32 %v6510, %v6511
  %v6513 = vrot.slane %v6512, 1
  %v6514 = vmax.f32 %v6512, %v6513
  %v6515 = vmax.f32 %v6479, %v6480
  %v6516 = vrot.slane %v6515, 4
  %v6517 = vmax.f32 %v6515, %v6516
  %v6518 = vrot.slane %v6517, 2
  %v6519 = vmax.f32 %v6517, %v6518
  %v6520 = vrot.slane %v6519, 1
  %v6521 = vmax.f32 %v6519, %v6520
  %v6522 = vmax.f32 %v6481, %v6482
  %v6523 = vrot.slane %v6522, 4
  %v6524 = vmax.f32 %v6522, %v6523
  %v6525 = vrot.slane %v6524, 2
  %v6526 = vmax.f32 %v6524, %v6525
  %v6527 = vrot.slane %v6526, 1
  %v6528 = vmax.f32 %v6526, %v6527
  %v6529 = vmax.f32 %v6483, %v6484
  %v6530 = vrot.slane %v6529, 4
  %v6531 = vmax.f32 %v6529, %v6530
  %v6532 = vrot.slane %v6531, 2
  %v6533 = vmax.f32 %v6531, %v6532
  %v6534 = vrot.slane %v6533, 1
  %v6535 = vmax.f32 %v6533, %v6534
  %v6536 = vmax.f32 %v6485, %v6486
  %v6537 = vrot.slane %v6536, 4
  %v6538 = vmax.f32 %v6536, %v6537
  %v6539 = vrot.slane %v6538, 2
  %v6540 = vmax.f32 %v6538, %v6539
  %v6541 = vrot.slane %v6540, 1
  %v6542 = vmax.f32 %v6540, %v6541
  %v6543 = vsub.f32 %v6471, %v6493
  %v6544 = vsub.f32 %v6472, %v6493
  %v6545 = vsub.f32 %v6473, %v6500
  %v6546 = vsub.f32 %v6474, %v6500
  %v6547 = vsub.f32 %v6475, %v6507
  %v6548 = vsub.f32 %v6476, %v6507
  %v6549 = vsub.f32 %v6477, %v6514
  %v6550 = vsub.f32 %v6478, %v6514
  %v6551 = vsub.f32 %v6479, %v6521
  %v6552 = vsub.f32 %v6480, %v6521
  %v6553 = vsub.f32 %v6481, %v6528
  %v6554 = vsub.f32 %v6482, %v6528
  %v6555 = vsub.f32 %v6483, %v6535
  %v6556 = vsub.f32 %v6484, %v6535
  %v6557 = vsub.f32 %v6485, %v6542
  %v6558 = vsub.f32 %v6486, %v6542
  %v6559 = vmul.f32 %v6543, 1.442695
  %v6560 = vpow.pop %v6559
  %v6561 = vmul.f32 %v6544, 1.442695
  %v6562 = vpow.pop %v6561
  %v6563 = vmul.f32 %v6545, 1.442695
  %v6564 = vpow.pop %v6563
  %v6565 = vmul.f32 %v6546, 1.442695
  %v6566 = vpow.pop %v6565
  %v6567 = vmul.f32 %v6547, 1.442695
  %v6568 = vpow.pop %v6567
  %v6569 = vmul.f32 %v6548, 1.442695
  %v6570 = vpow.pop %v6569
  %v6571 = vmul.f32 %v6549, 1.442695
  %v6572 = vpow.pop %v6571
  %v6573 = vmul.f32 %v6550, 1.442695
  %v6574 = vpow.pop %v6573
  %v6575 = vmul.f32 %v6551, 1.442695
  %v6576 = vpow.pop %v6575
  %v6577 = vmul.f32 %v6552, 1.442695
  %v6578 = vpow.pop %v6577
  %v6579 = vmul.f32 %v6553, 1.442695
  %v6580 = vpow.pop %v6579
  %v6581 = vmul.f32 %v6554, 1.442695
  %v6582 = vpow.pop %v6581
  %v6583 = vmul.f32 %v6555, 1.442695
  %v6584 = vpow.pop %v6583
  %v6585 = vmul.f32 %v6556, 1.442695
  %v6586 = vpow.pop %v6585
  %v6587 = vmul.f32 %v6557, 1.442695
  %v6588 = vpow.pop %v6587
  %v6589 = vmul.f32 %v6558, 1.442695
  %v6590 = vpow.pop %v6589
  %v6591 = vadd.f32 %v6560, %v6562
  %v6592 = vrot.slane %v6591, 4
  %v6593 = vadd.f32 %v6591, %v6592
  %v6594 = vrot.slane %v6593, 2
  %v6595 = vadd.f32 %v6593, %v6594
  %v6596 = vrot.slane %v6595, 1
  %v6597 = vadd.f32 %v6595, %v6596
  %v6598 = vadd.f32 %v6564, %v6566
  %v6599 = vrot.slane %v6598, 4
  %v6600 = vadd.f32 %v6598, %v6599
  %v6601 = vrot.slane %v6600, 2
  %v6602 = vadd.f32 %v6600, %v6601
  %v6603 = vrot.slane %v6602, 1
  %v6604 = vadd.f32 %v6602, %v6603
  %v6605 = vadd.f32 %v6568, %v6570
  %v6606 = vrot.slane %v6605, 4
  %v6607 = vadd.f32 %v6605, %v6606
  %v6608 = vrot.slane %v6607, 2
  %v6609 = vadd.f32 %v6607, %v6608
  %v6610 = vrot.slane %v6609, 1
  %v6611 = vadd.f32 %v6609, %v6610
  %v6612 = vadd.f32 %v6572, %v6574
  %v6613 = vrot.slane %v6612, 4
  %v6614 = vadd.f32 %v6612, %v6613
  %v6615 = vrot.slane %v6614, 2
  %v6616 = vadd.f32 %v6614, %v6615
  %v6617 = vrot.slane %v6616, 1
  %v6618 = vadd.f32 %v6616, %v6617
  %v6619 = vadd.f32 %v6576, %v6578
  %v6620 = vrot.slane %v6619, 4
  %v6621 = vadd.f32 %v6619, %v6620
  %v6622 = vrot.slane %v6621, 2
  %v6623 = vadd.f32 %v6621, %v6622
  %v6624 = vrot.slane %v6623, 1
  %v6625 = vadd.f32 %v6623, %v6624
  %v6626 = vadd.f32 %v6580, %v6582
  %v6627 = vrot.slane %v6626, 4
  %v6628 = vadd.f32 %v6626, %v6627
  %v6629 = vrot.slane %v6628, 2
  %v6630 = vadd.f32 %v6628, %v6629
  %v6631 = vrot.slane %v6630, 1
  %v6632 = vadd.f32 %v6630, %v6631
  %v6633 = vadd.f32 %v6584, %v6586
  %v6634 = vrot.slane %v6633, 4
  %v6635 = vadd.f32 %v6633, %v6634
  %v6636 = vrot.slane %v6635, 2
  %v6637 = vadd.f32 %v6635, %v6636
  %v6638 = vrot.slane %v6637, 1
  %v6639 = vadd.f32 %v6637, %v6638
  %v6640 = vadd.f32 %v6588, %v6590
  %v6641 = vrot.slane %v6640, 4
  %v6642 = vadd.f32 %v6640, %v6641
  %v6643 = vrot.slane %v6642, 2
  %v6644 = vadd.f32 %v6642, %v6643
  %v6645 = vrot.slane %v6644, 1
  %v6646 = vadd.f32 %v6644, %v6645
  %v6647 = vrcp.pop %v6597
  %v6648 = vmul.f32 %v6597, %v6647
  %v6649 = vsub.f32 1.0, %v6648
  %v6650 = vmul.f32 %v6647, %v6649
  %v6651 = vadd.f32 %v6647, %v6650
  %vm6652 = vweird.f32 %v6597
  %vm6653 = vweird.f32 %v6647
  %vm6654 = vmor %vm6652, %vm6653
  %v6655 = vsel %vm6654, %v6647, %v6651
  %v6656 = vand.u32 2147483647, %v6597
  %vm6657 = vcmp.eq.f32.partialorder %v6656, 8.507059e+37
  %v6658 = vand.u32 %v6597, 2147483648
  %v6659 = vor.u32 1.1754944e-38, %v6658
  %v6660 = vsel %vm6657, %v6659, %v6655
  %v6661 = vmul.f32 %v6560, %v6660
  %v6662 = vmul.f32 %v6562, %v6660
  %v6663 = vrcp.pop %v6604
  %v6664 = vmul.f32 %v6604, %v6663
  %v6665 = vsub.f32 1.0, %v6664
  %v6666 = vmul.f32 %v6663, %v6665
  %v6667 = vadd.f32 %v6663, %v6666
  %vm6668 = vweird.f32 %v6604
  %vm6669 = vweird.f32 %v6663
  %vm6670 = vmor %vm6668, %vm6669
  %v6671 = vsel %vm6670, %v6663, %v6667
  %v6672 = vand.u32 2147483647, %v6604
  %vm6673 = vcmp.eq.f32.partialorder %v6672, 8.507059e+37
  %v6674 = vand.u32 %v6604, 2147483648
  %v6675 = vor.u32 1.1754944e-38, %v6674
  %v6676 = vsel %vm6673, %v6675, %v6671
  %v6677 = vmul.f32 %v6564, %v6676
  %v6678 = vmul.f32 %v6566, %v6676
  %v6679 = vrcp.pop %v6611
  %v6680 = vmul.f32 %v6611, %v6679
  %v6681 = vsub.f32 1.0, %v6680
  %v6682 = vmul.f32 %v6679, %v6681
  %v6683 = vadd.f32 %v6679, %v6682
  %vm6684 = vweird.f32 %v6611
  %vm6685 = vweird.f32 %v6679
  %vm6686 = vmor %vm6684, %vm6685
  %v6687 = vsel %vm6686, %v6679, %v6683
  %v6688 = vand.u32 2147483647, %v6611
  %vm6689 = vcmp.eq.f32.partialorder %v6688, 8.507059e+37
  %v6690 = vand.u32 %v6611, 2147483648
  %v6691 = vor.u32 1.1754944e-38, %v6690
  %v6692 = vsel %vm6689, %v6691, %v6687
  %v6693 = vmul.f32 %v6568, %v6692
  %v6694 = vmul.f32 %v6570, %v6692
  %v6695 = vrcp.pop %v6618
  %v6696 = vmul.f32 %v6618, %v6695
  %v6697 = vsub.f32 1.0, %v6696
  %v6698 = vmul.f32 %v6695, %v6697
  %v6699 = vadd.f32 %v6695, %v6698
  %vm6700 = vweird.f32 %v6618
  %vm6701 = vweird.f32 %v6695
  %vm6702 = vmor %vm6700, %vm6701
  %v6703 = vsel %vm6702, %v6695, %v6699
  %v6704 = vand.u32 2147483647, %v6618
  %vm6705 = vcmp.eq.f32.partialorder %v6704, 8.507059e+37
  %v6706 = vand.u32 %v6618, 2147483648
  %v6707 = vor.u32 1.1754944e-38, %v6706
  %v6708 = vsel %vm6705, %v6707, %v6703
  %v6709 = vmul.f32 %v6572, %v6708
  %v6710 = vmul.f32 %v6574, %v6708
  %v6711 = vrcp.pop %v6625
  %v6712 = vmul.f32 %v6625, %v6711
  %v6713 = vsub.f32 1.0, %v6712
  %v6714 = vmul.f32 %v6711, %v6713
  %v6715 = vadd.f32 %v6711, %v6714
  %vm6716 = vweird.f32 %v6625
  %vm6717 = vweird.f32 %v6711
  %vm6718 = vmor %vm6716, %vm6717
  %v6719 = vsel %vm6718, %v6711, %v6715
  %v6720 = vand.u32 2147483647, %v6625
  %vm6721 = vcmp.eq.f32.partialorder %v6720, 8.507059e+37
  %v6722 = vand.u32 %v6625, 2147483648
  %v6723 = vor.u32 1.1754944e-38, %v6722
  %v6724 = vsel %vm6721, %v6723, %v6719
  %v6725 = vmul.f32 %v6576, %v6724
  %v6726 = vmul.f32 %v6578, %v6724
  %v6727 = vrcp.pop %v6632
  %v6728 = vmul.f32 %v6632, %v6727
  %v6729 = vsub.f32 1.0, %v6728
  %v6730 = vmul.f32 %v6727, %v6729
  %v6731 = vadd.f32 %v6727, %v6730
  %vm6732 = vweird.f32 %v6632
  %vm6733 = vweird.f32 %v6727
  %vm6734 = vmor %vm6732, %vm6733
  %v6735 = vsel %vm6734, %v6727, %v6731
  %v6736 = vand.u32 2147483647, %v6632
  %vm6737 = vcmp.eq.f32.partialorder %v6736, 8.507059e+37
  %v6738 = vand.u32 %v6632, 2147483648
  %v6739 = vor.u32 1.1754944e-38, %v6738
  %v6740 = vsel %vm6737, %v6739, %v6735
  %v6741 = vmul.f32 %v6580, %v6740
  %v6742 = vmul.f32 %v6582, %v6740
  %v6743 = vrcp.pop %v6639
  %v6744 = vmul.f32 %v6639, %v6743
  %v6745 = vsub.f32 1.0, %v6744
  %v6746 = vmul.f32 %v6743, %v6745
  %v6747 = vadd.f32 %v6743, %v6746
  %vm6748 = vweird.f32 %v6639
  %vm6749 = vweird.f32 %v6743
  %vm6750 = vmor %vm6748, %vm6749
  %v6751 = vsel %vm6750, %v6743, %v6747
  %v6752 = vand.u32 2147483647, %v6639
  %vm6753 = vcmp.eq.f32.partialorder %v6752, 8.507059e+37
  %v6754 = vand.u32 %v6639, 2147483648
  %v6755 = vor.u32 1.1754944e-38, %v6754
  %v6756 = vsel %vm6753, %v6755, %v6751
  %v6757 = vmul.f32 %v6584, %v6756
  %v6758 = vmul.f32 %v6586, %v6756
  %v6759 = vrcp.pop %v6646
  %v6760 = vmul.f32 %v6646, %v6759
  %v6761 = vsub.f32 1.0, %v6760
  %v6762 = vmul.f32 %v6759, %v6761
  %v6763 = vadd.f32 %v6759, %v6762
  %vm6764 = vweird.f32 %v6646
  %vm6765 = vweird.f32 %v6759
  %vm6766 = vmor %vm6764, %vm6765
  %v6767 = vsel %vm6766, %v6759, %v6763
  %v6768 = vand.u32 2147483647, %v6646
  %vm6769 = vcmp.eq.f32.partialorder %v6768, 8.507059e+37
  %v6770 = vand.u32 %v6646, 2147483648
  %v6771 = vor.u32 1.1754944e-38, %v6770
  %v6772 = vsel %vm6769, %v6771, %v6767
  %v6773 = vmul.f32 %v6588, %v6772
  %v6774 = vmul.f32 %v6590, %v6772
  %v6775 = vld [vmem:[%s0] sm:$0xff]
  %v6776 = vld [vmem:[%s0 + $0x8] sm:$0xff]
  %v6777 = vld [vmem:[%s0 + $0x10] sm:$0xff]
  %v6778 = vld [vmem:[%s0 + $0x18] sm:$0xff]
  %v6779 = vld [vmem:[%s0 + $0x20] sm:$0xff]
  %v6780 = vld [vmem:[%s0 + $0x28] sm:$0xff]
  %v6781 = vld [vmem:[%s0 + $0x30] sm:$0xff]
  %v6782 = vld [vmem:[%s0 + $0x38] sm:$0xff]
  %v6783 = vld [vmem:[%s0 + $0x40] sm:$0xff]
  %v6784 = vld [vmem:[%s0 + $0x48] sm:$0xff]
  %v6785 = vld [vmem:[%s0 + $0x50] sm:$0xff]
  %v6786 = vld [vmem:[%s0 + $0x58] sm:$0xff]
  %v6787 = vld [vmem:[%s0 + $0x60] sm:$0xff]
  %v6788 = vld [vmem:[%s0 + $0x68] sm:$0xff]
  %v6789 = vld [vmem:[%s0 + $0x70] sm:$0xff]
  %v6790 = vld [vmem:[%s0 + $0x78] sm:$0xff]
  %v6791 = vmul.f32 %v6775, %v6661
  %v6792 = vmul.f32 %v6776, %v6662
  %v6793 = vmul.f32 %v6777, %v6677
  %v6794 = vmul.f32 %v6778, %v6678
  %v6795 = vmul.f32 %v6779, %v6693
  %v6796 = vmul.f32 %v6780, %v6694
  %v6797 = vmul.f32 %v6781, %v6709
  %v6798 = vmul.f32 %v6782, %v6710
  %v6799 = vmul.f32 %v6783, %v6725
  %v6800 = vmul.f32 %v6784, %v6726
  %v6801 = vmul.f32 %v6785, %v6741
  %v6802 = vmul.f32 %v6786, %v6742
  %v6803 = vmul.f32 %v6787, %v6757
  %v6804 = vmul.f32 %v6788, %v6758
  %v6805 = vmul.f32 %v6789, %v6773
  %v6806 = vmul.f32 %v6790, %v6774
  %v6807 = vadd.f32 %v6791, %v6792
  %v6808 = vrot.slane %v6807, 4
  %v6809 = vadd.f32 %v6807, %v6808
  %v6810 = vrot.slane %v6809, 2
  %v6811 = vadd.f32 %v6809, %v6810
  %v6812 = vrot.slane %v6811, 1
  %v6813 = vadd.f32 %v6811, %v6812
  %v6814 = vadd.f32 %v6793, %v6794
  %v6815 = vrot.slane %v6814, 4
  %v6816 = vadd.f32 %v6814, %v6815
  %v6817 = vrot.slane %v6816, 2
  %v6818 = vadd.f32 %v6816, %v6817
  %v6819 = vrot.slane %v6818, 1
  %v6820 = vadd.f32 %v6818, %v6819
  %v6821 = vadd.f32 %v6795, %v6796
  %v6822 = vrot.slane %v6821, 4
  %v6823 = vadd.f32 %v6821, %v6822
  %v6824 = vrot.slane %v6823, 2
  %v6825 = vadd.f32 %v6823, %v6824
  %v6826 = vrot.slane %v6825, 1
  %v6827 = vadd.f32 %v6825, %v6826
  %v6828 = vadd.f32 %v6797, %v6798
  %v6829 = vrot.slane %v6828, 4
  %v6830 = vadd.f32 %v6828, %v6829
  %v6831 = vrot.slane %v6830, 2
  %v6832 = vadd.f32 %v6830, %v6831
  %v6833 = vrot.slane %v6832, 1
  %v6834 = vadd.f32 %v6832, %v6833
  %v6835 = vadd.f32 %v6799, %v6800
  %v6836 = vrot.slane %v6835, 4
  %v6837 = vadd.f32 %v6835, %v6836
  %v6838 = vrot.slane %v6837, 2
  %v6839 = vadd.f32 %v6837, %v6838
  %v6840 = vrot.slane %v6839, 1
  %v6841 = vadd.f32 %v6839, %v6840
  %v6842 = vadd.f32 %v6801, %v6802
  %v6843 = vrot.slane %v6842, 4
  %v6844 = vadd.f32 %v6842, %v6843
  %v6845 = vrot.slane %v6844, 2
  %v6846 = vadd.f32 %v6844, %v6845
  %v6847 = vrot.slane %v6846, 1
  %v6848 = vadd.f32 %v6846, %v6847
  %v6849 = vadd.f32 %v6803, %v6804
  %v6850 = vrot.slane %v6849, 4
  %v6851 = vadd.f32 %v6849, %v6850
  %v6852 = vrot.slane %v6851, 2
  %v6853 = vadd.f32 %v6851, %v6852
  %v6854 = vrot.slane %v6853, 1
  %v6855 = vadd.f32 %v6853, %v6854
  %v6856 = vadd.f32 %v6805, %v6806
  %v6857 = vrot.slane %v6856, 4
  %v6858 = vadd.f32 %v6856, %v6857
  %v6859 = vrot.slane %v6858, 2
  %v6860 = vadd.f32 %v6858, %v6859
  %v6861 = vrot.slane %v6860, 1
  %v6862 = vadd.f32 %v6860, %v6861
  %v6871 = vsel %vm191, %v6820, %v6813
  %v6872 = vsel %vm193, %v6827, %v6871
  %v6873 = vsel %vm195, %v6834, %v6872
  %v6874 = vsel %vm197, %v6841, %v6873
  %v6875 = vsel %vm199, %v6848, %v6874
  %v6876 = vsel %vm201, %v6855, %v6875
  %v6877 = vsel %vm203, %v6862, %v6876
  %v6879 = vmul.f32 %v6366, %v6877
  %v6880 = vpack.c.bf16 %v6879, %v6879
  %v6881 = vld [vmem:[%s10] sm:$0xff]
  %v6882 = vld [vmem:[%s10 + $0x8] sm:$0xff]
  %v6883 = vld [vmem:[%s10 + $0x10] sm:$0xff]
  %v6884 = vld [vmem:[%s10 + $0x18] sm:$0xff]
  %v6885 = vld [vmem:[%s10 + $0x20] sm:$0xff]
  %v6886 = vld [vmem:[%s10 + $0x28] sm:$0xff]
  %v6887 = vld [vmem:[%s10 + $0x30] sm:$0xff]
  %v6888 = vld [vmem:[%s10 + $0x38] sm:$0xff]
  %v6889 = vld [vmem:[%s10 + $0x40] sm:$0xff]
  %v6890 = vld [vmem:[%s10 + $0x48] sm:$0xff]
  %v6891 = vld [vmem:[%s10 + $0x50] sm:$0xff]
  %v6892 = vld [vmem:[%s10 + $0x58] sm:$0xff]
  %v6893 = vld [vmem:[%s10 + $0x60] sm:$0xff]
  %v6894 = vld [vmem:[%s10 + $0x68] sm:$0xff]
  %v6895 = vld [vmem:[%s10 + $0x70] sm:$0xff]
  %v6896 = vld [vmem:[%s10 + $0x78] sm:$0xff]
  %v6897 = vld [vmem:[%s10 + $0x80] sm:$0xff]
  %v6898 = vld [vmem:[%s10 + $0x88] sm:$0xff]
  %v6899 = vld [vmem:[%s10 + $0x90] sm:$0xff]
  %v6900 = vld [vmem:[%s10 + $0x98] sm:$0xff]
  %v6901 = vld [vmem:[%s10 + $0xa0] sm:$0xff]
  %v6902 = vld [vmem:[%s10 + $0xa8] sm:$0xff]
  %v6903 = vld [vmem:[%s10 + $0xb0] sm:$0xff]
  %v6904 = vld [vmem:[%s10 + $0xb8] sm:$0xff]
  %v6905 = vld [vmem:[%s10 + $0xc0] sm:$0xff]
  %v6906 = vld [vmem:[%s10 + $0xc8] sm:$0xff]
  %v6907 = vld [vmem:[%s10 + $0xd0] sm:$0xff]
  %v6908 = vld [vmem:[%s10 + $0xd8] sm:$0xff]
  %v6909 = vld [vmem:[%s10 + $0xe0] sm:$0xff]
  %v6910 = vld [vmem:[%s10 + $0xe8] sm:$0xff]
  %v6911 = vld [vmem:[%s10 + $0xf0] sm:$0xff]
  %v6912 = vld [vmem:[%s10 + $0xf8] sm:$0xff]
  %v6913 = vld [vmem:[%s10 + $0x100] sm:$0xff]
  %v6914 = vld [vmem:[%s10 + $0x108] sm:$0xff]
  %v6915 = vld [vmem:[%s10 + $0x110] sm:$0xff]
  %v6916 = vld [vmem:[%s10 + $0x118] sm:$0xff]
  %v6917 = vld [vmem:[%s10 + $0x120] sm:$0xff]
  %v6918 = vld [vmem:[%s10 + $0x128] sm:$0xff]
  %v6919 = vld [vmem:[%s10 + $0x130] sm:$0xff]
  %v6920 = vld [vmem:[%s10 + $0x138] sm:$0xff]
  %v6921 = vld [vmem:[%s10 + $0x140] sm:$0xff]
  %v6922 = vld [vmem:[%s10 + $0x148] sm:$0xff]
  %v6923 = vld [vmem:[%s10 + $0x150] sm:$0xff]
  %v6924 = vld [vmem:[%s10 + $0x158] sm:$0xff]
  %v6925 = vld [vmem:[%s10 + $0x160] sm:$0xff]
  %v6926 = vld [vmem:[%s10 + $0x168] sm:$0xff]
  %v6927 = vld [vmem:[%s10 + $0x170] sm:$0xff]
  %v6928 = vld [vmem:[%s10 + $0x178] sm:$0xff]
  %v6929 = vld [vmem:[%s10 + $0x180] sm:$0xff]
  %v6930 = vld [vmem:[%s10 + $0x188] sm:$0xff]
  %v6931 = vld [vmem:[%s10 + $0x190] sm:$0xff]
  %v6932 = vld [vmem:[%s10 + $0x198] sm:$0xff]
  %v6933 = vld [vmem:[%s10 + $0x1a0] sm:$0xff]
  %v6934 = vld [vmem:[%s10 + $0x1a8] sm:$0xff]
  %v6935 = vld [vmem:[%s10 + $0x1b0] sm:$0xff]
  %v6936 = vld [vmem:[%s10 + $0x1b8] sm:$0xff]
  %v6937 = vld [vmem:[%s10 + $0x1c0] sm:$0xff]
  %v6938 = vld [vmem:[%s10 + $0x1c8] sm:$0xff]
  %v6939 = vld [vmem:[%s10 + $0x1d0] sm:$0xff]
  %v6940 = vld [vmem:[%s10 + $0x1d8] sm:$0xff]
  %v6941 = vld [vmem:[%s10 + $0x1e0] sm:$0xff]
  %v6942 = vld [vmem:[%s10 + $0x1e8] sm:$0xff]
  %v6943 = vld [vmem:[%s10 + $0x1f0] sm:$0xff]
  %v6944 = vld [vmem:[%s10 + $0x1f8] sm:$0xff]
  %v7009 = vunpack.c.l.b16 %v6881
  %v7010 = vunpack.c.h.b16 %v6881
  %v7011 = vunpack.c.l.b16 %v6882
  %v7012 = vunpack.c.h.b16 %v6882
  %v7013 = vunpack.c.l.b16 %v6883
  %v7014 = vunpack.c.h.b16 %v6883
  %v7015 = vunpack.c.l.b16 %v6884
  %v7016 = vunpack.c.h.b16 %v6884
  %v7017 = vunpack.c.l.b16 %v6885
  %v7018 = vunpack.c.h.b16 %v6885
  %v7019 = vunpack.c.l.b16 %v6886
  %v7020 = vunpack.c.h.b16 %v6886
  %v7021 = vunpack.c.l.b16 %v6887
  %v7022 = vunpack.c.h.b16 %v6887
  %v7023 = vunpack.c.l.b16 %v6888
  %v7024 = vunpack.c.h.b16 %v6888
  %v7025 = vunpack.c.l.b16 %v6889
  %v7026 = vunpack.c.h.b16 %v6889
  %v7027 = vunpack.c.l.b16 %v6890
  %v7028 = vunpack.c.h.b16 %v6890
  %v7029 = vunpack.c.l.b16 %v6891
  %v7030 = vunpack.c.h.b16 %v6891
  %v7031 = vunpack.c.l.b16 %v6892
  %v7032 = vunpack.c.h.b16 %v6892
  %v7033 = vunpack.c.l.b16 %v6893
  %v7034 = vunpack.c.h.b16 %v6893
  %v7035 = vunpack.c.l.b16 %v6894
  %v7036 = vunpack.c.h.b16 %v6894
  %v7037 = vunpack.c.l.b16 %v6895
  %v7038 = vunpack.c.h.b16 %v6895
  %v7039 = vunpack.c.l.b16 %v6896
  %v7040 = vunpack.c.h.b16 %v6896
  %v7041 = vunpack.c.l.b16 %v6897
  %v7042 = vunpack.c.h.b16 %v6897
  %v7043 = vunpack.c.l.b16 %v6898
  %v7044 = vunpack.c.h.b16 %v6898
  %v7045 = vunpack.c.l.b16 %v6899
  %v7046 = vunpack.c.h.b16 %v6899
  %v7047 = vunpack.c.l.b16 %v6900
  %v7048 = vunpack.c.h.b16 %v6900
  %v7049 = vunpack.c.l.b16 %v6901
  %v7050 = vunpack.c.h.b16 %v6901
  %v7051 = vunpack.c.l.b16 %v6902
  %v7052 = vunpack.c.h.b16 %v6902
  %v7053 = vunpack.c.l.b16 %v6903
  %v7054 = vunpack.c.h.b16 %v6903
  %v7055 = vunpack.c.l.b16 %v6904
  %v7056 = vunpack.c.h.b16 %v6904
  %v7057 = vunpack.c.l.b16 %v6905
  %v7058 = vunpack.c.h.b16 %v6905
  %v7059 = vunpack.c.l.b16 %v6906
  %v7060 = vunpack.c.h.b16 %v6906
  %v7061 = vunpack.c.l.b16 %v6907
  %v7062 = vunpack.c.h.b16 %v6907
  %v7063 = vunpack.c.l.b16 %v6908
  %v7064 = vunpack.c.h.b16 %v6908
  %v7065 = vunpack.c.l.b16 %v6909
  %v7066 = vunpack.c.h.b16 %v6909
  %v7067 = vunpack.c.l.b16 %v6910
  %v7068 = vunpack.c.h.b16 %v6910
  %v7069 = vunpack.c.l.b16 %v6911
  %v7070 = vunpack.c.h.b16 %v6911
  %v7071 = vunpack.c.l.b16 %v6912
  %v7072 = vunpack.c.h.b16 %v6912
  %v7073 = vunpack.c.l.b16 %v6913
  %v7074 = vunpack.c.h.b16 %v6913
  %v7075 = vunpack.c.l.b16 %v6914
  %v7076 = vunpack.c.h.b16 %v6914
  %v7077 = vunpack.c.l.b16 %v6915
  %v7078 = vunpack.c.h.b16 %v6915
  %v7079 = vunpack.c.l.b16 %v6916
  %v7080 = vunpack.c.h.b16 %v6916
  %v7081 = vunpack.c.l.b16 %v6917
  %v7082 = vunpack.c.h.b16 %v6917
  %v7083 = vunpack.c.l.b16 %v6918
  %v7084 = vunpack.c.h.b16 %v6918
  %v7085 = vunpack.c.l.b16 %v6919
  %v7086 = vunpack.c.h.b16 %v6919
  %v7087 = vunpack.c.l.b16 %v6920
  %v7088 = vunpack.c.h.b16 %v6920
  %v7089 = vunpack.c.l.b16 %v6921
  %v7090 = vunpack.c.h.b16 %v6921
  %v7091 = vunpack.c.l.b16 %v6922
  %v7092 = vunpack.c.h.b16 %v6922
  %v7093 = vunpack.c.l.b16 %v6923
  %v7094 = vunpack.c.h.b16 %v6923
  %v7095 = vunpack.c.l.b16 %v6924
  %v7096 = vunpack.c.h.b16 %v6924
  %v7097 = vunpack.c.l.b16 %v6925
  %v7098 = vunpack.c.h.b16 %v6925
  %v7099 = vunpack.c.l.b16 %v6926
  %v7100 = vunpack.c.h.b16 %v6926
  %v7101 = vunpack.c.l.b16 %v6927
  %v7102 = vunpack.c.h.b16 %v6927
  %v7103 = vunpack.c.l.b16 %v6928
  %v7104 = vunpack.c.h.b16 %v6928
  %v7105 = vunpack.c.l.b16 %v6929
  %v7106 = vunpack.c.h.b16 %v6929
  %v7107 = vunpack.c.l.b16 %v6930
  %v7108 = vunpack.c.h.b16 %v6930
  %v7109 = vunpack.c.l.b16 %v6931
  %v7110 = vunpack.c.h.b16 %v6931
  %v7111 = vunpack.c.l.b16 %v6932
  %v7112 = vunpack.c.h.b16 %v6932
  %v7113 = vunpack.c.l.b16 %v6933
  %v7114 = vunpack.c.h.b16 %v6933
  %v7115 = vunpack.c.l.b16 %v6934
  %v7116 = vunpack.c.h.b16 %v6934
  %v7117 = vunpack.c.l.b16 %v6935
  %v7118 = vunpack.c.h.b16 %v6935
  %v7119 = vunpack.c.l.b16 %v6936
  %v7120 = vunpack.c.h.b16 %v6936
  %v7121 = vunpack.c.l.b16 %v6937
  %v7122 = vunpack.c.h.b16 %v6937
  %v7123 = vunpack.c.l.b16 %v6938
  %v7124 = vunpack.c.h.b16 %v6938
  %v7125 = vunpack.c.l.b16 %v6939
  %v7126 = vunpack.c.h.b16 %v6939
  %v7127 = vunpack.c.l.b16 %v6940
  %v7128 = vunpack.c.h.b16 %v6940
  %v7129 = vunpack.c.l.b16 %v6941
  %v7130 = vunpack.c.h.b16 %v6941
  %v7131 = vunpack.c.l.b16 %v6942
  %v7132 = vunpack.c.h.b16 %v6942
  %v7133 = vunpack.c.l.b16 %v6943
  %v7134 = vunpack.c.h.b16 %v6943
  %v7135 = vunpack.c.l.b16 %v6944
  %v7136 = vunpack.c.h.b16 %v6944
  %v7137 = vpack.c.b16 %v7013, %v7009
  %v7138 = vpack.c.b16 %v7014, %v7010
  %v7139 = vpack.c.b16 %v7015, %v7011
  %v7140 = vpack.c.b16 %v7016, %v7012
  %v7141 = vpack.c.b16 %v7021, %v7017
  %v7142 = vpack.c.b16 %v7022, %v7018
  %v7143 = vpack.c.b16 %v7023, %v7019
  %v7144 = vpack.c.b16 %v7024, %v7020
  %v7145 = vpack.c.b16 %v7029, %v7025
  %v7146 = vpack.c.b16 %v7030, %v7026
  %v7147 = vpack.c.b16 %v7031, %v7027
  %v7148 = vpack.c.b16 %v7032, %v7028
  %v7149 = vpack.c.b16 %v7037, %v7033
  %v7150 = vpack.c.b16 %v7038, %v7034
  %v7151 = vpack.c.b16 %v7039, %v7035
  %v7152 = vpack.c.b16 %v7040, %v7036
  %v7153 = vpack.c.b16 %v7045, %v7041
  %v7154 = vpack.c.b16 %v7046, %v7042
  %v7155 = vpack.c.b16 %v7047, %v7043
  %v7156 = vpack.c.b16 %v7048, %v7044
  %v7157 = vpack.c.b16 %v7053, %v7049
  %v7158 = vpack.c.b16 %v7054, %v7050
  %v7159 = vpack.c.b16 %v7055, %v7051
  %v7160 = vpack.c.b16 %v7056, %v7052
  %v7161 = vpack.c.b16 %v7061, %v7057
  %v7162 = vpack.c.b16 %v7062, %v7058
  %v7163 = vpack.c.b16 %v7063, %v7059
  %v7164 = vpack.c.b16 %v7064, %v7060
  %v7165 = vpack.c.b16 %v7069, %v7065
  %v7166 = vpack.c.b16 %v7070, %v7066
  %v7167 = vpack.c.b16 %v7071, %v7067
  %v7168 = vpack.c.b16 %v7072, %v7068
  %v7169 = vpack.c.b16 %v7077, %v7073
  %v7170 = vpack.c.b16 %v7078, %v7074
  %v7171 = vpack.c.b16 %v7079, %v7075
  %v7172 = vpack.c.b16 %v7080, %v7076
  %v7173 = vpack.c.b16 %v7085, %v7081
  %v7174 = vpack.c.b16 %v7086, %v7082
  %v7175 = vpack.c.b16 %v7087, %v7083
  %v7176 = vpack.c.b16 %v7088, %v7084
  %v7177 = vpack.c.b16 %v7093, %v7089
  %v7178 = vpack.c.b16 %v7094, %v7090
  %v7179 = vpack.c.b16 %v7095, %v7091
  %v7180 = vpack.c.b16 %v7096, %v7092
  %v7181 = vpack.c.b16 %v7101, %v7097
  %v7182 = vpack.c.b16 %v7102, %v7098
  %v7183 = vpack.c.b16 %v7103, %v7099
  %v7184 = vpack.c.b16 %v7104, %v7100
  %v7185 = vpack.c.b16 %v7109, %v7105
  %v7186 = vpack.c.b16 %v7110, %v7106
  %v7187 = vpack.c.b16 %v7111, %v7107
  %v7188 = vpack.c.b16 %v7112, %v7108
  %v7189 = vpack.c.b16 %v7117, %v7113
  %v7190 = vpack.c.b16 %v7118, %v7114
  %v7191 = vpack.c.b16 %v7119, %v7115
  %v7192 = vpack.c.b16 %v7120, %v7116
  %v7193 = vpack.c.b16 %v7125, %v7121
  %v7194 = vpack.c.b16 %v7126, %v7122
  %v7195 = vpack.c.b16 %v7127, %v7123
  %v7196 = vpack.c.b16 %v7128, %v7124
  %v7197 = vpack.c.b16 %v7133, %v7129
  %v7198 = vpack.c.b16 %v7134, %v7130
  %v7199 = vpack.c.b16 %v7135, %v7131
  %v7200 = vpack.c.b16 %v7136, %v7132
  %7265 = vmatpush.bf16.msra.mxu0 %v7165
  %7266 = vmatpush.bf16.msra.mxu0 %v7161
  %7267 = vmatpush.bf16.msra.mxu0 %v7157
  %7268 = vmatpush.bf16.msra.mxu0 %v7153
  %7269 = vmatpush.bf16.msra.mxu0 %v7149
  %7270 = vmatpush.bf16.msra.mxu0 %v7145
  %7271 = vmatpush.bf16.msra.mxu0 %v7141
  %7272 = vmatpush.bf16.msra.mxu0 %v7137
  %7273 = vmatmul.bf16.gmra.mxu0 %v5981
  %v7274 = vpop.f32.mrf.mxu0
  %v7275 = vadd.f32 %v1483, %v7274
  %v7276 = vpop.f32.mrf.mxu0
  %7277 = vdwg.mxu0
  %7278 = vmatpush.bf16.msra.mxu0 %v7197
  %7279 = vmatpush.bf16.msra.mxu0 %v7193
  %7280 = vmatpush.bf16.msra.mxu0 %v7189
  %7281 = vmatpush.bf16.msra.mxu0 %v7185
  %7282 = vmatpush.bf16.msra.mxu0 %v7181
  %7283 = vmatpush.bf16.msra.mxu0 %v7177
  %7284 = vmatpush.bf16.msra.mxu0 %v7173
  %7285 = vmatpush.bf16.msra.mxu0 %v7169
  %7286 = vmatmul.bf16.gmra.mxu0 %v6880
  %v7287 = vpop.f32.mrf.mxu0
  %v7288 = vadd.f32 %v7275, %v7287
  %v7289 = vpop.f32.mrf.mxu0
  %7290 = vdwg.mxu0
  %7291 = vmatpush.bf16.msra.mxu0 %v7166
  %7292 = vmatpush.bf16.msra.mxu0 %v7162
  %7293 = vmatpush.bf16.msra.mxu0 %v7158
  %7294 = vmatpush.bf16.msra.mxu0 %v7154
  %7295 = vmatpush.bf16.msra.mxu0 %v7150
  %7296 = vmatpush.bf16.msra.mxu0 %v7146
  %7297 = vmatpush.bf16.msra.mxu0 %v7142
  %7298 = vmatpush.bf16.msra.mxu0 %v7138
  %7299 = vmatmul.bf16.gmra.mxu0 %v5981
  %v7300 = vpop.f32.mrf.mxu0
  %v7301 = vadd.f32 %v1484, %v7300
  %v7302 = vpop.f32.mrf.mxu0
  %7303 = vdwg.mxu0
  %7304 = vmatpush.bf16.msra.mxu0 %v7198
  %7305 = vmatpush.bf16.msra.mxu0 %v7194
  %7306 = vmatpush.bf16.msra.mxu0 %v7190
  %7307 = vmatpush.bf16.msra.mxu0 %v7186
  %7308 = vmatpush.bf16.msra.mxu0 %v7182
  %7309 = vmatpush.bf16.msra.mxu0 %v7178
  %7310 = vmatpush.bf16.msra.mxu0 %v7174
  %7311 = vmatpush.bf16.msra.mxu0 %v7170
  %7312 = vmatmul.bf16.gmra.mxu0 %v6880
  %v7313 = vpop.f32.mrf.mxu0
  %v7314 = vadd.f32 %v7301, %v7313
  %v7315 = vpop.f32.mrf.mxu0
  %7316 = vdwg.mxu0
  %7317 = vmatpush.bf16.msra.mxu0 %v7167
  %7318 = vmatpush.bf16.msra.mxu0 %v7163
  %7319 = vmatpush.bf16.msra.mxu0 %v7159
  %7320 = vmatpush.bf16.msra.mxu0 %v7155
  %7321 = vmatpush.bf16.msra.mxu0 %v7151
  %7322 = vmatpush.bf16.msra.mxu0 %v7147
  %7323 = vmatpush.bf16.msra.mxu0 %v7143
  %7324 = vmatpush.bf16.msra.mxu0 %v7139
  %7325 = vmatmul.bf16.gmra.mxu0 %v5981
  %v7326 = vpop.f32.mrf.mxu0
  %v7327 = vadd.f32 %v1485, %v7326
  %v7328 = vpop.f32.mrf.mxu0
  %7329 = vdwg.mxu0
  %7330 = vmatpush.bf16.msra.mxu0 %v7199
  %7331 = vmatpush.bf16.msra.mxu0 %v7195
  %7332 = vmatpush.bf16.msra.mxu0 %v7191
  %7333 = vmatpush.bf16.msra.mxu0 %v7187
  %7334 = vmatpush.bf16.msra.mxu0 %v7183
  %7335 = vmatpush.bf16.msra.mxu0 %v7179
  %7336 = vmatpush.bf16.msra.mxu0 %v7175
  %7337 = vmatpush.bf16.msra.mxu0 %v7171
  %7338 = vmatmul.bf16.gmra.mxu0 %v6880
  %v7339 = vpop.f32.mrf.mxu0
  %v7340 = vadd.f32 %v7327, %v7339
  %v7341 = vpop.f32.mrf.mxu0
  %7342 = vdwg.mxu0
  %7343 = vmatpush.bf16.msra.mxu0 %v7168
  %7344 = vmatpush.bf16.msra.mxu0 %v7164
  %7345 = vmatpush.bf16.msra.mxu0 %v7160
  %7346 = vmatpush.bf16.msra.mxu0 %v7156
  %7347 = vmatpush.bf16.msra.mxu0 %v7152
  %7348 = vmatpush.bf16.msra.mxu0 %v7148
  %7349 = vmatpush.bf16.msra.mxu0 %v7144
  %7350 = vmatpush.bf16.msra.mxu0 %v7140
  %7351 = vmatmul.bf16.gmra.mxu0 %v5981
  %v7352 = vpop.f32.mrf.mxu0
  %v7353 = vadd.f32 %v1486, %v7352
  %v7354 = vpop.f32.mrf.mxu0
  %7355 = vdwg.mxu0
  %7356 = vmatpush.bf16.msra.mxu0 %v7200
  %7357 = vmatpush.bf16.msra.mxu0 %v7196
  %7358 = vmatpush.bf16.msra.mxu0 %v7192
  %7359 = vmatpush.bf16.msra.mxu0 %v7188
  %7360 = vmatpush.bf16.msra.mxu0 %v7184
  %7361 = vmatpush.bf16.msra.mxu0 %v7180
  %7362 = vmatpush.bf16.msra.mxu0 %v7176
  %7363 = vmatpush.bf16.msra.mxu0 %v7172
  %7364 = vmatmul.bf16.gmra.mxu0 %v6880
  %v7365 = vpop.f32.mrf.mxu0
  %v7366 = vadd.f32 %v7353, %v7365
  %v7367 = vpop.f32.mrf.mxu0
  %7368 = vdwg.mxu0
  %v7369 = vadd.f32 %v7288, %v6306
  %v7370 = vadd.f32 %v7314, %v6319
  %v7371 = vadd.f32 %v7340, %v6332
  %v7372 = vadd.f32 %v7366, %v6345
  %v7373 = vxor.u32 %v7369, 2147483648
  %v7374 = vmul.f32 %v7373, 1.442695
  %v7375 = vpow.pop %v7374
  %v7376 = vadd.f32 %v7375, 1.0
  %v7377 = vrcp.pop %v7376
  %v7378 = vmul.f32 %v7376, %v7377
  %v7379 = vsub.f32 1.0, %v7378
  %v7380 = vmul.f32 %v7377, %v7379
  %v7381 = vadd.f32 %v7377, %v7380
  %vm7382 = vweird.f32 %v7376
  %vm7383 = vweird.f32 %v7377
  %vm7384 = vmor %vm7382, %vm7383
  %v7385 = vsel %vm7384, %v7377, %v7381
  %v7386 = vand.u32 2147483647, %v7376
  %vm7387 = vcmp.eq.f32.partialorder %v7386, 8.507059e+37
  %v7388 = vand.u32 %v7376, 2147483648
  %v7389 = vor.u32 1.1754944e-38, %v7388
  %v7390 = vsel %vm7387, %v7389, %v7385
  %v7391 = vmul.f32 1.0, %v7390
  %v7392 = vxor.u32 %v7370, 2147483648
  %v7393 = vmul.f32 %v7392, 1.442695
  %v7394 = vpow.pop %v7393
  %v7395 = vadd.f32 %v7394, 1.0
  %v7396 = vrcp.pop %v7395
  %v7397 = vmul.f32 %v7395, %v7396
  %v7398 = vsub.f32 1.0, %v7397
  %v7399 = vmul.f32 %v7396, %v7398
  %v7400 = vadd.f32 %v7396, %v7399
  %vm7401 = vweird.f32 %v7395
  %vm7402 = vweird.f32 %v7396
  %vm7403 = vmor %vm7401, %vm7402
  %v7404 = vsel %vm7403, %v7396, %v7400
  %v7405 = vand.u32 2147483647, %v7395
  %vm7406 = vcmp.eq.f32.partialorder %v7405, 8.507059e+37
  %v7407 = vand.u32 %v7395, 2147483648
  %v7408 = vor.u32 1.1754944e-38, %v7407
  %v7409 = vsel %vm7406, %v7408, %v7404
  %v7410 = vmul.f32 1.0, %v7409
  %v7411 = vtanh.pop %v7371
  %v7412 = vxor.u32 %v7372, 2147483648
  %v7413 = vmul.f32 %v7412, 1.442695
  %v7414 = vpow.pop %v7413
  %v7415 = vadd.f32 %v7414, 1.0
  %v7416 = vrcp.pop %v7415
  %v7417 = vmul.f32 %v7415, %v7416
  %v7418 = vsub.f32 1.0, %v7417
  %v7419 = vmul.f32 %v7416, %v7418
  %v7420 = vadd.f32 %v7416, %v7419
  %vm7421 = vweird.f32 %v7415
  %vm7422 = vweird.f32 %v7416
  %vm7423 = vmor %vm7421, %vm7422
  %v7424 = vsel %vm7423, %v7416, %v7420
  %v7425 = vand.u32 2147483647, %v7415
  %vm7426 = vcmp.eq.f32.partialorder %v7425, 8.507059e+37
  %v7427 = vand.u32 %v7415, 2147483648
  %v7428 = vor.u32 1.1754944e-38, %v7427
  %v7429 = vsel %vm7426, %v7428, %v7424
  %v7430 = vmul.f32 1.0, %v7429
  %v7431 = vmul.f32 %v7410, %v5617
  %v7432 = vmul.f32 %v7391, %v7411
  %v7433 = vadd.f32 %v7431, %v7432
  %v7434 = vtanh.pop %v7433
  %v7435 = vmul.f32 %v7430, %v7434
  %v7436 = vpack.c.bf16 %v7435, %v7435
  %v7437 = vld [vmem:[%s12] sm:$0xff]
  %v7438 = vld [vmem:[%s12 + $0x8] sm:$0xff]
  %v7439 = vld [vmem:[%s12 + $0x10] sm:$0xff]
  %v7440 = vld [vmem:[%s12 + $0x18] sm:$0xff]
  %v7441 = vld [vmem:[%s12 + $0x20] sm:$0xff]
  %v7442 = vld [vmem:[%s12 + $0x28] sm:$0xff]
  %v7443 = vld [vmem:[%s12 + $0x30] sm:$0xff]
  %v7444 = vld [vmem:[%s12 + $0x38] sm:$0xff]
  %v7445 = vld [vmem:[%s12 + $0x40] sm:$0xff]
  %v7446 = vld [vmem:[%s12 + $0x48] sm:$0xff]
  %v7447 = vld [vmem:[%s12 + $0x50] sm:$0xff]
  %v7448 = vld [vmem:[%s12 + $0x58] sm:$0xff]
  %v7449 = vld [vmem:[%s12 + $0x60] sm:$0xff]
  %v7450 = vld [vmem:[%s12 + $0x68] sm:$0xff]
  %v7451 = vld [vmem:[%s12 + $0x70] sm:$0xff]
  %v7452 = vld [vmem:[%s12 + $0x78] sm:$0xff]
  %v7469 = vunpack.c.l.b16 %v7437
  %v7470 = vunpack.c.h.b16 %v7437
  %v7471 = vunpack.c.l.b16 %v7438
  %v7472 = vunpack.c.h.b16 %v7438
  %v7473 = vunpack.c.l.b16 %v7439
  %v7474 = vunpack.c.h.b16 %v7439
  %v7475 = vunpack.c.l.b16 %v7440
  %v7476 = vunpack.c.h.b16 %v7440
  %v7477 = vunpack.c.l.b16 %v7441
  %v7478 = vunpack.c.h.b16 %v7441
  %v7479 = vunpack.c.l.b16 %v7442
  %v7480 = vunpack.c.h.b16 %v7442
  %v7481 = vunpack.c.l.b16 %v7443
  %v7482 = vunpack.c.h.b16 %v7443
  %v7483 = vunpack.c.l.b16 %v7444
  %v7484 = vunpack.c.h.b16 %v7444
  %v7485 = vunpack.c.l.b16 %v7445
  %v7486 = vunpack.c.h.b16 %v7445
  %v7487 = vunpack.c.l.b16 %v7446
  %v7488 = vunpack.c.h.b16 %v7446
  %v7489 = vunpack.c.l.b16 %v7447
  %v7490 = vunpack.c.h.b16 %v7447
  %v7491 = vunpack.c.l.b16 %v7448
  %v7492 = vunpack.c.h.b16 %v7448
  %v7493 = vunpack.c.l.b16 %v7449
  %v7494 = vunpack.c.h.b16 %v7449
  %v7495 = vunpack.c.l.b16 %v7450
  %v7496 = vunpack.c.h.b16 %v7450
  %v7497 = vunpack.c.l.b16 %v7451
  %v7498 = vunpack.c.h.b16 %v7451
  %v7499 = vunpack.c.l.b16 %v7452
  %v7500 = vunpack.c.h.b16 %v7452
  %v7501 = vpack.c.b16 %v7471, %v7469
  %v7502 = vpack.c.b16 %v7472, %v7470
  %v7503 = vpack.c.b16 %v7475, %v7473
  %v7504 = vpack.c.b16 %v7476, %v7474
  %v7505 = vpack.c.b16 %v7479, %v7477
  %v7506 = vpack.c.b16 %v7480, %v7478
  %v7507 = vpack.c.b16 %v7483, %v7481
  %v7508 = vpack.c.b16 %v7484, %v7482
  %v7509 = vpack.c.b16 %v7487, %v7485
  %v7510 = vpack.c.b16 %v7488, %v7486
  %v7511 = vpack.c.b16 %v7491, %v7489
  %v7512 = vpack.c.b16 %v7492, %v7490
  %v7513 = vpack.c.b16 %v7495, %v7493
  %v7514 = vpack.c.b16 %v7496, %v7494
  %v7515 = vpack.c.b16 %v7499, %v7497
  %v7516 = vpack.c.b16 %v7500, %v7498
  %7533 = vmatpush.bf16.msra.mxu0 %v7515
  %7534 = vmatpush.bf16.msra.mxu0 %v7513
  %7535 = vmatpush.bf16.msra.mxu0 %v7511
  %7536 = vmatpush.bf16.msra.mxu0 %v7509
  %7537 = vmatpush.bf16.msra.mxu0 %v7507
  %7538 = vmatpush.bf16.msra.mxu0 %v7505
  %7539 = vmatpush.bf16.msra.mxu0 %v7503
  %7540 = vmatpush.bf16.msra.mxu0 %v7501
  %7541 = vmatmul.bf16.gmra.mxu0 %v7436
  %v7542 = vpop.f32.mrf.mxu0
  %v7543 = vadd.f32 %v2000, %v7542
  %v7544 = vpop.f32.mrf.mxu0
  %7545 = vdwg.mxu0
  %7546 = vmatpush.bf16.msra.mxu0 %v7516
  %7547 = vmatpush.bf16.msra.mxu0 %v7514
  %7548 = vmatpush.bf16.msra.mxu0 %v7512
  %7549 = vmatpush.bf16.msra.mxu0 %v7510
  %7550 = vmatpush.bf16.msra.mxu0 %v7508
  %7551 = vmatpush.bf16.msra.mxu0 %v7506
  %7552 = vmatpush.bf16.msra.mxu0 %v7504
  %7553 = vmatpush.bf16.msra.mxu0 %v7502
  %7554 = vmatmul.bf16.gmra.mxu0 %v7436
  %v7555 = vpop.f32.mrf.mxu0
  %v7556 = vadd.f32 %v2001, %v7555
  %v7557 = vpop.f32.mrf.mxu0
  %7558 = vdwg.mxu0
  %s7559 = scalar_lea.vmem %s14, 48
  %7560 = vst [vmem:[%s7559] sm:$0xff] %v7543
  %7561 = vst [vmem:[%s7559 + $0x8] sm:$0xff] %v7556
  %v7578 = vperm.slane %v6661, %v56
  %v7579 = vperm.slane %v6662, %v2129
  %v7580 = vsel %vm2131, %v7579, %v7578
  %v7581 = vperm.slane %v6677, %v56
  %v7582 = vperm.slane %v6678, %v2129
  %v7583 = vsel %vm2131, %v7582, %v7581
  %v7584 = vperm.slane %v6693, %v56
  %v7585 = vperm.slane %v6694, %v2129
  %v7586 = vsel %vm2131, %v7585, %v7584
  %v7587 = vperm.slane %v6709, %v56
  %v7588 = vperm.slane %v6710, %v2129
  %v7589 = vsel %vm2131, %v7588, %v7587
  %v7590 = vperm.slane %v6725, %v56
  %v7591 = vperm.slane %v6726, %v2129
  %v7592 = vsel %vm2131, %v7591, %v7590
  %v7593 = vperm.slane %v6741, %v56
  %v7594 = vperm.slane %v6742, %v2129
  %v7595 = vsel %vm2131, %v7594, %v7593
  %v7596 = vperm.slane %v6757, %v56
  %v7597 = vperm.slane %v6758, %v2129
  %v7598 = vsel %vm2131, %v7597, %v7596
  %v7599 = vperm.slane %v6773, %v56
  %v7600 = vperm.slane %v6774, %v2129
  %v7601 = vsel %vm2131, %v7600, %v7599
  %v7602 = vsel %vm191, %v7583, %v7580
  %v7603 = vsel %vm193, %v7586, %v7602
  %v7604 = vsel %vm195, %v7589, %v7603
  %v7605 = vsel %vm197, %v7592, %v7604
  %v7606 = vsel %vm199, %v7595, %v7605
  %v7607 = vsel %vm201, %v7598, %v7606
  %v7608 = vsel %vm203, %v7601, %v7607
  %s7610 = scalar_lea.vmem %s15, 24
  %7611 = vst.msk [vmem:[%s7610] sm:$0xff] %vm2162, %v7608
  %v7612 = vmax.f32 %v7543, %v7556
  %7613 = vmax.xlane.f32.xlu0 %v7612
  %v7614 = vpop.xlane.xlu0 %7613
  %vm7615 = vcmp.eq.f32.partialorder %v7543, %v7614
  %vm7616 = vcmp.eq.f32.partialorder %v7556, %v7614
  %v7617 = vsel %vm7615, %v56, 256
  %v7618 = vsel %vm7616, %v57, 256
  %vm7619 = vcmp.lt.s32.totalorder %v7617, %v7618
  %v7620 = vsel %vm7619, %v7617, %v7618
  %v7621 = vand.u32 %v7620, 65535
  %v7622 = vshra.s32 %v7620, 16
  %v7623 = vcvt.s32.f32 %v7621
  %v7624 = vcvt.s32.f32 %v7622
  %7625 = vmin.xlane.f32.xlu0 %v7624
  %v7626 = vpop.xlane.xlu0 %7625
  %vm7627 = vcmp.eq.f32.partialorder %v7624, %v7626
  %v7628 = vsel %vm7627, %v7623, inf
  %7629 = vmin.xlane.f32.xlu0 %v7628
  %v7630 = vpop.xlane.xlu0 %7629
  %v7631 = vcvt.f32.s32 %v7630
  %v7632 = vcvt.f32.s32 %v7626
  %v7633 = vshll.u32 %v7632, 16
  %v7634 = vadd.s32 %v7633, %v7631
  %vm7635 = vcmp.eq.s32.totalorder %v56, %v7634
  %vm7636 = vcmp.eq.s32.totalorder %v57, %v7634
  %v7637 = vsel %vm7635, 1, 0
  %v7638 = vsel %vm7636, 1, 0
  %v7639 = vcvt.s32.f32 %v7637
  %v7640 = vcvt.s32.f32 %v7638
  %v7641 = vpack.c.bf16 %v7639, %v7639
  %v7642 = vpack.c.bf16 %v7640, %v7640
  %v7643 = vld [vmem:[%s9] sm:$0xf]
  %v7644 = vld [vmem:[%s9 + $0x4] sm:$0xf]
  %v7645 = vld [vmem:[%s9 + $0x8] sm:$0xf]
  %v7646 = vld [vmem:[%s9 + $0xc] sm:$0xf]
  %v7647 = vld [vmem:[%s9 + $0x10] sm:$0xf]
  %v7648 = vld [vmem:[%s9 + $0x14] sm:$0xf]
  %v7649 = vld [vmem:[%s9 + $0x18] sm:$0xf]
  %v7650 = vld [vmem:[%s9 + $0x1c] sm:$0xf]
  %v7651 = vld [vmem:[%s9 + $0x20] sm:$0xf]
  %v7652 = vld [vmem:[%s9 + $0x24] sm:$0xf]
  %v7653 = vld [vmem:[%s9 + $0x28] sm:$0xf]
  %v7654 = vld [vmem:[%s9 + $0x2c] sm:$0xf]
  %v7655 = vld [vmem:[%s9 + $0x30] sm:$0xf]
  %v7656 = vld [vmem:[%s9 + $0x34] sm:$0xf]
  %v7657 = vld [vmem:[%s9 + $0x38] sm:$0xf]
  %v7658 = vld [vmem:[%s9 + $0x3c] sm:$0xf]
  %v7659 = vld [vmem:[%s9 + $0x40] sm:$0xf]
  %v7660 = vld [vmem:[%s9 + $0x44] sm:$0xf]
  %v7661 = vld [vmem:[%s9 + $0x48] sm:$0xf]
  %v7662 = vld [vmem:[%s9 + $0x4c] sm:$0xf]
  %v7663 = vld [vmem:[%s9 + $0x50] sm:$0xf]
  %v7664 = vld [vmem:[%s9 + $0x54] sm:$0xf]
  %v7665 = vld [vmem:[%s9 + $0x58] sm:$0xf]
  %v7666 = vld [vmem:[%s9 + $0x5c] sm:$0xf]
  %v7667 = vld [vmem:[%s9 + $0x60] sm:$0xf]
  %v7668 = vld [vmem:[%s9 + $0x64] sm:$0xf]
  %v7669 = vld [vmem:[%s9 + $0x68] sm:$0xf]
  %v7670 = vld [vmem:[%s9 + $0x6c] sm:$0xf]
  %v7671 = vld [vmem:[%s9 + $0x70] sm:$0xf]
  %v7672 = vld [vmem:[%s9 + $0x74] sm:$0xf]
  %v7673 = vld [vmem:[%s9 + $0x78] sm:$0xf]
  %v7674 = vld [vmem:[%s9 + $0x7c] sm:$0xf]
  %v7707 = vunpack.c.l.b16 %v7643
  %v7708 = vunpack.c.l.b16 %v7644
  %v7709 = vunpack.c.l.b16 %v7645
  %v7710 = vunpack.c.l.b16 %v7646
  %v7711 = vunpack.c.l.b16 %v7647
  %v7712 = vunpack.c.l.b16 %v7648
  %v7713 = vunpack.c.l.b16 %v7649
  %v7714 = vunpack.c.l.b16 %v7650
  %v7715 = vunpack.c.l.b16 %v7651
  %v7716 = vunpack.c.l.b16 %v7652
  %v7717 = vunpack.c.l.b16 %v7653
  %v7718 = vunpack.c.l.b16 %v7654
  %v7719 = vunpack.c.l.b16 %v7655
  %v7720 = vunpack.c.l.b16 %v7656
  %v7721 = vunpack.c.l.b16 %v7657
  %v7722 = vunpack.c.l.b16 %v7658
  %v7723 = vunpack.c.l.b16 %v7659
  %v7724 = vunpack.c.l.b16 %v7660
  %v7725 = vunpack.c.l.b16 %v7661
  %v7726 = vunpack.c.l.b16 %v7662
  %v7727 = vunpack.c.l.b16 %v7663
  %v7728 = vunpack.c.l.b16 %v7664
  %v7729 = vunpack.c.l.b16 %v7665
  %v7730 = vunpack.c.l.b16 %v7666
  %v7731 = vunpack.c.l.b16 %v7667
  %v7732 = vunpack.c.l.b16 %v7668
  %v7733 = vunpack.c.l.b16 %v7669
  %v7734 = vunpack.c.l.b16 %v7670
  %v7735 = vunpack.c.l.b16 %v7671
  %v7736 = vunpack.c.l.b16 %v7672
  %v7737 = vunpack.c.l.b16 %v7673
  %v7738 = vunpack.c.l.b16 %v7674
  %v7739 = vpack.c.b16 %v7708, %v7707
  %v7740 = vpack.c.b16 %v7710, %v7709
  %v7741 = vpack.c.b16 %v7712, %v7711
  %v7742 = vpack.c.b16 %v7714, %v7713
  %v7743 = vpack.c.b16 %v7716, %v7715
  %v7744 = vpack.c.b16 %v7718, %v7717
  %v7745 = vpack.c.b16 %v7720, %v7719
  %v7746 = vpack.c.b16 %v7722, %v7721
  %v7747 = vpack.c.b16 %v7724, %v7723
  %v7748 = vpack.c.b16 %v7726, %v7725
  %v7749 = vpack.c.b16 %v7728, %v7727
  %v7750 = vpack.c.b16 %v7730, %v7729
  %v7751 = vpack.c.b16 %v7732, %v7731
  %v7752 = vpack.c.b16 %v7734, %v7733
  %v7753 = vpack.c.b16 %v7736, %v7735
  %v7754 = vpack.c.b16 %v7738, %v7737
  %7771 = vmatpush.bf16.msra.mxu0 %v7746
  %7772 = vmatpush.bf16.msra.mxu0 %v7745
  %7773 = vmatpush.bf16.msra.mxu0 %v7744
  %7774 = vmatpush.bf16.msra.mxu0 %v7743
  %7775 = vmatpush.bf16.msra.mxu0 %v7742
  %7776 = vmatpush.bf16.msra.mxu0 %v7741
  %7777 = vmatpush.bf16.msra.mxu0 %v7740
  %7778 = vmatpush.bf16.msra.mxu0 %v7739
  %7779 = vmatmul.bf16.gmra.mxu0 %v7641
  %v7780 = vpop.f32.mrf.mxu0
  %v7781 = vadd.f32 0.0, %v7780
  %v7782 = vpop.f32.mrf.mxu0
  %7783 = vdwg.mxu0
  %7784 = vmatpush.bf16.msra.mxu0 %v7754
  %7785 = vmatpush.bf16.msra.mxu0 %v7753
  %7786 = vmatpush.bf16.msra.mxu0 %v7752
  %7787 = vmatpush.bf16.msra.mxu0 %v7751
  %7788 = vmatpush.bf16.msra.mxu0 %v7750
  %7789 = vmatpush.bf16.msra.mxu0 %v7749
  %7790 = vmatpush.bf16.msra.mxu0 %v7748
  %7791 = vmatpush.bf16.msra.mxu0 %v7747
  %7792 = vmatmul.bf16.gmra.mxu0 %v7642
  %v7793 = vpop.f32.mrf.mxu0
  %v7794 = vadd.f32 %v7781, %v7793
  %v7795 = vpop.f32.mrf.mxu0
  %7796 = vdwg.mxu0
  %v7797 = vpack.c.bf16 %v7794, %v7794
  %v7798 = vld [vmem:[%s5] sm:$0xff]
  %v7799 = vld [vmem:[%s5 + $0x8] sm:$0xff]
  %v7800 = vld [vmem:[%s5 + $0x10] sm:$0xff]
  %v7801 = vld [vmem:[%s5 + $0x18] sm:$0xff]
  %v7802 = vld [vmem:[%s5 + $0x20] sm:$0xff]
  %v7803 = vld [vmem:[%s5 + $0x28] sm:$0xff]
  %v7804 = vld [vmem:[%s5 + $0x30] sm:$0xff]
  %v7805 = vld [vmem:[%s5 + $0x38] sm:$0xff]
  %v7806 = vld [vmem:[%s5 + $0x40] sm:$0xff]
  %v7807 = vld [vmem:[%s5 + $0x48] sm:$0xff]
  %v7808 = vld [vmem:[%s5 + $0x50] sm:$0xff]
  %v7809 = vld [vmem:[%s5 + $0x58] sm:$0xff]
  %v7810 = vld [vmem:[%s5 + $0x60] sm:$0xff]
  %v7811 = vld [vmem:[%s5 + $0x68] sm:$0xff]
  %v7812 = vld [vmem:[%s5 + $0x70] sm:$0xff]
  %v7813 = vld [vmem:[%s5 + $0x78] sm:$0xff]
  %v7814 = vld [vmem:[%s5 + $0x80] sm:$0xff]
  %v7815 = vld [vmem:[%s5 + $0x88] sm:$0xff]
  %v7816 = vld [vmem:[%s5 + $0x90] sm:$0xff]
  %v7817 = vld [vmem:[%s5 + $0x98] sm:$0xff]
  %v7818 = vld [vmem:[%s5 + $0xa0] sm:$0xff]
  %v7819 = vld [vmem:[%s5 + $0xa8] sm:$0xff]
  %v7820 = vld [vmem:[%s5 + $0xb0] sm:$0xff]
  %v7821 = vld [vmem:[%s5 + $0xb8] sm:$0xff]
  %v7822 = vld [vmem:[%s5 + $0xc0] sm:$0xff]
  %v7823 = vld [vmem:[%s5 + $0xc8] sm:$0xff]
  %v7824 = vld [vmem:[%s5 + $0xd0] sm:$0xff]
  %v7825 = vld [vmem:[%s5 + $0xd8] sm:$0xff]
  %v7826 = vld [vmem:[%s5 + $0xe0] sm:$0xff]
  %v7827 = vld [vmem:[%s5 + $0xe8] sm:$0xff]
  %v7828 = vld [vmem:[%s5 + $0xf0] sm:$0xff]
  %v7829 = vld [vmem:[%s5 + $0xf8] sm:$0xff]
  %v7830 = vld [vmem:[%s5 + $0x100] sm:$0xff]
  %v7831 = vld [vmem:[%s5 + $0x108] sm:$0xff]
  %v7832 = vld [vmem:[%s5 + $0x110] sm:$0xff]
  %v7833 = vld [vmem:[%s5 + $0x118] sm:$0xff]
  %v7834 = vld [vmem:[%s5 + $0x120] sm:$0xff]
  %v7835 = vld [vmem:[%s5 + $0x128] sm:$0xff]
  %v7836 = vld [vmem:[%s5 + $0x130] sm:$0xff]
  %v7837 = vld [vmem:[%s5 + $0x138] sm:$0xff]
  %v7838 = vld [vmem:[%s5 + $0x140] sm:$0xff]
  %v7839 = vld [vmem:[%s5 + $0x148] sm:$0xff]
  %v7840 = vld [vmem:[%s5 + $0x150] sm:$0xff]
  %v7841 = vld [vmem:[%s5 + $0x158] sm:$0xff]
  %v7842 = vld [vmem:[%s5 + $0x160] sm:$0xff]
  %v7843 = vld [vmem:[%s5 + $0x168] sm:$0xff]
  %v7844 = vld [vmem:[%s5 + $0x170] sm:$0xff]
  %v7845 = vld [vmem:[%s5 + $0x178] sm:$0xff]
  %v7894 = vunpack.c.l.b16 %v7798
  %v7895 = vunpack.c.h.b16 %v7798
  %v7896 = vunpack.c.l.b16 %v7799
  %v7897 = vunpack.c.h.b16 %v7799
  %v7898 = vunpack.c.l.b16 %v7800
  %v7899 = vunpack.c.h.b16 %v7800
  %v7900 = vunpack.c.l.b16 %v7801
  %v7901 = vunpack.c.h.b16 %v7801
  %v7902 = vunpack.c.l.b16 %v7802
  %v7903 = vunpack.c.h.b16 %v7802
  %v7904 = vunpack.c.l.b16 %v7803
  %v7905 = vunpack.c.h.b16 %v7803
  %v7906 = vunpack.c.l.b16 %v7804
  %v7907 = vunpack.c.h.b16 %v7804
  %v7908 = vunpack.c.l.b16 %v7805
  %v7909 = vunpack.c.h.b16 %v7805
  %v7910 = vunpack.c.l.b16 %v7806
  %v7911 = vunpack.c.h.b16 %v7806
  %v7912 = vunpack.c.l.b16 %v7807
  %v7913 = vunpack.c.h.b16 %v7807
  %v7914 = vunpack.c.l.b16 %v7808
  %v7915 = vunpack.c.h.b16 %v7808
  %v7916 = vunpack.c.l.b16 %v7809
  %v7917 = vunpack.c.h.b16 %v7809
  %v7918 = vunpack.c.l.b16 %v7810
  %v7919 = vunpack.c.h.b16 %v7810
  %v7920 = vunpack.c.l.b16 %v7811
  %v7921 = vunpack.c.h.b16 %v7811
  %v7922 = vunpack.c.l.b16 %v7812
  %v7923 = vunpack.c.h.b16 %v7812
  %v7924 = vunpack.c.l.b16 %v7813
  %v7925 = vunpack.c.h.b16 %v7813
  %v7926 = vunpack.c.l.b16 %v7814
  %v7927 = vunpack.c.h.b16 %v7814
  %v7928 = vunpack.c.l.b16 %v7815
  %v7929 = vunpack.c.h.b16 %v7815
  %v7930 = vunpack.c.l.b16 %v7816
  %v7931 = vunpack.c.h.b16 %v7816
  %v7932 = vunpack.c.l.b16 %v7817
  %v7933 = vunpack.c.h.b16 %v7817
  %v7934 = vunpack.c.l.b16 %v7818
  %v7935 = vunpack.c.h.b16 %v7818
  %v7936 = vunpack.c.l.b16 %v7819
  %v7937 = vunpack.c.h.b16 %v7819
  %v7938 = vunpack.c.l.b16 %v7820
  %v7939 = vunpack.c.h.b16 %v7820
  %v7940 = vunpack.c.l.b16 %v7821
  %v7941 = vunpack.c.h.b16 %v7821
  %v7942 = vunpack.c.l.b16 %v7822
  %v7943 = vunpack.c.h.b16 %v7822
  %v7944 = vunpack.c.l.b16 %v7823
  %v7945 = vunpack.c.h.b16 %v7823
  %v7946 = vunpack.c.l.b16 %v7824
  %v7947 = vunpack.c.h.b16 %v7824
  %v7948 = vunpack.c.l.b16 %v7825
  %v7949 = vunpack.c.h.b16 %v7825
  %v7950 = vunpack.c.l.b16 %v7826
  %v7951 = vunpack.c.h.b16 %v7826
  %v7952 = vunpack.c.l.b16 %v7827
  %v7953 = vunpack.c.h.b16 %v7827
  %v7954 = vunpack.c.l.b16 %v7828
  %v7955 = vunpack.c.h.b16 %v7828
  %v7956 = vunpack.c.l.b16 %v7829
  %v7957 = vunpack.c.h.b16 %v7829
  %v7958 = vunpack.c.l.b16 %v7830
  %v7959 = vunpack.c.h.b16 %v7830
  %v7960 = vunpack.c.l.b16 %v7831
  %v7961 = vunpack.c.h.b16 %v7831
  %v7962 = vunpack.c.l.b16 %v7832
  %v7963 = vunpack.c.h.b16 %v7832
  %v7964 = vunpack.c.l.b16 %v7833
  %v7965 = vunpack.c.h.b16 %v7833
  %v7966 = vunpack.c.l.b16 %v7834
  %v7967 = vunpack.c.h.b16 %v7834
  %v7968 = vunpack.c.l.b16 %v7835
  %v7969 = vunpack.c.h.b16 %v7835
  %v7970 = vunpack.c.l.b16 %v7836
  %v7971 = vunpack.c.h.b16 %v7836
  %v7972 = vunpack.c.l.b16 %v7837
  %v7973 = vunpack.c.h.b16 %v7837
  %v7974 = vunpack.c.l.b16 %v7838
  %v7975 = vunpack.c.h.b16 %v7838
  %v7976 = vunpack.c.l.b16 %v7839
  %v7977 = vunpack.c.h.b16 %v7839
  %v7978 = vunpack.c.l.b16 %v7840
  %v7979 = vunpack.c.h.b16 %v7840
  %v7980 = vunpack.c.l.b16 %v7841
  %v7981 = vunpack.c.h.b16 %v7841
  %v7982 = vunpack.c.l.b16 %v7842
  %v7983 = vunpack.c.h.b16 %v7842
  %v7984 = vunpack.c.l.b16 %v7843
  %v7985 = vunpack.c.h.b16 %v7843
  %v7986 = vunpack.c.l.b16 %v7844
  %v7987 = vunpack.c.h.b16 %v7844
  %v7988 = vunpack.c.l.b16 %v7845
  %v7989 = vunpack.c.h.b16 %v7845
  %v7990 = vpack.c.b16 %v7900, %v7894
  %v7991 = vpack.c.b16 %v7901, %v7895
  %v7992 = vpack.c.b16 %v7902, %v7896
  %v7993 = vpack.c.b16 %v7903, %v7897
  %v7994 = vpack.c.b16 %v7904, %v7898
  %v7995 = vpack.c.b16 %v7905, %v7899
  %v7996 = vpack.c.b16 %v7912, %v7906
  %v7997 = vpack.c.b16 %v7913, %v7907
  %v7998 = vpack.c.b16 %v7914, %v7908
  %v7999 = vpack.c.b16 %v7915, %v7909
  %v8000 = vpack.c.b16 %v7916, %v7910
  %v8001 = vpack.c.b16 %v7917, %v7911
  %v8002 = vpack.c.b16 %v7924, %v7918
  %v8003 = vpack.c.b16 %v7925, %v7919
  %v8004 = vpack.c.b16 %v7926, %v7920
  %v8005 = vpack.c.b16 %v7927, %v7921
  %v8006 = vpack.c.b16 %v7928, %v7922
  %v8007 = vpack.c.b16 %v7929, %v7923
  %v8008 = vpack.c.b16 %v7936, %v7930
  %v8009 = vpack.c.b16 %v7937, %v7931
  %v8010 = vpack.c.b16 %v7938, %v7932
  %v8011 = vpack.c.b16 %v7939, %v7933
  %v8012 = vpack.c.b16 %v7940, %v7934
  %v8013 = vpack.c.b16 %v7941, %v7935
  %v8014 = vpack.c.b16 %v7948, %v7942
  %v8015 = vpack.c.b16 %v7949, %v7943
  %v8016 = vpack.c.b16 %v7950, %v7944
  %v8017 = vpack.c.b16 %v7951, %v7945
  %v8018 = vpack.c.b16 %v7952, %v7946
  %v8019 = vpack.c.b16 %v7953, %v7947
  %v8020 = vpack.c.b16 %v7960, %v7954
  %v8021 = vpack.c.b16 %v7961, %v7955
  %v8022 = vpack.c.b16 %v7962, %v7956
  %v8023 = vpack.c.b16 %v7963, %v7957
  %v8024 = vpack.c.b16 %v7964, %v7958
  %v8025 = vpack.c.b16 %v7965, %v7959
  %v8026 = vpack.c.b16 %v7972, %v7966
  %v8027 = vpack.c.b16 %v7973, %v7967
  %v8028 = vpack.c.b16 %v7974, %v7968
  %v8029 = vpack.c.b16 %v7975, %v7969
  %v8030 = vpack.c.b16 %v7976, %v7970
  %v8031 = vpack.c.b16 %v7977, %v7971
  %v8032 = vpack.c.b16 %v7984, %v7978
  %v8033 = vpack.c.b16 %v7985, %v7979
  %v8034 = vpack.c.b16 %v7986, %v7980
  %v8035 = vpack.c.b16 %v7987, %v7981
  %v8036 = vpack.c.b16 %v7988, %v7982
  %v8037 = vpack.c.b16 %v7989, %v7983
  %8086 = vmatpush.bf16.msra.mxu0 %v8032
  %8087 = vmatpush.bf16.msra.mxu0 %v8026
  %8088 = vmatpush.bf16.msra.mxu0 %v8020
  %8089 = vmatpush.bf16.msra.mxu0 %v8014
  %8090 = vmatpush.bf16.msra.mxu0 %v8008
  %8091 = vmatpush.bf16.msra.mxu0 %v8002
  %8092 = vmatpush.bf16.msra.mxu0 %v7996
  %8093 = vmatpush.bf16.msra.mxu0 %v7990
  %8094 = vmatmul.bf16.gmra.mxu0 %v7436
  %v8095 = vpop.f32.mrf.mxu0
  %v8096 = vadd.f32 %v567, %v8095
  %v8097 = vpop.f32.mrf.mxu0
  %8098 = vdwg.mxu0
  %8099 = vmatpush.bf16.msra.mxu0 %v8033
  %8100 = vmatpush.bf16.msra.mxu0 %v8027
  %8101 = vmatpush.bf16.msra.mxu0 %v8021
  %8102 = vmatpush.bf16.msra.mxu0 %v8015
  %8103 = vmatpush.bf16.msra.mxu0 %v8009
  %8104 = vmatpush.bf16.msra.mxu0 %v8003
  %8105 = vmatpush.bf16.msra.mxu0 %v7997
  %8106 = vmatpush.bf16.msra.mxu0 %v7991
  %8107 = vmatmul.bf16.gmra.mxu0 %v7436
  %v8108 = vpop.f32.mrf.mxu0
  %v8109 = vadd.f32 %v568, %v8108
  %v8110 = vpop.f32.mrf.mxu0
  %8111 = vdwg.mxu0
  %8112 = vmatpush.bf16.msra.mxu0 %v8034
  %8113 = vmatpush.bf16.msra.mxu0 %v8028
  %8114 = vmatpush.bf16.msra.mxu0 %v8022
  %8115 = vmatpush.bf16.msra.mxu0 %v8016
  %8116 = vmatpush.bf16.msra.mxu0 %v8010
  %8117 = vmatpush.bf16.msra.mxu0 %v8004
  %8118 = vmatpush.bf16.msra.mxu0 %v7998
  %8119 = vmatpush.bf16.msra.mxu0 %v7992
  %8120 = vmatmul.bf16.gmra.mxu0 %v7436
  %v8121 = vpop.f32.mrf.mxu0
  %v8122 = vadd.f32 %v569, %v8121
  %v8123 = vpop.f32.mrf.mxu0
  %8124 = vdwg.mxu0
  %8125 = vmatpush.bf16.msra.mxu0 %v8035
  %8126 = vmatpush.bf16.msra.mxu0 %v8029
  %8127 = vmatpush.bf16.msra.mxu0 %v8023
  %8128 = vmatpush.bf16.msra.mxu0 %v8017
  %8129 = vmatpush.bf16.msra.mxu0 %v8011
  %8130 = vmatpush.bf16.msra.mxu0 %v8005
  %8131 = vmatpush.bf16.msra.mxu0 %v7999
  %8132 = vmatpush.bf16.msra.mxu0 %v7993
  %8133 = vmatmul.bf16.gmra.mxu0 %v7436
  %v8134 = vpop.f32.mrf.mxu0
  %v8135 = vadd.f32 %v570, %v8134
  %v8136 = vpop.f32.mrf.mxu0
  %8137 = vdwg.mxu0
  %8138 = vmatpush.bf16.msra.mxu0 %v8036
  %8139 = vmatpush.bf16.msra.mxu0 %v8030
  %8140 = vmatpush.bf16.msra.mxu0 %v8024
  %8141 = vmatpush.bf16.msra.mxu0 %v8018
  %8142 = vmatpush.bf16.msra.mxu0 %v8012
  %8143 = vmatpush.bf16.msra.mxu0 %v8006
  %8144 = vmatpush.bf16.msra.mxu0 %v8000
  %8145 = vmatpush.bf16.msra.mxu0 %v7994
  %8146 = vmatmul.bf16.gmra.mxu0 %v7436
  %v8147 = vpop.f32.mrf.mxu0
  %v8148 = vadd.f32 %v571, %v8147
  %v8149 = vpop.f32.mrf.mxu0
  %8150 = vdwg.mxu0
  %8151 = vmatpush.bf16.msra.mxu0 %v8037
  %8152 = vmatpush.bf16.msra.mxu0 %v8031
  %8153 = vmatpush.bf16.msra.mxu0 %v8025
  %8154 = vmatpush.bf16.msra.mxu0 %v8019
  %8155 = vmatpush.bf16.msra.mxu0 %v8013
  %8156 = vmatpush.bf16.msra.mxu0 %v8007
  %8157 = vmatpush.bf16.msra.mxu0 %v8001
  %8158 = vmatpush.bf16.msra.mxu0 %v7995
  %8159 = vmatmul.bf16.gmra.mxu0 %v7436
  %v8160 = vpop.f32.mrf.mxu0
  %v8161 = vadd.f32 %v572, %v8160
  %v8162 = vpop.f32.mrf.mxu0
  %8163 = vdwg.mxu0
  %v8164 = vxor.u32 %v8109, 2147483648
  %v8165 = vmul.f32 %v8164, 1.442695
  %v8166 = vpow.pop %v8165
  %v8167 = vadd.f32 %v8166, 1.0
  %v8168 = vrcp.pop %v8167
  %v8169 = vmul.f32 %v8167, %v8168
  %v8170 = vsub.f32 1.0, %v8169
  %v8171 = vmul.f32 %v8168, %v8170
  %v8172 = vadd.f32 %v8168, %v8171
  %vm8173 = vweird.f32 %v8167
  %vm8174 = vweird.f32 %v8168
  %vm8175 = vmor %vm8173, %vm8174
  %v8176 = vsel %vm8175, %v8168, %v8172
  %v8177 = vand.u32 2147483647, %v8167
  %vm8178 = vcmp.eq.f32.partialorder %v8177, 8.507059e+37
  %v8179 = vand.u32 %v8167, 2147483648
  %v8180 = vor.u32 1.1754944e-38, %v8179
  %v8181 = vsel %vm8178, %v8180, %v8176
  %v8182 = vmul.f32 1.0, %v8181
  %v8184 = vrot.slane %v8096, 1
  %v8185 = vrot.slane %v8096, 2
  %v8186 = vrot.slane %v8096, 3
  %v8187 = vrot.slane %v8096, 4
  %v8188 = vrot.slane %v8096, 5
  %v8189 = vrot.slane %v8096, 6
  %v8190 = vrot.slane %v8096, 7
  %v8191 = vperm.slane %v8096, 0
  %v8192 = vperm.slane %v8184, 0
  %v8193 = vperm.slane %v8185, 0
  %v8194 = vperm.slane %v8186, 0
  %v8195 = vperm.slane %v8187, 0
  %v8196 = vperm.slane %v8188, 0
  %v8197 = vperm.slane %v8189, 0
  %v8198 = vperm.slane %v8190, 0
  %v8207 = vadd.f32 %v496, %v8191
  %v8208 = vadd.f32 %v497, %v8191
  %v8209 = vadd.f32 %v498, %v8192
  %v8210 = vadd.f32 %v499, %v8192
  %v8211 = vadd.f32 %v500, %v8193
  %v8212 = vadd.f32 %v501, %v8193
  %v8213 = vadd.f32 %v502, %v8194
  %v8214 = vadd.f32 %v503, %v8194
  %v8215 = vadd.f32 %v504, %v8195
  %v8216 = vadd.f32 %v505, %v8195
  %v8217 = vadd.f32 %v506, %v8196
  %v8218 = vadd.f32 %v507, %v8196
  %v8219 = vadd.f32 %v508, %v8197
  %v8220 = vadd.f32 %v509, %v8197
  %v8221 = vadd.f32 %v510, %v8198
  %v8222 = vadd.f32 %v511, %v8198
  %v8223 = vtanh.pop %v8207
  %v8224 = vtanh.pop %v8208
  %v8225 = vtanh.pop %v8209
  %v8226 = vtanh.pop %v8210
  %v8227 = vtanh.pop %v8211
  %v8228 = vtanh.pop %v8212
  %v8229 = vtanh.pop %v8213
  %v8230 = vtanh.pop %v8214
  %v8231 = vtanh.pop %v8215
  %v8232 = vtanh.pop %v8216
  %v8233 = vtanh.pop %v8217
  %v8234 = vtanh.pop %v8218
  %v8235 = vtanh.pop %v8219
  %v8236 = vtanh.pop %v8220
  %v8237 = vtanh.pop %v8221
  %v8238 = vtanh.pop %v8222
  %v8239 = vmul.f32 %v8223, %v973
  %v8240 = vmul.f32 %v8224, %v973
  %v8241 = vmul.f32 %v8225, %v973
  %v8242 = vmul.f32 %v8226, %v973
  %v8243 = vmul.f32 %v8227, %v973
  %v8244 = vmul.f32 %v8228, %v973
  %v8245 = vmul.f32 %v8229, %v973
  %v8246 = vmul.f32 %v8230, %v973
  %v8247 = vmul.f32 %v8231, %v973
  %v8248 = vmul.f32 %v8232, %v973
  %v8249 = vmul.f32 %v8233, %v973
  %v8250 = vmul.f32 %v8234, %v973
  %v8251 = vmul.f32 %v8235, %v973
  %v8252 = vmul.f32 %v8236, %v973
  %v8253 = vmul.f32 %v8237, %v973
  %v8254 = vmul.f32 %v8238, %v973
  %8255 = vadd.xlane.f32.xlu0 %v8239
  %v8256 = vpop.xlane.xlu0 %8255
  %8257 = vadd.xlane.f32.xlu0 %v8240
  %v8258 = vpop.xlane.xlu0 %8257
  %8259 = vadd.xlane.f32.xlu0 %v8241
  %v8260 = vpop.xlane.xlu0 %8259
  %8261 = vadd.xlane.f32.xlu0 %v8242
  %v8262 = vpop.xlane.xlu0 %8261
  %8263 = vadd.xlane.f32.xlu0 %v8243
  %v8264 = vpop.xlane.xlu0 %8263
  %8265 = vadd.xlane.f32.xlu0 %v8244
  %v8266 = vpop.xlane.xlu0 %8265
  %8267 = vadd.xlane.f32.xlu0 %v8245
  %v8268 = vpop.xlane.xlu0 %8267
  %8269 = vadd.xlane.f32.xlu0 %v8246
  %v8270 = vpop.xlane.xlu0 %8269
  %8271 = vadd.xlane.f32.xlu0 %v8247
  %v8272 = vpop.xlane.xlu0 %8271
  %8273 = vadd.xlane.f32.xlu0 %v8248
  %v8274 = vpop.xlane.xlu0 %8273
  %8275 = vadd.xlane.f32.xlu0 %v8249
  %v8276 = vpop.xlane.xlu0 %8275
  %8277 = vadd.xlane.f32.xlu0 %v8250
  %v8278 = vpop.xlane.xlu0 %8277
  %8279 = vadd.xlane.f32.xlu0 %v8251
  %v8280 = vpop.xlane.xlu0 %8279
  %8281 = vadd.xlane.f32.xlu0 %v8252
  %v8282 = vpop.xlane.xlu0 %8281
  %8283 = vadd.xlane.f32.xlu0 %v8253
  %v8284 = vpop.xlane.xlu0 %8283
  %8285 = vadd.xlane.f32.xlu0 %v8254
  %v8286 = vpop.xlane.xlu0 %8285
  %v8287 = vadd.f32 %v8256, %v1023
  %v8288 = vadd.f32 %v8258, %v1023
  %v8289 = vadd.f32 %v8260, %v1023
  %v8290 = vadd.f32 %v8262, %v1023
  %v8291 = vadd.f32 %v8264, %v1023
  %v8292 = vadd.f32 %v8266, %v1023
  %v8293 = vadd.f32 %v8268, %v1023
  %v8294 = vadd.f32 %v8270, %v1023
  %v8295 = vadd.f32 %v8272, %v1023
  %v8296 = vadd.f32 %v8274, %v1023
  %v8297 = vadd.f32 %v8276, %v1023
  %v8298 = vadd.f32 %v8278, %v1023
  %v8299 = vadd.f32 %v8280, %v1023
  %v8300 = vadd.f32 %v8282, %v1023
  %v8301 = vadd.f32 %v8284, %v1023
  %v8302 = vadd.f32 %v8286, %v1023
  %v8303 = vmax.f32 %v8287, %v8288
  %v8304 = vrot.slane %v8303, 4
  %v8305 = vmax.f32 %v8303, %v8304
  %v8306 = vrot.slane %v8305, 2
  %v8307 = vmax.f32 %v8305, %v8306
  %v8308 = vrot.slane %v8307, 1
  %v8309 = vmax.f32 %v8307, %v8308
  %v8310 = vmax.f32 %v8289, %v8290
  %v8311 = vrot.slane %v8310, 4
  %v8312 = vmax.f32 %v8310, %v8311
  %v8313 = vrot.slane %v8312, 2
  %v8314 = vmax.f32 %v8312, %v8313
  %v8315 = vrot.slane %v8314, 1
  %v8316 = vmax.f32 %v8314, %v8315
  %v8317 = vmax.f32 %v8291, %v8292
  %v8318 = vrot.slane %v8317, 4
  %v8319 = vmax.f32 %v8317, %v8318
  %v8320 = vrot.slane %v8319, 2
  %v8321 = vmax.f32 %v8319, %v8320
  %v8322 = vrot.slane %v8321, 1
  %v8323 = vmax.f32 %v8321, %v8322
  %v8324 = vmax.f32 %v8293, %v8294
  %v8325 = vrot.slane %v8324, 4
  %v8326 = vmax.f32 %v8324, %v8325
  %v8327 = vrot.slane %v8326, 2
  %v8328 = vmax.f32 %v8326, %v8327
  %v8329 = vrot.slane %v8328, 1
  %v8330 = vmax.f32 %v8328, %v8329
  %v8331 = vmax.f32 %v8295, %v8296
  %v8332 = vrot.slane %v8331, 4
  %v8333 = vmax.f32 %v8331, %v8332
  %v8334 = vrot.slane %v8333, 2
  %v8335 = vmax.f32 %v8333, %v8334
  %v8336 = vrot.slane %v8335, 1
  %v8337 = vmax.f32 %v8335, %v8336
  %v8338 = vmax.f32 %v8297, %v8298
  %v8339 = vrot.slane %v8338, 4
  %v8340 = vmax.f32 %v8338, %v8339
  %v8341 = vrot.slane %v8340, 2
  %v8342 = vmax.f32 %v8340, %v8341
  %v8343 = vrot.slane %v8342, 1
  %v8344 = vmax.f32 %v8342, %v8343
  %v8345 = vmax.f32 %v8299, %v8300
  %v8346 = vrot.slane %v8345, 4
  %v8347 = vmax.f32 %v8345, %v8346
  %v8348 = vrot.slane %v8347, 2
  %v8349 = vmax.f32 %v8347, %v8348
  %v8350 = vrot.slane %v8349, 1
  %v8351 = vmax.f32 %v8349, %v8350
  %v8352 = vmax.f32 %v8301, %v8302
  %v8353 = vrot.slane %v8352, 4
  %v8354 = vmax.f32 %v8352, %v8353
  %v8355 = vrot.slane %v8354, 2
  %v8356 = vmax.f32 %v8354, %v8355
  %v8357 = vrot.slane %v8356, 1
  %v8358 = vmax.f32 %v8356, %v8357
  %v8359 = vsub.f32 %v8287, %v8309
  %v8360 = vsub.f32 %v8288, %v8309
  %v8361 = vsub.f32 %v8289, %v8316
  %v8362 = vsub.f32 %v8290, %v8316
  %v8363 = vsub.f32 %v8291, %v8323
  %v8364 = vsub.f32 %v8292, %v8323
  %v8365 = vsub.f32 %v8293, %v8330
  %v8366 = vsub.f32 %v8294, %v8330
  %v8367 = vsub.f32 %v8295, %v8337
  %v8368 = vsub.f32 %v8296, %v8337
  %v8369 = vsub.f32 %v8297, %v8344
  %v8370 = vsub.f32 %v8298, %v8344
  %v8371 = vsub.f32 %v8299, %v8351
  %v8372 = vsub.f32 %v8300, %v8351
  %v8373 = vsub.f32 %v8301, %v8358
  %v8374 = vsub.f32 %v8302, %v8358
  %v8375 = vmul.f32 %v8359, 1.442695
  %v8376 = vpow.pop %v8375
  %v8377 = vmul.f32 %v8360, 1.442695
  %v8378 = vpow.pop %v8377
  %v8379 = vmul.f32 %v8361, 1.442695
  %v8380 = vpow.pop %v8379
  %v8381 = vmul.f32 %v8362, 1.442695
  %v8382 = vpow.pop %v8381
  %v8383 = vmul.f32 %v8363, 1.442695
  %v8384 = vpow.pop %v8383
  %v8385 = vmul.f32 %v8364, 1.442695
  %v8386 = vpow.pop %v8385
  %v8387 = vmul.f32 %v8365, 1.442695
  %v8388 = vpow.pop %v8387
  %v8389 = vmul.f32 %v8366, 1.442695
  %v8390 = vpow.pop %v8389
  %v8391 = vmul.f32 %v8367, 1.442695
  %v8392 = vpow.pop %v8391
  %v8393 = vmul.f32 %v8368, 1.442695
  %v8394 = vpow.pop %v8393
  %v8395 = vmul.f32 %v8369, 1.442695
  %v8396 = vpow.pop %v8395
  %v8397 = vmul.f32 %v8370, 1.442695
  %v8398 = vpow.pop %v8397
  %v8399 = vmul.f32 %v8371, 1.442695
  %v8400 = vpow.pop %v8399
  %v8401 = vmul.f32 %v8372, 1.442695
  %v8402 = vpow.pop %v8401
  %v8403 = vmul.f32 %v8373, 1.442695
  %v8404 = vpow.pop %v8403
  %v8405 = vmul.f32 %v8374, 1.442695
  %v8406 = vpow.pop %v8405
  %v8407 = vadd.f32 %v8376, %v8378
  %v8408 = vrot.slane %v8407, 4
  %v8409 = vadd.f32 %v8407, %v8408
  %v8410 = vrot.slane %v8409, 2
  %v8411 = vadd.f32 %v8409, %v8410
  %v8412 = vrot.slane %v8411, 1
  %v8413 = vadd.f32 %v8411, %v8412
  %v8414 = vadd.f32 %v8380, %v8382
  %v8415 = vrot.slane %v8414, 4
  %v8416 = vadd.f32 %v8414, %v8415
  %v8417 = vrot.slane %v8416, 2
  %v8418 = vadd.f32 %v8416, %v8417
  %v8419 = vrot.slane %v8418, 1
  %v8420 = vadd.f32 %v8418, %v8419
  %v8421 = vadd.f32 %v8384, %v8386
  %v8422 = vrot.slane %v8421, 4
  %v8423 = vadd.f32 %v8421, %v8422
  %v8424 = vrot.slane %v8423, 2
  %v8425 = vadd.f32 %v8423, %v8424
  %v8426 = vrot.slane %v8425, 1
  %v8427 = vadd.f32 %v8425, %v8426
  %v8428 = vadd.f32 %v8388, %v8390
  %v8429 = vrot.slane %v8428, 4
  %v8430 = vadd.f32 %v8428, %v8429
  %v8431 = vrot.slane %v8430, 2
  %v8432 = vadd.f32 %v8430, %v8431
  %v8433 = vrot.slane %v8432, 1
  %v8434 = vadd.f32 %v8432, %v8433
  %v8435 = vadd.f32 %v8392, %v8394
  %v8436 = vrot.slane %v8435, 4
  %v8437 = vadd.f32 %v8435, %v8436
  %v8438 = vrot.slane %v8437, 2
  %v8439 = vadd.f32 %v8437, %v8438
  %v8440 = vrot.slane %v8439, 1
  %v8441 = vadd.f32 %v8439, %v8440
  %v8442 = vadd.f32 %v8396, %v8398
  %v8443 = vrot.slane %v8442, 4
  %v8444 = vadd.f32 %v8442, %v8443
  %v8445 = vrot.slane %v8444, 2
  %v8446 = vadd.f32 %v8444, %v8445
  %v8447 = vrot.slane %v8446, 1
  %v8448 = vadd.f32 %v8446, %v8447
  %v8449 = vadd.f32 %v8400, %v8402
  %v8450 = vrot.slane %v8449, 4
  %v8451 = vadd.f32 %v8449, %v8450
  %v8452 = vrot.slane %v8451, 2
  %v8453 = vadd.f32 %v8451, %v8452
  %v8454 = vrot.slane %v8453, 1
  %v8455 = vadd.f32 %v8453, %v8454
  %v8456 = vadd.f32 %v8404, %v8406
  %v8457 = vrot.slane %v8456, 4
  %v8458 = vadd.f32 %v8456, %v8457
  %v8459 = vrot.slane %v8458, 2
  %v8460 = vadd.f32 %v8458, %v8459
  %v8461 = vrot.slane %v8460, 1
  %v8462 = vadd.f32 %v8460, %v8461
  %v8463 = vrcp.pop %v8413
  %v8464 = vmul.f32 %v8413, %v8463
  %v8465 = vsub.f32 1.0, %v8464
  %v8466 = vmul.f32 %v8463, %v8465
  %v8467 = vadd.f32 %v8463, %v8466
  %vm8468 = vweird.f32 %v8413
  %vm8469 = vweird.f32 %v8463
  %vm8470 = vmor %vm8468, %vm8469
  %v8471 = vsel %vm8470, %v8463, %v8467
  %v8472 = vand.u32 2147483647, %v8413
  %vm8473 = vcmp.eq.f32.partialorder %v8472, 8.507059e+37
  %v8474 = vand.u32 %v8413, 2147483648
  %v8475 = vor.u32 1.1754944e-38, %v8474
  %v8476 = vsel %vm8473, %v8475, %v8471
  %v8477 = vmul.f32 %v8376, %v8476
  %v8478 = vmul.f32 %v8378, %v8476
  %v8479 = vrcp.pop %v8420
  %v8480 = vmul.f32 %v8420, %v8479
  %v8481 = vsub.f32 1.0, %v8480
  %v8482 = vmul.f32 %v8479, %v8481
  %v8483 = vadd.f32 %v8479, %v8482
  %vm8484 = vweird.f32 %v8420
  %vm8485 = vweird.f32 %v8479
  %vm8486 = vmor %vm8484, %vm8485
  %v8487 = vsel %vm8486, %v8479, %v8483
  %v8488 = vand.u32 2147483647, %v8420
  %vm8489 = vcmp.eq.f32.partialorder %v8488, 8.507059e+37
  %v8490 = vand.u32 %v8420, 2147483648
  %v8491 = vor.u32 1.1754944e-38, %v8490
  %v8492 = vsel %vm8489, %v8491, %v8487
  %v8493 = vmul.f32 %v8380, %v8492
  %v8494 = vmul.f32 %v8382, %v8492
  %v8495 = vrcp.pop %v8427
  %v8496 = vmul.f32 %v8427, %v8495
  %v8497 = vsub.f32 1.0, %v8496
  %v8498 = vmul.f32 %v8495, %v8497
  %v8499 = vadd.f32 %v8495, %v8498
  %vm8500 = vweird.f32 %v8427
  %vm8501 = vweird.f32 %v8495
  %vm8502 = vmor %vm8500, %vm8501
  %v8503 = vsel %vm8502, %v8495, %v8499
  %v8504 = vand.u32 2147483647, %v8427
  %vm8505 = vcmp.eq.f32.partialorder %v8504, 8.507059e+37
  %v8506 = vand.u32 %v8427, 2147483648
  %v8507 = vor.u32 1.1754944e-38, %v8506
  %v8508 = vsel %vm8505, %v8507, %v8503
  %v8509 = vmul.f32 %v8384, %v8508
  %v8510 = vmul.f32 %v8386, %v8508
  %v8511 = vrcp.pop %v8434
  %v8512 = vmul.f32 %v8434, %v8511
  %v8513 = vsub.f32 1.0, %v8512
  %v8514 = vmul.f32 %v8511, %v8513
  %v8515 = vadd.f32 %v8511, %v8514
  %vm8516 = vweird.f32 %v8434
  %vm8517 = vweird.f32 %v8511
  %vm8518 = vmor %vm8516, %vm8517
  %v8519 = vsel %vm8518, %v8511, %v8515
  %v8520 = vand.u32 2147483647, %v8434
  %vm8521 = vcmp.eq.f32.partialorder %v8520, 8.507059e+37
  %v8522 = vand.u32 %v8434, 2147483648
  %v8523 = vor.u32 1.1754944e-38, %v8522
  %v8524 = vsel %vm8521, %v8523, %v8519
  %v8525 = vmul.f32 %v8388, %v8524
  %v8526 = vmul.f32 %v8390, %v8524
  %v8527 = vrcp.pop %v8441
  %v8528 = vmul.f32 %v8441, %v8527
  %v8529 = vsub.f32 1.0, %v8528
  %v8530 = vmul.f32 %v8527, %v8529
  %v8531 = vadd.f32 %v8527, %v8530
  %vm8532 = vweird.f32 %v8441
  %vm8533 = vweird.f32 %v8527
  %vm8534 = vmor %vm8532, %vm8533
  %v8535 = vsel %vm8534, %v8527, %v8531
  %v8536 = vand.u32 2147483647, %v8441
  %vm8537 = vcmp.eq.f32.partialorder %v8536, 8.507059e+37
  %v8538 = vand.u32 %v8441, 2147483648
  %v8539 = vor.u32 1.1754944e-38, %v8538
  %v8540 = vsel %vm8537, %v8539, %v8535
  %v8541 = vmul.f32 %v8392, %v8540
  %v8542 = vmul.f32 %v8394, %v8540
  %v8543 = vrcp.pop %v8448
  %v8544 = vmul.f32 %v8448, %v8543
  %v8545 = vsub.f32 1.0, %v8544
  %v8546 = vmul.f32 %v8543, %v8545
  %v8547 = vadd.f32 %v8543, %v8546
  %vm8548 = vweird.f32 %v8448
  %vm8549 = vweird.f32 %v8543
  %vm8550 = vmor %vm8548, %vm8549
  %v8551 = vsel %vm8550, %v8543, %v8547
  %v8552 = vand.u32 2147483647, %v8448
  %vm8553 = vcmp.eq.f32.partialorder %v8552, 8.507059e+37
  %v8554 = vand.u32 %v8448, 2147483648
  %v8555 = vor.u32 1.1754944e-38, %v8554
  %v8556 = vsel %vm8553, %v8555, %v8551
  %v8557 = vmul.f32 %v8396, %v8556
  %v8558 = vmul.f32 %v8398, %v8556
  %v8559 = vrcp.pop %v8455
  %v8560 = vmul.f32 %v8455, %v8559
  %v8561 = vsub.f32 1.0, %v8560
  %v8562 = vmul.f32 %v8559, %v8561
  %v8563 = vadd.f32 %v8559, %v8562
  %vm8564 = vweird.f32 %v8455
  %vm8565 = vweird.f32 %v8559
  %vm8566 = vmor %vm8564, %vm8565
  %v8567 = vsel %vm8566, %v8559, %v8563
  %v8568 = vand.u32 2147483647, %v8455
  %vm8569 = vcmp.eq.f32.partialorder %v8568, 8.507059e+37
  %v8570 = vand.u32 %v8455, 2147483648
  %v8571 = vor.u32 1.1754944e-38, %v8570
  %v8572 = vsel %vm8569, %v8571, %v8567
  %v8573 = vmul.f32 %v8400, %v8572
  %v8574 = vmul.f32 %v8402, %v8572
  %v8575 = vrcp.pop %v8462
  %v8576 = vmul.f32 %v8462, %v8575
  %v8577 = vsub.f32 1.0, %v8576
  %v8578 = vmul.f32 %v8575, %v8577
  %v8579 = vadd.f32 %v8575, %v8578
  %vm8580 = vweird.f32 %v8462
  %vm8581 = vweird.f32 %v8575
  %vm8582 = vmor %vm8580, %vm8581
  %v8583 = vsel %vm8582, %v8575, %v8579
  %v8584 = vand.u32 2147483647, %v8462
  %vm8585 = vcmp.eq.f32.partialorder %v8584, 8.507059e+37
  %v8586 = vand.u32 %v8462, 2147483648
  %v8587 = vor.u32 1.1754944e-38, %v8586
  %v8588 = vsel %vm8585, %v8587, %v8583
  %v8589 = vmul.f32 %v8404, %v8588
  %v8590 = vmul.f32 %v8406, %v8588
  %v8591 = vld [vmem:[%s0] sm:$0xff]
  %v8592 = vld [vmem:[%s0 + $0x8] sm:$0xff]
  %v8593 = vld [vmem:[%s0 + $0x10] sm:$0xff]
  %v8594 = vld [vmem:[%s0 + $0x18] sm:$0xff]
  %v8595 = vld [vmem:[%s0 + $0x20] sm:$0xff]
  %v8596 = vld [vmem:[%s0 + $0x28] sm:$0xff]
  %v8597 = vld [vmem:[%s0 + $0x30] sm:$0xff]
  %v8598 = vld [vmem:[%s0 + $0x38] sm:$0xff]
  %v8599 = vld [vmem:[%s0 + $0x40] sm:$0xff]
  %v8600 = vld [vmem:[%s0 + $0x48] sm:$0xff]
  %v8601 = vld [vmem:[%s0 + $0x50] sm:$0xff]
  %v8602 = vld [vmem:[%s0 + $0x58] sm:$0xff]
  %v8603 = vld [vmem:[%s0 + $0x60] sm:$0xff]
  %v8604 = vld [vmem:[%s0 + $0x68] sm:$0xff]
  %v8605 = vld [vmem:[%s0 + $0x70] sm:$0xff]
  %v8606 = vld [vmem:[%s0 + $0x78] sm:$0xff]
  %v8607 = vmul.f32 %v8591, %v8477
  %v8608 = vmul.f32 %v8592, %v8478
  %v8609 = vmul.f32 %v8593, %v8493
  %v8610 = vmul.f32 %v8594, %v8494
  %v8611 = vmul.f32 %v8595, %v8509
  %v8612 = vmul.f32 %v8596, %v8510
  %v8613 = vmul.f32 %v8597, %v8525
  %v8614 = vmul.f32 %v8598, %v8526
  %v8615 = vmul.f32 %v8599, %v8541
  %v8616 = vmul.f32 %v8600, %v8542
  %v8617 = vmul.f32 %v8601, %v8557
  %v8618 = vmul.f32 %v8602, %v8558
  %v8619 = vmul.f32 %v8603, %v8573
  %v8620 = vmul.f32 %v8604, %v8574
  %v8621 = vmul.f32 %v8605, %v8589
  %v8622 = vmul.f32 %v8606, %v8590
  %v8623 = vadd.f32 %v8607, %v8608
  %v8624 = vrot.slane %v8623, 4
  %v8625 = vadd.f32 %v8623, %v8624
  %v8626 = vrot.slane %v8625, 2
  %v8627 = vadd.f32 %v8625, %v8626
  %v8628 = vrot.slane %v8627, 1
  %v8629 = vadd.f32 %v8627, %v8628
  %v8630 = vadd.f32 %v8609, %v8610
  %v8631 = vrot.slane %v8630, 4
  %v8632 = vadd.f32 %v8630, %v8631
  %v8633 = vrot.slane %v8632, 2
  %v8634 = vadd.f32 %v8632, %v8633
  %v8635 = vrot.slane %v8634, 1
  %v8636 = vadd.f32 %v8634, %v8635
  %v8637 = vadd.f32 %v8611, %v8612
  %v8638 = vrot.slane %v8637, 4
  %v8639 = vadd.f32 %v8637, %v8638
  %v8640 = vrot.slane %v8639, 2
  %v8641 = vadd.f32 %v8639, %v8640
  %v8642 = vrot.slane %v8641, 1
  %v8643 = vadd.f32 %v8641, %v8642
  %v8644 = vadd.f32 %v8613, %v8614
  %v8645 = vrot.slane %v8644, 4
  %v8646 = vadd.f32 %v8644, %v8645
  %v8647 = vrot.slane %v8646, 2
  %v8648 = vadd.f32 %v8646, %v8647
  %v8649 = vrot.slane %v8648, 1
  %v8650 = vadd.f32 %v8648, %v8649
  %v8651 = vadd.f32 %v8615, %v8616
  %v8652 = vrot.slane %v8651, 4
  %v8653 = vadd.f32 %v8651, %v8652
  %v8654 = vrot.slane %v8653, 2
  %v8655 = vadd.f32 %v8653, %v8654
  %v8656 = vrot.slane %v8655, 1
  %v8657 = vadd.f32 %v8655, %v8656
  %v8658 = vadd.f32 %v8617, %v8618
  %v8659 = vrot.slane %v8658, 4
  %v8660 = vadd.f32 %v8658, %v8659
  %v8661 = vrot.slane %v8660, 2
  %v8662 = vadd.f32 %v8660, %v8661
  %v8663 = vrot.slane %v8662, 1
  %v8664 = vadd.f32 %v8662, %v8663
  %v8665 = vadd.f32 %v8619, %v8620
  %v8666 = vrot.slane %v8665, 4
  %v8667 = vadd.f32 %v8665, %v8666
  %v8668 = vrot.slane %v8667, 2
  %v8669 = vadd.f32 %v8667, %v8668
  %v8670 = vrot.slane %v8669, 1
  %v8671 = vadd.f32 %v8669, %v8670
  %v8672 = vadd.f32 %v8621, %v8622
  %v8673 = vrot.slane %v8672, 4
  %v8674 = vadd.f32 %v8672, %v8673
  %v8675 = vrot.slane %v8674, 2
  %v8676 = vadd.f32 %v8674, %v8675
  %v8677 = vrot.slane %v8676, 1
  %v8678 = vadd.f32 %v8676, %v8677
  %v8687 = vsel %vm191, %v8636, %v8629
  %v8688 = vsel %vm193, %v8643, %v8687
  %v8689 = vsel %vm195, %v8650, %v8688
  %v8690 = vsel %vm197, %v8657, %v8689
  %v8691 = vsel %vm199, %v8664, %v8690
  %v8692 = vsel %vm201, %v8671, %v8691
  %v8693 = vsel %vm203, %v8678, %v8692
  %v8695 = vmul.f32 %v8182, %v8693
  %v8696 = vpack.c.bf16 %v8695, %v8695
  %v8697 = vld [vmem:[%s10] sm:$0xff]
  %v8698 = vld [vmem:[%s10 + $0x8] sm:$0xff]
  %v8699 = vld [vmem:[%s10 + $0x10] sm:$0xff]
  %v8700 = vld [vmem:[%s10 + $0x18] sm:$0xff]
  %v8701 = vld [vmem:[%s10 + $0x20] sm:$0xff]
  %v8702 = vld [vmem:[%s10 + $0x28] sm:$0xff]
  %v8703 = vld [vmem:[%s10 + $0x30] sm:$0xff]
  %v8704 = vld [vmem:[%s10 + $0x38] sm:$0xff]
  %v8705 = vld [vmem:[%s10 + $0x40] sm:$0xff]
  %v8706 = vld [vmem:[%s10 + $0x48] sm:$0xff]
  %v8707 = vld [vmem:[%s10 + $0x50] sm:$0xff]
  %v8708 = vld [vmem:[%s10 + $0x58] sm:$0xff]
  %v8709 = vld [vmem:[%s10 + $0x60] sm:$0xff]
  %v8710 = vld [vmem:[%s10 + $0x68] sm:$0xff]
  %v8711 = vld [vmem:[%s10 + $0x70] sm:$0xff]
  %v8712 = vld [vmem:[%s10 + $0x78] sm:$0xff]
  %v8713 = vld [vmem:[%s10 + $0x80] sm:$0xff]
  %v8714 = vld [vmem:[%s10 + $0x88] sm:$0xff]
  %v8715 = vld [vmem:[%s10 + $0x90] sm:$0xff]
  %v8716 = vld [vmem:[%s10 + $0x98] sm:$0xff]
  %v8717 = vld [vmem:[%s10 + $0xa0] sm:$0xff]
  %v8718 = vld [vmem:[%s10 + $0xa8] sm:$0xff]
  %v8719 = vld [vmem:[%s10 + $0xb0] sm:$0xff]
  %v8720 = vld [vmem:[%s10 + $0xb8] sm:$0xff]
  %v8721 = vld [vmem:[%s10 + $0xc0] sm:$0xff]
  %v8722 = vld [vmem:[%s10 + $0xc8] sm:$0xff]
  %v8723 = vld [vmem:[%s10 + $0xd0] sm:$0xff]
  %v8724 = vld [vmem:[%s10 + $0xd8] sm:$0xff]
  %v8725 = vld [vmem:[%s10 + $0xe0] sm:$0xff]
  %v8726 = vld [vmem:[%s10 + $0xe8] sm:$0xff]
  %v8727 = vld [vmem:[%s10 + $0xf0] sm:$0xff]
  %v8728 = vld [vmem:[%s10 + $0xf8] sm:$0xff]
  %v8729 = vld [vmem:[%s10 + $0x100] sm:$0xff]
  %v8730 = vld [vmem:[%s10 + $0x108] sm:$0xff]
  %v8731 = vld [vmem:[%s10 + $0x110] sm:$0xff]
  %v8732 = vld [vmem:[%s10 + $0x118] sm:$0xff]
  %v8733 = vld [vmem:[%s10 + $0x120] sm:$0xff]
  %v8734 = vld [vmem:[%s10 + $0x128] sm:$0xff]
  %v8735 = vld [vmem:[%s10 + $0x130] sm:$0xff]
  %v8736 = vld [vmem:[%s10 + $0x138] sm:$0xff]
  %v8737 = vld [vmem:[%s10 + $0x140] sm:$0xff]
  %v8738 = vld [vmem:[%s10 + $0x148] sm:$0xff]
  %v8739 = vld [vmem:[%s10 + $0x150] sm:$0xff]
  %v8740 = vld [vmem:[%s10 + $0x158] sm:$0xff]
  %v8741 = vld [vmem:[%s10 + $0x160] sm:$0xff]
  %v8742 = vld [vmem:[%s10 + $0x168] sm:$0xff]
  %v8743 = vld [vmem:[%s10 + $0x170] sm:$0xff]
  %v8744 = vld [vmem:[%s10 + $0x178] sm:$0xff]
  %v8745 = vld [vmem:[%s10 + $0x180] sm:$0xff]
  %v8746 = vld [vmem:[%s10 + $0x188] sm:$0xff]
  %v8747 = vld [vmem:[%s10 + $0x190] sm:$0xff]
  %v8748 = vld [vmem:[%s10 + $0x198] sm:$0xff]
  %v8749 = vld [vmem:[%s10 + $0x1a0] sm:$0xff]
  %v8750 = vld [vmem:[%s10 + $0x1a8] sm:$0xff]
  %v8751 = vld [vmem:[%s10 + $0x1b0] sm:$0xff]
  %v8752 = vld [vmem:[%s10 + $0x1b8] sm:$0xff]
  %v8753 = vld [vmem:[%s10 + $0x1c0] sm:$0xff]
  %v8754 = vld [vmem:[%s10 + $0x1c8] sm:$0xff]
  %v8755 = vld [vmem:[%s10 + $0x1d0] sm:$0xff]
  %v8756 = vld [vmem:[%s10 + $0x1d8] sm:$0xff]
  %v8757 = vld [vmem:[%s10 + $0x1e0] sm:$0xff]
  %v8758 = vld [vmem:[%s10 + $0x1e8] sm:$0xff]
  %v8759 = vld [vmem:[%s10 + $0x1f0] sm:$0xff]
  %v8760 = vld [vmem:[%s10 + $0x1f8] sm:$0xff]
  %v8825 = vunpack.c.l.b16 %v8697
  %v8826 = vunpack.c.h.b16 %v8697
  %v8827 = vunpack.c.l.b16 %v8698
  %v8828 = vunpack.c.h.b16 %v8698
  %v8829 = vunpack.c.l.b16 %v8699
  %v8830 = vunpack.c.h.b16 %v8699
  %v8831 = vunpack.c.l.b16 %v8700
  %v8832 = vunpack.c.h.b16 %v8700
  %v8833 = vunpack.c.l.b16 %v8701
  %v8834 = vunpack.c.h.b16 %v8701
  %v8835 = vunpack.c.l.b16 %v8702
  %v8836 = vunpack.c.h.b16 %v8702
  %v8837 = vunpack.c.l.b16 %v8703
  %v8838 = vunpack.c.h.b16 %v8703
  %v8839 = vunpack.c.l.b16 %v8704
  %v8840 = vunpack.c.h.b16 %v8704
  %v8841 = vunpack.c.l.b16 %v8705
  %v8842 = vunpack.c.h.b16 %v8705
  %v8843 = vunpack.c.l.b16 %v8706
  %v8844 = vunpack.c.h.b16 %v8706
  %v8845 = vunpack.c.l.b16 %v8707
  %v8846 = vunpack.c.h.b16 %v8707
  %v8847 = vunpack.c.l.b16 %v8708
  %v8848 = vunpack.c.h.b16 %v8708
  %v8849 = vunpack.c.l.b16 %v8709
  %v8850 = vunpack.c.h.b16 %v8709
  %v8851 = vunpack.c.l.b16 %v8710
  %v8852 = vunpack.c.h.b16 %v8710
  %v8853 = vunpack.c.l.b16 %v8711
  %v8854 = vunpack.c.h.b16 %v8711
  %v8855 = vunpack.c.l.b16 %v8712
  %v8856 = vunpack.c.h.b16 %v8712
  %v8857 = vunpack.c.l.b16 %v8713
  %v8858 = vunpack.c.h.b16 %v8713
  %v8859 = vunpack.c.l.b16 %v8714
  %v8860 = vunpack.c.h.b16 %v8714
  %v8861 = vunpack.c.l.b16 %v8715
  %v8862 = vunpack.c.h.b16 %v8715
  %v8863 = vunpack.c.l.b16 %v8716
  %v8864 = vunpack.c.h.b16 %v8716
  %v8865 = vunpack.c.l.b16 %v8717
  %v8866 = vunpack.c.h.b16 %v8717
  %v8867 = vunpack.c.l.b16 %v8718
  %v8868 = vunpack.c.h.b16 %v8718
  %v8869 = vunpack.c.l.b16 %v8719
  %v8870 = vunpack.c.h.b16 %v8719
  %v8871 = vunpack.c.l.b16 %v8720
  %v8872 = vunpack.c.h.b16 %v8720
  %v8873 = vunpack.c.l.b16 %v8721
  %v8874 = vunpack.c.h.b16 %v8721
  %v8875 = vunpack.c.l.b16 %v8722
  %v8876 = vunpack.c.h.b16 %v8722
  %v8877 = vunpack.c.l.b16 %v8723
  %v8878 = vunpack.c.h.b16 %v8723
  %v8879 = vunpack.c.l.b16 %v8724
  %v8880 = vunpack.c.h.b16 %v8724
  %v8881 = vunpack.c.l.b16 %v8725
  %v8882 = vunpack.c.h.b16 %v8725
  %v8883 = vunpack.c.l.b16 %v8726
  %v8884 = vunpack.c.h.b16 %v8726
  %v8885 = vunpack.c.l.b16 %v8727
  %v8886 = vunpack.c.h.b16 %v8727
  %v8887 = vunpack.c.l.b16 %v8728
  %v8888 = vunpack.c.h.b16 %v8728
  %v8889 = vunpack.c.l.b16 %v8729
  %v8890 = vunpack.c.h.b16 %v8729
  %v8891 = vunpack.c.l.b16 %v8730
  %v8892 = vunpack.c.h.b16 %v8730
  %v8893 = vunpack.c.l.b16 %v8731
  %v8894 = vunpack.c.h.b16 %v8731
  %v8895 = vunpack.c.l.b16 %v8732
  %v8896 = vunpack.c.h.b16 %v8732
  %v8897 = vunpack.c.l.b16 %v8733
  %v8898 = vunpack.c.h.b16 %v8733
  %v8899 = vunpack.c.l.b16 %v8734
  %v8900 = vunpack.c.h.b16 %v8734
  %v8901 = vunpack.c.l.b16 %v8735
  %v8902 = vunpack.c.h.b16 %v8735
  %v8903 = vunpack.c.l.b16 %v8736
  %v8904 = vunpack.c.h.b16 %v8736
  %v8905 = vunpack.c.l.b16 %v8737
  %v8906 = vunpack.c.h.b16 %v8737
  %v8907 = vunpack.c.l.b16 %v8738
  %v8908 = vunpack.c.h.b16 %v8738
  %v8909 = vunpack.c.l.b16 %v8739
  %v8910 = vunpack.c.h.b16 %v8739
  %v8911 = vunpack.c.l.b16 %v8740
  %v8912 = vunpack.c.h.b16 %v8740
  %v8913 = vunpack.c.l.b16 %v8741
  %v8914 = vunpack.c.h.b16 %v8741
  %v8915 = vunpack.c.l.b16 %v8742
  %v8916 = vunpack.c.h.b16 %v8742
  %v8917 = vunpack.c.l.b16 %v8743
  %v8918 = vunpack.c.h.b16 %v8743
  %v8919 = vunpack.c.l.b16 %v8744
  %v8920 = vunpack.c.h.b16 %v8744
  %v8921 = vunpack.c.l.b16 %v8745
  %v8922 = vunpack.c.h.b16 %v8745
  %v8923 = vunpack.c.l.b16 %v8746
  %v8924 = vunpack.c.h.b16 %v8746
  %v8925 = vunpack.c.l.b16 %v8747
  %v8926 = vunpack.c.h.b16 %v8747
  %v8927 = vunpack.c.l.b16 %v8748
  %v8928 = vunpack.c.h.b16 %v8748
  %v8929 = vunpack.c.l.b16 %v8749
  %v8930 = vunpack.c.h.b16 %v8749
  %v8931 = vunpack.c.l.b16 %v8750
  %v8932 = vunpack.c.h.b16 %v8750
  %v8933 = vunpack.c.l.b16 %v8751
  %v8934 = vunpack.c.h.b16 %v8751
  %v8935 = vunpack.c.l.b16 %v8752
  %v8936 = vunpack.c.h.b16 %v8752
  %v8937 = vunpack.c.l.b16 %v8753
  %v8938 = vunpack.c.h.b16 %v8753
  %v8939 = vunpack.c.l.b16 %v8754
  %v8940 = vunpack.c.h.b16 %v8754
  %v8941 = vunpack.c.l.b16 %v8755
  %v8942 = vunpack.c.h.b16 %v8755
  %v8943 = vunpack.c.l.b16 %v8756
  %v8944 = vunpack.c.h.b16 %v8756
  %v8945 = vunpack.c.l.b16 %v8757
  %v8946 = vunpack.c.h.b16 %v8757
  %v8947 = vunpack.c.l.b16 %v8758
  %v8948 = vunpack.c.h.b16 %v8758
  %v8949 = vunpack.c.l.b16 %v8759
  %v8950 = vunpack.c.h.b16 %v8759
  %v8951 = vunpack.c.l.b16 %v8760
  %v8952 = vunpack.c.h.b16 %v8760
  %v8953 = vpack.c.b16 %v8829, %v8825
  %v8954 = vpack.c.b16 %v8830, %v8826
  %v8955 = vpack.c.b16 %v8831, %v8827
  %v8956 = vpack.c.b16 %v8832, %v8828
  %v8957 = vpack.c.b16 %v8837, %v8833
  %v8958 = vpack.c.b16 %v8838, %v8834
  %v8959 = vpack.c.b16 %v8839, %v8835
  %v8960 = vpack.c.b16 %v8840, %v8836
  %v8961 = vpack.c.b16 %v8845, %v8841
  %v8962 = vpack.c.b16 %v8846, %v8842
  %v8963 = vpack.c.b16 %v8847, %v8843
  %v8964 = vpack.c.b16 %v8848, %v8844
  %v8965 = vpack.c.b16 %v8853, %v8849
  %v8966 = vpack.c.b16 %v8854, %v8850
  %v8967 = vpack.c.b16 %v8855, %v8851
  %v8968 = vpack.c.b16 %v8856, %v8852
  %v8969 = vpack.c.b16 %v8861, %v8857
  %v8970 = vpack.c.b16 %v8862, %v8858
  %v8971 = vpack.c.b16 %v8863, %v8859
  %v8972 = vpack.c.b16 %v8864, %v8860
  %v8973 = vpack.c.b16 %v8869, %v8865
  %v8974 = vpack.c.b16 %v8870, %v8866
  %v8975 = vpack.c.b16 %v8871, %v8867
  %v8976 = vpack.c.b16 %v8872, %v8868
  %v8977 = vpack.c.b16 %v8877, %v8873
  %v8978 = vpack.c.b16 %v8878, %v8874
  %v8979 = vpack.c.b16 %v8879, %v8875
  %v8980 = vpack.c.b16 %v8880, %v8876
  %v8981 = vpack.c.b16 %v8885, %v8881
  %v8982 = vpack.c.b16 %v8886, %v8882
  %v8983 = vpack.c.b16 %v8887, %v8883
  %v8984 = vpack.c.b16 %v8888, %v8884
  %v8985 = vpack.c.b16 %v8893, %v8889
  %v8986 = vpack.c.b16 %v8894, %v8890
  %v8987 = vpack.c.b16 %v8895, %v8891
  %v8988 = vpack.c.b16 %v8896, %v8892
  %v8989 = vpack.c.b16 %v8901, %v8897
  %v8990 = vpack.c.b16 %v8902, %v8898
  %v8991 = vpack.c.b16 %v8903, %v8899
  %v8992 = vpack.c.b16 %v8904, %v8900
  %v8993 = vpack.c.b16 %v8909, %v8905
  %v8994 = vpack.c.b16 %v8910, %v8906
  %v8995 = vpack.c.b16 %v8911, %v8907
  %v8996 = vpack.c.b16 %v8912, %v8908
  %v8997 = vpack.c.b16 %v8917, %v8913
  %v8998 = vpack.c.b16 %v8918, %v8914
  %v8999 = vpack.c.b16 %v8919, %v8915
  %v9000 = vpack.c.b16 %v8920, %v8916
  %v9001 = vpack.c.b16 %v8925, %v8921
  %v9002 = vpack.c.b16 %v8926, %v8922
  %v9003 = vpack.c.b16 %v8927, %v8923
  %v9004 = vpack.c.b16 %v8928, %v8924
  %v9005 = vpack.c.b16 %v8933, %v8929
  %v9006 = vpack.c.b16 %v8934, %v8930
  %v9007 = vpack.c.b16 %v8935, %v8931
  %v9008 = vpack.c.b16 %v8936, %v8932
  %v9009 = vpack.c.b16 %v8941, %v8937
  %v9010 = vpack.c.b16 %v8942, %v8938
  %v9011 = vpack.c.b16 %v8943, %v8939
  %v9012 = vpack.c.b16 %v8944, %v8940
  %v9013 = vpack.c.b16 %v8949, %v8945
  %v9014 = vpack.c.b16 %v8950, %v8946
  %v9015 = vpack.c.b16 %v8951, %v8947
  %v9016 = vpack.c.b16 %v8952, %v8948
  %9081 = vmatpush.bf16.msra.mxu0 %v8981
  %9082 = vmatpush.bf16.msra.mxu0 %v8977
  %9083 = vmatpush.bf16.msra.mxu0 %v8973
  %9084 = vmatpush.bf16.msra.mxu0 %v8969
  %9085 = vmatpush.bf16.msra.mxu0 %v8965
  %9086 = vmatpush.bf16.msra.mxu0 %v8961
  %9087 = vmatpush.bf16.msra.mxu0 %v8957
  %9088 = vmatpush.bf16.msra.mxu0 %v8953
  %9089 = vmatmul.bf16.gmra.mxu0 %v7797
  %v9090 = vpop.f32.mrf.mxu0
  %v9091 = vadd.f32 %v1483, %v9090
  %v9092 = vpop.f32.mrf.mxu0
  %9093 = vdwg.mxu0
  %9094 = vmatpush.bf16.msra.mxu0 %v9013
  %9095 = vmatpush.bf16.msra.mxu0 %v9009
  %9096 = vmatpush.bf16.msra.mxu0 %v9005
  %9097 = vmatpush.bf16.msra.mxu0 %v9001
  %9098 = vmatpush.bf16.msra.mxu0 %v8997
  %9099 = vmatpush.bf16.msra.mxu0 %v8993
  %9100 = vmatpush.bf16.msra.mxu0 %v8989
  %9101 = vmatpush.bf16.msra.mxu0 %v8985
  %9102 = vmatmul.bf16.gmra.mxu0 %v8696
  %v9103 = vpop.f32.mrf.mxu0
  %v9104 = vadd.f32 %v9091, %v9103
  %v9105 = vpop.f32.mrf.mxu0
  %9106 = vdwg.mxu0
  %9107 = vmatpush.bf16.msra.mxu0 %v8982
  %9108 = vmatpush.bf16.msra.mxu0 %v8978
  %9109 = vmatpush.bf16.msra.mxu0 %v8974
  %9110 = vmatpush.bf16.msra.mxu0 %v8970
  %9111 = vmatpush.bf16.msra.mxu0 %v8966
  %9112 = vmatpush.bf16.msra.mxu0 %v8962
  %9113 = vmatpush.bf16.msra.mxu0 %v8958
  %9114 = vmatpush.bf16.msra.mxu0 %v8954
  %9115 = vmatmul.bf16.gmra.mxu0 %v7797
  %v9116 = vpop.f32.mrf.mxu0
  %v9117 = vadd.f32 %v1484, %v9116
  %v9118 = vpop.f32.mrf.mxu0
  %9119 = vdwg.mxu0
  %9120 = vmatpush.bf16.msra.mxu0 %v9014
  %9121 = vmatpush.bf16.msra.mxu0 %v9010
  %9122 = vmatpush.bf16.msra.mxu0 %v9006
  %9123 = vmatpush.bf16.msra.mxu0 %v9002
  %9124 = vmatpush.bf16.msra.mxu0 %v8998
  %9125 = vmatpush.bf16.msra.mxu0 %v8994
  %9126 = vmatpush.bf16.msra.mxu0 %v8990
  %9127 = vmatpush.bf16.msra.mxu0 %v8986
  %9128 = vmatmul.bf16.gmra.mxu0 %v8696
  %v9129 = vpop.f32.mrf.mxu0
  %v9130 = vadd.f32 %v9117, %v9129
  %v9131 = vpop.f32.mrf.mxu0
  %9132 = vdwg.mxu0
  %9133 = vmatpush.bf16.msra.mxu0 %v8983
  %9134 = vmatpush.bf16.msra.mxu0 %v8979
  %9135 = vmatpush.bf16.msra.mxu0 %v8975
  %9136 = vmatpush.bf16.msra.mxu0 %v8971
  %9137 = vmatpush.bf16.msra.mxu0 %v8967
  %9138 = vmatpush.bf16.msra.mxu0 %v8963
  %9139 = vmatpush.bf16.msra.mxu0 %v8959
  %9140 = vmatpush.bf16.msra.mxu0 %v8955
  %9141 = vmatmul.bf16.gmra.mxu0 %v7797
  %v9142 = vpop.f32.mrf.mxu0
  %v9143 = vadd.f32 %v1485, %v9142
  %v9144 = vpop.f32.mrf.mxu0
  %9145 = vdwg.mxu0
  %9146 = vmatpush.bf16.msra.mxu0 %v9015
  %9147 = vmatpush.bf16.msra.mxu0 %v9011
  %9148 = vmatpush.bf16.msra.mxu0 %v9007
  %9149 = vmatpush.bf16.msra.mxu0 %v9003
  %9150 = vmatpush.bf16.msra.mxu0 %v8999
  %9151 = vmatpush.bf16.msra.mxu0 %v8995
  %9152 = vmatpush.bf16.msra.mxu0 %v8991
  %9153 = vmatpush.bf16.msra.mxu0 %v8987
  %9154 = vmatmul.bf16.gmra.mxu0 %v8696
  %v9155 = vpop.f32.mrf.mxu0
  %v9156 = vadd.f32 %v9143, %v9155
  %v9157 = vpop.f32.mrf.mxu0
  %9158 = vdwg.mxu0
  %9159 = vmatpush.bf16.msra.mxu0 %v8984
  %9160 = vmatpush.bf16.msra.mxu0 %v8980
  %9161 = vmatpush.bf16.msra.mxu0 %v8976
  %9162 = vmatpush.bf16.msra.mxu0 %v8972
  %9163 = vmatpush.bf16.msra.mxu0 %v8968
  %9164 = vmatpush.bf16.msra.mxu0 %v8964
  %9165 = vmatpush.bf16.msra.mxu0 %v8960
  %9166 = vmatpush.bf16.msra.mxu0 %v8956
  %9167 = vmatmul.bf16.gmra.mxu0 %v7797
  %v9168 = vpop.f32.mrf.mxu0
  %v9169 = vadd.f32 %v1486, %v9168
  %v9170 = vpop.f32.mrf.mxu0
  %9171 = vdwg.mxu0
  %9172 = vmatpush.bf16.msra.mxu0 %v9016
  %9173 = vmatpush.bf16.msra.mxu0 %v9012
  %9174 = vmatpush.bf16.msra.mxu0 %v9008
  %9175 = vmatpush.bf16.msra.mxu0 %v9004
  %9176 = vmatpush.bf16.msra.mxu0 %v9000
  %9177 = vmatpush.bf16.msra.mxu0 %v8996
  %9178 = vmatpush.bf16.msra.mxu0 %v8992
  %9179 = vmatpush.bf16.msra.mxu0 %v8988
  %9180 = vmatmul.bf16.gmra.mxu0 %v8696
  %v9181 = vpop.f32.mrf.mxu0
  %v9182 = vadd.f32 %v9169, %v9181
  %v9183 = vpop.f32.mrf.mxu0
  %9184 = vdwg.mxu0
  %v9185 = vadd.f32 %v9104, %v8122
  %v9186 = vadd.f32 %v9130, %v8135
  %v9187 = vadd.f32 %v9156, %v8148
  %v9188 = vadd.f32 %v9182, %v8161
  %v9189 = vxor.u32 %v9185, 2147483648
  %v9190 = vmul.f32 %v9189, 1.442695
  %v9191 = vpow.pop %v9190
  %v9192 = vadd.f32 %v9191, 1.0
  %v9193 = vrcp.pop %v9192
  %v9194 = vmul.f32 %v9192, %v9193
  %v9195 = vsub.f32 1.0, %v9194
  %v9196 = vmul.f32 %v9193, %v9195
  %v9197 = vadd.f32 %v9193, %v9196
  %vm9198 = vweird.f32 %v9192
  %vm9199 = vweird.f32 %v9193
  %vm9200 = vmor %vm9198, %vm9199
  %v9201 = vsel %vm9200, %v9193, %v9197
  %v9202 = vand.u32 2147483647, %v9192
  %vm9203 = vcmp.eq.f32.partialorder %v9202, 8.507059e+37
  %v9204 = vand.u32 %v9192, 2147483648
  %v9205 = vor.u32 1.1754944e-38, %v9204
  %v9206 = vsel %vm9203, %v9205, %v9201
  %v9207 = vmul.f32 1.0, %v9206
  %v9208 = vxor.u32 %v9186, 2147483648
  %v9209 = vmul.f32 %v9208, 1.442695
  %v9210 = vpow.pop %v9209
  %v9211 = vadd.f32 %v9210, 1.0
  %v9212 = vrcp.pop %v9211
  %v9213 = vmul.f32 %v9211, %v9212
  %v9214 = vsub.f32 1.0, %v9213
  %v9215 = vmul.f32 %v9212, %v9214
  %v9216 = vadd.f32 %v9212, %v9215
  %vm9217 = vweird.f32 %v9211
  %vm9218 = vweird.f32 %v9212
  %vm9219 = vmor %vm9217, %vm9218
  %v9220 = vsel %vm9219, %v9212, %v9216
  %v9221 = vand.u32 2147483647, %v9211
  %vm9222 = vcmp.eq.f32.partialorder %v9221, 8.507059e+37
  %v9223 = vand.u32 %v9211, 2147483648
  %v9224 = vor.u32 1.1754944e-38, %v9223
  %v9225 = vsel %vm9222, %v9224, %v9220
  %v9226 = vmul.f32 1.0, %v9225
  %v9227 = vtanh.pop %v9187
  %v9228 = vxor.u32 %v9188, 2147483648
  %v9229 = vmul.f32 %v9228, 1.442695
  %v9230 = vpow.pop %v9229
  %v9231 = vadd.f32 %v9230, 1.0
  %v9232 = vrcp.pop %v9231
  %v9233 = vmul.f32 %v9231, %v9232
  %v9234 = vsub.f32 1.0, %v9233
  %v9235 = vmul.f32 %v9232, %v9234
  %v9236 = vadd.f32 %v9232, %v9235
  %vm9237 = vweird.f32 %v9231
  %vm9238 = vweird.f32 %v9232
  %vm9239 = vmor %vm9237, %vm9238
  %v9240 = vsel %vm9239, %v9232, %v9236
  %v9241 = vand.u32 2147483647, %v9231
  %vm9242 = vcmp.eq.f32.partialorder %v9241, 8.507059e+37
  %v9243 = vand.u32 %v9231, 2147483648
  %v9244 = vor.u32 1.1754944e-38, %v9243
  %v9245 = vsel %vm9242, %v9244, %v9240
  %v9246 = vmul.f32 1.0, %v9245
  %v9247 = vmul.f32 %v9226, %v7433
  %v9248 = vmul.f32 %v9207, %v9227
  %v9249 = vadd.f32 %v9247, %v9248
  %v9250 = vtanh.pop %v9249
  %v9251 = vmul.f32 %v9246, %v9250
  %v9252 = vpack.c.bf16 %v9251, %v9251
  %v9253 = vld [vmem:[%s12] sm:$0xff]
  %v9254 = vld [vmem:[%s12 + $0x8] sm:$0xff]
  %v9255 = vld [vmem:[%s12 + $0x10] sm:$0xff]
  %v9256 = vld [vmem:[%s12 + $0x18] sm:$0xff]
  %v9257 = vld [vmem:[%s12 + $0x20] sm:$0xff]
  %v9258 = vld [vmem:[%s12 + $0x28] sm:$0xff]
  %v9259 = vld [vmem:[%s12 + $0x30] sm:$0xff]
  %v9260 = vld [vmem:[%s12 + $0x38] sm:$0xff]
  %v9261 = vld [vmem:[%s12 + $0x40] sm:$0xff]
  %v9262 = vld [vmem:[%s12 + $0x48] sm:$0xff]
  %v9263 = vld [vmem:[%s12 + $0x50] sm:$0xff]
  %v9264 = vld [vmem:[%s12 + $0x58] sm:$0xff]
  %v9265 = vld [vmem:[%s12 + $0x60] sm:$0xff]
  %v9266 = vld [vmem:[%s12 + $0x68] sm:$0xff]
  %v9267 = vld [vmem:[%s12 + $0x70] sm:$0xff]
  %v9268 = vld [vmem:[%s12 + $0x78] sm:$0xff]
  %v9285 = vunpack.c.l.b16 %v9253
  %v9286 = vunpack.c.h.b16 %v9253
  %v9287 = vunpack.c.l.b16 %v9254
  %v9288 = vunpack.c.h.b16 %v9254
  %v9289 = vunpack.c.l.b16 %v9255
  %v9290 = vunpack.c.h.b16 %v9255
  %v9291 = vunpack.c.l.b16 %v9256
  %v9292 = vunpack.c.h.b16 %v9256
  %v9293 = vunpack.c.l.b16 %v9257
  %v9294 = vunpack.c.h.b16 %v9257
  %v9295 = vunpack.c.l.b16 %v9258
  %v9296 = vunpack.c.h.b16 %v9258
  %v9297 = vunpack.c.l.b16 %v9259
  %v9298 = vunpack.c.h.b16 %v9259
  %v9299 = vunpack.c.l.b16 %v9260
  %v9300 = vunpack.c.h.b16 %v9260
  %v9301 = vunpack.c.l.b16 %v9261
  %v9302 = vunpack.c.h.b16 %v9261
  %v9303 = vunpack.c.l.b16 %v9262
  %v9304 = vunpack.c.h.b16 %v9262
  %v9305 = vunpack.c.l.b16 %v9263
  %v9306 = vunpack.c.h.b16 %v9263
  %v9307 = vunpack.c.l.b16 %v9264
  %v9308 = vunpack.c.h.b16 %v9264
  %v9309 = vunpack.c.l.b16 %v9265
  %v9310 = vunpack.c.h.b16 %v9265
  %v9311 = vunpack.c.l.b16 %v9266
  %v9312 = vunpack.c.h.b16 %v9266
  %v9313 = vunpack.c.l.b16 %v9267
  %v9314 = vunpack.c.h.b16 %v9267
  %v9315 = vunpack.c.l.b16 %v9268
  %v9316 = vunpack.c.h.b16 %v9268
  %v9317 = vpack.c.b16 %v9287, %v9285
  %v9318 = vpack.c.b16 %v9288, %v9286
  %v9319 = vpack.c.b16 %v9291, %v9289
  %v9320 = vpack.c.b16 %v9292, %v9290
  %v9321 = vpack.c.b16 %v9295, %v9293
  %v9322 = vpack.c.b16 %v9296, %v9294
  %v9323 = vpack.c.b16 %v9299, %v9297
  %v9324 = vpack.c.b16 %v9300, %v9298
  %v9325 = vpack.c.b16 %v9303, %v9301
  %v9326 = vpack.c.b16 %v9304, %v9302
  %v9327 = vpack.c.b16 %v9307, %v9305
  %v9328 = vpack.c.b16 %v9308, %v9306
  %v9329 = vpack.c.b16 %v9311, %v9309
  %v9330 = vpack.c.b16 %v9312, %v9310
  %v9331 = vpack.c.b16 %v9315, %v9313
  %v9332 = vpack.c.b16 %v9316, %v9314
  %9349 = vmatpush.bf16.msra.mxu0 %v9331
  %9350 = vmatpush.bf16.msra.mxu0 %v9329
  %9351 = vmatpush.bf16.msra.mxu0 %v9327
  %9352 = vmatpush.bf16.msra.mxu0 %v9325
  %9353 = vmatpush.bf16.msra.mxu0 %v9323
  %9354 = vmatpush.bf16.msra.mxu0 %v9321
  %9355 = vmatpush.bf16.msra.mxu0 %v9319
  %9356 = vmatpush.bf16.msra.mxu0 %v9317
  %9357 = vmatmul.bf16.gmra.mxu0 %v9252
  %v9358 = vpop.f32.mrf.mxu0
  %v9359 = vadd.f32 %v2000, %v9358
  %v9360 = vpop.f32.mrf.mxu0
  %9361 = vdwg.mxu0
  %9362 = vmatpush.bf16.msra.mxu0 %v9332
  %9363 = vmatpush.bf16.msra.mxu0 %v9330
  %9364 = vmatpush.bf16.msra.mxu0 %v9328
  %9365 = vmatpush.bf16.msra.mxu0 %v9326
  %9366 = vmatpush.bf16.msra.mxu0 %v9324
  %9367 = vmatpush.bf16.msra.mxu0 %v9322
  %9368 = vmatpush.bf16.msra.mxu0 %v9320
  %9369 = vmatpush.bf16.msra.mxu0 %v9318
  %9370 = vmatmul.bf16.gmra.mxu0 %v9252
  %v9371 = vpop.f32.mrf.mxu0
  %v9372 = vadd.f32 %v2001, %v9371
  %v9373 = vpop.f32.mrf.mxu0
  %9374 = vdwg.mxu0
  %s9375 = scalar_lea.vmem %s14, 64
  %9376 = vst [vmem:[%s9375] sm:$0xff] %v9359
  %9377 = vst [vmem:[%s9375 + $0x8] sm:$0xff] %v9372
  %v9394 = vperm.slane %v8477, %v56
  %v9395 = vperm.slane %v8478, %v2129
  %v9396 = vsel %vm2131, %v9395, %v9394
  %v9397 = vperm.slane %v8493, %v56
  %v9398 = vperm.slane %v8494, %v2129
  %v9399 = vsel %vm2131, %v9398, %v9397
  %v9400 = vperm.slane %v8509, %v56
  %v9401 = vperm.slane %v8510, %v2129
  %v9402 = vsel %vm2131, %v9401, %v9400
  %v9403 = vperm.slane %v8525, %v56
  %v9404 = vperm.slane %v8526, %v2129
  %v9405 = vsel %vm2131, %v9404, %v9403
  %v9406 = vperm.slane %v8541, %v56
  %v9407 = vperm.slane %v8542, %v2129
  %v9408 = vsel %vm2131, %v9407, %v9406
  %v9409 = vperm.slane %v8557, %v56
  %v9410 = vperm.slane %v8558, %v2129
  %v9411 = vsel %vm2131, %v9410, %v9409
  %v9412 = vperm.slane %v8573, %v56
  %v9413 = vperm.slane %v8574, %v2129
  %v9414 = vsel %vm2131, %v9413, %v9412
  %v9415 = vperm.slane %v8589, %v56
  %v9416 = vperm.slane %v8590, %v2129
  %v9417 = vsel %vm2131, %v9416, %v9415
  %v9418 = vsel %vm191, %v9399, %v9396
  %v9419 = vsel %vm193, %v9402, %v9418
  %v9420 = vsel %vm195, %v9405, %v9419
  %v9421 = vsel %vm197, %v9408, %v9420
  %v9422 = vsel %vm199, %v9411, %v9421
  %v9423 = vsel %vm201, %v9414, %v9422
  %v9424 = vsel %vm203, %v9417, %v9423
  %s9426 = scalar_lea.vmem %s15, 32
  %9427 = vst.msk [vmem:[%s9426] sm:$0xff] %vm2162, %v9424
  %v9428 = vmax.f32 %v9359, %v9372
  %9429 = vmax.xlane.f32.xlu0 %v9428
  %v9430 = vpop.xlane.xlu0 %9429
  %vm9431 = vcmp.eq.f32.partialorder %v9359, %v9430
  %vm9432 = vcmp.eq.f32.partialorder %v9372, %v9430
  %v9433 = vsel %vm9431, %v56, 256
  %v9434 = vsel %vm9432, %v57, 256
  %vm9435 = vcmp.lt.s32.totalorder %v9433, %v9434
  %v9436 = vsel %vm9435, %v9433, %v9434
  %v9437 = vand.u32 %v9436, 65535
  %v9438 = vshra.s32 %v9436, 16
  %v9439 = vcvt.s32.f32 %v9437
  %v9440 = vcvt.s32.f32 %v9438
  %9441 = vmin.xlane.f32.xlu0 %v9440
  %v9442 = vpop.xlane.xlu0 %9441
  %vm9443 = vcmp.eq.f32.partialorder %v9440, %v9442
  %v9444 = vsel %vm9443, %v9439, inf
  %9445 = vmin.xlane.f32.xlu0 %v9444
  %v9446 = vpop.xlane.xlu0 %9445
  %v9447 = vcvt.f32.s32 %v9446
  %v9448 = vcvt.f32.s32 %v9442
  %v9449 = vshll.u32 %v9448, 16
  %v9450 = vadd.s32 %v9449, %v9447
  %vm9451 = vcmp.eq.s32.totalorder %v56, %v9450
  %vm9452 = vcmp.eq.s32.totalorder %v57, %v9450
  %v9453 = vsel %vm9451, 1, 0
  %v9454 = vsel %vm9452, 1, 0
  %v9455 = vcvt.s32.f32 %v9453
  %v9456 = vcvt.s32.f32 %v9454
  %v9457 = vpack.c.bf16 %v9455, %v9455
  %v9458 = vpack.c.bf16 %v9456, %v9456
  %v9459 = vld [vmem:[%s9] sm:$0xf]
  %v9460 = vld [vmem:[%s9 + $0x4] sm:$0xf]
  %v9461 = vld [vmem:[%s9 + $0x8] sm:$0xf]
  %v9462 = vld [vmem:[%s9 + $0xc] sm:$0xf]
  %v9463 = vld [vmem:[%s9 + $0x10] sm:$0xf]
  %v9464 = vld [vmem:[%s9 + $0x14] sm:$0xf]
  %v9465 = vld [vmem:[%s9 + $0x18] sm:$0xf]
  %v9466 = vld [vmem:[%s9 + $0x1c] sm:$0xf]
  %v9467 = vld [vmem:[%s9 + $0x20] sm:$0xf]
  %v9468 = vld [vmem:[%s9 + $0x24] sm:$0xf]
  %v9469 = vld [vmem:[%s9 + $0x28] sm:$0xf]
  %v9470 = vld [vmem:[%s9 + $0x2c] sm:$0xf]
  %v9471 = vld [vmem:[%s9 + $0x30] sm:$0xf]
  %v9472 = vld [vmem:[%s9 + $0x34] sm:$0xf]
  %v9473 = vld [vmem:[%s9 + $0x38] sm:$0xf]
  %v9474 = vld [vmem:[%s9 + $0x3c] sm:$0xf]
  %v9475 = vld [vmem:[%s9 + $0x40] sm:$0xf]
  %v9476 = vld [vmem:[%s9 + $0x44] sm:$0xf]
  %v9477 = vld [vmem:[%s9 + $0x48] sm:$0xf]
  %v9478 = vld [vmem:[%s9 + $0x4c] sm:$0xf]
  %v9479 = vld [vmem:[%s9 + $0x50] sm:$0xf]
  %v9480 = vld [vmem:[%s9 + $0x54] sm:$0xf]
  %v9481 = vld [vmem:[%s9 + $0x58] sm:$0xf]
  %v9482 = vld [vmem:[%s9 + $0x5c] sm:$0xf]
  %v9483 = vld [vmem:[%s9 + $0x60] sm:$0xf]
  %v9484 = vld [vmem:[%s9 + $0x64] sm:$0xf]
  %v9485 = vld [vmem:[%s9 + $0x68] sm:$0xf]
  %v9486 = vld [vmem:[%s9 + $0x6c] sm:$0xf]
  %v9487 = vld [vmem:[%s9 + $0x70] sm:$0xf]
  %v9488 = vld [vmem:[%s9 + $0x74] sm:$0xf]
  %v9489 = vld [vmem:[%s9 + $0x78] sm:$0xf]
  %v9490 = vld [vmem:[%s9 + $0x7c] sm:$0xf]
  %v9523 = vunpack.c.l.b16 %v9459
  %v9524 = vunpack.c.l.b16 %v9460
  %v9525 = vunpack.c.l.b16 %v9461
  %v9526 = vunpack.c.l.b16 %v9462
  %v9527 = vunpack.c.l.b16 %v9463
  %v9528 = vunpack.c.l.b16 %v9464
  %v9529 = vunpack.c.l.b16 %v9465
  %v9530 = vunpack.c.l.b16 %v9466
  %v9531 = vunpack.c.l.b16 %v9467
  %v9532 = vunpack.c.l.b16 %v9468
  %v9533 = vunpack.c.l.b16 %v9469
  %v9534 = vunpack.c.l.b16 %v9470
  %v9535 = vunpack.c.l.b16 %v9471
  %v9536 = vunpack.c.l.b16 %v9472
  %v9537 = vunpack.c.l.b16 %v9473
  %v9538 = vunpack.c.l.b16 %v9474
  %v9539 = vunpack.c.l.b16 %v9475
  %v9540 = vunpack.c.l.b16 %v9476
  %v9541 = vunpack.c.l.b16 %v9477
  %v9542 = vunpack.c.l.b16 %v9478
  %v9543 = vunpack.c.l.b16 %v9479
  %v9544 = vunpack.c.l.b16 %v9480
  %v9545 = vunpack.c.l.b16 %v9481
  %v9546 = vunpack.c.l.b16 %v9482
  %v9547 = vunpack.c.l.b16 %v9483
  %v9548 = vunpack.c.l.b16 %v9484
  %v9549 = vunpack.c.l.b16 %v9485
  %v9550 = vunpack.c.l.b16 %v9486
  %v9551 = vunpack.c.l.b16 %v9487
  %v9552 = vunpack.c.l.b16 %v9488
  %v9553 = vunpack.c.l.b16 %v9489
  %v9554 = vunpack.c.l.b16 %v9490
  %v9555 = vpack.c.b16 %v9524, %v9523
  %v9556 = vpack.c.b16 %v9526, %v9525
  %v9557 = vpack.c.b16 %v9528, %v9527
  %v9558 = vpack.c.b16 %v9530, %v9529
  %v9559 = vpack.c.b16 %v9532, %v9531
  %v9560 = vpack.c.b16 %v9534, %v9533
  %v9561 = vpack.c.b16 %v9536, %v9535
  %v9562 = vpack.c.b16 %v9538, %v9537
  %v9563 = vpack.c.b16 %v9540, %v9539
  %v9564 = vpack.c.b16 %v9542, %v9541
  %v9565 = vpack.c.b16 %v9544, %v9543
  %v9566 = vpack.c.b16 %v9546, %v9545
  %v9567 = vpack.c.b16 %v9548, %v9547
  %v9568 = vpack.c.b16 %v9550, %v9549
  %v9569 = vpack.c.b16 %v9552, %v9551
  %v9570 = vpack.c.b16 %v9554, %v9553
  %9587 = vmatpush.bf16.msra.mxu0 %v9562
  %9588 = vmatpush.bf16.msra.mxu0 %v9561
  %9589 = vmatpush.bf16.msra.mxu0 %v9560
  %9590 = vmatpush.bf16.msra.mxu0 %v9559
  %9591 = vmatpush.bf16.msra.mxu0 %v9558
  %9592 = vmatpush.bf16.msra.mxu0 %v9557
  %9593 = vmatpush.bf16.msra.mxu0 %v9556
  %9594 = vmatpush.bf16.msra.mxu0 %v9555
  %9595 = vmatmul.bf16.gmra.mxu0 %v9457
  %v9596 = vpop.f32.mrf.mxu0
  %v9597 = vadd.f32 0.0, %v9596
  %v9598 = vpop.f32.mrf.mxu0
  %9599 = vdwg.mxu0
  %9600 = vmatpush.bf16.msra.mxu0 %v9570
  %9601 = vmatpush.bf16.msra.mxu0 %v9569
  %9602 = vmatpush.bf16.msra.mxu0 %v9568
  %9603 = vmatpush.bf16.msra.mxu0 %v9567
  %9604 = vmatpush.bf16.msra.mxu0 %v9566
  %9605 = vmatpush.bf16.msra.mxu0 %v9565
  %9606 = vmatpush.bf16.msra.mxu0 %v9564
  %9607 = vmatpush.bf16.msra.mxu0 %v9563
  %9608 = vmatmul.bf16.gmra.mxu0 %v9458
  %v9609 = vpop.f32.mrf.mxu0
  %v9610 = vadd.f32 %v9597, %v9609
  %v9611 = vpop.f32.mrf.mxu0
  %9612 = vdwg.mxu0
  %v9613 = vpack.c.bf16 %v9610, %v9610
  %v9614 = vld [vmem:[%s5] sm:$0xff]
  %v9615 = vld [vmem:[%s5 + $0x8] sm:$0xff]
  %v9616 = vld [vmem:[%s5 + $0x10] sm:$0xff]
  %v9617 = vld [vmem:[%s5 + $0x18] sm:$0xff]
  %v9618 = vld [vmem:[%s5 + $0x20] sm:$0xff]
  %v9619 = vld [vmem:[%s5 + $0x28] sm:$0xff]
  %v9620 = vld [vmem:[%s5 + $0x30] sm:$0xff]
  %v9621 = vld [vmem:[%s5 + $0x38] sm:$0xff]
  %v9622 = vld [vmem:[%s5 + $0x40] sm:$0xff]
  %v9623 = vld [vmem:[%s5 + $0x48] sm:$0xff]
  %v9624 = vld [vmem:[%s5 + $0x50] sm:$0xff]
  %v9625 = vld [vmem:[%s5 + $0x58] sm:$0xff]
  %v9626 = vld [vmem:[%s5 + $0x60] sm:$0xff]
  %v9627 = vld [vmem:[%s5 + $0x68] sm:$0xff]
  %v9628 = vld [vmem:[%s5 + $0x70] sm:$0xff]
  %v9629 = vld [vmem:[%s5 + $0x78] sm:$0xff]
  %v9630 = vld [vmem:[%s5 + $0x80] sm:$0xff]
  %v9631 = vld [vmem:[%s5 + $0x88] sm:$0xff]
  %v9632 = vld [vmem:[%s5 + $0x90] sm:$0xff]
  %v9633 = vld [vmem:[%s5 + $0x98] sm:$0xff]
  %v9634 = vld [vmem:[%s5 + $0xa0] sm:$0xff]
  %v9635 = vld [vmem:[%s5 + $0xa8] sm:$0xff]
  %v9636 = vld [vmem:[%s5 + $0xb0] sm:$0xff]
  %v9637 = vld [vmem:[%s5 + $0xb8] sm:$0xff]
  %v9638 = vld [vmem:[%s5 + $0xc0] sm:$0xff]
  %v9639 = vld [vmem:[%s5 + $0xc8] sm:$0xff]
  %v9640 = vld [vmem:[%s5 + $0xd0] sm:$0xff]
  %v9641 = vld [vmem:[%s5 + $0xd8] sm:$0xff]
  %v9642 = vld [vmem:[%s5 + $0xe0] sm:$0xff]
  %v9643 = vld [vmem:[%s5 + $0xe8] sm:$0xff]
  %v9644 = vld [vmem:[%s5 + $0xf0] sm:$0xff]
  %v9645 = vld [vmem:[%s5 + $0xf8] sm:$0xff]
  %v9646 = vld [vmem:[%s5 + $0x100] sm:$0xff]
  %v9647 = vld [vmem:[%s5 + $0x108] sm:$0xff]
  %v9648 = vld [vmem:[%s5 + $0x110] sm:$0xff]
  %v9649 = vld [vmem:[%s5 + $0x118] sm:$0xff]
  %v9650 = vld [vmem:[%s5 + $0x120] sm:$0xff]
  %v9651 = vld [vmem:[%s5 + $0x128] sm:$0xff]
  %v9652 = vld [vmem:[%s5 + $0x130] sm:$0xff]
  %v9653 = vld [vmem:[%s5 + $0x138] sm:$0xff]
  %v9654 = vld [vmem:[%s5 + $0x140] sm:$0xff]
  %v9655 = vld [vmem:[%s5 + $0x148] sm:$0xff]
  %v9656 = vld [vmem:[%s5 + $0x150] sm:$0xff]
  %v9657 = vld [vmem:[%s5 + $0x158] sm:$0xff]
  %v9658 = vld [vmem:[%s5 + $0x160] sm:$0xff]
  %v9659 = vld [vmem:[%s5 + $0x168] sm:$0xff]
  %v9660 = vld [vmem:[%s5 + $0x170] sm:$0xff]
  %v9661 = vld [vmem:[%s5 + $0x178] sm:$0xff]
  %v9710 = vunpack.c.l.b16 %v9614
  %v9711 = vunpack.c.h.b16 %v9614
  %v9712 = vunpack.c.l.b16 %v9615
  %v9713 = vunpack.c.h.b16 %v9615
  %v9714 = vunpack.c.l.b16 %v9616
  %v9715 = vunpack.c.h.b16 %v9616
  %v9716 = vunpack.c.l.b16 %v9617
  %v9717 = vunpack.c.h.b16 %v9617
  %v9718 = vunpack.c.l.b16 %v9618
  %v9719 = vunpack.c.h.b16 %v9618
  %v9720 = vunpack.c.l.b16 %v9619
  %v9721 = vunpack.c.h.b16 %v9619
  %v9722 = vunpack.c.l.b16 %v9620
  %v9723 = vunpack.c.h.b16 %v9620
  %v9724 = vunpack.c.l.b16 %v9621
  %v9725 = vunpack.c.h.b16 %v9621
  %v9726 = vunpack.c.l.b16 %v9622
  %v9727 = vunpack.c.h.b16 %v9622
  %v9728 = vunpack.c.l.b16 %v9623
  %v9729 = vunpack.c.h.b16 %v9623
  %v9730 = vunpack.c.l.b16 %v9624
  %v9731 = vunpack.c.h.b16 %v9624
  %v9732 = vunpack.c.l.b16 %v9625
  %v9733 = vunpack.c.h.b16 %v9625
  %v9734 = vunpack.c.l.b16 %v9626
  %v9735 = vunpack.c.h.b16 %v9626
  %v9736 = vunpack.c.l.b16 %v9627
  %v9737 = vunpack.c.h.b16 %v9627
  %v9738 = vunpack.c.l.b16 %v9628
  %v9739 = vunpack.c.h.b16 %v9628
  %v9740 = vunpack.c.l.b16 %v9629
  %v9741 = vunpack.c.h.b16 %v9629
  %v9742 = vunpack.c.l.b16 %v9630
  %v9743 = vunpack.c.h.b16 %v9630
  %v9744 = vunpack.c.l.b16 %v9631
  %v9745 = vunpack.c.h.b16 %v9631
  %v9746 = vunpack.c.l.b16 %v9632
  %v9747 = vunpack.c.h.b16 %v9632
  %v9748 = vunpack.c.l.b16 %v9633
  %v9749 = vunpack.c.h.b16 %v9633
  %v9750 = vunpack.c.l.b16 %v9634
  %v9751 = vunpack.c.h.b16 %v9634
  %v9752 = vunpack.c.l.b16 %v9635
  %v9753 = vunpack.c.h.b16 %v9635
  %v9754 = vunpack.c.l.b16 %v9636
  %v9755 = vunpack.c.h.b16 %v9636
  %v9756 = vunpack.c.l.b16 %v9637
  %v9757 = vunpack.c.h.b16 %v9637
  %v9758 = vunpack.c.l.b16 %v9638
  %v9759 = vunpack.c.h.b16 %v9638
  %v9760 = vunpack.c.l.b16 %v9639
  %v9761 = vunpack.c.h.b16 %v9639
  %v9762 = vunpack.c.l.b16 %v9640
  %v9763 = vunpack.c.h.b16 %v9640
  %v9764 = vunpack.c.l.b16 %v9641
  %v9765 = vunpack.c.h.b16 %v9641
  %v9766 = vunpack.c.l.b16 %v9642
  %v9767 = vunpack.c.h.b16 %v9642
  %v9768 = vunpack.c.l.b16 %v9643
  %v9769 = vunpack.c.h.b16 %v9643
  %v9770 = vunpack.c.l.b16 %v9644
  %v9771 = vunpack.c.h.b16 %v9644
  %v9772 = vunpack.c.l.b16 %v9645
  %v9773 = vunpack.c.h.b16 %v9645
  %v9774 = vunpack.c.l.b16 %v9646
  %v9775 = vunpack.c.h.b16 %v9646
  %v9776 = vunpack.c.l.b16 %v9647
  %v9777 = vunpack.c.h.b16 %v9647
  %v9778 = vunpack.c.l.b16 %v9648
  %v9779 = vunpack.c.h.b16 %v9648
  %v9780 = vunpack.c.l.b16 %v9649
  %v9781 = vunpack.c.h.b16 %v9649
  %v9782 = vunpack.c.l.b16 %v9650
  %v9783 = vunpack.c.h.b16 %v9650
  %v9784 = vunpack.c.l.b16 %v9651
  %v9785 = vunpack.c.h.b16 %v9651
  %v9786 = vunpack.c.l.b16 %v9652
  %v9787 = vunpack.c.h.b16 %v9652
  %v9788 = vunpack.c.l.b16 %v9653
  %v9789 = vunpack.c.h.b16 %v9653
  %v9790 = vunpack.c.l.b16 %v9654
  %v9791 = vunpack.c.h.b16 %v9654
  %v9792 = vunpack.c.l.b16 %v9655
  %v9793 = vunpack.c.h.b16 %v9655
  %v9794 = vunpack.c.l.b16 %v9656
  %v9795 = vunpack.c.h.b16 %v9656
  %v9796 = vunpack.c.l.b16 %v9657
  %v9797 = vunpack.c.h.b16 %v9657
  %v9798 = vunpack.c.l.b16 %v9658
  %v9799 = vunpack.c.h.b16 %v9658
  %v9800 = vunpack.c.l.b16 %v9659
  %v9801 = vunpack.c.h.b16 %v9659
  %v9802 = vunpack.c.l.b16 %v9660
  %v9803 = vunpack.c.h.b16 %v9660
  %v9804 = vunpack.c.l.b16 %v9661
  %v9805 = vunpack.c.h.b16 %v9661
  %v9806 = vpack.c.b16 %v9716, %v9710
  %v9807 = vpack.c.b16 %v9717, %v9711
  %v9808 = vpack.c.b16 %v9718, %v9712
  %v9809 = vpack.c.b16 %v9719, %v9713
  %v9810 = vpack.c.b16 %v9720, %v9714
  %v9811 = vpack.c.b16 %v9721, %v9715
  %v9812 = vpack.c.b16 %v9728, %v9722
  %v9813 = vpack.c.b16 %v9729, %v9723
  %v9814 = vpack.c.b16 %v9730, %v9724
  %v9815 = vpack.c.b16 %v9731, %v9725
  %v9816 = vpack.c.b16 %v9732, %v9726
  %v9817 = vpack.c.b16 %v9733, %v9727
  %v9818 = vpack.c.b16 %v9740, %v9734
  %v9819 = vpack.c.b16 %v9741, %v9735
  %v9820 = vpack.c.b16 %v9742, %v9736
  %v9821 = vpack.c.b16 %v9743, %v9737
  %v9822 = vpack.c.b16 %v9744, %v9738
  %v9823 = vpack.c.b16 %v9745, %v9739
  %v9824 = vpack.c.b16 %v9752, %v9746
  %v9825 = vpack.c.b16 %v9753, %v9747
  %v9826 = vpack.c.b16 %v9754, %v9748
  %v9827 = vpack.c.b16 %v9755, %v9749
  %v9828 = vpack.c.b16 %v9756, %v9750
  %v9829 = vpack.c.b16 %v9757, %v9751
  %v9830 = vpack.c.b16 %v9764, %v9758
  %v9831 = vpack.c.b16 %v9765, %v9759
  %v9832 = vpack.c.b16 %v9766, %v9760
  %v9833 = vpack.c.b16 %v9767, %v9761
  %v9834 = vpack.c.b16 %v9768, %v9762
  %v9835 = vpack.c.b16 %v9769, %v9763
  %v9836 = vpack.c.b16 %v9776, %v9770
  %v9837 = vpack.c.b16 %v9777, %v9771
  %v9838 = vpack.c.b16 %v9778, %v9772
  %v9839 = vpack.c.b16 %v9779, %v9773
  %v9840 = vpack.c.b16 %v9780, %v9774
  %v9841 = vpack.c.b16 %v9781, %v9775
  %v9842 = vpack.c.b16 %v9788, %v9782
  %v9843 = vpack.c.b16 %v9789, %v9783
  %v9844 = vpack.c.b16 %v9790, %v9784
  %v9845 = vpack.c.b16 %v9791, %v9785
  %v9846 = vpack.c.b16 %v9792, %v9786
  %v9847 = vpack.c.b16 %v9793, %v9787
  %v9848 = vpack.c.b16 %v9800, %v9794
  %v9849 = vpack.c.b16 %v9801, %v9795
  %v9850 = vpack.c.b16 %v9802, %v9796
  %v9851 = vpack.c.b16 %v9803, %v9797
  %v9852 = vpack.c.b16 %v9804, %v9798
  %v9853 = vpack.c.b16 %v9805, %v9799
  %9902 = vmatpush.bf16.msra.mxu0 %v9848
  %9903 = vmatpush.bf16.msra.mxu0 %v9842
  %9904 = vmatpush.bf16.msra.mxu0 %v9836
  %9905 = vmatpush.bf16.msra.mxu0 %v9830
  %9906 = vmatpush.bf16.msra.mxu0 %v9824
  %9907 = vmatpush.bf16.msra.mxu0 %v9818
  %9908 = vmatpush.bf16.msra.mxu0 %v9812
  %9909 = vmatpush.bf16.msra.mxu0 %v9806
  %9910 = vmatmul.bf16.gmra.mxu0 %v9252
  %v9911 = vpop.f32.mrf.mxu0
  %v9912 = vadd.f32 %v567, %v9911
  %v9913 = vpop.f32.mrf.mxu0
  %9914 = vdwg.mxu0
  %9915 = vmatpush.bf16.msra.mxu0 %v9849
  %9916 = vmatpush.bf16.msra.mxu0 %v9843
  %9917 = vmatpush.bf16.msra.mxu0 %v9837
  %9918 = vmatpush.bf16.msra.mxu0 %v9831
  %9919 = vmatpush.bf16.msra.mxu0 %v9825
  %9920 = vmatpush.bf16.msra.mxu0 %v9819
  %9921 = vmatpush.bf16.msra.mxu0 %v9813
  %9922 = vmatpush.bf16.msra.mxu0 %v9807
  %9923 = vmatmul.bf16.gmra.mxu0 %v9252
  %v9924 = vpop.f32.mrf.mxu0
  %v9925 = vadd.f32 %v568, %v9924
  %v9926 = vpop.f32.mrf.mxu0
  %9927 = vdwg.mxu0
  %9928 = vmatpush.bf16.msra.mxu0 %v9850
  %9929 = vmatpush.bf16.msra.mxu0 %v9844
  %9930 = vmatpush.bf16.msra.mxu0 %v9838
  %9931 = vmatpush.bf16.msra.mxu0 %v9832
  %9932 = vmatpush.bf16.msra.mxu0 %v9826
  %9933 = vmatpush.bf16.msra.mxu0 %v9820
  %9934 = vmatpush.bf16.msra.mxu0 %v9814
  %9935 = vmatpush.bf16.msra.mxu0 %v9808
  %9936 = vmatmul.bf16.gmra.mxu0 %v9252
  %v9937 = vpop.f32.mrf.mxu0
  %v9938 = vadd.f32 %v569, %v9937
  %v9939 = vpop.f32.mrf.mxu0
  %9940 = vdwg.mxu0
  %9941 = vmatpush.bf16.msra.mxu0 %v9851
  %9942 = vmatpush.bf16.msra.mxu0 %v9845
  %9943 = vmatpush.bf16.msra.mxu0 %v9839
  %9944 = vmatpush.bf16.msra.mxu0 %v9833
  %9945 = vmatpush.bf16.msra.mxu0 %v9827
  %9946 = vmatpush.bf16.msra.mxu0 %v9821
  %9947 = vmatpush.bf16.msra.mxu0 %v9815
  %9948 = vmatpush.bf16.msra.mxu0 %v9809
  %9949 = vmatmul.bf16.gmra.mxu0 %v9252
  %v9950 = vpop.f32.mrf.mxu0
  %v9951 = vadd.f32 %v570, %v9950
  %v9952 = vpop.f32.mrf.mxu0
  %9953 = vdwg.mxu0
  %9954 = vmatpush.bf16.msra.mxu0 %v9852
  %9955 = vmatpush.bf16.msra.mxu0 %v9846
  %9956 = vmatpush.bf16.msra.mxu0 %v9840
  %9957 = vmatpush.bf16.msra.mxu0 %v9834
  %9958 = vmatpush.bf16.msra.mxu0 %v9828
  %9959 = vmatpush.bf16.msra.mxu0 %v9822
  %9960 = vmatpush.bf16.msra.mxu0 %v9816
  %9961 = vmatpush.bf16.msra.mxu0 %v9810
  %9962 = vmatmul.bf16.gmra.mxu0 %v9252
  %v9963 = vpop.f32.mrf.mxu0
  %v9964 = vadd.f32 %v571, %v9963
  %v9965 = vpop.f32.mrf.mxu0
  %9966 = vdwg.mxu0
  %9967 = vmatpush.bf16.msra.mxu0 %v9853
  %9968 = vmatpush.bf16.msra.mxu0 %v9847
  %9969 = vmatpush.bf16.msra.mxu0 %v9841
  %9970 = vmatpush.bf16.msra.mxu0 %v9835
  %9971 = vmatpush.bf16.msra.mxu0 %v9829
  %9972 = vmatpush.bf16.msra.mxu0 %v9823
  %9973 = vmatpush.bf16.msra.mxu0 %v9817
  %9974 = vmatpush.bf16.msra.mxu0 %v9811
  %9975 = vmatmul.bf16.gmra.mxu0 %v9252
  %v9976 = vpop.f32.mrf.mxu0
  %v9977 = vadd.f32 %v572, %v9976
  %v9978 = vpop.f32.mrf.mxu0
  %9979 = vdwg.mxu0
  %v9980 = vxor.u32 %v9925, 2147483648
  %v9981 = vmul.f32 %v9980, 1.442695
  %v9982 = vpow.pop %v9981
  %v9983 = vadd.f32 %v9982, 1.0
  %v9984 = vrcp.pop %v9983
  %v9985 = vmul.f32 %v9983, %v9984
  %v9986 = vsub.f32 1.0, %v9985
  %v9987 = vmul.f32 %v9984, %v9986
  %v9988 = vadd.f32 %v9984, %v9987
  %vm9989 = vweird.f32 %v9983
  %vm9990 = vweird.f32 %v9984
  %vm9991 = vmor %vm9989, %vm9990
  %v9992 = vsel %vm9991, %v9984, %v9988
  %v9993 = vand.u32 2147483647, %v9983
  %vm9994 = vcmp.eq.f32.partialorder %v9993, 8.507059e+37
  %v9995 = vand.u32 %v9983, 2147483648
  %v9996 = vor.u32 1.1754944e-38, %v9995
  %v9997 = vsel %vm9994, %v9996, %v9992
  %v9998 = vmul.f32 1.0, %v9997
  %v10000 = vrot.slane %v9912, 1
  %v10001 = vrot.slane %v9912, 2
  %v10002 = vrot.slane %v9912, 3
  %v10003 = vrot.slane %v9912, 4
  %v10004 = vrot.slane %v9912, 5
  %v10005 = vrot.slane %v9912, 6
  %v10006 = vrot.slane %v9912, 7
  %v10007 = vperm.slane %v9912, 0
  %v10008 = vperm.slane %v10000, 0
  %v10009 = vperm.slane %v10001, 0
  %v10010 = vperm.slane %v10002, 0
  %v10011 = vperm.slane %v10003, 0
  %v10012 = vperm.slane %v10004, 0
  %v10013 = vperm.slane %v10005, 0
  %v10014 = vperm.slane %v10006, 0
  %v10023 = vadd.f32 %v496, %v10007
  %v10024 = vadd.f32 %v497, %v10007
  %v10025 = vadd.f32 %v498, %v10008
  %v10026 = vadd.f32 %v499, %v10008
  %v10027 = vadd.f32 %v500, %v10009
  %v10028 = vadd.f32 %v501, %v10009
  %v10029 = vadd.f32 %v502, %v10010
  %v10030 = vadd.f32 %v503, %v10010
  %v10031 = vadd.f32 %v504, %v10011
  %v10032 = vadd.f32 %v505, %v10011
  %v10033 = vadd.f32 %v506, %v10012
  %v10034 = vadd.f32 %v507, %v10012
  %v10035 = vadd.f32 %v508, %v10013
  %v10036 = vadd.f32 %v509, %v10013
  %v10037 = vadd.f32 %v510, %v10014
  %v10038 = vadd.f32 %v511, %v10014
  %v10039 = vtanh.pop %v10023
  %v10040 = vtanh.pop %v10024
  %v10041 = vtanh.pop %v10025
  %v10042 = vtanh.pop %v10026
  %v10043 = vtanh.pop %v10027
  %v10044 = vtanh.pop %v10028
  %v10045 = vtanh.pop %v10029
  %v10046 = vtanh.pop %v10030
  %v10047 = vtanh.pop %v10031
  %v10048 = vtanh.pop %v10032
  %v10049 = vtanh.pop %v10033
  %v10050 = vtanh.pop %v10034
  %v10051 = vtanh.pop %v10035
  %v10052 = vtanh.pop %v10036
  %v10053 = vtanh.pop %v10037
  %v10054 = vtanh.pop %v10038
  %v10055 = vmul.f32 %v10039, %v973
  %v10056 = vmul.f32 %v10040, %v973
  %v10057 = vmul.f32 %v10041, %v973
  %v10058 = vmul.f32 %v10042, %v973
  %v10059 = vmul.f32 %v10043, %v973
  %v10060 = vmul.f32 %v10044, %v973
  %v10061 = vmul.f32 %v10045, %v973
  %v10062 = vmul.f32 %v10046, %v973
  %v10063 = vmul.f32 %v10047, %v973
  %v10064 = vmul.f32 %v10048, %v973
  %v10065 = vmul.f32 %v10049, %v973
  %v10066 = vmul.f32 %v10050, %v973
  %v10067 = vmul.f32 %v10051, %v973
  %v10068 = vmul.f32 %v10052, %v973
  %v10069 = vmul.f32 %v10053, %v973
  %v10070 = vmul.f32 %v10054, %v973
  %10071 = vadd.xlane.f32.xlu0 %v10055
  %v10072 = vpop.xlane.xlu0 %10071
  %10073 = vadd.xlane.f32.xlu0 %v10056
  %v10074 = vpop.xlane.xlu0 %10073
  %10075 = vadd.xlane.f32.xlu0 %v10057
  %v10076 = vpop.xlane.xlu0 %10075
  %10077 = vadd.xlane.f32.xlu0 %v10058
  %v10078 = vpop.xlane.xlu0 %10077
  %10079 = vadd.xlane.f32.xlu0 %v10059
  %v10080 = vpop.xlane.xlu0 %10079
  %10081 = vadd.xlane.f32.xlu0 %v10060
  %v10082 = vpop.xlane.xlu0 %10081
  %10083 = vadd.xlane.f32.xlu0 %v10061
  %v10084 = vpop.xlane.xlu0 %10083
  %10085 = vadd.xlane.f32.xlu0 %v10062
  %v10086 = vpop.xlane.xlu0 %10085
  %10087 = vadd.xlane.f32.xlu0 %v10063
  %v10088 = vpop.xlane.xlu0 %10087
  %10089 = vadd.xlane.f32.xlu0 %v10064
  %v10090 = vpop.xlane.xlu0 %10089
  %10091 = vadd.xlane.f32.xlu0 %v10065
  %v10092 = vpop.xlane.xlu0 %10091
  %10093 = vadd.xlane.f32.xlu0 %v10066
  %v10094 = vpop.xlane.xlu0 %10093
  %10095 = vadd.xlane.f32.xlu0 %v10067
  %v10096 = vpop.xlane.xlu0 %10095
  %10097 = vadd.xlane.f32.xlu0 %v10068
  %v10098 = vpop.xlane.xlu0 %10097
  %10099 = vadd.xlane.f32.xlu0 %v10069
  %v10100 = vpop.xlane.xlu0 %10099
  %10101 = vadd.xlane.f32.xlu0 %v10070
  %v10102 = vpop.xlane.xlu0 %10101
  %v10103 = vadd.f32 %v10072, %v1023
  %v10104 = vadd.f32 %v10074, %v1023
  %v10105 = vadd.f32 %v10076, %v1023
  %v10106 = vadd.f32 %v10078, %v1023
  %v10107 = vadd.f32 %v10080, %v1023
  %v10108 = vadd.f32 %v10082, %v1023
  %v10109 = vadd.f32 %v10084, %v1023
  %v10110 = vadd.f32 %v10086, %v1023
  %v10111 = vadd.f32 %v10088, %v1023
  %v10112 = vadd.f32 %v10090, %v1023
  %v10113 = vadd.f32 %v10092, %v1023
  %v10114 = vadd.f32 %v10094, %v1023
  %v10115 = vadd.f32 %v10096, %v1023
  %v10116 = vadd.f32 %v10098, %v1023
  %v10117 = vadd.f32 %v10100, %v1023
  %v10118 = vadd.f32 %v10102, %v1023
  %v10119 = vmax.f32 %v10103, %v10104
  %v10120 = vrot.slane %v10119, 4
  %v10121 = vmax.f32 %v10119, %v10120
  %v10122 = vrot.slane %v10121, 2
  %v10123 = vmax.f32 %v10121, %v10122
  %v10124 = vrot.slane %v10123, 1
  %v10125 = vmax.f32 %v10123, %v10124
  %v10126 = vmax.f32 %v10105, %v10106
  %v10127 = vrot.slane %v10126, 4
  %v10128 = vmax.f32 %v10126, %v10127
  %v10129 = vrot.slane %v10128, 2
  %v10130 = vmax.f32 %v10128, %v10129
  %v10131 = vrot.slane %v10130, 1
  %v10132 = vmax.f32 %v10130, %v10131
  %v10133 = vmax.f32 %v10107, %v10108
  %v10134 = vrot.slane %v10133, 4
  %v10135 = vmax.f32 %v10133, %v10134
  %v10136 = vrot.slane %v10135, 2
  %v10137 = vmax.f32 %v10135, %v10136
  %v10138 = vrot.slane %v10137, 1
  %v10139 = vmax.f32 %v10137, %v10138
  %v10140 = vmax.f32 %v10109, %v10110
  %v10141 = vrot.slane %v10140, 4
  %v10142 = vmax.f32 %v10140, %v10141
  %v10143 = vrot.slane %v10142, 2
  %v10144 = vmax.f32 %v10142, %v10143
  %v10145 = vrot.slane %v10144, 1
  %v10146 = vmax.f32 %v10144, %v10145
  %v10147 = vmax.f32 %v10111, %v10112
  %v10148 = vrot.slane %v10147, 4
  %v10149 = vmax.f32 %v10147, %v10148
  %v10150 = vrot.slane %v10149, 2
  %v10151 = vmax.f32 %v10149, %v10150
  %v10152 = vrot.slane %v10151, 1
  %v10153 = vmax.f32 %v10151, %v10152
  %v10154 = vmax.f32 %v10113, %v10114
  %v10155 = vrot.slane %v10154, 4
  %v10156 = vmax.f32 %v10154, %v10155
  %v10157 = vrot.slane %v10156, 2
  %v10158 = vmax.f32 %v10156, %v10157
  %v10159 = vrot.slane %v10158, 1
  %v10160 = vmax.f32 %v10158, %v10159
  %v10161 = vmax.f32 %v10115, %v10116
  %v10162 = vrot.slane %v10161, 4
  %v10163 = vmax.f32 %v10161, %v10162
  %v10164 = vrot.slane %v10163, 2
  %v10165 = vmax.f32 %v10163, %v10164
  %v10166 = vrot.slane %v10165, 1
  %v10167 = vmax.f32 %v10165, %v10166
  %v10168 = vmax.f32 %v10117, %v10118
  %v10169 = vrot.slane %v10168, 4
  %v10170 = vmax.f32 %v10168, %v10169
  %v10171 = vrot.slane %v10170, 2
  %v10172 = vmax.f32 %v10170, %v10171
  %v10173 = vrot.slane %v10172, 1
  %v10174 = vmax.f32 %v10172, %v10173
  %v10175 = vsub.f32 %v10103, %v10125
  %v10176 = vsub.f32 %v10104, %v10125
  %v10177 = vsub.f32 %v10105, %v10132
  %v10178 = vsub.f32 %v10106, %v10132
  %v10179 = vsub.f32 %v10107, %v10139
  %v10180 = vsub.f32 %v10108, %v10139
  %v10181 = vsub.f32 %v10109, %v10146
  %v10182 = vsub.f32 %v10110, %v10146
  %v10183 = vsub.f32 %v10111, %v10153
  %v10184 = vsub.f32 %v10112, %v10153
  %v10185 = vsub.f32 %v10113, %v10160
  %v10186 = vsub.f32 %v10114, %v10160
  %v10187 = vsub.f32 %v10115, %v10167
  %v10188 = vsub.f32 %v10116, %v10167
  %v10189 = vsub.f32 %v10117, %v10174
  %v10190 = vsub.f32 %v10118, %v10174
  %v10191 = vmul.f32 %v10175, 1.442695
  %v10192 = vpow.pop %v10191
  %v10193 = vmul.f32 %v10176, 1.442695
  %v10194 = vpow.pop %v10193
  %v10195 = vmul.f32 %v10177, 1.442695
  %v10196 = vpow.pop %v10195
  %v10197 = vmul.f32 %v10178, 1.442695
  %v10198 = vpow.pop %v10197
  %v10199 = vmul.f32 %v10179, 1.442695
  %v10200 = vpow.pop %v10199
  %v10201 = vmul.f32 %v10180, 1.442695
  %v10202 = vpow.pop %v10201
  %v10203 = vmul.f32 %v10181, 1.442695
  %v10204 = vpow.pop %v10203
  %v10205 = vmul.f32 %v10182, 1.442695
  %v10206 = vpow.pop %v10205
  %v10207 = vmul.f32 %v10183, 1.442695
  %v10208 = vpow.pop %v10207
  %v10209 = vmul.f32 %v10184, 1.442695
  %v10210 = vpow.pop %v10209
  %v10211 = vmul.f32 %v10185, 1.442695
  %v10212 = vpow.pop %v10211
  %v10213 = vmul.f32 %v10186, 1.442695
  %v10214 = vpow.pop %v10213
  %v10215 = vmul.f32 %v10187, 1.442695
  %v10216 = vpow.pop %v10215
  %v10217 = vmul.f32 %v10188, 1.442695
  %v10218 = vpow.pop %v10217
  %v10219 = vmul.f32 %v10189, 1.442695
  %v10220 = vpow.pop %v10219
  %v10221 = vmul.f32 %v10190, 1.442695
  %v10222 = vpow.pop %v10221
  %v10223 = vadd.f32 %v10192, %v10194
  %v10224 = vrot.slane %v10223, 4
  %v10225 = vadd.f32 %v10223, %v10224
  %v10226 = vrot.slane %v10225, 2
  %v10227 = vadd.f32 %v10225, %v10226
  %v10228 = vrot.slane %v10227, 1
  %v10229 = vadd.f32 %v10227, %v10228
  %v10230 = vadd.f32 %v10196, %v10198
  %v10231 = vrot.slane %v10230, 4
  %v10232 = vadd.f32 %v10230, %v10231
  %v10233 = vrot.slane %v10232, 2
  %v10234 = vadd.f32 %v10232, %v10233
  %v10235 = vrot.slane %v10234, 1
  %v10236 = vadd.f32 %v10234, %v10235
  %v10237 = vadd.f32 %v10200, %v10202
  %v10238 = vrot.slane %v10237, 4
  %v10239 = vadd.f32 %v10237, %v10238
  %v10240 = vrot.slane %v10239, 2
  %v10241 = vadd.f32 %v10239, %v10240
  %v10242 = vrot.slane %v10241, 1
  %v10243 = vadd.f32 %v10241, %v10242
  %v10244 = vadd.f32 %v10204, %v10206
  %v10245 = vrot.slane %v10244, 4
  %v10246 = vadd.f32 %v10244, %v10245
  %v10247 = vrot.slane %v10246, 2
  %v10248 = vadd.f32 %v10246, %v10247
  %v10249 = vrot.slane %v10248, 1
  %v10250 = vadd.f32 %v10248, %v10249
  %v10251 = vadd.f32 %v10208, %v10210
  %v10252 = vrot.slane %v10251, 4
  %v10253 = vadd.f32 %v10251, %v10252
  %v10254 = vrot.slane %v10253, 2
  %v10255 = vadd.f32 %v10253, %v10254
  %v10256 = vrot.slane %v10255, 1
  %v10257 = vadd.f32 %v10255, %v10256
  %v10258 = vadd.f32 %v10212, %v10214
  %v10259 = vrot.slane %v10258, 4
  %v10260 = vadd.f32 %v10258, %v10259
  %v10261 = vrot.slane %v10260, 2
  %v10262 = vadd.f32 %v10260, %v10261
  %v10263 = vrot.slane %v10262, 1
  %v10264 = vadd.f32 %v10262, %v10263
  %v10265 = vadd.f32 %v10216, %v10218
  %v10266 = vrot.slane %v10265, 4
  %v10267 = vadd.f32 %v10265, %v10266
  %v10268 = vrot.slane %v10267, 2
  %v10269 = vadd.f32 %v10267, %v10268
  %v10270 = vrot.slane %v10269, 1
  %v10271 = vadd.f32 %v10269, %v10270
  %v10272 = vadd.f32 %v10220, %v10222
  %v10273 = vrot.slane %v10272, 4
  %v10274 = vadd.f32 %v10272, %v10273
  %v10275 = vrot.slane %v10274, 2
  %v10276 = vadd.f32 %v10274, %v10275
  %v10277 = vrot.slane %v10276, 1
  %v10278 = vadd.f32 %v10276, %v10277
  %v10279 = vrcp.pop %v10229
  %v10280 = vmul.f32 %v10229, %v10279
  %v10281 = vsub.f32 1.0, %v10280
  %v10282 = vmul.f32 %v10279, %v10281
  %v10283 = vadd.f32 %v10279, %v10282
  %vm10284 = vweird.f32 %v10229
  %vm10285 = vweird.f32 %v10279
  %vm10286 = vmor %vm10284, %vm10285
  %v10287 = vsel %vm10286, %v10279, %v10283
  %v10288 = vand.u32 2147483647, %v10229
  %vm10289 = vcmp.eq.f32.partialorder %v10288, 8.507059e+37
  %v10290 = vand.u32 %v10229, 2147483648
  %v10291 = vor.u32 1.1754944e-38, %v10290
  %v10292 = vsel %vm10289, %v10291, %v10287
  %v10293 = vmul.f32 %v10192, %v10292
  %v10294 = vmul.f32 %v10194, %v10292
  %v10295 = vrcp.pop %v10236
  %v10296 = vmul.f32 %v10236, %v10295
  %v10297 = vsub.f32 1.0, %v10296
  %v10298 = vmul.f32 %v10295, %v10297
  %v10299 = vadd.f32 %v10295, %v10298
  %vm10300 = vweird.f32 %v10236
  %vm10301 = vweird.f32 %v10295
  %vm10302 = vmor %vm10300, %vm10301
  %v10303 = vsel %vm10302, %v10295, %v10299
  %v10304 = vand.u32 2147483647, %v10236
  %vm10305 = vcmp.eq.f32.partialorder %v10304, 8.507059e+37
  %v10306 = vand.u32 %v10236, 2147483648
  %v10307 = vor.u32 1.1754944e-38, %v10306
  %v10308 = vsel %vm10305, %v10307, %v10303
  %v10309 = vmul.f32 %v10196, %v10308
  %v10310 = vmul.f32 %v10198, %v10308
  %v10311 = vrcp.pop %v10243
  %v10312 = vmul.f32 %v10243, %v10311
  %v10313 = vsub.f32 1.0, %v10312
  %v10314 = vmul.f32 %v10311, %v10313
  %v10315 = vadd.f32 %v10311, %v10314
  %vm10316 = vweird.f32 %v10243
  %vm10317 = vweird.f32 %v10311
  %vm10318 = vmor %vm10316, %vm10317
  %v10319 = vsel %vm10318, %v10311, %v10315
  %v10320 = vand.u32 2147483647, %v10243
  %vm10321 = vcmp.eq.f32.partialorder %v10320, 8.507059e+37
  %v10322 = vand.u32 %v10243, 2147483648
  %v10323 = vor.u32 1.1754944e-38, %v10322
  %v10324 = vsel %vm10321, %v10323, %v10319
  %v10325 = vmul.f32 %v10200, %v10324
  %v10326 = vmul.f32 %v10202, %v10324
  %v10327 = vrcp.pop %v10250
  %v10328 = vmul.f32 %v10250, %v10327
  %v10329 = vsub.f32 1.0, %v10328
  %v10330 = vmul.f32 %v10327, %v10329
  %v10331 = vadd.f32 %v10327, %v10330
  %vm10332 = vweird.f32 %v10250
  %vm10333 = vweird.f32 %v10327
  %vm10334 = vmor %vm10332, %vm10333
  %v10335 = vsel %vm10334, %v10327, %v10331
  %v10336 = vand.u32 2147483647, %v10250
  %vm10337 = vcmp.eq.f32.partialorder %v10336, 8.507059e+37
  %v10338 = vand.u32 %v10250, 2147483648
  %v10339 = vor.u32 1.1754944e-38, %v10338
  %v10340 = vsel %vm10337, %v10339, %v10335
  %v10341 = vmul.f32 %v10204, %v10340
  %v10342 = vmul.f32 %v10206, %v10340
  %v10343 = vrcp.pop %v10257
  %v10344 = vmul.f32 %v10257, %v10343
  %v10345 = vsub.f32 1.0, %v10344
  %v10346 = vmul.f32 %v10343, %v10345
  %v10347 = vadd.f32 %v10343, %v10346
  %vm10348 = vweird.f32 %v10257
  %vm10349 = vweird.f32 %v10343
  %vm10350 = vmor %vm10348, %vm10349
  %v10351 = vsel %vm10350, %v10343, %v10347
  %v10352 = vand.u32 2147483647, %v10257
  %vm10353 = vcmp.eq.f32.partialorder %v10352, 8.507059e+37
  %v10354 = vand.u32 %v10257, 2147483648
  %v10355 = vor.u32 1.1754944e-38, %v10354
  %v10356 = vsel %vm10353, %v10355, %v10351
  %v10357 = vmul.f32 %v10208, %v10356
  %v10358 = vmul.f32 %v10210, %v10356
  %v10359 = vrcp.pop %v10264
  %v10360 = vmul.f32 %v10264, %v10359
  %v10361 = vsub.f32 1.0, %v10360
  %v10362 = vmul.f32 %v10359, %v10361
  %v10363 = vadd.f32 %v10359, %v10362
  %vm10364 = vweird.f32 %v10264
  %vm10365 = vweird.f32 %v10359
  %vm10366 = vmor %vm10364, %vm10365
  %v10367 = vsel %vm10366, %v10359, %v10363
  %v10368 = vand.u32 2147483647, %v10264
  %vm10369 = vcmp.eq.f32.partialorder %v10368, 8.507059e+37
  %v10370 = vand.u32 %v10264, 2147483648
  %v10371 = vor.u32 1.1754944e-38, %v10370
  %v10372 = vsel %vm10369, %v10371, %v10367
  %v10373 = vmul.f32 %v10212, %v10372
  %v10374 = vmul.f32 %v10214, %v10372
  %v10375 = vrcp.pop %v10271
  %v10376 = vmul.f32 %v10271, %v10375
  %v10377 = vsub.f32 1.0, %v10376
  %v10378 = vmul.f32 %v10375, %v10377
  %v10379 = vadd.f32 %v10375, %v10378
  %vm10380 = vweird.f32 %v10271
  %vm10381 = vweird.f32 %v10375
  %vm10382 = vmor %vm10380, %vm10381
  %v10383 = vsel %vm10382, %v10375, %v10379
  %v10384 = vand.u32 2147483647, %v10271
  %vm10385 = vcmp.eq.f32.partialorder %v10384, 8.507059e+37
  %v10386 = vand.u32 %v10271, 2147483648
  %v10387 = vor.u32 1.1754944e-38, %v10386
  %v10388 = vsel %vm10385, %v10387, %v10383
  %v10389 = vmul.f32 %v10216, %v10388
  %v10390 = vmul.f32 %v10218, %v10388
  %v10391 = vrcp.pop %v10278
  %v10392 = vmul.f32 %v10278, %v10391
  %v10393 = vsub.f32 1.0, %v10392
  %v10394 = vmul.f32 %v10391, %v10393
  %v10395 = vadd.f32 %v10391, %v10394
  %vm10396 = vweird.f32 %v10278
  %vm10397 = vweird.f32 %v10391
  %vm10398 = vmor %vm10396, %vm10397
  %v10399 = vsel %vm10398, %v10391, %v10395
  %v10400 = vand.u32 2147483647, %v10278
  %vm10401 = vcmp.eq.f32.partialorder %v10400, 8.507059e+37
  %v10402 = vand.u32 %v10278, 2147483648
  %v10403 = vor.u32 1.1754944e-38, %v10402
  %v10404 = vsel %vm10401, %v10403, %v10399
  %v10405 = vmul.f32 %v10220, %v10404
  %v10406 = vmul.f32 %v10222, %v10404
  %v10407 = vld [vmem:[%s0] sm:$0xff]
  %v10408 = vld [vmem:[%s0 + $0x8] sm:$0xff]
  %v10409 = vld [vmem:[%s0 + $0x10] sm:$0xff]
  %v10410 = vld [vmem:[%s0 + $0x18] sm:$0xff]
  %v10411 = vld [vmem:[%s0 + $0x20] sm:$0xff]
  %v10412 = vld [vmem:[%s0 + $0x28] sm:$0xff]
  %v10413 = vld [vmem:[%s0 + $0x30] sm:$0xff]
  %v10414 = vld [vmem:[%s0 + $0x38] sm:$0xff]
  %v10415 = vld [vmem:[%s0 + $0x40] sm:$0xff]
  %v10416 = vld [vmem:[%s0 + $0x48] sm:$0xff]
  %v10417 = vld [vmem:[%s0 + $0x50] sm:$0xff]
  %v10418 = vld [vmem:[%s0 + $0x58] sm:$0xff]
  %v10419 = vld [vmem:[%s0 + $0x60] sm:$0xff]
  %v10420 = vld [vmem:[%s0 + $0x68] sm:$0xff]
  %v10421 = vld [vmem:[%s0 + $0x70] sm:$0xff]
  %v10422 = vld [vmem:[%s0 + $0x78] sm:$0xff]
  %v10423 = vmul.f32 %v10407, %v10293
  %v10424 = vmul.f32 %v10408, %v10294
  %v10425 = vmul.f32 %v10409, %v10309
  %v10426 = vmul.f32 %v10410, %v10310
  %v10427 = vmul.f32 %v10411, %v10325
  %v10428 = vmul.f32 %v10412, %v10326
  %v10429 = vmul.f32 %v10413, %v10341
  %v10430 = vmul.f32 %v10414, %v10342
  %v10431 = vmul.f32 %v10415, %v10357
  %v10432 = vmul.f32 %v10416, %v10358
  %v10433 = vmul.f32 %v10417, %v10373
  %v10434 = vmul.f32 %v10418, %v10374
  %v10435 = vmul.f32 %v10419, %v10389
  %v10436 = vmul.f32 %v10420, %v10390
  %v10437 = vmul.f32 %v10421, %v10405
  %v10438 = vmul.f32 %v10422, %v10406
  %v10439 = vadd.f32 %v10423, %v10424
  %v10440 = vrot.slane %v10439, 4
  %v10441 = vadd.f32 %v10439, %v10440
  %v10442 = vrot.slane %v10441, 2
  %v10443 = vadd.f32 %v10441, %v10442
  %v10444 = vrot.slane %v10443, 1
  %v10445 = vadd.f32 %v10443, %v10444
  %v10446 = vadd.f32 %v10425, %v10426
  %v10447 = vrot.slane %v10446, 4
  %v10448 = vadd.f32 %v10446, %v10447
  %v10449 = vrot.slane %v10448, 2
  %v10450 = vadd.f32 %v10448, %v10449
  %v10451 = vrot.slane %v10450, 1
  %v10452 = vadd.f32 %v10450, %v10451
  %v10453 = vadd.f32 %v10427, %v10428
  %v10454 = vrot.slane %v10453, 4
  %v10455 = vadd.f32 %v10453, %v10454
  %v10456 = vrot.slane %v10455, 2
  %v10457 = vadd.f32 %v10455, %v10456
  %v10458 = vrot.slane %v10457, 1
  %v10459 = vadd.f32 %v10457, %v10458
  %v10460 = vadd.f32 %v10429, %v10430
  %v10461 = vrot.slane %v10460, 4
  %v10462 = vadd.f32 %v10460, %v10461
  %v10463 = vrot.slane %v10462, 2
  %v10464 = vadd.f32 %v10462, %v10463
  %v10465 = vrot.slane %v10464, 1
  %v10466 = vadd.f32 %v10464, %v10465
  %v10467 = vadd.f32 %v10431, %v10432
  %v10468 = vrot.slane %v10467, 4
  %v10469 = vadd.f32 %v10467, %v10468
  %v10470 = vrot.slane %v10469, 2
  %v10471 = vadd.f32 %v10469, %v10470
  %v10472 = vrot.slane %v10471, 1
  %v10473 = vadd.f32 %v10471, %v10472
  %v10474 = vadd.f32 %v10433, %v10434
  %v10475 = vrot.slane %v10474, 4
  %v10476 = vadd.f32 %v10474, %v10475
  %v10477 = vrot.slane %v10476, 2
  %v10478 = vadd.f32 %v10476, %v10477
  %v10479 = vrot.slane %v10478, 1
  %v10480 = vadd.f32 %v10478, %v10479
  %v10481 = vadd.f32 %v10435, %v10436
  %v10482 = vrot.slane %v10481, 4
  %v10483 = vadd.f32 %v10481, %v10482
  %v10484 = vrot.slane %v10483, 2
  %v10485 = vadd.f32 %v10483, %v10484
  %v10486 = vrot.slane %v10485, 1
  %v10487 = vadd.f32 %v10485, %v10486
  %v10488 = vadd.f32 %v10437, %v10438
  %v10489 = vrot.slane %v10488, 4
  %v10490 = vadd.f32 %v10488, %v10489
  %v10491 = vrot.slane %v10490, 2
  %v10492 = vadd.f32 %v10490, %v10491
  %v10493 = vrot.slane %v10492, 1
  %v10494 = vadd.f32 %v10492, %v10493
  %v10503 = vsel %vm191, %v10452, %v10445
  %v10504 = vsel %vm193, %v10459, %v10503
  %v10505 = vsel %vm195, %v10466, %v10504
  %v10506 = vsel %vm197, %v10473, %v10505
  %v10507 = vsel %vm199, %v10480, %v10506
  %v10508 = vsel %vm201, %v10487, %v10507
  %v10509 = vsel %vm203, %v10494, %v10508
  %v10511 = vmul.f32 %v9998, %v10509
  %v10512 = vpack.c.bf16 %v10511, %v10511
  %v10513 = vld [vmem:[%s10] sm:$0xff]
  %v10514 = vld [vmem:[%s10 + $0x8] sm:$0xff]
  %v10515 = vld [vmem:[%s10 + $0x10] sm:$0xff]
  %v10516 = vld [vmem:[%s10 + $0x18] sm:$0xff]
  %v10517 = vld [vmem:[%s10 + $0x20] sm:$0xff]
  %v10518 = vld [vmem:[%s10 + $0x28] sm:$0xff]
  %v10519 = vld [vmem:[%s10 + $0x30] sm:$0xff]
  %v10520 = vld [vmem:[%s10 + $0x38] sm:$0xff]
  %v10521 = vld [vmem:[%s10 + $0x40] sm:$0xff]
  %v10522 = vld [vmem:[%s10 + $0x48] sm:$0xff]
  %v10523 = vld [vmem:[%s10 + $0x50] sm:$0xff]
  %v10524 = vld [vmem:[%s10 + $0x58] sm:$0xff]
  %v10525 = vld [vmem:[%s10 + $0x60] sm:$0xff]
  %v10526 = vld [vmem:[%s10 + $0x68] sm:$0xff]
  %v10527 = vld [vmem:[%s10 + $0x70] sm:$0xff]
  %v10528 = vld [vmem:[%s10 + $0x78] sm:$0xff]
  %v10529 = vld [vmem:[%s10 + $0x80] sm:$0xff]
  %v10530 = vld [vmem:[%s10 + $0x88] sm:$0xff]
  %v10531 = vld [vmem:[%s10 + $0x90] sm:$0xff]
  %v10532 = vld [vmem:[%s10 + $0x98] sm:$0xff]
  %v10533 = vld [vmem:[%s10 + $0xa0] sm:$0xff]
  %v10534 = vld [vmem:[%s10 + $0xa8] sm:$0xff]
  %v10535 = vld [vmem:[%s10 + $0xb0] sm:$0xff]
  %v10536 = vld [vmem:[%s10 + $0xb8] sm:$0xff]
  %v10537 = vld [vmem:[%s10 + $0xc0] sm:$0xff]
  %v10538 = vld [vmem:[%s10 + $0xc8] sm:$0xff]
  %v10539 = vld [vmem:[%s10 + $0xd0] sm:$0xff]
  %v10540 = vld [vmem:[%s10 + $0xd8] sm:$0xff]
  %v10541 = vld [vmem:[%s10 + $0xe0] sm:$0xff]
  %v10542 = vld [vmem:[%s10 + $0xe8] sm:$0xff]
  %v10543 = vld [vmem:[%s10 + $0xf0] sm:$0xff]
  %v10544 = vld [vmem:[%s10 + $0xf8] sm:$0xff]
  %v10545 = vld [vmem:[%s10 + $0x100] sm:$0xff]
  %v10546 = vld [vmem:[%s10 + $0x108] sm:$0xff]
  %v10547 = vld [vmem:[%s10 + $0x110] sm:$0xff]
  %v10548 = vld [vmem:[%s10 + $0x118] sm:$0xff]
  %v10549 = vld [vmem:[%s10 + $0x120] sm:$0xff]
  %v10550 = vld [vmem:[%s10 + $0x128] sm:$0xff]
  %v10551 = vld [vmem:[%s10 + $0x130] sm:$0xff]
  %v10552 = vld [vmem:[%s10 + $0x138] sm:$0xff]
  %v10553 = vld [vmem:[%s10 + $0x140] sm:$0xff]
  %v10554 = vld [vmem:[%s10 + $0x148] sm:$0xff]
  %v10555 = vld [vmem:[%s10 + $0x150] sm:$0xff]
  %v10556 = vld [vmem:[%s10 + $0x158] sm:$0xff]
  %v10557 = vld [vmem:[%s10 + $0x160] sm:$0xff]
  %v10558 = vld [vmem:[%s10 + $0x168] sm:$0xff]
  %v10559 = vld [vmem:[%s10 + $0x170] sm:$0xff]
  %v10560 = vld [vmem:[%s10 + $0x178] sm:$0xff]
  %v10561 = vld [vmem:[%s10 + $0x180] sm:$0xff]
  %v10562 = vld [vmem:[%s10 + $0x188] sm:$0xff]
  %v10563 = vld [vmem:[%s10 + $0x190] sm:$0xff]
  %v10564 = vld [vmem:[%s10 + $0x198] sm:$0xff]
  %v10565 = vld [vmem:[%s10 + $0x1a0] sm:$0xff]
  %v10566 = vld [vmem:[%s10 + $0x1a8] sm:$0xff]
  %v10567 = vld [vmem:[%s10 + $0x1b0] sm:$0xff]
  %v10568 = vld [vmem:[%s10 + $0x1b8] sm:$0xff]
  %v10569 = vld [vmem:[%s10 + $0x1c0] sm:$0xff]
  %v10570 = vld [vmem:[%s10 + $0x1c8] sm:$0xff]
  %v10571 = vld [vmem:[%s10 + $0x1d0] sm:$0xff]
  %v10572 = vld [vmem:[%s10 + $0x1d8] sm:$0xff]
  %v10573 = vld [vmem:[%s10 + $0x1e0] sm:$0xff]
  %v10574 = vld [vmem:[%s10 + $0x1e8] sm:$0xff]
  %v10575 = vld [vmem:[%s10 + $0x1f0] sm:$0xff]
  %v10576 = vld [vmem:[%s10 + $0x1f8] sm:$0xff]
  %v10641 = vunpack.c.l.b16 %v10513
  %v10642 = vunpack.c.h.b16 %v10513
  %v10643 = vunpack.c.l.b16 %v10514
  %v10644 = vunpack.c.h.b16 %v10514
  %v10645 = vunpack.c.l.b16 %v10515
  %v10646 = vunpack.c.h.b16 %v10515
  %v10647 = vunpack.c.l.b16 %v10516
  %v10648 = vunpack.c.h.b16 %v10516
  %v10649 = vunpack.c.l.b16 %v10517
  %v10650 = vunpack.c.h.b16 %v10517
  %v10651 = vunpack.c.l.b16 %v10518
  %v10652 = vunpack.c.h.b16 %v10518
  %v10653 = vunpack.c.l.b16 %v10519
  %v10654 = vunpack.c.h.b16 %v10519
  %v10655 = vunpack.c.l.b16 %v10520
  %v10656 = vunpack.c.h.b16 %v10520
  %v10657 = vunpack.c.l.b16 %v10521
  %v10658 = vunpack.c.h.b16 %v10521
  %v10659 = vunpack.c.l.b16 %v10522
  %v10660 = vunpack.c.h.b16 %v10522
  %v10661 = vunpack.c.l.b16 %v10523
  %v10662 = vunpack.c.h.b16 %v10523
  %v10663 = vunpack.c.l.b16 %v10524
  %v10664 = vunpack.c.h.b16 %v10524
  %v10665 = vunpack.c.l.b16 %v10525
  %v10666 = vunpack.c.h.b16 %v10525
  %v10667 = vunpack.c.l.b16 %v10526
  %v10668 = vunpack.c.h.b16 %v10526
  %v10669 = vunpack.c.l.b16 %v10527
  %v10670 = vunpack.c.h.b16 %v10527
  %v10671 = vunpack.c.l.b16 %v10528
  %v10672 = vunpack.c.h.b16 %v10528
  %v10673 = vunpack.c.l.b16 %v10529
  %v10674 = vunpack.c.h.b16 %v10529
  %v10675 = vunpack.c.l.b16 %v10530
  %v10676 = vunpack.c.h.b16 %v10530
  %v10677 = vunpack.c.l.b16 %v10531
  %v10678 = vunpack.c.h.b16 %v10531
  %v10679 = vunpack.c.l.b16 %v10532
  %v10680 = vunpack.c.h.b16 %v10532
  %v10681 = vunpack.c.l.b16 %v10533
  %v10682 = vunpack.c.h.b16 %v10533
  %v10683 = vunpack.c.l.b16 %v10534
  %v10684 = vunpack.c.h.b16 %v10534
  %v10685 = vunpack.c.l.b16 %v10535
  %v10686 = vunpack.c.h.b16 %v10535
  %v10687 = vunpack.c.l.b16 %v10536
  %v10688 = vunpack.c.h.b16 %v10536
  %v10689 = vunpack.c.l.b16 %v10537
  %v10690 = vunpack.c.h.b16 %v10537
  %v10691 = vunpack.c.l.b16 %v10538
  %v10692 = vunpack.c.h.b16 %v10538
  %v10693 = vunpack.c.l.b16 %v10539
  %v10694 = vunpack.c.h.b16 %v10539
  %v10695 = vunpack.c.l.b16 %v10540
  %v10696 = vunpack.c.h.b16 %v10540
  %v10697 = vunpack.c.l.b16 %v10541
  %v10698 = vunpack.c.h.b16 %v10541
  %v10699 = vunpack.c.l.b16 %v10542
  %v10700 = vunpack.c.h.b16 %v10542
  %v10701 = vunpack.c.l.b16 %v10543
  %v10702 = vunpack.c.h.b16 %v10543
  %v10703 = vunpack.c.l.b16 %v10544
  %v10704 = vunpack.c.h.b16 %v10544
  %v10705 = vunpack.c.l.b16 %v10545
  %v10706 = vunpack.c.h.b16 %v10545
  %v10707 = vunpack.c.l.b16 %v10546
  %v10708 = vunpack.c.h.b16 %v10546
  %v10709 = vunpack.c.l.b16 %v10547
  %v10710 = vunpack.c.h.b16 %v10547
  %v10711 = vunpack.c.l.b16 %v10548
  %v10712 = vunpack.c.h.b16 %v10548
  %v10713 = vunpack.c.l.b16 %v10549
  %v10714 = vunpack.c.h.b16 %v10549
  %v10715 = vunpack.c.l.b16 %v10550
  %v10716 = vunpack.c.h.b16 %v10550
  %v10717 = vunpack.c.l.b16 %v10551
  %v10718 = vunpack.c.h.b16 %v10551
  %v10719 = vunpack.c.l.b16 %v10552
  %v10720 = vunpack.c.h.b16 %v10552
  %v10721 = vunpack.c.l.b16 %v10553
  %v10722 = vunpack.c.h.b16 %v10553
  %v10723 = vunpack.c.l.b16 %v10554
  %v10724 = vunpack.c.h.b16 %v10554
  %v10725 = vunpack.c.l.b16 %v10555
  %v10726 = vunpack.c.h.b16 %v10555
  %v10727 = vunpack.c.l.b16 %v10556
  %v10728 = vunpack.c.h.b16 %v10556
  %v10729 = vunpack.c.l.b16 %v10557
  %v10730 = vunpack.c.h.b16 %v10557
  %v10731 = vunpack.c.l.b16 %v10558
  %v10732 = vunpack.c.h.b16 %v10558
  %v10733 = vunpack.c.l.b16 %v10559
  %v10734 = vunpack.c.h.b16 %v10559
  %v10735 = vunpack.c.l.b16 %v10560
  %v10736 = vunpack.c.h.b16 %v10560
  %v10737 = vunpack.c.l.b16 %v10561
  %v10738 = vunpack.c.h.b16 %v10561
  %v10739 = vunpack.c.l.b16 %v10562
  %v10740 = vunpack.c.h.b16 %v10562
  %v10741 = vunpack.c.l.b16 %v10563
  %v10742 = vunpack.c.h.b16 %v10563
  %v10743 = vunpack.c.l.b16 %v10564
  %v10744 = vunpack.c.h.b16 %v10564
  %v10745 = vunpack.c.l.b16 %v10565
  %v10746 = vunpack.c.h.b16 %v10565
  %v10747 = vunpack.c.l.b16 %v10566
  %v10748 = vunpack.c.h.b16 %v10566
  %v10749 = vunpack.c.l.b16 %v10567
  %v10750 = vunpack.c.h.b16 %v10567
  %v10751 = vunpack.c.l.b16 %v10568
  %v10752 = vunpack.c.h.b16 %v10568
  %v10753 = vunpack.c.l.b16 %v10569
  %v10754 = vunpack.c.h.b16 %v10569
  %v10755 = vunpack.c.l.b16 %v10570
  %v10756 = vunpack.c.h.b16 %v10570
  %v10757 = vunpack.c.l.b16 %v10571
  %v10758 = vunpack.c.h.b16 %v10571
  %v10759 = vunpack.c.l.b16 %v10572
  %v10760 = vunpack.c.h.b16 %v10572
  %v10761 = vunpack.c.l.b16 %v10573
  %v10762 = vunpack.c.h.b16 %v10573
  %v10763 = vunpack.c.l.b16 %v10574
  %v10764 = vunpack.c.h.b16 %v10574
  %v10765 = vunpack.c.l.b16 %v10575
  %v10766 = vunpack.c.h.b16 %v10575
  %v10767 = vunpack.c.l.b16 %v10576
  %v10768 = vunpack.c.h.b16 %v10576
  %v10769 = vpack.c.b16 %v10645, %v10641
  %v10770 = vpack.c.b16 %v10646, %v10642
  %v10771 = vpack.c.b16 %v10647, %v10643
  %v10772 = vpack.c.b16 %v10648, %v10644
  %v10773 = vpack.c.b16 %v10653, %v10649
  %v10774 = vpack.c.b16 %v10654, %v10650
  %v10775 = vpack.c.b16 %v10655, %v10651
  %v10776 = vpack.c.b16 %v10656, %v10652
  %v10777 = vpack.c.b16 %v10661, %v10657
  %v10778 = vpack.c.b16 %v10662, %v10658
  %v10779 = vpack.c.b16 %v10663, %v10659
  %v10780 = vpack.c.b16 %v10664, %v10660
  %v10781 = vpack.c.b16 %v10669, %v10665
  %v10782 = vpack.c.b16 %v10670, %v10666
  %v10783 = vpack.c.b16 %v10671, %v10667
  %v10784 = vpack.c.b16 %v10672, %v10668
  %v10785 = vpack.c.b16 %v10677, %v10673
  %v10786 = vpack.c.b16 %v10678, %v10674
  %v10787 = vpack.c.b16 %v10679, %v10675
  %v10788 = vpack.c.b16 %v10680, %v10676
  %v10789 = vpack.c.b16 %v10685, %v10681
  %v10790 = vpack.c.b16 %v10686, %v10682
  %v10791 = vpack.c.b16 %v10687, %v10683
  %v10792 = vpack.c.b16 %v10688, %v10684
  %v10793 = vpack.c.b16 %v10693, %v10689
  %v10794 = vpack.c.b16 %v10694, %v10690
  %v10795 = vpack.c.b16 %v10695, %v10691
  %v10796 = vpack.c.b16 %v10696, %v10692
  %v10797 = vpack.c.b16 %v10701, %v10697
  %v10798 = vpack.c.b16 %v10702, %v10698
  %v10799 = vpack.c.b16 %v10703, %v10699
  %v10800 = vpack.c.b16 %v10704, %v10700
  %v10801 = vpack.c.b16 %v10709, %v10705
  %v10802 = vpack.c.b16 %v10710, %v10706
  %v10803 = vpack.c.b16 %v10711, %v10707
  %v10804 = vpack.c.b16 %v10712, %v10708
  %v10805 = vpack.c.b16 %v10717, %v10713
  %v10806 = vpack.c.b16 %v10718, %v10714
  %v10807 = vpack.c.b16 %v10719, %v10715
  %v10808 = vpack.c.b16 %v10720, %v10716
  %v10809 = vpack.c.b16 %v10725, %v10721
  %v10810 = vpack.c.b16 %v10726, %v10722
  %v10811 = vpack.c.b16 %v10727, %v10723
  %v10812 = vpack.c.b16 %v10728, %v10724
  %v10813 = vpack.c.b16 %v10733, %v10729
  %v10814 = vpack.c.b16 %v10734, %v10730
  %v10815 = vpack.c.b16 %v10735, %v10731
  %v10816 = vpack.c.b16 %v10736, %v10732
  %v10817 = vpack.c.b16 %v10741, %v10737
  %v10818 = vpack.c.b16 %v10742, %v10738
  %v10819 = vpack.c.b16 %v10743, %v10739
  %v10820 = vpack.c.b16 %v10744, %v10740
  %v10821 = vpack.c.b16 %v10749, %v10745
  %v10822 = vpack.c.b16 %v10750, %v10746
  %v10823 = vpack.c.b16 %v10751, %v10747
  %v10824 = vpack.c.b16 %v10752, %v10748
  %v10825 = vpack.c.b16 %v10757, %v10753
  %v10826 = vpack.c.b16 %v10758, %v10754
  %v10827 = vpack.c.b16 %v10759, %v10755
  %v10828 = vpack.c.b16 %v10760, %v10756
  %v10829 = vpack.c.b16 %v10765, %v10761
  %v10830 = vpack.c.b16 %v10766, %v10762
  %v10831 = vpack.c.b16 %v10767, %v10763
  %v10832 = vpack.c.b16 %v10768, %v10764
  %10897 = vmatpush.bf16.msra.mxu0 %v10797
  %10898 = vmatpush.bf16.msra.mxu0 %v10793
  %10899 = vmatpush.bf16.msra.mxu0 %v10789
  %10900 = vmatpush.bf16.msra.mxu0 %v10785
  %10901 = vmatpush.bf16.msra.mxu0 %v10781
  %10902 = vmatpush.bf16.msra.mxu0 %v10777
  %10903 = vmatpush.bf16.msra.mxu0 %v10773
  %10904 = vmatpush.bf16.msra.mxu0 %v10769
  %10905 = vmatmul.bf16.gmra.mxu0 %v9613
  %v10906 = vpop.f32.mrf.mxu0
  %v10907 = vadd.f32 %v1483, %v10906
  %v10908 = vpop.f32.mrf.mxu0
  %10909 = vdwg.mxu0
  %10910 = vmatpush.bf16.msra.mxu0 %v10829
  %10911 = vmatpush.bf16.msra.mxu0 %v10825
  %10912 = vmatpush.bf16.msra.mxu0 %v10821
  %10913 = vmatpush.bf16.msra.mxu0 %v10817
  %10914 = vmatpush.bf16.msra.mxu0 %v10813
  %10915 = vmatpush.bf16.msra.mxu0 %v10809
  %10916 = vmatpush.bf16.msra.mxu0 %v10805
  %10917 = vmatpush.bf16.msra.mxu0 %v10801
  %10918 = vmatmul.bf16.gmra.mxu0 %v10512
  %v10919 = vpop.f32.mrf.mxu0
  %v10920 = vadd.f32 %v10907, %v10919
  %v10921 = vpop.f32.mrf.mxu0
  %10922 = vdwg.mxu0
  %10923 = vmatpush.bf16.msra.mxu0 %v10798
  %10924 = vmatpush.bf16.msra.mxu0 %v10794
  %10925 = vmatpush.bf16.msra.mxu0 %v10790
  %10926 = vmatpush.bf16.msra.mxu0 %v10786
  %10927 = vmatpush.bf16.msra.mxu0 %v10782
  %10928 = vmatpush.bf16.msra.mxu0 %v10778
  %10929 = vmatpush.bf16.msra.mxu0 %v10774
  %10930 = vmatpush.bf16.msra.mxu0 %v10770
  %10931 = vmatmul.bf16.gmra.mxu0 %v9613
  %v10932 = vpop.f32.mrf.mxu0
  %v10933 = vadd.f32 %v1484, %v10932
  %v10934 = vpop.f32.mrf.mxu0
  %10935 = vdwg.mxu0
  %10936 = vmatpush.bf16.msra.mxu0 %v10830
  %10937 = vmatpush.bf16.msra.mxu0 %v10826
  %10938 = vmatpush.bf16.msra.mxu0 %v10822
  %10939 = vmatpush.bf16.msra.mxu0 %v10818
  %10940 = vmatpush.bf16.msra.mxu0 %v10814
  %10941 = vmatpush.bf16.msra.mxu0 %v10810
  %10942 = vmatpush.bf16.msra.mxu0 %v10806
  %10943 = vmatpush.bf16.msra.mxu0 %v10802
  %10944 = vmatmul.bf16.gmra.mxu0 %v10512
  %v10945 = vpop.f32.mrf.mxu0
  %v10946 = vadd.f32 %v10933, %v10945
  %v10947 = vpop.f32.mrf.mxu0
  %10948 = vdwg.mxu0
  %10949 = vmatpush.bf16.msra.mxu0 %v10799
  %10950 = vmatpush.bf16.msra.mxu0 %v10795
  %10951 = vmatpush.bf16.msra.mxu0 %v10791
  %10952 = vmatpush.bf16.msra.mxu0 %v10787
  %10953 = vmatpush.bf16.msra.mxu0 %v10783
  %10954 = vmatpush.bf16.msra.mxu0 %v10779
  %10955 = vmatpush.bf16.msra.mxu0 %v10775
  %10956 = vmatpush.bf16.msra.mxu0 %v10771
  %10957 = vmatmul.bf16.gmra.mxu0 %v9613
  %v10958 = vpop.f32.mrf.mxu0
  %v10959 = vadd.f32 %v1485, %v10958
  %v10960 = vpop.f32.mrf.mxu0
  %10961 = vdwg.mxu0
  %10962 = vmatpush.bf16.msra.mxu0 %v10831
  %10963 = vmatpush.bf16.msra.mxu0 %v10827
  %10964 = vmatpush.bf16.msra.mxu0 %v10823
  %10965 = vmatpush.bf16.msra.mxu0 %v10819
  %10966 = vmatpush.bf16.msra.mxu0 %v10815
  %10967 = vmatpush.bf16.msra.mxu0 %v10811
  %10968 = vmatpush.bf16.msra.mxu0 %v10807
  %10969 = vmatpush.bf16.msra.mxu0 %v10803
  %10970 = vmatmul.bf16.gmra.mxu0 %v10512
  %v10971 = vpop.f32.mrf.mxu0
  %v10972 = vadd.f32 %v10959, %v10971
  %v10973 = vpop.f32.mrf.mxu0
  %10974 = vdwg.mxu0
  %10975 = vmatpush.bf16.msra.mxu0 %v10800
  %10976 = vmatpush.bf16.msra.mxu0 %v10796
  %10977 = vmatpush.bf16.msra.mxu0 %v10792
  %10978 = vmatpush.bf16.msra.mxu0 %v10788
  %10979 = vmatpush.bf16.msra.mxu0 %v10784
  %10980 = vmatpush.bf16.msra.mxu0 %v10780
  %10981 = vmatpush.bf16.msra.mxu0 %v10776
  %10982 = vmatpush.bf16.msra.mxu0 %v10772
  %10983 = vmatmul.bf16.gmra.mxu0 %v9613
  %v10984 = vpop.f32.mrf.mxu0
  %v10985 = vadd.f32 %v1486, %v10984
  %v10986 = vpop.f32.mrf.mxu0
  %10987 = vdwg.mxu0
  %10988 = vmatpush.bf16.msra.mxu0 %v10832
  %10989 = vmatpush.bf16.msra.mxu0 %v10828
  %10990 = vmatpush.bf16.msra.mxu0 %v10824
  %10991 = vmatpush.bf16.msra.mxu0 %v10820
  %10992 = vmatpush.bf16.msra.mxu0 %v10816
  %10993 = vmatpush.bf16.msra.mxu0 %v10812
  %10994 = vmatpush.bf16.msra.mxu0 %v10808
  %10995 = vmatpush.bf16.msra.mxu0 %v10804
  %10996 = vmatmul.bf16.gmra.mxu0 %v10512
  %v10997 = vpop.f32.mrf.mxu0
  %v10998 = vadd.f32 %v10985, %v10997
  %v10999 = vpop.f32.mrf.mxu0
  %11000 = vdwg.mxu0
  %v11001 = vadd.f32 %v10920, %v9938
  %v11002 = vadd.f32 %v10946, %v9951
  %v11003 = vadd.f32 %v10972, %v9964
  %v11004 = vadd.f32 %v10998, %v9977
  %v11005 = vxor.u32 %v11001, 2147483648
  %v11006 = vmul.f32 %v11005, 1.442695
  %v11007 = vpow.pop %v11006
  %v11008 = vadd.f32 %v11007, 1.0
  %v11009 = vrcp.pop %v11008
  %v11010 = vmul.f32 %v11008, %v11009
  %v11011 = vsub.f32 1.0, %v11010
  %v11012 = vmul.f32 %v11009, %v11011
  %v11013 = vadd.f32 %v11009, %v11012
  %vm11014 = vweird.f32 %v11008
  %vm11015 = vweird.f32 %v11009
  %vm11016 = vmor %vm11014, %vm11015
  %v11017 = vsel %vm11016, %v11009, %v11013
  %v11018 = vand.u32 2147483647, %v11008
  %vm11019 = vcmp.eq.f32.partialorder %v11018, 8.507059e+37
  %v11020 = vand.u32 %v11008, 2147483648
  %v11021 = vor.u32 1.1754944e-38, %v11020
  %v11022 = vsel %vm11019, %v11021, %v11017
  %v11023 = vmul.f32 1.0, %v11022
  %v11024 = vxor.u32 %v11002, 2147483648
  %v11025 = vmul.f32 %v11024, 1.442695
  %v11026 = vpow.pop %v11025
  %v11027 = vadd.f32 %v11026, 1.0
  %v11028 = vrcp.pop %v11027
  %v11029 = vmul.f32 %v11027, %v11028
  %v11030 = vsub.f32 1.0, %v11029
  %v11031 = vmul.f32 %v11028, %v11030
  %v11032 = vadd.f32 %v11028, %v11031
  %vm11033 = vweird.f32 %v11027
  %vm11034 = vweird.f32 %v11028
  %vm11035 = vmor %vm11033, %vm11034
  %v11036 = vsel %vm11035, %v11028, %v11032
  %v11037 = vand.u32 2147483647, %v11027
  %vm11038 = vcmp.eq.f32.partialorder %v11037, 8.507059e+37
  %v11039 = vand.u32 %v11027, 2147483648
  %v11040 = vor.u32 1.1754944e-38, %v11039
  %v11041 = vsel %vm11038, %v11040, %v11036
  %v11042 = vmul.f32 1.0, %v11041
  %v11043 = vtanh.pop %v11003
  %v11044 = vxor.u32 %v11004, 2147483648
  %v11045 = vmul.f32 %v11044, 1.442695
  %v11046 = vpow.pop %v11045
  %v11047 = vadd.f32 %v11046, 1.0
  %v11048 = vrcp.pop %v11047
  %v11049 = vmul.f32 %v11047, %v11048
  %v11050 = vsub.f32 1.0, %v11049
  %v11051 = vmul.f32 %v11048, %v11050
  %v11052 = vadd.f32 %v11048, %v11051
  %vm11053 = vweird.f32 %v11047
  %vm11054 = vweird.f32 %v11048
  %vm11055 = vmor %vm11053, %vm11054
  %v11056 = vsel %vm11055, %v11048, %v11052
  %v11057 = vand.u32 2147483647, %v11047
  %vm11058 = vcmp.eq.f32.partialorder %v11057, 8.507059e+37
  %v11059 = vand.u32 %v11047, 2147483648
  %v11060 = vor.u32 1.1754944e-38, %v11059
  %v11061 = vsel %vm11058, %v11060, %v11056
  %v11062 = vmul.f32 1.0, %v11061
  %v11063 = vmul.f32 %v11042, %v9249
  %v11064 = vmul.f32 %v11023, %v11043
  %v11065 = vadd.f32 %v11063, %v11064
  %v11066 = vtanh.pop %v11065
  %v11067 = vmul.f32 %v11062, %v11066
  %v11068 = vpack.c.bf16 %v11067, %v11067
  %v11069 = vld [vmem:[%s12] sm:$0xff]
  %v11070 = vld [vmem:[%s12 + $0x8] sm:$0xff]
  %v11071 = vld [vmem:[%s12 + $0x10] sm:$0xff]
  %v11072 = vld [vmem:[%s12 + $0x18] sm:$0xff]
  %v11073 = vld [vmem:[%s12 + $0x20] sm:$0xff]
  %v11074 = vld [vmem:[%s12 + $0x28] sm:$0xff]
  %v11075 = vld [vmem:[%s12 + $0x30] sm:$0xff]
  %v11076 = vld [vmem:[%s12 + $0x38] sm:$0xff]
  %v11077 = vld [vmem:[%s12 + $0x40] sm:$0xff]
  %v11078 = vld [vmem:[%s12 + $0x48] sm:$0xff]
  %v11079 = vld [vmem:[%s12 + $0x50] sm:$0xff]
  %v11080 = vld [vmem:[%s12 + $0x58] sm:$0xff]
  %v11081 = vld [vmem:[%s12 + $0x60] sm:$0xff]
  %v11082 = vld [vmem:[%s12 + $0x68] sm:$0xff]
  %v11083 = vld [vmem:[%s12 + $0x70] sm:$0xff]
  %v11084 = vld [vmem:[%s12 + $0x78] sm:$0xff]
  %v11101 = vunpack.c.l.b16 %v11069
  %v11102 = vunpack.c.h.b16 %v11069
  %v11103 = vunpack.c.l.b16 %v11070
  %v11104 = vunpack.c.h.b16 %v11070
  %v11105 = vunpack.c.l.b16 %v11071
  %v11106 = vunpack.c.h.b16 %v11071
  %v11107 = vunpack.c.l.b16 %v11072
  %v11108 = vunpack.c.h.b16 %v11072
  %v11109 = vunpack.c.l.b16 %v11073
  %v11110 = vunpack.c.h.b16 %v11073
  %v11111 = vunpack.c.l.b16 %v11074
  %v11112 = vunpack.c.h.b16 %v11074
  %v11113 = vunpack.c.l.b16 %v11075
  %v11114 = vunpack.c.h.b16 %v11075
  %v11115 = vunpack.c.l.b16 %v11076
  %v11116 = vunpack.c.h.b16 %v11076
  %v11117 = vunpack.c.l.b16 %v11077
  %v11118 = vunpack.c.h.b16 %v11077
  %v11119 = vunpack.c.l.b16 %v11078
  %v11120 = vunpack.c.h.b16 %v11078
  %v11121 = vunpack.c.l.b16 %v11079
  %v11122 = vunpack.c.h.b16 %v11079
  %v11123 = vunpack.c.l.b16 %v11080
  %v11124 = vunpack.c.h.b16 %v11080
  %v11125 = vunpack.c.l.b16 %v11081
  %v11126 = vunpack.c.h.b16 %v11081
  %v11127 = vunpack.c.l.b16 %v11082
  %v11128 = vunpack.c.h.b16 %v11082
  %v11129 = vunpack.c.l.b16 %v11083
  %v11130 = vunpack.c.h.b16 %v11083
  %v11131 = vunpack.c.l.b16 %v11084
  %v11132 = vunpack.c.h.b16 %v11084
  %v11133 = vpack.c.b16 %v11103, %v11101
  %v11134 = vpack.c.b16 %v11104, %v11102
  %v11135 = vpack.c.b16 %v11107, %v11105
  %v11136 = vpack.c.b16 %v11108, %v11106
  %v11137 = vpack.c.b16 %v11111, %v11109
  %v11138 = vpack.c.b16 %v11112, %v11110
  %v11139 = vpack.c.b16 %v11115, %v11113
  %v11140 = vpack.c.b16 %v11116, %v11114
  %v11141 = vpack.c.b16 %v11119, %v11117
  %v11142 = vpack.c.b16 %v11120, %v11118
  %v11143 = vpack.c.b16 %v11123, %v11121
  %v11144 = vpack.c.b16 %v11124, %v11122
  %v11145 = vpack.c.b16 %v11127, %v11125
  %v11146 = vpack.c.b16 %v11128, %v11126
  %v11147 = vpack.c.b16 %v11131, %v11129
  %v11148 = vpack.c.b16 %v11132, %v11130
  %11165 = vmatpush.bf16.msra.mxu0 %v11147
  %11166 = vmatpush.bf16.msra.mxu0 %v11145
  %11167 = vmatpush.bf16.msra.mxu0 %v11143
  %11168 = vmatpush.bf16.msra.mxu0 %v11141
  %11169 = vmatpush.bf16.msra.mxu0 %v11139
  %11170 = vmatpush.bf16.msra.mxu0 %v11137
  %11171 = vmatpush.bf16.msra.mxu0 %v11135
  %11172 = vmatpush.bf16.msra.mxu0 %v11133
  %11173 = vmatmul.bf16.gmra.mxu0 %v11068
  %v11174 = vpop.f32.mrf.mxu0
  %v11175 = vadd.f32 %v2000, %v11174
  %v11176 = vpop.f32.mrf.mxu0
  %11177 = vdwg.mxu0
  %11178 = vmatpush.bf16.msra.mxu0 %v11148
  %11179 = vmatpush.bf16.msra.mxu0 %v11146
  %11180 = vmatpush.bf16.msra.mxu0 %v11144
  %11181 = vmatpush.bf16.msra.mxu0 %v11142
  %11182 = vmatpush.bf16.msra.mxu0 %v11140
  %11183 = vmatpush.bf16.msra.mxu0 %v11138
  %11184 = vmatpush.bf16.msra.mxu0 %v11136
  %11185 = vmatpush.bf16.msra.mxu0 %v11134
  %11186 = vmatmul.bf16.gmra.mxu0 %v11068
  %v11187 = vpop.f32.mrf.mxu0
  %v11188 = vadd.f32 %v2001, %v11187
  %v11189 = vpop.f32.mrf.mxu0
  %11190 = vdwg.mxu0
  %s11191 = scalar_lea.vmem %s14, 80
  %11192 = vst [vmem:[%s11191] sm:$0xff] %v11175
  %11193 = vst [vmem:[%s11191 + $0x8] sm:$0xff] %v11188
  %v11210 = vperm.slane %v10293, %v56
  %v11211 = vperm.slane %v10294, %v2129
  %v11212 = vsel %vm2131, %v11211, %v11210
  %v11213 = vperm.slane %v10309, %v56
  %v11214 = vperm.slane %v10310, %v2129
  %v11215 = vsel %vm2131, %v11214, %v11213
  %v11216 = vperm.slane %v10325, %v56
  %v11217 = vperm.slane %v10326, %v2129
  %v11218 = vsel %vm2131, %v11217, %v11216
  %v11219 = vperm.slane %v10341, %v56
  %v11220 = vperm.slane %v10342, %v2129
  %v11221 = vsel %vm2131, %v11220, %v11219
  %v11222 = vperm.slane %v10357, %v56
  %v11223 = vperm.slane %v10358, %v2129
  %v11224 = vsel %vm2131, %v11223, %v11222
  %v11225 = vperm.slane %v10373, %v56
  %v11226 = vperm.slane %v10374, %v2129
  %v11227 = vsel %vm2131, %v11226, %v11225
  %v11228 = vperm.slane %v10389, %v56
  %v11229 = vperm.slane %v10390, %v2129
  %v11230 = vsel %vm2131, %v11229, %v11228
  %v11231 = vperm.slane %v10405, %v56
  %v11232 = vperm.slane %v10406, %v2129
  %v11233 = vsel %vm2131, %v11232, %v11231
  %v11234 = vsel %vm191, %v11215, %v11212
  %v11235 = vsel %vm193, %v11218, %v11234
  %v11236 = vsel %vm195, %v11221, %v11235
  %v11237 = vsel %vm197, %v11224, %v11236
  %v11238 = vsel %vm199, %v11227, %v11237
  %v11239 = vsel %vm201, %v11230, %v11238
  %v11240 = vsel %vm203, %v11233, %v11239
  %s11242 = scalar_lea.vmem %s15, 40
  %11243 = vst.msk [vmem:[%s11242] sm:$0xff] %vm2162, %v11240
  %v11244 = vmax.f32 %v11175, %v11188
  %11245 = vmax.xlane.f32.xlu0 %v11244
  %v11246 = vpop.xlane.xlu0 %11245
  %vm11247 = vcmp.eq.f32.partialorder %v11175, %v11246
  %vm11248 = vcmp.eq.f32.partialorder %v11188, %v11246
  %v11249 = vsel %vm11247, %v56, 256
  %v11250 = vsel %vm11248, %v57, 256
  %vm11251 = vcmp.lt.s32.totalorder %v11249, %v11250
  %v11252 = vsel %vm11251, %v11249, %v11250
  %v11253 = vand.u32 %v11252, 65535
  %v11254 = vshra.s32 %v11252, 16
  %v11255 = vcvt.s32.f32 %v11253
  %v11256 = vcvt.s32.f32 %v11254
  %11257 = vmin.xlane.f32.xlu0 %v11256
  %v11258 = vpop.xlane.xlu0 %11257
  %vm11259 = vcmp.eq.f32.partialorder %v11256, %v11258
  %v11260 = vsel %vm11259, %v11255, inf
  %11261 = vmin.xlane.f32.xlu0 %v11260
  %v11262 = vpop.xlane.xlu0 %11261
  %v11263 = vcvt.f32.s32 %v11262
  %v11264 = vcvt.f32.s32 %v11258
  %v11265 = vshll.u32 %v11264, 16
  %v11266 = vadd.s32 %v11265, %v11263
  %vm11267 = vcmp.eq.s32.totalorder %v56, %v11266
  %vm11268 = vcmp.eq.s32.totalorder %v57, %v11266
  %v11269 = vsel %vm11267, 1, 0
  %v11270 = vsel %vm11268, 1, 0
  %v11271 = vcvt.s32.f32 %v11269
  %v11272 = vcvt.s32.f32 %v11270
  %v11273 = vpack.c.bf16 %v11271, %v11271
  %v11274 = vpack.c.bf16 %v11272, %v11272
  %v11275 = vld [vmem:[%s9] sm:$0xf]
  %v11276 = vld [vmem:[%s9 + $0x4] sm:$0xf]
  %v11277 = vld [vmem:[%s9 + $0x8] sm:$0xf]
  %v11278 = vld [vmem:[%s9 + $0xc] sm:$0xf]
  %v11279 = vld [vmem:[%s9 + $0x10] sm:$0xf]
  %v11280 = vld [vmem:[%s9 + $0x14] sm:$0xf]
  %v11281 = vld [vmem:[%s9 + $0x18] sm:$0xf]
  %v11282 = vld [vmem:[%s9 + $0x1c] sm:$0xf]
  %v11283 = vld [vmem:[%s9 + $0x20] sm:$0xf]
  %v11284 = vld [vmem:[%s9 + $0x24] sm:$0xf]
  %v11285 = vld [vmem:[%s9 + $0x28] sm:$0xf]
  %v11286 = vld [vmem:[%s9 + $0x2c] sm:$0xf]
  %v11287 = vld [vmem:[%s9 + $0x30] sm:$0xf]
  %v11288 = vld [vmem:[%s9 + $0x34] sm:$0xf]
  %v11289 = vld [vmem:[%s9 + $0x38] sm:$0xf]
  %v11290 = vld [vmem:[%s9 + $0x3c] sm:$0xf]
  %v11291 = vld [vmem:[%s9 + $0x40] sm:$0xf]
  %v11292 = vld [vmem:[%s9 + $0x44] sm:$0xf]
  %v11293 = vld [vmem:[%s9 + $0x48] sm:$0xf]
  %v11294 = vld [vmem:[%s9 + $0x4c] sm:$0xf]
  %v11295 = vld [vmem:[%s9 + $0x50] sm:$0xf]
  %v11296 = vld [vmem:[%s9 + $0x54] sm:$0xf]
  %v11297 = vld [vmem:[%s9 + $0x58] sm:$0xf]
  %v11298 = vld [vmem:[%s9 + $0x5c] sm:$0xf]
  %v11299 = vld [vmem:[%s9 + $0x60] sm:$0xf]
  %v11300 = vld [vmem:[%s9 + $0x64] sm:$0xf]
  %v11301 = vld [vmem:[%s9 + $0x68] sm:$0xf]
  %v11302 = vld [vmem:[%s9 + $0x6c] sm:$0xf]
  %v11303 = vld [vmem:[%s9 + $0x70] sm:$0xf]
  %v11304 = vld [vmem:[%s9 + $0x74] sm:$0xf]
  %v11305 = vld [vmem:[%s9 + $0x78] sm:$0xf]
  %v11306 = vld [vmem:[%s9 + $0x7c] sm:$0xf]
  %v11339 = vunpack.c.l.b16 %v11275
  %v11340 = vunpack.c.l.b16 %v11276
  %v11341 = vunpack.c.l.b16 %v11277
  %v11342 = vunpack.c.l.b16 %v11278
  %v11343 = vunpack.c.l.b16 %v11279
  %v11344 = vunpack.c.l.b16 %v11280
  %v11345 = vunpack.c.l.b16 %v11281
  %v11346 = vunpack.c.l.b16 %v11282
  %v11347 = vunpack.c.l.b16 %v11283
  %v11348 = vunpack.c.l.b16 %v11284
  %v11349 = vunpack.c.l.b16 %v11285
  %v11350 = vunpack.c.l.b16 %v11286
  %v11351 = vunpack.c.l.b16 %v11287
  %v11352 = vunpack.c.l.b16 %v11288
  %v11353 = vunpack.c.l.b16 %v11289
  %v11354 = vunpack.c.l.b16 %v11290
  %v11355 = vunpack.c.l.b16 %v11291
  %v11356 = vunpack.c.l.b16 %v11292
  %v11357 = vunpack.c.l.b16 %v11293
  %v11358 = vunpack.c.l.b16 %v11294
  %v11359 = vunpack.c.l.b16 %v11295
  %v11360 = vunpack.c.l.b16 %v11296
  %v11361 = vunpack.c.l.b16 %v11297
  %v11362 = vunpack.c.l.b16 %v11298
  %v11363 = vunpack.c.l.b16 %v11299
  %v11364 = vunpack.c.l.b16 %v11300
  %v11365 = vunpack.c.l.b16 %v11301
  %v11366 = vunpack.c.l.b16 %v11302
  %v11367 = vunpack.c.l.b16 %v11303
  %v11368 = vunpack.c.l.b16 %v11304
  %v11369 = vunpack.c.l.b16 %v11305
  %v11370 = vunpack.c.l.b16 %v11306
  %v11371 = vpack.c.b16 %v11340, %v11339
  %v11372 = vpack.c.b16 %v11342, %v11341
  %v11373 = vpack.c.b16 %v11344, %v11343
  %v11374 = vpack.c.b16 %v11346, %v11345
  %v11375 = vpack.c.b16 %v11348, %v11347
  %v11376 = vpack.c.b16 %v11350, %v11349
  %v11377 = vpack.c.b16 %v11352, %v11351
  %v11378 = vpack.c.b16 %v11354, %v11353
  %v11379 = vpack.c.b16 %v11356, %v11355
  %v11380 = vpack.c.b16 %v11358, %v11357
  %v11381 = vpack.c.b16 %v11360, %v11359
  %v11382 = vpack.c.b16 %v11362, %v11361
  %v11383 = vpack.c.b16 %v11364, %v11363
  %v11384 = vpack.c.b16 %v11366, %v11365
  %v11385 = vpack.c.b16 %v11368, %v11367
  %v11386 = vpack.c.b16 %v11370, %v11369
  %11403 = vmatpush.bf16.msra.mxu0 %v11378
  %11404 = vmatpush.bf16.msra.mxu0 %v11377
  %11405 = vmatpush.bf16.msra.mxu0 %v11376
  %11406 = vmatpush.bf16.msra.mxu0 %v11375
  %11407 = vmatpush.bf16.msra.mxu0 %v11374
  %11408 = vmatpush.bf16.msra.mxu0 %v11373
  %11409 = vmatpush.bf16.msra.mxu0 %v11372
  %11410 = vmatpush.bf16.msra.mxu0 %v11371
  %11411 = vmatmul.bf16.gmra.mxu0 %v11273
  %v11412 = vpop.f32.mrf.mxu0
  %v11413 = vadd.f32 0.0, %v11412
  %v11414 = vpop.f32.mrf.mxu0
  %11415 = vdwg.mxu0
  %11416 = vmatpush.bf16.msra.mxu0 %v11386
  %11417 = vmatpush.bf16.msra.mxu0 %v11385
  %11418 = vmatpush.bf16.msra.mxu0 %v11384
  %11419 = vmatpush.bf16.msra.mxu0 %v11383
  %11420 = vmatpush.bf16.msra.mxu0 %v11382
  %11421 = vmatpush.bf16.msra.mxu0 %v11381
  %11422 = vmatpush.bf16.msra.mxu0 %v11380
  %11423 = vmatpush.bf16.msra.mxu0 %v11379
  %11424 = vmatmul.bf16.gmra.mxu0 %v11274
  %v11425 = vpop.f32.mrf.mxu0
  %v11426 = vadd.f32 %v11413, %v11425
  %v11427 = vpop.f32.mrf.mxu0
  %11428 = vdwg.mxu0
  %v11429 = vpack.c.bf16 %v11426, %v11426
  %v11430 = vld [vmem:[%s5] sm:$0xff]
  %v11431 = vld [vmem:[%s5 + $0x8] sm:$0xff]
  %v11432 = vld [vmem:[%s5 + $0x10] sm:$0xff]
  %v11433 = vld [vmem:[%s5 + $0x18] sm:$0xff]
  %v11434 = vld [vmem:[%s5 + $0x20] sm:$0xff]
  %v11435 = vld [vmem:[%s5 + $0x28] sm:$0xff]
  %v11436 = vld [vmem:[%s5 + $0x30] sm:$0xff]
  %v11437 = vld [vmem:[%s5 + $0x38] sm:$0xff]
  %v11438 = vld [vmem:[%s5 + $0x40] sm:$0xff]
  %v11439 = vld [vmem:[%s5 + $0x48] sm:$0xff]
  %v11440 = vld [vmem:[%s5 + $0x50] sm:$0xff]
  %v11441 = vld [vmem:[%s5 + $0x58] sm:$0xff]
  %v11442 = vld [vmem:[%s5 + $0x60] sm:$0xff]
  %v11443 = vld [vmem:[%s5 + $0x68] sm:$0xff]
  %v11444 = vld [vmem:[%s5 + $0x70] sm:$0xff]
  %v11445 = vld [vmem:[%s5 + $0x78] sm:$0xff]
  %v11446 = vld [vmem:[%s5 + $0x80] sm:$0xff]
  %v11447 = vld [vmem:[%s5 + $0x88] sm:$0xff]
  %v11448 = vld [vmem:[%s5 + $0x90] sm:$0xff]
  %v11449 = vld [vmem:[%s5 + $0x98] sm:$0xff]
  %v11450 = vld [vmem:[%s5 + $0xa0] sm:$0xff]
  %v11451 = vld [vmem:[%s5 + $0xa8] sm:$0xff]
  %v11452 = vld [vmem:[%s5 + $0xb0] sm:$0xff]
  %v11453 = vld [vmem:[%s5 + $0xb8] sm:$0xff]
  %v11454 = vld [vmem:[%s5 + $0xc0] sm:$0xff]
  %v11455 = vld [vmem:[%s5 + $0xc8] sm:$0xff]
  %v11456 = vld [vmem:[%s5 + $0xd0] sm:$0xff]
  %v11457 = vld [vmem:[%s5 + $0xd8] sm:$0xff]
  %v11458 = vld [vmem:[%s5 + $0xe0] sm:$0xff]
  %v11459 = vld [vmem:[%s5 + $0xe8] sm:$0xff]
  %v11460 = vld [vmem:[%s5 + $0xf0] sm:$0xff]
  %v11461 = vld [vmem:[%s5 + $0xf8] sm:$0xff]
  %v11462 = vld [vmem:[%s5 + $0x100] sm:$0xff]
  %v11463 = vld [vmem:[%s5 + $0x108] sm:$0xff]
  %v11464 = vld [vmem:[%s5 + $0x110] sm:$0xff]
  %v11465 = vld [vmem:[%s5 + $0x118] sm:$0xff]
  %v11466 = vld [vmem:[%s5 + $0x120] sm:$0xff]
  %v11467 = vld [vmem:[%s5 + $0x128] sm:$0xff]
  %v11468 = vld [vmem:[%s5 + $0x130] sm:$0xff]
  %v11469 = vld [vmem:[%s5 + $0x138] sm:$0xff]
  %v11470 = vld [vmem:[%s5 + $0x140] sm:$0xff]
  %v11471 = vld [vmem:[%s5 + $0x148] sm:$0xff]
  %v11472 = vld [vmem:[%s5 + $0x150] sm:$0xff]
  %v11473 = vld [vmem:[%s5 + $0x158] sm:$0xff]
  %v11474 = vld [vmem:[%s5 + $0x160] sm:$0xff]
  %v11475 = vld [vmem:[%s5 + $0x168] sm:$0xff]
  %v11476 = vld [vmem:[%s5 + $0x170] sm:$0xff]
  %v11477 = vld [vmem:[%s5 + $0x178] sm:$0xff]
  %v11526 = vunpack.c.l.b16 %v11430
  %v11527 = vunpack.c.h.b16 %v11430
  %v11528 = vunpack.c.l.b16 %v11431
  %v11529 = vunpack.c.h.b16 %v11431
  %v11530 = vunpack.c.l.b16 %v11432
  %v11531 = vunpack.c.h.b16 %v11432
  %v11532 = vunpack.c.l.b16 %v11433
  %v11533 = vunpack.c.h.b16 %v11433
  %v11534 = vunpack.c.l.b16 %v11434
  %v11535 = vunpack.c.h.b16 %v11434
  %v11536 = vunpack.c.l.b16 %v11435
  %v11537 = vunpack.c.h.b16 %v11435
  %v11538 = vunpack.c.l.b16 %v11436
  %v11539 = vunpack.c.h.b16 %v11436
  %v11540 = vunpack.c.l.b16 %v11437
  %v11541 = vunpack.c.h.b16 %v11437
  %v11542 = vunpack.c.l.b16 %v11438
  %v11543 = vunpack.c.h.b16 %v11438
  %v11544 = vunpack.c.l.b16 %v11439
  %v11545 = vunpack.c.h.b16 %v11439
  %v11546 = vunpack.c.l.b16 %v11440
  %v11547 = vunpack.c.h.b16 %v11440
  %v11548 = vunpack.c.l.b16 %v11441
  %v11549 = vunpack.c.h.b16 %v11441
  %v11550 = vunpack.c.l.b16 %v11442
  %v11551 = vunpack.c.h.b16 %v11442
  %v11552 = vunpack.c.l.b16 %v11443
  %v11553 = vunpack.c.h.b16 %v11443
  %v11554 = vunpack.c.l.b16 %v11444
  %v11555 = vunpack.c.h.b16 %v11444
  %v11556 = vunpack.c.l.b16 %v11445
  %v11557 = vunpack.c.h.b16 %v11445
  %v11558 = vunpack.c.l.b16 %v11446
  %v11559 = vunpack.c.h.b16 %v11446
  %v11560 = vunpack.c.l.b16 %v11447
  %v11561 = vunpack.c.h.b16 %v11447
  %v11562 = vunpack.c.l.b16 %v11448
  %v11563 = vunpack.c.h.b16 %v11448
  %v11564 = vunpack.c.l.b16 %v11449
  %v11565 = vunpack.c.h.b16 %v11449
  %v11566 = vunpack.c.l.b16 %v11450
  %v11567 = vunpack.c.h.b16 %v11450
  %v11568 = vunpack.c.l.b16 %v11451
  %v11569 = vunpack.c.h.b16 %v11451
  %v11570 = vunpack.c.l.b16 %v11452
  %v11571 = vunpack.c.h.b16 %v11452
  %v11572 = vunpack.c.l.b16 %v11453
  %v11573 = vunpack.c.h.b16 %v11453
  %v11574 = vunpack.c.l.b16 %v11454
  %v11575 = vunpack.c.h.b16 %v11454
  %v11576 = vunpack.c.l.b16 %v11455
  %v11577 = vunpack.c.h.b16 %v11455
  %v11578 = vunpack.c.l.b16 %v11456
  %v11579 = vunpack.c.h.b16 %v11456
  %v11580 = vunpack.c.l.b16 %v11457
  %v11581 = vunpack.c.h.b16 %v11457
  %v11582 = vunpack.c.l.b16 %v11458
  %v11583 = vunpack.c.h.b16 %v11458
  %v11584 = vunpack.c.l.b16 %v11459
  %v11585 = vunpack.c.h.b16 %v11459
  %v11586 = vunpack.c.l.b16 %v11460
  %v11587 = vunpack.c.h.b16 %v11460
  %v11588 = vunpack.c.l.b16 %v11461
  %v11589 = vunpack.c.h.b16 %v11461
  %v11590 = vunpack.c.l.b16 %v11462
  %v11591 = vunpack.c.h.b16 %v11462
  %v11592 = vunpack.c.l.b16 %v11463
  %v11593 = vunpack.c.h.b16 %v11463
  %v11594 = vunpack.c.l.b16 %v11464
  %v11595 = vunpack.c.h.b16 %v11464
  %v11596 = vunpack.c.l.b16 %v11465
  %v11597 = vunpack.c.h.b16 %v11465
  %v11598 = vunpack.c.l.b16 %v11466
  %v11599 = vunpack.c.h.b16 %v11466
  %v11600 = vunpack.c.l.b16 %v11467
  %v11601 = vunpack.c.h.b16 %v11467
  %v11602 = vunpack.c.l.b16 %v11468
  %v11603 = vunpack.c.h.b16 %v11468
  %v11604 = vunpack.c.l.b16 %v11469
  %v11605 = vunpack.c.h.b16 %v11469
  %v11606 = vunpack.c.l.b16 %v11470
  %v11607 = vunpack.c.h.b16 %v11470
  %v11608 = vunpack.c.l.b16 %v11471
  %v11609 = vunpack.c.h.b16 %v11471
  %v11610 = vunpack.c.l.b16 %v11472
  %v11611 = vunpack.c.h.b16 %v11472
  %v11612 = vunpack.c.l.b16 %v11473
  %v11613 = vunpack.c.h.b16 %v11473
  %v11614 = vunpack.c.l.b16 %v11474
  %v11615 = vunpack.c.h.b16 %v11474
  %v11616 = vunpack.c.l.b16 %v11475
  %v11617 = vunpack.c.h.b16 %v11475
  %v11618 = vunpack.c.l.b16 %v11476
  %v11619 = vunpack.c.h.b16 %v11476
  %v11620 = vunpack.c.l.b16 %v11477
  %v11621 = vunpack.c.h.b16 %v11477
  %v11622 = vpack.c.b16 %v11532, %v11526
  %v11623 = vpack.c.b16 %v11533, %v11527
  %v11624 = vpack.c.b16 %v11534, %v11528
  %v11625 = vpack.c.b16 %v11535, %v11529
  %v11626 = vpack.c.b16 %v11536, %v11530
  %v11627 = vpack.c.b16 %v11537, %v11531
  %v11628 = vpack.c.b16 %v11544, %v11538
  %v11629 = vpack.c.b16 %v11545, %v11539
  %v11630 = vpack.c.b16 %v11546, %v11540
  %v11631 = vpack.c.b16 %v11547, %v11541
  %v11632 = vpack.c.b16 %v11548, %v11542
  %v11633 = vpack.c.b16 %v11549, %v11543
  %v11634 = vpack.c.b16 %v11556, %v11550
  %v11635 = vpack.c.b16 %v11557, %v11551
  %v11636 = vpack.c.b16 %v11558, %v11552
  %v11637 = vpack.c.b16 %v11559, %v11553
  %v11638 = vpack.c.b16 %v11560, %v11554
  %v11639 = vpack.c.b16 %v11561, %v11555
  %v11640 = vpack.c.b16 %v11568, %v11562
  %v11641 = vpack.c.b16 %v11569, %v11563
  %v11642 = vpack.c.b16 %v11570, %v11564
  %v11643 = vpack.c.b16 %v11571, %v11565
  %v11644 = vpack.c.b16 %v11572, %v11566
  %v11645 = vpack.c.b16 %v11573, %v11567
  %v11646 = vpack.c.b16 %v11580, %v11574
  %v11647 = vpack.c.b16 %v11581, %v11575
  %v11648 = vpack.c.b16 %v11582, %v11576
  %v11649 = vpack.c.b16 %v11583, %v11577
  %v11650 = vpack.c.b16 %v11584, %v11578
  %v11651 = vpack.c.b16 %v11585, %v11579
  %v11652 = vpack.c.b16 %v11592, %v11586
  %v11653 = vpack.c.b16 %v11593, %v11587
  %v11654 = vpack.c.b16 %v11594, %v11588
  %v11655 = vpack.c.b16 %v11595, %v11589
  %v11656 = vpack.c.b16 %v11596, %v11590
  %v11657 = vpack.c.b16 %v11597, %v11591
  %v11658 = vpack.c.b16 %v11604, %v11598
  %v11659 = vpack.c.b16 %v11605, %v11599
  %v11660 = vpack.c.b16 %v11606, %v11600
  %v11661 = vpack.c.b16 %v11607, %v11601
  %v11662 = vpack.c.b16 %v11608, %v11602
  %v11663 = vpack.c.b16 %v11609, %v11603
  %v11664 = vpack.c.b16 %v11616, %v11610
  %v11665 = vpack.c.b16 %v11617, %v11611
  %v11666 = vpack.c.b16 %v11618, %v11612
  %v11667 = vpack.c.b16 %v11619, %v11613
  %v11668 = vpack.c.b16 %v11620, %v11614
  %v11669 = vpack.c.b16 %v11621, %v11615
  %11718 = vmatpush.bf16.msra.mxu0 %v11664
  %11719 = vmatpush.bf16.msra.mxu0 %v11658
  %11720 = vmatpush.bf16.msra.mxu0 %v11652
  %11721 = vmatpush.bf16.msra.mxu0 %v11646
  %11722 = vmatpush.bf16.msra.mxu0 %v11640
  %11723 = vmatpush.bf16.msra.mxu0 %v11634
  %11724 = vmatpush.bf16.msra.mxu0 %v11628
  %11725 = vmatpush.bf16.msra.mxu0 %v11622
  %11726 = vmatmul.bf16.gmra.mxu0 %v11068
  %v11727 = vpop.f32.mrf.mxu0
  %v11728 = vadd.f32 %v567, %v11727
  %v11729 = vpop.f32.mrf.mxu0
  %11730 = vdwg.mxu0
  %11731 = vmatpush.bf16.msra.mxu0 %v11665
  %11732 = vmatpush.bf16.msra.mxu0 %v11659
  %11733 = vmatpush.bf16.msra.mxu0 %v11653
  %11734 = vmatpush.bf16.msra.mxu0 %v11647
  %11735 = vmatpush.bf16.msra.mxu0 %v11641
  %11736 = vmatpush.bf16.msra.mxu0 %v11635
  %11737 = vmatpush.bf16.msra.mxu0 %v11629
  %11738 = vmatpush.bf16.msra.mxu0 %v11623
  %11739 = vmatmul.bf16.gmra.mxu0 %v11068
  %v11740 = vpop.f32.mrf.mxu0
  %v11741 = vadd.f32 %v568, %v11740
  %v11742 = vpop.f32.mrf.mxu0
  %11743 = vdwg.mxu0
  %11744 = vmatpush.bf16.msra.mxu0 %v11666
  %11745 = vmatpush.bf16.msra.mxu0 %v11660
  %11746 = vmatpush.bf16.msra.mxu0 %v11654
  %11747 = vmatpush.bf16.msra.mxu0 %v11648
  %11748 = vmatpush.bf16.msra.mxu0 %v11642
  %11749 = vmatpush.bf16.msra.mxu0 %v11636
  %11750 = vmatpush.bf16.msra.mxu0 %v11630
  %11751 = vmatpush.bf16.msra.mxu0 %v11624
  %11752 = vmatmul.bf16.gmra.mxu0 %v11068
  %v11753 = vpop.f32.mrf.mxu0
  %v11754 = vadd.f32 %v569, %v11753
  %v11755 = vpop.f32.mrf.mxu0
  %11756 = vdwg.mxu0
  %11757 = vmatpush.bf16.msra.mxu0 %v11667
  %11758 = vmatpush.bf16.msra.mxu0 %v11661
  %11759 = vmatpush.bf16.msra.mxu0 %v11655
  %11760 = vmatpush.bf16.msra.mxu0 %v11649
  %11761 = vmatpush.bf16.msra.mxu0 %v11643
  %11762 = vmatpush.bf16.msra.mxu0 %v11637
  %11763 = vmatpush.bf16.msra.mxu0 %v11631
  %11764 = vmatpush.bf16.msra.mxu0 %v11625
  %11765 = vmatmul.bf16.gmra.mxu0 %v11068
  %v11766 = vpop.f32.mrf.mxu0
  %v11767 = vadd.f32 %v570, %v11766
  %v11768 = vpop.f32.mrf.mxu0
  %11769 = vdwg.mxu0
  %11770 = vmatpush.bf16.msra.mxu0 %v11668
  %11771 = vmatpush.bf16.msra.mxu0 %v11662
  %11772 = vmatpush.bf16.msra.mxu0 %v11656
  %11773 = vmatpush.bf16.msra.mxu0 %v11650
  %11774 = vmatpush.bf16.msra.mxu0 %v11644
  %11775 = vmatpush.bf16.msra.mxu0 %v11638
  %11776 = vmatpush.bf16.msra.mxu0 %v11632
  %11777 = vmatpush.bf16.msra.mxu0 %v11626
  %11778 = vmatmul.bf16.gmra.mxu0 %v11068
  %v11779 = vpop.f32.mrf.mxu0
  %v11780 = vadd.f32 %v571, %v11779
  %v11781 = vpop.f32.mrf.mxu0
  %11782 = vdwg.mxu0
  %11783 = vmatpush.bf16.msra.mxu0 %v11669
  %11784 = vmatpush.bf16.msra.mxu0 %v11663
  %11785 = vmatpush.bf16.msra.mxu0 %v11657
  %11786 = vmatpush.bf16.msra.mxu0 %v11651
  %11787 = vmatpush.bf16.msra.mxu0 %v11645
  %11788 = vmatpush.bf16.msra.mxu0 %v11639
  %11789 = vmatpush.bf16.msra.mxu0 %v11633
  %11790 = vmatpush.bf16.msra.mxu0 %v11627
  %11791 = vmatmul.bf16.gmra.mxu0 %v11068
  %v11792 = vpop.f32.mrf.mxu0
  %v11793 = vadd.f32 %v572, %v11792
  %v11794 = vpop.f32.mrf.mxu0
  %11795 = vdwg.mxu0
  %v11796 = vxor.u32 %v11741, 2147483648
  %v11797 = vmul.f32 %v11796, 1.442695
  %v11798 = vpow.pop %v11797
  %v11799 = vadd.f32 %v11798, 1.0
  %v11800 = vrcp.pop %v11799
  %v11801 = vmul.f32 %v11799, %v11800
  %v11802 = vsub.f32 1.0, %v11801
  %v11803 = vmul.f32 %v11800, %v11802
  %v11804 = vadd.f32 %v11800, %v11803
  %vm11805 = vweird.f32 %v11799
  %vm11806 = vweird.f32 %v11800
  %vm11807 = vmor %vm11805, %vm11806
  %v11808 = vsel %vm11807, %v11800, %v11804
  %v11809 = vand.u32 2147483647, %v11799
  %vm11810 = vcmp.eq.f32.partialorder %v11809, 8.507059e+37
  %v11811 = vand.u32 %v11799, 2147483648
  %v11812 = vor.u32 1.1754944e-38, %v11811
  %v11813 = vsel %vm11810, %v11812, %v11808
  %v11814 = vmul.f32 1.0, %v11813
  %v11816 = vrot.slane %v11728, 1
  %v11817 = vrot.slane %v11728, 2
  %v11818 = vrot.slane %v11728, 3
  %v11819 = vrot.slane %v11728, 4
  %v11820 = vrot.slane %v11728, 5
  %v11821 = vrot.slane %v11728, 6
  %v11822 = vrot.slane %v11728, 7
  %v11823 = vperm.slane %v11728, 0
  %v11824 = vperm.slane %v11816, 0
  %v11825 = vperm.slane %v11817, 0
  %v11826 = vperm.slane %v11818, 0
  %v11827 = vperm.slane %v11819, 0
  %v11828 = vperm.slane %v11820, 0
  %v11829 = vperm.slane %v11821, 0
  %v11830 = vperm.slane %v11822, 0
  %v11839 = vadd.f32 %v496, %v11823
  %v11840 = vadd.f32 %v497, %v11823
  %v11841 = vadd.f32 %v498, %v11824
  %v11842 = vadd.f32 %v499, %v11824
  %v11843 = vadd.f32 %v500, %v11825
  %v11844 = vadd.f32 %v501, %v11825
  %v11845 = vadd.f32 %v502, %v11826
  %v11846 = vadd.f32 %v503, %v11826
  %v11847 = vadd.f32 %v504, %v11827
  %v11848 = vadd.f32 %v505, %v11827
  %v11849 = vadd.f32 %v506, %v11828
  %v11850 = vadd.f32 %v507, %v11828
  %v11851 = vadd.f32 %v508, %v11829
  %v11852 = vadd.f32 %v509, %v11829
  %v11853 = vadd.f32 %v510, %v11830
  %v11854 = vadd.f32 %v511, %v11830
  %v11855 = vtanh.pop %v11839
  %v11856 = vtanh.pop %v11840
  %v11857 = vtanh.pop %v11841
  %v11858 = vtanh.pop %v11842
  %v11859 = vtanh.pop %v11843
  %v11860 = vtanh.pop %v11844
  %v11861 = vtanh.pop %v11845
  %v11862 = vtanh.pop %v11846
  %v11863 = vtanh.pop %v11847
  %v11864 = vtanh.pop %v11848
  %v11865 = vtanh.pop %v11849
  %v11866 = vtanh.pop %v11850
  %v11867 = vtanh.pop %v11851
  %v11868 = vtanh.pop %v11852
  %v11869 = vtanh.pop %v11853
  %v11870 = vtanh.pop %v11854
  %v11871 = vmul.f32 %v11855, %v973
  %v11872 = vmul.f32 %v11856, %v973
  %v11873 = vmul.f32 %v11857, %v973
  %v11874 = vmul.f32 %v11858, %v973
  %v11875 = vmul.f32 %v11859, %v973
  %v11876 = vmul.f32 %v11860, %v973
  %v11877 = vmul.f32 %v11861, %v973
  %v11878 = vmul.f32 %v11862, %v973
  %v11879 = vmul.f32 %v11863, %v973
  %v11880 = vmul.f32 %v11864, %v973
  %v11881 = vmul.f32 %v11865, %v973
  %v11882 = vmul.f32 %v11866, %v973
  %v11883 = vmul.f32 %v11867, %v973
  %v11884 = vmul.f32 %v11868, %v973
  %v11885 = vmul.f32 %v11869, %v973
  %v11886 = vmul.f32 %v11870, %v973
  %11887 = vadd.xlane.f32.xlu0 %v11871
  %v11888 = vpop.xlane.xlu0 %11887
  %11889 = vadd.xlane.f32.xlu0 %v11872
  %v11890 = vpop.xlane.xlu0 %11889
  %11891 = vadd.xlane.f32.xlu0 %v11873
  %v11892 = vpop.xlane.xlu0 %11891
  %11893 = vadd.xlane.f32.xlu0 %v11874
  %v11894 = vpop.xlane.xlu0 %11893
  %11895 = vadd.xlane.f32.xlu0 %v11875
  %v11896 = vpop.xlane.xlu0 %11895
  %11897 = vadd.xlane.f32.xlu0 %v11876
  %v11898 = vpop.xlane.xlu0 %11897
  %11899 = vadd.xlane.f32.xlu0 %v11877
  %v11900 = vpop.xlane.xlu0 %11899
  %11901 = vadd.xlane.f32.xlu0 %v11878
  %v11902 = vpop.xlane.xlu0 %11901
  %11903 = vadd.xlane.f32.xlu0 %v11879
  %v11904 = vpop.xlane.xlu0 %11903
  %11905 = vadd.xlane.f32.xlu0 %v11880
  %v11906 = vpop.xlane.xlu0 %11905
  %11907 = vadd.xlane.f32.xlu0 %v11881
  %v11908 = vpop.xlane.xlu0 %11907
  %11909 = vadd.xlane.f32.xlu0 %v11882
  %v11910 = vpop.xlane.xlu0 %11909
  %11911 = vadd.xlane.f32.xlu0 %v11883
  %v11912 = vpop.xlane.xlu0 %11911
  %11913 = vadd.xlane.f32.xlu0 %v11884
  %v11914 = vpop.xlane.xlu0 %11913
  %11915 = vadd.xlane.f32.xlu0 %v11885
  %v11916 = vpop.xlane.xlu0 %11915
  %11917 = vadd.xlane.f32.xlu0 %v11886
  %v11918 = vpop.xlane.xlu0 %11917
  %v11919 = vadd.f32 %v11888, %v1023
  %v11920 = vadd.f32 %v11890, %v1023
  %v11921 = vadd.f32 %v11892, %v1023
  %v11922 = vadd.f32 %v11894, %v1023
  %v11923 = vadd.f32 %v11896, %v1023
  %v11924 = vadd.f32 %v11898, %v1023
  %v11925 = vadd.f32 %v11900, %v1023
  %v11926 = vadd.f32 %v11902, %v1023
  %v11927 = vadd.f32 %v11904, %v1023
  %v11928 = vadd.f32 %v11906, %v1023
  %v11929 = vadd.f32 %v11908, %v1023
  %v11930 = vadd.f32 %v11910, %v1023
  %v11931 = vadd.f32 %v11912, %v1023
  %v11932 = vadd.f32 %v11914, %v1023
  %v11933 = vadd.f32 %v11916, %v1023
  %v11934 = vadd.f32 %v11918, %v1023
  %v11935 = vmax.f32 %v11919, %v11920
  %v11936 = vrot.slane %v11935, 4
  %v11937 = vmax.f32 %v11935, %v11936
  %v11938 = vrot.slane %v11937, 2
  %v11939 = vmax.f32 %v11937, %v11938
  %v11940 = vrot.slane %v11939, 1
  %v11941 = vmax.f32 %v11939, %v11940
  %v11942 = vmax.f32 %v11921, %v11922
  %v11943 = vrot.slane %v11942, 4
  %v11944 = vmax.f32 %v11942, %v11943
  %v11945 = vrot.slane %v11944, 2
  %v11946 = vmax.f32 %v11944, %v11945
  %v11947 = vrot.slane %v11946, 1
  %v11948 = vmax.f32 %v11946, %v11947
  %v11949 = vmax.f32 %v11923, %v11924
  %v11950 = vrot.slane %v11949, 4
  %v11951 = vmax.f32 %v11949, %v11950
  %v11952 = vrot.slane %v11951, 2
  %v11953 = vmax.f32 %v11951, %v11952
  %v11954 = vrot.slane %v11953, 1
  %v11955 = vmax.f32 %v11953, %v11954
  %v11956 = vmax.f32 %v11925, %v11926
  %v11957 = vrot.slane %v11956, 4
  %v11958 = vmax.f32 %v11956, %v11957
  %v11959 = vrot.slane %v11958, 2
  %v11960 = vmax.f32 %v11958, %v11959
  %v11961 = vrot.slane %v11960, 1
  %v11962 = vmax.f32 %v11960, %v11961
  %v11963 = vmax.f32 %v11927, %v11928
  %v11964 = vrot.slane %v11963, 4
  %v11965 = vmax.f32 %v11963, %v11964
  %v11966 = vrot.slane %v11965, 2
  %v11967 = vmax.f32 %v11965, %v11966
  %v11968 = vrot.slane %v11967, 1
  %v11969 = vmax.f32 %v11967, %v11968
  %v11970 = vmax.f32 %v11929, %v11930
  %v11971 = vrot.slane %v11970, 4
  %v11972 = vmax.f32 %v11970, %v11971
  %v11973 = vrot.slane %v11972, 2
  %v11974 = vmax.f32 %v11972, %v11973
  %v11975 = vrot.slane %v11974, 1
  %v11976 = vmax.f32 %v11974, %v11975
  %v11977 = vmax.f32 %v11931, %v11932
  %v11978 = vrot.slane %v11977, 4
  %v11979 = vmax.f32 %v11977, %v11978
  %v11980 = vrot.slane %v11979, 2
  %v11981 = vmax.f32 %v11979, %v11980
  %v11982 = vrot.slane %v11981, 1
  %v11983 = vmax.f32 %v11981, %v11982
  %v11984 = vmax.f32 %v11933, %v11934
  %v11985 = vrot.slane %v11984, 4
  %v11986 = vmax.f32 %v11984, %v11985
  %v11987 = vrot.slane %v11986, 2
  %v11988 = vmax.f32 %v11986, %v11987
  %v11989 = vrot.slane %v11988, 1
  %v11990 = vmax.f32 %v11988, %v11989
  %v11991 = vsub.f32 %v11919, %v11941
  %v11992 = vsub.f32 %v11920, %v11941
  %v11993 = vsub.f32 %v11921, %v11948
  %v11994 = vsub.f32 %v11922, %v11948
  %v11995 = vsub.f32 %v11923, %v11955
  %v11996 = vsub.f32 %v11924, %v11955
  %v11997 = vsub.f32 %v11925, %v11962
  %v11998 = vsub.f32 %v11926, %v11962
  %v11999 = vsub.f32 %v11927, %v11969
  %v12000 = vsub.f32 %v11928, %v11969
  %v12001 = vsub.f32 %v11929, %v11976
  %v12002 = vsub.f32 %v11930, %v11976
  %v12003 = vsub.f32 %v11931, %v11983
  %v12004 = vsub.f32 %v11932, %v11983
  %v12005 = vsub.f32 %v11933, %v11990
  %v12006 = vsub.f32 %v11934, %v11990
  %v12007 = vmul.f32 %v11991, 1.442695
  %v12008 = vpow.pop %v12007
  %v12009 = vmul.f32 %v11992, 1.442695
  %v12010 = vpow.pop %v12009
  %v12011 = vmul.f32 %v11993, 1.442695
  %v12012 = vpow.pop %v12011
  %v12013 = vmul.f32 %v11994, 1.442695
  %v12014 = vpow.pop %v12013
  %v12015 = vmul.f32 %v11995, 1.442695
  %v12016 = vpow.pop %v12015
  %v12017 = vmul.f32 %v11996, 1.442695
  %v12018 = vpow.pop %v12017
  %v12019 = vmul.f32 %v11997, 1.442695
  %v12020 = vpow.pop %v12019
  %v12021 = vmul.f32 %v11998, 1.442695
  %v12022 = vpow.pop %v12021
  %v12023 = vmul.f32 %v11999, 1.442695
  %v12024 = vpow.pop %v12023
  %v12025 = vmul.f32 %v12000, 1.442695
  %v12026 = vpow.pop %v12025
  %v12027 = vmul.f32 %v12001, 1.442695
  %v12028 = vpow.pop %v12027
  %v12029 = vmul.f32 %v12002, 1.442695
  %v12030 = vpow.pop %v12029
  %v12031 = vmul.f32 %v12003, 1.442695
  %v12032 = vpow.pop %v12031
  %v12033 = vmul.f32 %v12004, 1.442695
  %v12034 = vpow.pop %v12033
  %v12035 = vmul.f32 %v12005, 1.442695
  %v12036 = vpow.pop %v12035
  %v12037 = vmul.f32 %v12006, 1.442695
  %v12038 = vpow.pop %v12037
  %v12039 = vadd.f32 %v12008, %v12010
  %v12040 = vrot.slane %v12039, 4
  %v12041 = vadd.f32 %v12039, %v12040
  %v12042 = vrot.slane %v12041, 2
  %v12043 = vadd.f32 %v12041, %v12042
  %v12044 = vrot.slane %v12043, 1
  %v12045 = vadd.f32 %v12043, %v12044
  %v12046 = vadd.f32 %v12012, %v12014
  %v12047 = vrot.slane %v12046, 4
  %v12048 = vadd.f32 %v12046, %v12047
  %v12049 = vrot.slane %v12048, 2
  %v12050 = vadd.f32 %v12048, %v12049
  %v12051 = vrot.slane %v12050, 1
  %v12052 = vadd.f32 %v12050, %v12051
  %v12053 = vadd.f32 %v12016, %v12018
  %v12054 = vrot.slane %v12053, 4
  %v12055 = vadd.f32 %v12053, %v12054
  %v12056 = vrot.slane %v12055, 2
  %v12057 = vadd.f32 %v12055, %v12056
  %v12058 = vrot.slane %v12057, 1
  %v12059 = vadd.f32 %v12057, %v12058
  %v12060 = vadd.f32 %v12020, %v12022
  %v12061 = vrot.slane %v12060, 4
  %v12062 = vadd.f32 %v12060, %v12061
  %v12063 = vrot.slane %v12062, 2
  %v12064 = vadd.f32 %v12062, %v12063
  %v12065 = vrot.slane %v12064, 1
  %v12066 = vadd.f32 %v12064, %v12065
  %v12067 = vadd.f32 %v12024, %v12026
  %v12068 = vrot.slane %v12067, 4
  %v12069 = vadd.f32 %v12067, %v12068
  %v12070 = vrot.slane %v12069, 2
  %v12071 = vadd.f32 %v12069, %v12070
  %v12072 = vrot.slane %v12071, 1
  %v12073 = vadd.f32 %v12071, %v12072
  %v12074 = vadd.f32 %v12028, %v12030
  %v12075 = vrot.slane %v12074, 4
  %v12076 = vadd.f32 %v12074, %v12075
  %v12077 = vrot.slane %v12076, 2
  %v12078 = vadd.f32 %v12076, %v12077
  %v12079 = vrot.slane %v12078, 1
  %v12080 = vadd.f32 %v12078, %v12079
  %v12081 = vadd.f32 %v12032, %v12034
  %v12082 = vrot.slane %v12081, 4
  %v12083 = vadd.f32 %v12081, %v12082
  %v12084 = vrot.slane %v12083, 2
  %v12085 = vadd.f32 %v12083, %v12084
  %v12086 = vrot.slane %v12085, 1
  %v12087 = vadd.f32 %v12085, %v12086
  %v12088 = vadd.f32 %v12036, %v12038
  %v12089 = vrot.slane %v12088, 4
  %v12090 = vadd.f32 %v12088, %v12089
  %v12091 = vrot.slane %v12090, 2
  %v12092 = vadd.f32 %v12090, %v12091
  %v12093 = vrot.slane %v12092, 1
  %v12094 = vadd.f32 %v12092, %v12093
  %v12095 = vrcp.pop %v12045
  %v12096 = vmul.f32 %v12045, %v12095
  %v12097 = vsub.f32 1.0, %v12096
  %v12098 = vmul.f32 %v12095, %v12097
  %v12099 = vadd.f32 %v12095, %v12098
  %vm12100 = vweird.f32 %v12045
  %vm12101 = vweird.f32 %v12095
  %vm12102 = vmor %vm12100, %vm12101
  %v12103 = vsel %vm12102, %v12095, %v12099
  %v12104 = vand.u32 2147483647, %v12045
  %vm12105 = vcmp.eq.f32.partialorder %v12104, 8.507059e+37
  %v12106 = vand.u32 %v12045, 2147483648
  %v12107 = vor.u32 1.1754944e-38, %v12106
  %v12108 = vsel %vm12105, %v12107, %v12103
  %v12109 = vmul.f32 %v12008, %v12108
  %v12110 = vmul.f32 %v12010, %v12108
  %v12111 = vrcp.pop %v12052
  %v12112 = vmul.f32 %v12052, %v12111
  %v12113 = vsub.f32 1.0, %v12112
  %v12114 = vmul.f32 %v12111, %v12113
  %v12115 = vadd.f32 %v12111, %v12114
  %vm12116 = vweird.f32 %v12052
  %vm12117 = vweird.f32 %v12111
  %vm12118 = vmor %vm12116, %vm12117
  %v12119 = vsel %vm12118, %v12111, %v12115
  %v12120 = vand.u32 2147483647, %v12052
  %vm12121 = vcmp.eq.f32.partialorder %v12120, 8.507059e+37
  %v12122 = vand.u32 %v12052, 2147483648
  %v12123 = vor.u32 1.1754944e-38, %v12122
  %v12124 = vsel %vm12121, %v12123, %v12119
  %v12125 = vmul.f32 %v12012, %v12124
  %v12126 = vmul.f32 %v12014, %v12124
  %v12127 = vrcp.pop %v12059
  %v12128 = vmul.f32 %v12059, %v12127
  %v12129 = vsub.f32 1.0, %v12128
  %v12130 = vmul.f32 %v12127, %v12129
  %v12131 = vadd.f32 %v12127, %v12130
  %vm12132 = vweird.f32 %v12059
  %vm12133 = vweird.f32 %v12127
  %vm12134 = vmor %vm12132, %vm12133
  %v12135 = vsel %vm12134, %v12127, %v12131
  %v12136 = vand.u32 2147483647, %v12059
  %vm12137 = vcmp.eq.f32.partialorder %v12136, 8.507059e+37
  %v12138 = vand.u32 %v12059, 2147483648
  %v12139 = vor.u32 1.1754944e-38, %v12138
  %v12140 = vsel %vm12137, %v12139, %v12135
  %v12141 = vmul.f32 %v12016, %v12140
  %v12142 = vmul.f32 %v12018, %v12140
  %v12143 = vrcp.pop %v12066
  %v12144 = vmul.f32 %v12066, %v12143
  %v12145 = vsub.f32 1.0, %v12144
  %v12146 = vmul.f32 %v12143, %v12145
  %v12147 = vadd.f32 %v12143, %v12146
  %vm12148 = vweird.f32 %v12066
  %vm12149 = vweird.f32 %v12143
  %vm12150 = vmor %vm12148, %vm12149
  %v12151 = vsel %vm12150, %v12143, %v12147
  %v12152 = vand.u32 2147483647, %v12066
  %vm12153 = vcmp.eq.f32.partialorder %v12152, 8.507059e+37
  %v12154 = vand.u32 %v12066, 2147483648
  %v12155 = vor.u32 1.1754944e-38, %v12154
  %v12156 = vsel %vm12153, %v12155, %v12151
  %v12157 = vmul.f32 %v12020, %v12156
  %v12158 = vmul.f32 %v12022, %v12156
  %v12159 = vrcp.pop %v12073
  %v12160 = vmul.f32 %v12073, %v12159
  %v12161 = vsub.f32 1.0, %v12160
  %v12162 = vmul.f32 %v12159, %v12161
  %v12163 = vadd.f32 %v12159, %v12162
  %vm12164 = vweird.f32 %v12073
  %vm12165 = vweird.f32 %v12159
  %vm12166 = vmor %vm12164, %vm12165
  %v12167 = vsel %vm12166, %v12159, %v12163
  %v12168 = vand.u32 2147483647, %v12073
  %vm12169 = vcmp.eq.f32.partialorder %v12168, 8.507059e+37
  %v12170 = vand.u32 %v12073, 2147483648
  %v12171 = vor.u32 1.1754944e-38, %v12170
  %v12172 = vsel %vm12169, %v12171, %v12167
  %v12173 = vmul.f32 %v12024, %v12172
  %v12174 = vmul.f32 %v12026, %v12172
  %v12175 = vrcp.pop %v12080
  %v12176 = vmul.f32 %v12080, %v12175
  %v12177 = vsub.f32 1.0, %v12176
  %v12178 = vmul.f32 %v12175, %v12177
  %v12179 = vadd.f32 %v12175, %v12178
  %vm12180 = vweird.f32 %v12080
  %vm12181 = vweird.f32 %v12175
  %vm12182 = vmor %vm12180, %vm12181
  %v12183 = vsel %vm12182, %v12175, %v12179
  %v12184 = vand.u32 2147483647, %v12080
  %vm12185 = vcmp.eq.f32.partialorder %v12184, 8.507059e+37
  %v12186 = vand.u32 %v12080, 2147483648
  %v12187 = vor.u32 1.1754944e-38, %v12186
  %v12188 = vsel %vm12185, %v12187, %v12183
  %v12189 = vmul.f32 %v12028, %v12188
  %v12190 = vmul.f32 %v12030, %v12188
  %v12191 = vrcp.pop %v12087
  %v12192 = vmul.f32 %v12087, %v12191
  %v12193 = vsub.f32 1.0, %v12192
  %v12194 = vmul.f32 %v12191, %v12193
  %v12195 = vadd.f32 %v12191, %v12194
  %vm12196 = vweird.f32 %v12087
  %vm12197 = vweird.f32 %v12191
  %vm12198 = vmor %vm12196, %vm12197
  %v12199 = vsel %vm12198, %v12191, %v12195
  %v12200 = vand.u32 2147483647, %v12087
  %vm12201 = vcmp.eq.f32.partialorder %v12200, 8.507059e+37
  %v12202 = vand.u32 %v12087, 2147483648
  %v12203 = vor.u32 1.1754944e-38, %v12202
  %v12204 = vsel %vm12201, %v12203, %v12199
  %v12205 = vmul.f32 %v12032, %v12204
  %v12206 = vmul.f32 %v12034, %v12204
  %v12207 = vrcp.pop %v12094
  %v12208 = vmul.f32 %v12094, %v12207
  %v12209 = vsub.f32 1.0, %v12208
  %v12210 = vmul.f32 %v12207, %v12209
  %v12211 = vadd.f32 %v12207, %v12210
  %vm12212 = vweird.f32 %v12094
  %vm12213 = vweird.f32 %v12207
  %vm12214 = vmor %vm12212, %vm12213
  %v12215 = vsel %vm12214, %v12207, %v12211
  %v12216 = vand.u32 2147483647, %v12094
  %vm12217 = vcmp.eq.f32.partialorder %v12216, 8.507059e+37
  %v12218 = vand.u32 %v12094, 2147483648
  %v12219 = vor.u32 1.1754944e-38, %v12218
  %v12220 = vsel %vm12217, %v12219, %v12215
  %v12221 = vmul.f32 %v12036, %v12220
  %v12222 = vmul.f32 %v12038, %v12220
  %v12223 = vld [vmem:[%s0] sm:$0xff]
  %v12224 = vld [vmem:[%s0 + $0x8] sm:$0xff]
  %v12225 = vld [vmem:[%s0 + $0x10] sm:$0xff]
  %v12226 = vld [vmem:[%s0 + $0x18] sm:$0xff]
  %v12227 = vld [vmem:[%s0 + $0x20] sm:$0xff]
  %v12228 = vld [vmem:[%s0 + $0x28] sm:$0xff]
  %v12229 = vld [vmem:[%s0 + $0x30] sm:$0xff]
  %v12230 = vld [vmem:[%s0 + $0x38] sm:$0xff]
  %v12231 = vld [vmem:[%s0 + $0x40] sm:$0xff]
  %v12232 = vld [vmem:[%s0 + $0x48] sm:$0xff]
  %v12233 = vld [vmem:[%s0 + $0x50] sm:$0xff]
  %v12234 = vld [vmem:[%s0 + $0x58] sm:$0xff]
  %v12235 = vld [vmem:[%s0 + $0x60] sm:$0xff]
  %v12236 = vld [vmem:[%s0 + $0x68] sm:$0xff]
  %v12237 = vld [vmem:[%s0 + $0x70] sm:$0xff]
  %v12238 = vld [vmem:[%s0 + $0x78] sm:$0xff]
  %v12239 = vmul.f32 %v12223, %v12109
  %v12240 = vmul.f32 %v12224, %v12110
  %v12241 = vmul.f32 %v12225, %v12125
  %v12242 = vmul.f32 %v12226, %v12126
  %v12243 = vmul.f32 %v12227, %v12141
  %v12244 = vmul.f32 %v12228, %v12142
  %v12245 = vmul.f32 %v12229, %v12157
  %v12246 = vmul.f32 %v12230, %v12158
  %v12247 = vmul.f32 %v12231, %v12173
  %v12248 = vmul.f32 %v12232, %v12174
  %v12249 = vmul.f32 %v12233, %v12189
  %v12250 = vmul.f32 %v12234, %v12190
  %v12251 = vmul.f32 %v12235, %v12205
  %v12252 = vmul.f32 %v12236, %v12206
  %v12253 = vmul.f32 %v12237, %v12221
  %v12254 = vmul.f32 %v12238, %v12222
  %v12255 = vadd.f32 %v12239, %v12240
  %v12256 = vrot.slane %v12255, 4
  %v12257 = vadd.f32 %v12255, %v12256
  %v12258 = vrot.slane %v12257, 2
  %v12259 = vadd.f32 %v12257, %v12258
  %v12260 = vrot.slane %v12259, 1
  %v12261 = vadd.f32 %v12259, %v12260
  %v12262 = vadd.f32 %v12241, %v12242
  %v12263 = vrot.slane %v12262, 4
  %v12264 = vadd.f32 %v12262, %v12263
  %v12265 = vrot.slane %v12264, 2
  %v12266 = vadd.f32 %v12264, %v12265
  %v12267 = vrot.slane %v12266, 1
  %v12268 = vadd.f32 %v12266, %v12267
  %v12269 = vadd.f32 %v12243, %v12244
  %v12270 = vrot.slane %v12269, 4
  %v12271 = vadd.f32 %v12269, %v12270
  %v12272 = vrot.slane %v12271, 2
  %v12273 = vadd.f32 %v12271, %v12272
  %v12274 = vrot.slane %v12273, 1
  %v12275 = vadd.f32 %v12273, %v12274
  %v12276 = vadd.f32 %v12245, %v12246
  %v12277 = vrot.slane %v12276, 4
  %v12278 = vadd.f32 %v12276, %v12277
  %v12279 = vrot.slane %v12278, 2
  %v12280 = vadd.f32 %v12278, %v12279
  %v12281 = vrot.slane %v12280, 1
  %v12282 = vadd.f32 %v12280, %v12281
  %v12283 = vadd.f32 %v12247, %v12248
  %v12284 = vrot.slane %v12283, 4
  %v12285 = vadd.f32 %v12283, %v12284
  %v12286 = vrot.slane %v12285, 2
  %v12287 = vadd.f32 %v12285, %v12286
  %v12288 = vrot.slane %v12287, 1
  %v12289 = vadd.f32 %v12287, %v12288
  %v12290 = vadd.f32 %v12249, %v12250
  %v12291 = vrot.slane %v12290, 4
  %v12292 = vadd.f32 %v12290, %v12291
  %v12293 = vrot.slane %v12292, 2
  %v12294 = vadd.f32 %v12292, %v12293
  %v12295 = vrot.slane %v12294, 1
  %v12296 = vadd.f32 %v12294, %v12295
  %v12297 = vadd.f32 %v12251, %v12252
  %v12298 = vrot.slane %v12297, 4
  %v12299 = vadd.f32 %v12297, %v12298
  %v12300 = vrot.slane %v12299, 2
  %v12301 = vadd.f32 %v12299, %v12300
  %v12302 = vrot.slane %v12301, 1
  %v12303 = vadd.f32 %v12301, %v12302
  %v12304 = vadd.f32 %v12253, %v12254
  %v12305 = vrot.slane %v12304, 4
  %v12306 = vadd.f32 %v12304, %v12305
  %v12307 = vrot.slane %v12306, 2
  %v12308 = vadd.f32 %v12306, %v12307
  %v12309 = vrot.slane %v12308, 1
  %v12310 = vadd.f32 %v12308, %v12309
  %v12319 = vsel %vm191, %v12268, %v12261
  %v12320 = vsel %vm193, %v12275, %v12319
  %v12321 = vsel %vm195, %v12282, %v12320
  %v12322 = vsel %vm197, %v12289, %v12321
  %v12323 = vsel %vm199, %v12296, %v12322
  %v12324 = vsel %vm201, %v12303, %v12323
  %v12325 = vsel %vm203, %v12310, %v12324
  %v12327 = vmul.f32 %v11814, %v12325
  %v12328 = vpack.c.bf16 %v12327, %v12327
  %v12329 = vld [vmem:[%s10] sm:$0xff]
  %v12330 = vld [vmem:[%s10 + $0x8] sm:$0xff]
  %v12331 = vld [vmem:[%s10 + $0x10] sm:$0xff]
  %v12332 = vld [vmem:[%s10 + $0x18] sm:$0xff]
  %v12333 = vld [vmem:[%s10 + $0x20] sm:$0xff]
  %v12334 = vld [vmem:[%s10 + $0x28] sm:$0xff]
  %v12335 = vld [vmem:[%s10 + $0x30] sm:$0xff]
  %v12336 = vld [vmem:[%s10 + $0x38] sm:$0xff]
  %v12337 = vld [vmem:[%s10 + $0x40] sm:$0xff]
  %v12338 = vld [vmem:[%s10 + $0x48] sm:$0xff]
  %v12339 = vld [vmem:[%s10 + $0x50] sm:$0xff]
  %v12340 = vld [vmem:[%s10 + $0x58] sm:$0xff]
  %v12341 = vld [vmem:[%s10 + $0x60] sm:$0xff]
  %v12342 = vld [vmem:[%s10 + $0x68] sm:$0xff]
  %v12343 = vld [vmem:[%s10 + $0x70] sm:$0xff]
  %v12344 = vld [vmem:[%s10 + $0x78] sm:$0xff]
  %v12345 = vld [vmem:[%s10 + $0x80] sm:$0xff]
  %v12346 = vld [vmem:[%s10 + $0x88] sm:$0xff]
  %v12347 = vld [vmem:[%s10 + $0x90] sm:$0xff]
  %v12348 = vld [vmem:[%s10 + $0x98] sm:$0xff]
  %v12349 = vld [vmem:[%s10 + $0xa0] sm:$0xff]
  %v12350 = vld [vmem:[%s10 + $0xa8] sm:$0xff]
  %v12351 = vld [vmem:[%s10 + $0xb0] sm:$0xff]
  %v12352 = vld [vmem:[%s10 + $0xb8] sm:$0xff]
  %v12353 = vld [vmem:[%s10 + $0xc0] sm:$0xff]
  %v12354 = vld [vmem:[%s10 + $0xc8] sm:$0xff]
  %v12355 = vld [vmem:[%s10 + $0xd0] sm:$0xff]
  %v12356 = vld [vmem:[%s10 + $0xd8] sm:$0xff]
  %v12357 = vld [vmem:[%s10 + $0xe0] sm:$0xff]
  %v12358 = vld [vmem:[%s10 + $0xe8] sm:$0xff]
  %v12359 = vld [vmem:[%s10 + $0xf0] sm:$0xff]
  %v12360 = vld [vmem:[%s10 + $0xf8] sm:$0xff]
  %v12361 = vld [vmem:[%s10 + $0x100] sm:$0xff]
  %v12362 = vld [vmem:[%s10 + $0x108] sm:$0xff]
  %v12363 = vld [vmem:[%s10 + $0x110] sm:$0xff]
  %v12364 = vld [vmem:[%s10 + $0x118] sm:$0xff]
  %v12365 = vld [vmem:[%s10 + $0x120] sm:$0xff]
  %v12366 = vld [vmem:[%s10 + $0x128] sm:$0xff]
  %v12367 = vld [vmem:[%s10 + $0x130] sm:$0xff]
  %v12368 = vld [vmem:[%s10 + $0x138] sm:$0xff]
  %v12369 = vld [vmem:[%s10 + $0x140] sm:$0xff]
  %v12370 = vld [vmem:[%s10 + $0x148] sm:$0xff]
  %v12371 = vld [vmem:[%s10 + $0x150] sm:$0xff]
  %v12372 = vld [vmem:[%s10 + $0x158] sm:$0xff]
  %v12373 = vld [vmem:[%s10 + $0x160] sm:$0xff]
  %v12374 = vld [vmem:[%s10 + $0x168] sm:$0xff]
  %v12375 = vld [vmem:[%s10 + $0x170] sm:$0xff]
  %v12376 = vld [vmem:[%s10 + $0x178] sm:$0xff]
  %v12377 = vld [vmem:[%s10 + $0x180] sm:$0xff]
  %v12378 = vld [vmem:[%s10 + $0x188] sm:$0xff]
  %v12379 = vld [vmem:[%s10 + $0x190] sm:$0xff]
  %v12380 = vld [vmem:[%s10 + $0x198] sm:$0xff]
  %v12381 = vld [vmem:[%s10 + $0x1a0] sm:$0xff]
  %v12382 = vld [vmem:[%s10 + $0x1a8] sm:$0xff]
  %v12383 = vld [vmem:[%s10 + $0x1b0] sm:$0xff]
  %v12384 = vld [vmem:[%s10 + $0x1b8] sm:$0xff]
  %v12385 = vld [vmem:[%s10 + $0x1c0] sm:$0xff]
  %v12386 = vld [vmem:[%s10 + $0x1c8] sm:$0xff]
  %v12387 = vld [vmem:[%s10 + $0x1d0] sm:$0xff]
  %v12388 = vld [vmem:[%s10 + $0x1d8] sm:$0xff]
  %v12389 = vld [vmem:[%s10 + $0x1e0] sm:$0xff]
  %v12390 = vld [vmem:[%s10 + $0x1e8] sm:$0xff]
  %v12391 = vld [vmem:[%s10 + $0x1f0] sm:$0xff]
  %v12392 = vld [vmem:[%s10 + $0x1f8] sm:$0xff]
  %v12457 = vunpack.c.l.b16 %v12329
  %v12458 = vunpack.c.h.b16 %v12329
  %v12459 = vunpack.c.l.b16 %v12330
  %v12460 = vunpack.c.h.b16 %v12330
  %v12461 = vunpack.c.l.b16 %v12331
  %v12462 = vunpack.c.h.b16 %v12331
  %v12463 = vunpack.c.l.b16 %v12332
  %v12464 = vunpack.c.h.b16 %v12332
  %v12465 = vunpack.c.l.b16 %v12333
  %v12466 = vunpack.c.h.b16 %v12333
  %v12467 = vunpack.c.l.b16 %v12334
  %v12468 = vunpack.c.h.b16 %v12334
  %v12469 = vunpack.c.l.b16 %v12335
  %v12470 = vunpack.c.h.b16 %v12335
  %v12471 = vunpack.c.l.b16 %v12336
  %v12472 = vunpack.c.h.b16 %v12336
  %v12473 = vunpack.c.l.b16 %v12337
  %v12474 = vunpack.c.h.b16 %v12337
  %v12475 = vunpack.c.l.b16 %v12338
  %v12476 = vunpack.c.h.b16 %v12338
  %v12477 = vunpack.c.l.b16 %v12339
  %v12478 = vunpack.c.h.b16 %v12339
  %v12479 = vunpack.c.l.b16 %v12340
  %v12480 = vunpack.c.h.b16 %v12340
  %v12481 = vunpack.c.l.b16 %v12341
  %v12482 = vunpack.c.h.b16 %v12341
  %v12483 = vunpack.c.l.b16 %v12342
  %v12484 = vunpack.c.h.b16 %v12342
  %v12485 = vunpack.c.l.b16 %v12343
  %v12486 = vunpack.c.h.b16 %v12343
  %v12487 = vunpack.c.l.b16 %v12344
  %v12488 = vunpack.c.h.b16 %v12344
  %v12489 = vunpack.c.l.b16 %v12345
  %v12490 = vunpack.c.h.b16 %v12345
  %v12491 = vunpack.c.l.b16 %v12346
  %v12492 = vunpack.c.h.b16 %v12346
  %v12493 = vunpack.c.l.b16 %v12347
  %v12494 = vunpack.c.h.b16 %v12347
  %v12495 = vunpack.c.l.b16 %v12348
  %v12496 = vunpack.c.h.b16 %v12348
  %v12497 = vunpack.c.l.b16 %v12349
  %v12498 = vunpack.c.h.b16 %v12349
  %v12499 = vunpack.c.l.b16 %v12350
  %v12500 = vunpack.c.h.b16 %v12350
  %v12501 = vunpack.c.l.b16 %v12351
  %v12502 = vunpack.c.h.b16 %v12351
  %v12503 = vunpack.c.l.b16 %v12352
  %v12504 = vunpack.c.h.b16 %v12352
  %v12505 = vunpack.c.l.b16 %v12353
  %v12506 = vunpack.c.h.b16 %v12353
  %v12507 = vunpack.c.l.b16 %v12354
  %v12508 = vunpack.c.h.b16 %v12354
  %v12509 = vunpack.c.l.b16 %v12355
  %v12510 = vunpack.c.h.b16 %v12355
  %v12511 = vunpack.c.l.b16 %v12356
  %v12512 = vunpack.c.h.b16 %v12356
  %v12513 = vunpack.c.l.b16 %v12357
  %v12514 = vunpack.c.h.b16 %v12357
  %v12515 = vunpack.c.l.b16 %v12358
  %v12516 = vunpack.c.h.b16 %v12358
  %v12517 = vunpack.c.l.b16 %v12359
  %v12518 = vunpack.c.h.b16 %v12359
  %v12519 = vunpack.c.l.b16 %v12360
  %v12520 = vunpack.c.h.b16 %v12360
  %v12521 = vunpack.c.l.b16 %v12361
  %v12522 = vunpack.c.h.b16 %v12361
  %v12523 = vunpack.c.l.b16 %v12362
  %v12524 = vunpack.c.h.b16 %v12362
  %v12525 = vunpack.c.l.b16 %v12363
  %v12526 = vunpack.c.h.b16 %v12363
  %v12527 = vunpack.c.l.b16 %v12364
  %v12528 = vunpack.c.h.b16 %v12364
  %v12529 = vunpack.c.l.b16 %v12365
  %v12530 = vunpack.c.h.b16 %v12365
  %v12531 = vunpack.c.l.b16 %v12366
  %v12532 = vunpack.c.h.b16 %v12366
  %v12533 = vunpack.c.l.b16 %v12367
  %v12534 = vunpack.c.h.b16 %v12367
  %v12535 = vunpack.c.l.b16 %v12368
  %v12536 = vunpack.c.h.b16 %v12368
  %v12537 = vunpack.c.l.b16 %v12369
  %v12538 = vunpack.c.h.b16 %v12369
  %v12539 = vunpack.c.l.b16 %v12370
  %v12540 = vunpack.c.h.b16 %v12370
  %v12541 = vunpack.c.l.b16 %v12371
  %v12542 = vunpack.c.h.b16 %v12371
  %v12543 = vunpack.c.l.b16 %v12372
  %v12544 = vunpack.c.h.b16 %v12372
  %v12545 = vunpack.c.l.b16 %v12373
  %v12546 = vunpack.c.h.b16 %v12373
  %v12547 = vunpack.c.l.b16 %v12374
  %v12548 = vunpack.c.h.b16 %v12374
  %v12549 = vunpack.c.l.b16 %v12375
  %v12550 = vunpack.c.h.b16 %v12375
  %v12551 = vunpack.c.l.b16 %v12376
  %v12552 = vunpack.c.h.b16 %v12376
  %v12553 = vunpack.c.l.b16 %v12377
  %v12554 = vunpack.c.h.b16 %v12377
  %v12555 = vunpack.c.l.b16 %v12378
  %v12556 = vunpack.c.h.b16 %v12378
  %v12557 = vunpack.c.l.b16 %v12379
  %v12558 = vunpack.c.h.b16 %v12379
  %v12559 = vunpack.c.l.b16 %v12380
  %v12560 = vunpack.c.h.b16 %v12380
  %v12561 = vunpack.c.l.b16 %v12381
  %v12562 = vunpack.c.h.b16 %v12381
  %v12563 = vunpack.c.l.b16 %v12382
  %v12564 = vunpack.c.h.b16 %v12382
  %v12565 = vunpack.c.l.b16 %v12383
  %v12566 = vunpack.c.h.b16 %v12383
  %v12567 = vunpack.c.l.b16 %v12384
  %v12568 = vunpack.c.h.b16 %v12384
  %v12569 = vunpack.c.l.b16 %v12385
  %v12570 = vunpack.c.h.b16 %v12385
  %v12571 = vunpack.c.l.b16 %v12386
  %v12572 = vunpack.c.h.b16 %v12386
  %v12573 = vunpack.c.l.b16 %v12387
  %v12574 = vunpack.c.h.b16 %v12387
  %v12575 = vunpack.c.l.b16 %v12388
  %v12576 = vunpack.c.h.b16 %v12388
  %v12577 = vunpack.c.l.b16 %v12389
  %v12578 = vunpack.c.h.b16 %v12389
  %v12579 = vunpack.c.l.b16 %v12390
  %v12580 = vunpack.c.h.b16 %v12390
  %v12581 = vunpack.c.l.b16 %v12391
  %v12582 = vunpack.c.h.b16 %v12391
  %v12583 = vunpack.c.l.b16 %v12392
  %v12584 = vunpack.c.h.b16 %v12392
  %v12585 = vpack.c.b16 %v12461, %v12457
  %v12586 = vpack.c.b16 %v12462, %v12458
  %v12587 = vpack.c.b16 %v12463, %v12459
  %v12588 = vpack.c.b16 %v12464, %v12460
  %v12589 = vpack.c.b16 %v12469, %v12465
  %v12590 = vpack.c.b16 %v12470, %v12466
  %v12591 = vpack.c.b16 %v12471, %v12467
  %v12592 = vpack.c.b16 %v12472, %v12468
  %v12593 = vpack.c.b16 %v12477, %v12473
  %v12594 = vpack.c.b16 %v12478, %v12474
  %v12595 = vpack.c.b16 %v12479, %v12475
  %v12596 = vpack.c.b16 %v12480, %v12476
  %v12597 = vpack.c.b16 %v12485, %v12481
  %v12598 = vpack.c.b16 %v12486, %v12482
  %v12599 = vpack.c.b16 %v12487, %v12483
  %v12600 = vpack.c.b16 %v12488, %v12484
  %v12601 = vpack.c.b16 %v12493, %v12489
  %v12602 = vpack.c.b16 %v12494, %v12490
  %v12603 = vpack.c.b16 %v12495, %v12491
  %v12604 = vpack.c.b16 %v12496, %v12492
  %v12605 = vpack.c.b16 %v12501, %v12497
  %v12606 = vpack.c.b16 %v12502, %v12498
  %v12607 = vpack.c.b16 %v12503, %v12499
  %v12608 = vpack.c.b16 %v12504, %v12500
  %v12609 = vpack.c.b16 %v12509, %v12505
  %v12610 = vpack.c.b16 %v12510, %v12506
  %v12611 = vpack.c.b16 %v12511, %v12507
  %v12612 = vpack.c.b16 %v12512, %v12508
  %v12613 = vpack.c.b16 %v12517, %v12513
  %v12614 = vpack.c.b16 %v12518, %v12514
  %v12615 = vpack.c.b16 %v12519, %v12515
  %v12616 = vpack.c.b16 %v12520, %v12516
  %v12617 = vpack.c.b16 %v12525, %v12521
  %v12618 = vpack.c.b16 %v12526, %v12522
  %v12619 = vpack.c.b16 %v12527, %v12523
  %v12620 = vpack.c.b16 %v12528, %v12524
  %v12621 = vpack.c.b16 %v12533, %v12529
  %v12622 = vpack.c.b16 %v12534, %v12530
  %v12623 = vpack.c.b16 %v12535, %v12531
  %v12624 = vpack.c.b16 %v12536, %v12532
  %v12625 = vpack.c.b16 %v12541, %v12537
  %v12626 = vpack.c.b16 %v12542, %v12538
  %v12627 = vpack.c.b16 %v12543, %v12539
  %v12628 = vpack.c.b16 %v12544, %v12540
  %v12629 = vpack.c.b16 %v12549, %v12545
  %v12630 = vpack.c.b16 %v12550, %v12546
  %v12631 = vpack.c.b16 %v12551, %v12547
  %v12632 = vpack.c.b16 %v12552, %v12548
  %v12633 = vpack.c.b16 %v12557, %v12553
  %v12634 = vpack.c.b16 %v12558, %v12554
  %v12635 = vpack.c.b16 %v12559, %v12555
  %v12636 = vpack.c.b16 %v12560, %v12556
  %v12637 = vpack.c.b16 %v12565, %v12561
  %v12638 = vpack.c.b16 %v12566, %v12562
  %v12639 = vpack.c.b16 %v12567, %v12563
  %v12640 = vpack.c.b16 %v12568, %v12564
  %v12641 = vpack.c.b16 %v12573, %v12569
  %v12642 = vpack.c.b16 %v12574, %v12570
  %v12643 = vpack.c.b16 %v12575, %v12571
  %v12644 = vpack.c.b16 %v12576, %v12572
  %v12645 = vpack.c.b16 %v12581, %v12577
  %v12646 = vpack.c.b16 %v12582, %v12578
  %v12647 = vpack.c.b16 %v12583, %v12579
  %v12648 = vpack.c.b16 %v12584, %v12580
  %12713 = vmatpush.bf16.msra.mxu0 %v12613
  %12714 = vmatpush.bf16.msra.mxu0 %v12609
  %12715 = vmatpush.bf16.msra.mxu0 %v12605
  %12716 = vmatpush.bf16.msra.mxu0 %v12601
  %12717 = vmatpush.bf16.msra.mxu0 %v12597
  %12718 = vmatpush.bf16.msra.mxu0 %v12593
  %12719 = vmatpush.bf16.msra.mxu0 %v12589
  %12720 = vmatpush.bf16.msra.mxu0 %v12585
  %12721 = vmatmul.bf16.gmra.mxu0 %v11429
  %v12722 = vpop.f32.mrf.mxu0
  %v12723 = vadd.f32 %v1483, %v12722
  %v12724 = vpop.f32.mrf.mxu0
  %12725 = vdwg.mxu0
  %12726 = vmatpush.bf16.msra.mxu0 %v12645
  %12727 = vmatpush.bf16.msra.mxu0 %v12641
  %12728 = vmatpush.bf16.msra.mxu0 %v12637
  %12729 = vmatpush.bf16.msra.mxu0 %v12633
  %12730 = vmatpush.bf16.msra.mxu0 %v12629
  %12731 = vmatpush.bf16.msra.mxu0 %v12625
  %12732 = vmatpush.bf16.msra.mxu0 %v12621
  %12733 = vmatpush.bf16.msra.mxu0 %v12617
  %12734 = vmatmul.bf16.gmra.mxu0 %v12328
  %v12735 = vpop.f32.mrf.mxu0
  %v12736 = vadd.f32 %v12723, %v12735
  %v12737 = vpop.f32.mrf.mxu0
  %12738 = vdwg.mxu0
  %12739 = vmatpush.bf16.msra.mxu0 %v12614
  %12740 = vmatpush.bf16.msra.mxu0 %v12610
  %12741 = vmatpush.bf16.msra.mxu0 %v12606
  %12742 = vmatpush.bf16.msra.mxu0 %v12602
  %12743 = vmatpush.bf16.msra.mxu0 %v12598
  %12744 = vmatpush.bf16.msra.mxu0 %v12594
  %12745 = vmatpush.bf16.msra.mxu0 %v12590
  %12746 = vmatpush.bf16.msra.mxu0 %v12586
  %12747 = vmatmul.bf16.gmra.mxu0 %v11429
  %v12748 = vpop.f32.mrf.mxu0
  %v12749 = vadd.f32 %v1484, %v12748
  %v12750 = vpop.f32.mrf.mxu0
  %12751 = vdwg.mxu0
  %12752 = vmatpush.bf16.msra.mxu0 %v12646
  %12753 = vmatpush.bf16.msra.mxu0 %v12642
  %12754 = vmatpush.bf16.msra.mxu0 %v12638
  %12755 = vmatpush.bf16.msra.mxu0 %v12634
  %12756 = vmatpush.bf16.msra.mxu0 %v12630
  %12757 = vmatpush.bf16.msra.mxu0 %v12626
  %12758 = vmatpush.bf16.msra.mxu0 %v12622
  %12759 = vmatpush.bf16.msra.mxu0 %v12618
  %12760 = vmatmul.bf16.gmra.mxu0 %v12328
  %v12761 = vpop.f32.mrf.mxu0
  %v12762 = vadd.f32 %v12749, %v12761
  %v12763 = vpop.f32.mrf.mxu0
  %12764 = vdwg.mxu0
  %12765 = vmatpush.bf16.msra.mxu0 %v12615
  %12766 = vmatpush.bf16.msra.mxu0 %v12611
  %12767 = vmatpush.bf16.msra.mxu0 %v12607
  %12768 = vmatpush.bf16.msra.mxu0 %v12603
  %12769 = vmatpush.bf16.msra.mxu0 %v12599
  %12770 = vmatpush.bf16.msra.mxu0 %v12595
  %12771 = vmatpush.bf16.msra.mxu0 %v12591
  %12772 = vmatpush.bf16.msra.mxu0 %v12587
  %12773 = vmatmul.bf16.gmra.mxu0 %v11429
  %v12774 = vpop.f32.mrf.mxu0
  %v12775 = vadd.f32 %v1485, %v12774
  %v12776 = vpop.f32.mrf.mxu0
  %12777 = vdwg.mxu0
  %12778 = vmatpush.bf16.msra.mxu0 %v12647
  %12779 = vmatpush.bf16.msra.mxu0 %v12643
  %12780 = vmatpush.bf16.msra.mxu0 %v12639
  %12781 = vmatpush.bf16.msra.mxu0 %v12635
  %12782 = vmatpush.bf16.msra.mxu0 %v12631
  %12783 = vmatpush.bf16.msra.mxu0 %v12627
  %12784 = vmatpush.bf16.msra.mxu0 %v12623
  %12785 = vmatpush.bf16.msra.mxu0 %v12619
  %12786 = vmatmul.bf16.gmra.mxu0 %v12328
  %v12787 = vpop.f32.mrf.mxu0
  %v12788 = vadd.f32 %v12775, %v12787
  %v12789 = vpop.f32.mrf.mxu0
  %12790 = vdwg.mxu0
  %12791 = vmatpush.bf16.msra.mxu0 %v12616
  %12792 = vmatpush.bf16.msra.mxu0 %v12612
  %12793 = vmatpush.bf16.msra.mxu0 %v12608
  %12794 = vmatpush.bf16.msra.mxu0 %v12604
  %12795 = vmatpush.bf16.msra.mxu0 %v12600
  %12796 = vmatpush.bf16.msra.mxu0 %v12596
  %12797 = vmatpush.bf16.msra.mxu0 %v12592
  %12798 = vmatpush.bf16.msra.mxu0 %v12588
  %12799 = vmatmul.bf16.gmra.mxu0 %v11429
  %v12800 = vpop.f32.mrf.mxu0
  %v12801 = vadd.f32 %v1486, %v12800
  %v12802 = vpop.f32.mrf.mxu0
  %12803 = vdwg.mxu0
  %12804 = vmatpush.bf16.msra.mxu0 %v12648
  %12805 = vmatpush.bf16.msra.mxu0 %v12644
  %12806 = vmatpush.bf16.msra.mxu0 %v12640
  %12807 = vmatpush.bf16.msra.mxu0 %v12636
  %12808 = vmatpush.bf16.msra.mxu0 %v12632
  %12809 = vmatpush.bf16.msra.mxu0 %v12628
  %12810 = vmatpush.bf16.msra.mxu0 %v12624
  %12811 = vmatpush.bf16.msra.mxu0 %v12620
  %12812 = vmatmul.bf16.gmra.mxu0 %v12328
  %v12813 = vpop.f32.mrf.mxu0
  %v12814 = vadd.f32 %v12801, %v12813
  %v12815 = vpop.f32.mrf.mxu0
  %12816 = vdwg.mxu0
  %v12817 = vadd.f32 %v12736, %v11754
  %v12818 = vadd.f32 %v12762, %v11767
  %v12819 = vadd.f32 %v12788, %v11780
  %v12820 = vadd.f32 %v12814, %v11793
  %v12821 = vxor.u32 %v12817, 2147483648
  %v12822 = vmul.f32 %v12821, 1.442695
  %v12823 = vpow.pop %v12822
  %v12824 = vadd.f32 %v12823, 1.0
  %v12825 = vrcp.pop %v12824
  %v12826 = vmul.f32 %v12824, %v12825
  %v12827 = vsub.f32 1.0, %v12826
  %v12828 = vmul.f32 %v12825, %v12827
  %v12829 = vadd.f32 %v12825, %v12828
  %vm12830 = vweird.f32 %v12824
  %vm12831 = vweird.f32 %v12825
  %vm12832 = vmor %vm12830, %vm12831
  %v12833 = vsel %vm12832, %v12825, %v12829
  %v12834 = vand.u32 2147483647, %v12824
  %vm12835 = vcmp.eq.f32.partialorder %v12834, 8.507059e+37
  %v12836 = vand.u32 %v12824, 2147483648
  %v12837 = vor.u32 1.1754944e-38, %v12836
  %v12838 = vsel %vm12835, %v12837, %v12833
  %v12839 = vmul.f32 1.0, %v12838
  %v12840 = vxor.u32 %v12818, 2147483648
  %v12841 = vmul.f32 %v12840, 1.442695
  %v12842 = vpow.pop %v12841
  %v12843 = vadd.f32 %v12842, 1.0
  %v12844 = vrcp.pop %v12843
  %v12845 = vmul.f32 %v12843, %v12844
  %v12846 = vsub.f32 1.0, %v12845
  %v12847 = vmul.f32 %v12844, %v12846
  %v12848 = vadd.f32 %v12844, %v12847
  %vm12849 = vweird.f32 %v12843
  %vm12850 = vweird.f32 %v12844
  %vm12851 = vmor %vm12849, %vm12850
  %v12852 = vsel %vm12851, %v12844, %v12848
  %v12853 = vand.u32 2147483647, %v12843
  %vm12854 = vcmp.eq.f32.partialorder %v12853, 8.507059e+37
  %v12855 = vand.u32 %v12843, 2147483648
  %v12856 = vor.u32 1.1754944e-38, %v12855
  %v12857 = vsel %vm12854, %v12856, %v12852
  %v12858 = vmul.f32 1.0, %v12857
  %v12859 = vtanh.pop %v12819
  %v12860 = vxor.u32 %v12820, 2147483648
  %v12861 = vmul.f32 %v12860, 1.442695
  %v12862 = vpow.pop %v12861
  %v12863 = vadd.f32 %v12862, 1.0
  %v12864 = vrcp.pop %v12863
  %v12865 = vmul.f32 %v12863, %v12864
  %v12866 = vsub.f32 1.0, %v12865
  %v12867 = vmul.f32 %v12864, %v12866
  %v12868 = vadd.f32 %v12864, %v12867
  %vm12869 = vweird.f32 %v12863
  %vm12870 = vweird.f32 %v12864
  %vm12871 = vmor %vm12869, %vm12870
  %v12872 = vsel %vm12871, %v12864, %v12868
  %v12873 = vand.u32 2147483647, %v12863
  %vm12874 = vcmp.eq.f32.partialorder %v12873, 8.507059e+37
  %v12875 = vand.u32 %v12863, 2147483648
  %v12876 = vor.u32 1.1754944e-38, %v12875
  %v12877 = vsel %vm12874, %v12876, %v12872
  %v12878 = vmul.f32 1.0, %v12877
  %v12879 = vmul.f32 %v12858, %v11065
  %v12880 = vmul.f32 %v12839, %v12859
  %v12881 = vadd.f32 %v12879, %v12880
  %v12882 = vtanh.pop %v12881
  %v12883 = vmul.f32 %v12878, %v12882
  %v12884 = vpack.c.bf16 %v12883, %v12883
  %v12885 = vld [vmem:[%s12] sm:$0xff]
  %v12886 = vld [vmem:[%s12 + $0x8] sm:$0xff]
  %v12887 = vld [vmem:[%s12 + $0x10] sm:$0xff]
  %v12888 = vld [vmem:[%s12 + $0x18] sm:$0xff]
  %v12889 = vld [vmem:[%s12 + $0x20] sm:$0xff]
  %v12890 = vld [vmem:[%s12 + $0x28] sm:$0xff]
  %v12891 = vld [vmem:[%s12 + $0x30] sm:$0xff]
  %v12892 = vld [vmem:[%s12 + $0x38] sm:$0xff]
  %v12893 = vld [vmem:[%s12 + $0x40] sm:$0xff]
  %v12894 = vld [vmem:[%s12 + $0x48] sm:$0xff]
  %v12895 = vld [vmem:[%s12 + $0x50] sm:$0xff]
  %v12896 = vld [vmem:[%s12 + $0x58] sm:$0xff]
  %v12897 = vld [vmem:[%s12 + $0x60] sm:$0xff]
  %v12898 = vld [vmem:[%s12 + $0x68] sm:$0xff]
  %v12899 = vld [vmem:[%s12 + $0x70] sm:$0xff]
  %v12900 = vld [vmem:[%s12 + $0x78] sm:$0xff]
  %v12917 = vunpack.c.l.b16 %v12885
  %v12918 = vunpack.c.h.b16 %v12885
  %v12919 = vunpack.c.l.b16 %v12886
  %v12920 = vunpack.c.h.b16 %v12886
  %v12921 = vunpack.c.l.b16 %v12887
  %v12922 = vunpack.c.h.b16 %v12887
  %v12923 = vunpack.c.l.b16 %v12888
  %v12924 = vunpack.c.h.b16 %v12888
  %v12925 = vunpack.c.l.b16 %v12889
  %v12926 = vunpack.c.h.b16 %v12889
  %v12927 = vunpack.c.l.b16 %v12890
  %v12928 = vunpack.c.h.b16 %v12890
  %v12929 = vunpack.c.l.b16 %v12891
  %v12930 = vunpack.c.h.b16 %v12891
  %v12931 = vunpack.c.l.b16 %v12892
  %v12932 = vunpack.c.h.b16 %v12892
  %v12933 = vunpack.c.l.b16 %v12893
  %v12934 = vunpack.c.h.b16 %v12893
  %v12935 = vunpack.c.l.b16 %v12894
  %v12936 = vunpack.c.h.b16 %v12894
  %v12937 = vunpack.c.l.b16 %v12895
  %v12938 = vunpack.c.h.b16 %v12895
  %v12939 = vunpack.c.l.b16 %v12896
  %v12940 = vunpack.c.h.b16 %v12896
  %v12941 = vunpack.c.l.b16 %v12897
  %v12942 = vunpack.c.h.b16 %v12897
  %v12943 = vunpack.c.l.b16 %v12898
  %v12944 = vunpack.c.h.b16 %v12898
  %v12945 = vunpack.c.l.b16 %v12899
  %v12946 = vunpack.c.h.b16 %v12899
  %v12947 = vunpack.c.l.b16 %v12900
  %v12948 = vunpack.c.h.b16 %v12900
  %v12949 = vpack.c.b16 %v12919, %v12917
  %v12950 = vpack.c.b16 %v12920, %v12918
  %v12951 = vpack.c.b16 %v12923, %v12921
  %v12952 = vpack.c.b16 %v12924, %v12922
  %v12953 = vpack.c.b16 %v12927, %v12925
  %v12954 = vpack.c.b16 %v12928, %v12926
  %v12955 = vpack.c.b16 %v12931, %v12929
  %v12956 = vpack.c.b16 %v12932, %v12930
  %v12957 = vpack.c.b16 %v12935, %v12933
  %v12958 = vpack.c.b16 %v12936, %v12934
  %v12959 = vpack.c.b16 %v12939, %v12937
  %v12960 = vpack.c.b16 %v12940, %v12938
  %v12961 = vpack.c.b16 %v12943, %v12941
  %v12962 = vpack.c.b16 %v12944, %v12942
  %v12963 = vpack.c.b16 %v12947, %v12945
  %v12964 = vpack.c.b16 %v12948, %v12946
  %12981 = vmatpush.bf16.msra.mxu0 %v12963
  %12982 = vmatpush.bf16.msra.mxu0 %v12961
  %12983 = vmatpush.bf16.msra.mxu0 %v12959
  %12984 = vmatpush.bf16.msra.mxu0 %v12957
  %12985 = vmatpush.bf16.msra.mxu0 %v12955
  %12986 = vmatpush.bf16.msra.mxu0 %v12953
  %12987 = vmatpush.bf16.msra.mxu0 %v12951
  %12988 = vmatpush.bf16.msra.mxu0 %v12949
  %12989 = vmatmul.bf16.gmra.mxu0 %v12884
  %v12990 = vpop.f32.mrf.mxu0
  %v12991 = vadd.f32 %v2000, %v12990
  %v12992 = vpop.f32.mrf.mxu0
  %12993 = vdwg.mxu0
  %12994 = vmatpush.bf16.msra.mxu0 %v12964
  %12995 = vmatpush.bf16.msra.mxu0 %v12962
  %12996 = vmatpush.bf16.msra.mxu0 %v12960
  %12997 = vmatpush.bf16.msra.mxu0 %v12958
  %12998 = vmatpush.bf16.msra.mxu0 %v12956
  %12999 = vmatpush.bf16.msra.mxu0 %v12954
  %13000 = vmatpush.bf16.msra.mxu0 %v12952
  %13001 = vmatpush.bf16.msra.mxu0 %v12950
  %13002 = vmatmul.bf16.gmra.mxu0 %v12884
  %v13003 = vpop.f32.mrf.mxu0
  %v13004 = vadd.f32 %v2001, %v13003
  %v13005 = vpop.f32.mrf.mxu0
  %13006 = vdwg.mxu0
  %s13007 = scalar_lea.vmem %s14, 96
  %13008 = vst [vmem:[%s13007] sm:$0xff] %v12991
  %13009 = vst [vmem:[%s13007 + $0x8] sm:$0xff] %v13004
  %v13026 = vperm.slane %v12109, %v56
  %v13027 = vperm.slane %v12110, %v2129
  %v13028 = vsel %vm2131, %v13027, %v13026
  %v13029 = vperm.slane %v12125, %v56
  %v13030 = vperm.slane %v12126, %v2129
  %v13031 = vsel %vm2131, %v13030, %v13029
  %v13032 = vperm.slane %v12141, %v56
  %v13033 = vperm.slane %v12142, %v2129
  %v13034 = vsel %vm2131, %v13033, %v13032
  %v13035 = vperm.slane %v12157, %v56
  %v13036 = vperm.slane %v12158, %v2129
  %v13037 = vsel %vm2131, %v13036, %v13035
  %v13038 = vperm.slane %v12173, %v56
  %v13039 = vperm.slane %v12174, %v2129
  %v13040 = vsel %vm2131, %v13039, %v13038
  %v13041 = vperm.slane %v12189, %v56
  %v13042 = vperm.slane %v12190, %v2129
  %v13043 = vsel %vm2131, %v13042, %v13041
  %v13044 = vperm.slane %v12205, %v56
  %v13045 = vperm.slane %v12206, %v2129
  %v13046 = vsel %vm2131, %v13045, %v13044
  %v13047 = vperm.slane %v12221, %v56
  %v13048 = vperm.slane %v12222, %v2129
  %v13049 = vsel %vm2131, %v13048, %v13047
  %v13050 = vsel %vm191, %v13031, %v13028
  %v13051 = vsel %vm193, %v13034, %v13050
  %v13052 = vsel %vm195, %v13037, %v13051
  %v13053 = vsel %vm197, %v13040, %v13052
  %v13054 = vsel %vm199, %v13043, %v13053
  %v13055 = vsel %vm201, %v13046, %v13054
  %v13056 = vsel %vm203, %v13049, %v13055
  %s13058 = scalar_lea.vmem %s15, 48
  %13059 = vst.msk [vmem:[%s13058] sm:$0xff] %vm2162, %v13056
  // Predicated region
  $region58: #{decoder_forward.1} parent=0 // pred_check
    _
  $region59: #{decoder_forward.1} parent=0 // pred_check_branch
    %13061 = sbr.rel (0) target = $region61
  $region60: #{decoder_forward.1} parent=0 // pred_region
    _
  $region61: #{decoder_forward.1} parent=0 // pred_fallthru
    _
  // Predicated region
  $region62: #{decoder_forward.1} parent=0 // pred_check
    _
  $region63: #{decoder_forward.1} parent=0 // pred_check_branch
    %13063 = sbr.rel (0) target = $region65
  $region64: #{decoder_forward.1} parent=0 // pred_region
    _
  $region65: #{decoder_forward.1} parent=0 // pred_fallthru
    _
  // Predicated region
  $region66: #{decoder_forward.1} parent=0 // pred_check
    _
  $region67: #{decoder_forward.1} parent=0 // pred_check_branch
    %13065 = sbr.rel (0) target = $region69
  $region68: #{decoder_forward.1} parent=0 // pred_region
    _
  $region69: #{decoder_forward.1} parent=0 // pred_fallthru
    _
  // Predicated region
  $region70: #{decoder_forward.1} parent=0 // pred_check
    _
  $region71: #{decoder_forward.1} parent=0 // pred_check_branch
    %13067 = sbr.rel (0) target = $region73
  $region72: #{decoder_forward.1} parent=0 // pred_region
    _
  $region73: #{decoder_forward.1} parent=0 // pred_fallthru
    _

</llo_original>
